<compile_context>
chip_gen: v6e
topology: v6e:2x2x1
jax: 0.10.0
libtpu: 0.0.40
codegen_flags: <defaults>
</compile_context>

<pallas_src>
import jax
import jax.numpy as jnp
from jax.experimental import pallas as pl
from jax.experimental.pallas import tpu as pltpu

# --- config (from the PyTorch module) -----------------------------------------
N_EMB = 384
N_HEAD = 6
HEAD_SIZE = N_EMB // N_HEAD          # 64
LN_EPS = 1e-5                        # nn.LayerNorm default
NEG_INF = -1e30                      # finite mask value (exp-/padding-safe)


def _layernorm(x, gamma, beta):
    mu = jnp.mean(x, axis=-1, keepdims=True)
    var = jnp.mean((x - mu) ** 2, axis=-1, keepdims=True)
    return (x - mu) * jax.lax.rsqrt(var + LN_EPS) * gamma + beta


def block_kernel(xf_ref,
                 ln1g_ref, ln1b_ref,
                 wq_ref, wkv_ref, wp_ref, bp_ref,
                 ln2g_ref, ln2b_ref,
                 w1_ref, fb1_ref, w2_ref, fb2_ref,
                 y_ref,
                 kv_scratch, attn_scratch):
    T = kv_scratch.shape[0]
    C = N_EMB
    TQ = y_ref.shape[1]
    TK = TQ
    qi = pl.program_id(1)
    row0 = pl.multiple_of(qi * TQ, TQ)

    g1 = ln1g_ref[...]
    b1 = ln1b_ref[...]

    # ---- K/V for the whole sequence: computed once per batch element (qi == 0),
    #      persisted in VMEM scratch across the "arbitrary" query-tile grid axis.
    @pl.when(qi == 0)
    def _():
        h_full = _layernorm(xf_ref[0].astype(jnp.float32), g1, b1)        # (T, C) f32
        kv = jnp.dot(h_full.astype(jnp.bfloat16), wkv_ref[...],
                     preferred_element_type=jnp.float32)                  # (T, 2C) f32
        kv_scratch[...] = kv.astype(jnp.bfloat16)

    # ---- query tile: LN1 + Q projection (attention scale pre-folded into wq) ----
    x_tile = xf_ref[0, pl.ds(row0, TQ), :].astype(jnp.float32)            # (TQ, C) f32
    h_tile = _layernorm(x_tile, g1, b1)
    q_bf = jnp.dot(h_tile.astype(jnp.bfloat16), wq_ref[...],
                   preferred_element_type=jnp.float32).astype(jnp.bfloat16)

    # causal mask pieces (hoisted out of the head / KV loops)
    rows = row0 + jax.lax.broadcasted_iota(jnp.int32, (TQ, TK), 0)
    col_base = jax.lax.broadcasted_iota(jnp.int32, (TQ, TK), 1)

    num_kv = qi + 1          # causal skipping: KV blocks above the diagonal are never touched

    for hd in range(N_HEAD):
        lo = hd * HEAD_SIZE
        qh = q_bf[:, lo:lo + HEAD_SIZE]                                    # (TQ, 64) bf16

        def kv_step(j, carry, lo=lo, qh=qh):
            m_prev, l_prev, acc_prev = carry
            koff = pl.multiple_of(j * TK, TK)
            kh = kv_scratch[pl.ds(koff, TK), lo:lo + HEAD_SIZE]            # (TK, 64) bf16
            vh = kv_scratch[pl.ds(koff, TK), C + lo:C + lo + HEAD_SIZE]    # (TK, 64) bf16
            s = jax.lax.dot_general(qh, kh, (((1,), (1,)), ((), ())),
                                    preferred_element_type=jnp.float32)    # (TQ, TK)
            s = jnp.where(rows >= koff + col_base, s, NEG_INF)
            m_new = jnp.maximum(m_prev, jnp.max(s, axis=-1, keepdims=True))
            alpha = jnp.exp(m_prev - m_new)
            p = jnp.exp(s - m_new)
            l_new = alpha * l_prev + jnp.sum(p, axis=-1, keepdims=True)
            acc_new = alpha * acc_prev + jnp.dot(p.astype(jnp.bfloat16), vh,
                                                 preferred_element_type=jnp.float32)
            return m_new, l_new, acc_new

        carry0 = (jnp.full((TQ, 1), NEG_INF, jnp.float32),
                  jnp.zeros((TQ, 1), jnp.float32),
                  jnp.zeros((TQ, HEAD_SIZE), jnp.float32))
        _, l_f, acc_f = jax.lax.fori_loop(0, num_kv, kv_step, carry0)

        # (dropout on attention weights == identity in eval mode)
        out_h = acc_f * pl.reciprocal(l_f, approx=True)                    # (TQ, 64) f32
        attn_scratch[:, lo:lo + HEAD_SIZE] = out_h.astype(jnp.bfloat16)

    # fused output projection: one K=384 matmul instead of six K=64 matmuls
    attn = jnp.dot(attn_scratch[...], wp_ref[...],
                   preferred_element_type=jnp.float32) + bp_ref[...]
    x1 = x_tile + attn                     # residual 1 (projection dropout == identity)

    # ---------------- x + FFN(LN2(x)) ----------------
    h2 = _layernorm(x1, ln2g_ref[...], ln2b_ref[...])
    f = jnp.dot(h2.astype(jnp.bfloat16), w1_ref[...],
                preferred_element_type=jnp.float32) + fb1_ref[...]
    f = jnp.maximum(f, 0.0)
    f = jnp.dot(f.astype(jnp.bfloat16), w2_ref[...],
                preferred_element_type=jnp.float32) + fb2_ref[...]
    y_ref[0] = (x1 + f).astype(y_ref.dtype)   # residual 2 (FFN dropout == identity)


def _vmem_capacity_bytes():
    cap = 64 << 20                            # conservative default (v7x physical VMEM)
    try:
        info = pltpu.get_tpu_info()
        cap = int(getattr(info, "vmem_capacity_bytes", cap)) or cap
    except Exception:
        pass
    return cap


def _pick_tq(T, vmem_cap):
    # larger query tiles on 128 MiB chips (v5e/v6e), smaller on v7x (64 MiB)
    cap_tq = 512 if vmem_cap >= (96 << 20) else 256
    if T <= cap_tq:
        return T
    tq = cap_tq
    while tq > 8 and T % tq != 0:
        tq //= 2
    return tq if T % tq == 0 else T


def transformer_block(x, params, tq=None):
    """x: (B, T, C) float32 -> (B, T, C) float32 (eval-mode Block forward)."""
    B, T, C = x.shape
    assert C == N_EMB

    vmem_cap = _vmem_capacity_bytes()
    if tq is None:
        tq = _pick_tq(T, vmem_cap)
    assert T % tq == 0 and (tq == T or tq % 8 == 0), "bad query tile size"
    NQ = T // tq

    # --- wrapper-time weight packing / casting (done once, outside the kernel) ---
    scale = jnp.float32(C) ** -0.5            # C**-0.5 with C = n_emb (reference Head.forward)
    x_bf = x.astype(jnp.bfloat16)
    wq = (params['wq'] * scale).astype(jnp.bfloat16)                                  # (C, C)
    wkv = jnp.concatenate([params['wk'], params['wv']], axis=1).astype(jnp.bfloat16)  # (C, 2C)
    wp = params['wp'].astype(jnp.bfloat16)                                            # (C, C)
    w1 = params['w1'].astype(jnp.bfloat16)                                            # (C, 4C)
    w2 = params['w2'].astype(jnp.bfloat16)                                            # (4C, C)
    # TODO(synk): optional fp8 (e4m3) weight storage for v7x not implemented (bf16 everywhere).

    weights = [params['ln1_g'], params['ln1_b'],
               wq, wkv, wp, params['bp'],
               params['ln2_g'], params['ln2_b'],
               w1, params['b1'], w2, params['b2']]

    # x: one full-sequence block per batch element, re-used across all query tiles of that b.
    xf_spec = pl.BlockSpec((1, T, C), lambda b, qi: (b, 0, 0))
    # Weights: whole-array resident in VMEM (copied once; no per-step double buffering).
    w_specs = [pl.BlockSpec(memory_space=pltpu.MemorySpace.VMEM) for _ in weights]
    out_spec = pl.BlockSpec((1, tq, C), lambda b, qi: (b, qi, 0))

    return pl.pallas_call(
        block_kernel,
        out_shape=jax.ShapeDtypeStruct((B, T, C), x.dtype),
        grid=(B, NQ),
        in_specs=[xf_spec] + w_specs,
        out_specs=out_spec,
        scratch_shapes=[pltpu.VMEM((T, 2 * C), jnp.bfloat16),   # K|V, persists across tiles
                        pltpu.VMEM((tq, C), jnp.bfloat16)],     # per-head attention outputs
        compiler_params=pltpu.CompilerParams(
            # batch axis "parallel" (megacore / v7x 2-TC sharding); query-tile axis must be
            # "arbitrary" so the per-batch K/V scratch computed at qi==0 stays valid.
            dimension_semantics=("parallel", "arbitrary"),
            vmem_limit_bytes=int(min(vmem_cap * 3 // 4, 112 << 20)),
        ),
    )(x_bf, *weights)


# --------------------------- parameter init (deterministic) ---------------------------
def init_params(key):
    ks = jax.random.split(key, 6)
    s = 0.02
    return {
        'ln1_g': jnp.ones((1, N_EMB), jnp.float32),
        'ln1_b': jnp.zeros((1, N_EMB), jnp.float32),
        'wq': s * jax.random.normal(ks[0], (N_EMB, N_EMB), jnp.float32),
        'wk': s * jax.random.normal(ks[1], (N_EMB, N_EMB), jnp.float32),
        'wv': s * jax.random.normal(ks[2], (N_EMB, N_EMB), jnp.float32),
        'wp': s * jax.random.normal(ks[3], (N_EMB, N_EMB), jnp.float32),
        'bp': jnp.zeros((1, N_EMB), jnp.float32),
        'ln2_g': jnp.ones((1, N_EMB), jnp.float32),
        'ln2_b': jnp.zeros((1, N_EMB), jnp.float32),
        'w1': s * jax.random.normal(ks[4], (N_EMB, 4 * N_EMB), jnp.float32),
        'b1': jnp.zeros((1, 4 * N_EMB), jnp.float32),
        'w2': s * jax.random.normal(ks[5], (4 * N_EMB, N_EMB), jnp.float32),
        'b2': jnp.zeros((1, N_EMB), jnp.float32),
    }


# --------------------------- pure-JAX f32 reference for validation --------------------
def ref_block(x, p):
    def ln(v, g, b):
        mu = v.mean(-1, keepdims=True)
        var = ((v - mu) ** 2).mean(-1, keepdims=True)
        return (v - mu) / jnp.sqrt(var + LN_EPS) * g + b

    B, T, C = x.shape
    h = ln(x, p['ln1_g'], p['ln1_b'])
    q = (h @ p['wq']).reshape(B, T, N_HEAD, HEAD_SIZE)
    k = (h @ p['wk']).reshape(B, T, N_HEAD, HEAD_SIZE)
    v = (h @ p['wv']).reshape(B, T, N_HEAD, HEAD_SIZE)
    wei = jnp.einsum('bthd,bshd->bhts', q, k) * (C ** -0.5)
    mask = jnp.tril(jnp.ones((T, T), bool))
    wei = jnp.where(mask, wei, -jnp.inf)
    wei = jax.nn.softmax(wei, axis=-1)
    attn = jnp.einsum('bhts,bshd->bthd', wei, v).reshape(B, T, C)
    x1 = x + attn @ p['wp'] + p['bp']
    h2 = ln(x1, p['ln2_g'], p['ln2_b'])
    f = jnp.maximum(h2 @ p['w1'] + p['b1'], 0.0) @ p['w2'] + p['b2']
    return x1 + f


if __name__ == "__main__":
    key = jax.random.PRNGKey(0)
    kx1, kx2, kp = jax.random.split(key, 3)
    params = init_params(kp)

    # Small shapes (B=2, T=8): single query tile / single KV block.
    x = jax.random.normal(kx1, (2, 8, N_EMB), jnp.float32)
    y = jax.block_until_ready(transformer_block(x, params))
    y_ref = ref_block(x, params)
    assert y.shape == x.shape
    assert jnp.all(jnp.isfinite(y))
    err = jnp.max(jnp.abs(y - y_ref))
    # bf16 matmuls / bf16 x (f32 accumulation) + approx reciprocal -> looser tolerance
    assert jnp.allclose(y, y_ref, atol=2e-2, rtol=2e-2), f"max abs diff {err}"

    # Multi-tile causal path (T = block_size = 256, forced tq=64 -> 4 query tiles per batch):
    # exercises the persistent K/V scratch and the causal KV-block (flash) loop with row0 > 0.
    x2 = jax.random.normal(kx2, (2, 256, N_EMB), jnp.float32)
    y2 = jax.block_until_ready(transformer_block(x2, params, tq=64))
    y2_ref = ref_block(x2, params)
    err2 = jnp.max(jnp.abs(y2 - y2_ref))
    assert jnp.allclose(y2, y2_ref, atol=2e-2, rtol=2e-2), f"max abs diff {err2}"

    print("KERNEL_OK")
</pallas_src>

<mosaic_0001>
module attributes {stable_mosaic.version = 11 : i64} {
  func.func @block_kernel(%arg0: i32, %arg1: i32, %arg2: memref<1x8x384xbf16, #tpu.memory_space<vmem>>, %arg3: memref<1x384xf32, #tpu.memory_space<vmem>>, %arg4: memref<1x384xf32, #tpu.memory_space<vmem>>, %arg5: memref<384x384xbf16, #tpu.memory_space<vmem>>, %arg6: memref<384x768xbf16, #tpu.memory_space<vmem>>, %arg7: memref<384x384xbf16, #tpu.memory_space<vmem>>, %arg8: memref<1x384xf32, #tpu.memory_space<vmem>>, %arg9: memref<1x384xf32, #tpu.memory_space<vmem>>, %arg10: memref<1x384xf32, #tpu.memory_space<vmem>>, %arg11: memref<384x1536xbf16, #tpu.memory_space<vmem>>, %arg12: memref<1x1536xf32, #tpu.memory_space<vmem>>, %arg13: memref<1536x384xbf16, #tpu.memory_space<vmem>>, %arg14: memref<1x384xf32, #tpu.memory_space<vmem>>, %arg15: memref<1x8x384xf32, #tpu.memory_space<vmem>>, %arg16: memref<8x768xbf16, #tpu.memory_space<vmem>>, %arg17: memref<8x384xbf16, #tpu.memory_space<vmem>>) attributes {dimension_semantics = [#tpu.dimension_semantics<parallel>, #tpu.dimension_semantics<arbitrary>], iteration_bounds = array<i64: 2, 1>, scalar_prefetch = 0 : i64, scratch_operands = 2 : i64, tpu.core_type = #tpu.core_type<tc>, window_params = [{transform_indices = @transform_0, window_bounds = array<i64: 1, 8, 384>}, {pipeline_mode = #tpu.pipeline_mode<synchronous>, transform_indices = @transform_1, window_bounds = array<i64: 1, 384>}, {pipeline_mode = #tpu.pipeline_mode<synchronous>, transform_indices = @transform_2, window_bounds = array<i64: 1, 384>}, {pipeline_mode = #tpu.pipeline_mode<synchronous>, transform_indices = @transform_3, window_bounds = array<i64: 384, 384>}, {pipeline_mode = #tpu.pipeline_mode<synchronous>, transform_indices = @transform_4, window_bounds = array<i64: 384, 768>}, {pipeline_mode = #tpu.pipeline_mode<synchronous>, transform_indices = @transform_5, window_bounds = array<i64: 384, 384>}, {pipeline_mode = #tpu.pipeline_mode<synchronous>, transform_indices = @transform_6, window_bounds = array<i64: 1, 384>}, {pipeline_mode = #tpu.pipeline_mode<synchronous>, transform_indices = @transform_7, window_bounds = array<i64: 1, 384>}, {pipeline_mode = #tpu.pipeline_mode<synchronous>, transform_indices = @transform_8, window_bounds = array<i64: 1, 384>}, {pipeline_mode = #tpu.pipeline_mode<synchronous>, transform_indices = @transform_9, window_bounds = array<i64: 384, 1536>}, {pipeline_mode = #tpu.pipeline_mode<synchronous>, transform_indices = @transform_10, window_bounds = array<i64: 1, 1536>}, {pipeline_mode = #tpu.pipeline_mode<synchronous>, transform_indices = @transform_11, window_bounds = array<i64: 1536, 384>}, {pipeline_mode = #tpu.pipeline_mode<synchronous>, transform_indices = @transform_12, window_bounds = array<i64: 1, 384>}, {transform_indices = @transform_13, window_bounds = array<i64: 1, 8, 384>}]} {
    %c8_i32 = arith.constant 8 : i32
    %0 = arith.muli %arg1, %c8_i32 : i32
    %1 = tpu.assume_multiple %0, 8 : i32
    %c0 = arith.constant 0 : index
    %c0_0 = arith.constant 0 : index
    %2 = vector.load %arg3[%c0, %c0_0] : memref<1x384xf32, #tpu.memory_space<vmem>>, vector<1x384xf32>
    %c0_1 = arith.constant 0 : index
    %c0_2 = arith.constant 0 : index
    %3 = vector.load %arg4[%c0_1, %c0_2] : memref<1x384xf32, #tpu.memory_space<vmem>>, vector<1x384xf32>
    %c0_i32 = arith.constant 0 : i32
    %4 = arith.cmpi eq, %arg1, %c0_i32 : i32
    %5 = arith.extui %4 : i1 to i32
    %c0_i32_3 = arith.constant 0 : i32
    %6 = arith.cmpi ne, %5, %c0_i32_3 : i32
    scf.if %6 {
      %c0_80 = arith.constant 0 : index
      %c0_81 = arith.constant 0 : index
      %c0_82 = arith.constant 0 : index
      %163 = vector.load %arg2[%c0_80, %c0_81, %c0_82] : memref<1x8x384xbf16, #tpu.memory_space<vmem>>, vector<1x8x384xbf16>
      %164 = vector.shape_cast %163 : vector<1x8x384xbf16> to vector<8x384xbf16>
      %165 = arith.extf %164 : vector<8x384xbf16> to vector<8x384xf32>
      %cst_83 = arith.constant dense<0.000000e+00> : vector<8xf32>
      %166 = vector.multi_reduction <add>, %165, %cst_83 [1] : vector<8x384xf32> to vector<8xf32>
      %167 = vector.shape_cast %166 : vector<8xf32> to vector<8x1xf32>
      %cst_84 = arith.constant 3.840000e+02 : f32
      %168 = vector.broadcast %cst_84 : f32 to vector<8x1xf32>
      %169 = arith.divf %167, %168 : vector<8x1xf32>
      %170 = vector.broadcast %169 : vector<8x1xf32> to vector<8x384xf32>
      %171 = arith.subf %165, %170 : vector<8x384xf32>
      %172 = arith.mulf %171, %171 : vector<8x384xf32>
      %cst_85 = arith.constant dense<0.000000e+00> : vector<8xf32>
      %173 = vector.multi_reduction <add>, %172, %cst_85 [1] : vector<8x384xf32> to vector<8xf32>
      %174 = vector.shape_cast %173 : vector<8xf32> to vector<8x1xf32>
      %cst_86 = arith.constant 3.840000e+02 : f32
      %175 = vector.broadcast %cst_86 : f32 to vector<8x1xf32>
      %176 = arith.divf %174, %175 : vector<8x1xf32>
      %177 = vector.broadcast %169 : vector<8x1xf32> to vector<8x384xf32>
      %178 = arith.subf %165, %177 : vector<8x384xf32>
      %cst_87 = arith.constant 9.99999974E-6 : f32
      %179 = vector.broadcast %cst_87 : f32 to vector<8x1xf32>
      %180 = arith.addf %176, %179 : vector<8x1xf32>
      %181 = math.rsqrt %180 : vector<8x1xf32>
      %182 = vector.broadcast %181 : vector<8x1xf32> to vector<8x384xf32>
      %183 = arith.mulf %178, %182 : vector<8x384xf32>
      %184 = vector.broadcast %2 : vector<1x384xf32> to vector<8x384xf32>
      %185 = arith.mulf %183, %184 : vector<8x384xf32>
      %186 = vector.broadcast %3 : vector<1x384xf32> to vector<8x384xf32>
      %187 = arith.addf %185, %186 : vector<8x384xf32>
      %188 = arith.truncf %187 : vector<8x384xf32> to vector<8x384xbf16>
      %c0_88 = arith.constant 0 : index
      %c0_89 = arith.constant 0 : index
      %189 = vector.load %arg6[%c0_88, %c0_89] : memref<384x768xbf16, #tpu.memory_space<vmem>>, vector<384x768xbf16>
      %cst_90 = arith.constant dense<0.000000e+00> : vector<8x768xf32>
      %190 = tpu.matmul %188, %189, %cst_90 {dimension_numbers = #tpu.dot_dimension_numbers<[1], [0], [0], [1], [0, 0, 1, 1], [], []>} : vector<8x384xbf16>, vector<384x768xbf16>, vector<8x768xf32> -> vector<8x768xf32>
      %191 = arith.truncf %190 : vector<8x768xf32> to vector<8x768xbf16>
      %c0_91 = arith.constant 0 : index
      %c0_92 = arith.constant 0 : index
      %192 = vector.load %arg16[%c0_91, %c0_92] : memref<8x768xbf16, #tpu.memory_space<vmem>>, vector<8x768xbf16>
      tpu.vector_store %arg16[%c0_91, %c0_92], %191 {strides = array<i32>} : memref<8x768xbf16, #tpu.memory_space<vmem>>, vector<8x768xbf16>,
    } else {
    }
    %c0_4 = arith.constant 0 : index
    %7 = arith.index_cast %1 : i32 to index
    %c0_5 = arith.constant 0 : index
    %8 = vector.load %arg2[%c0_4, %7, %c0_5] : memref<1x8x384xbf16, #tpu.memory_space<vmem>>, vector<1x8x384xbf16>
    %9 = vector.shape_cast %8 : vector<1x8x384xbf16> to vector<8x384xbf16>
    %10 = arith.extf %9 : vector<8x384xbf16> to vector<8x384xf32>
    %cst = arith.constant dense<0.000000e+00> : vector<8xf32>
    %11 = vector.multi_reduction <add>, %10, %cst [1] : vector<8x384xf32> to vector<8xf32>
    %12 = vector.shape_cast %11 : vector<8xf32> to vector<8x1xf32>
    %cst_6 = arith.constant 3.840000e+02 : f32
    %13 = vector.broadcast %cst_6 : f32 to vector<8x1xf32>
    %14 = arith.divf %12, %13 : vector<8x1xf32>
    %15 = vector.broadcast %14 : vector<8x1xf32> to vector<8x384xf32>
    %16 = arith.subf %10, %15 : vector<8x384xf32>
    %17 = arith.mulf %16, %16 : vector<8x384xf32>
    %cst_7 = arith.constant dense<0.000000e+00> : vector<8xf32>
    %18 = vector.multi_reduction <add>, %17, %cst_7 [1] : vector<8x384xf32> to vector<8xf32>
    %19 = vector.shape_cast %18 : vector<8xf32> to vector<8x1xf32>
    %cst_8 = arith.constant 3.840000e+02 : f32
    %20 = vector.broadcast %cst_8 : f32 to vector<8x1xf32>
    %21 = arith.divf %19, %20 : vector<8x1xf32>
    %22 = vector.broadcast %14 : vector<8x1xf32> to vector<8x384xf32>
    %23 = arith.subf %10, %22 : vector<8x384xf32>
    %cst_9 = arith.constant 9.99999974E-6 : f32
    %24 = vector.broadcast %cst_9 : f32 to vector<8x1xf32>
    %25 = arith.addf %21, %24 : vector<8x1xf32>
    %26 = math.rsqrt %25 : vector<8x1xf32>
    %27 = vector.broadcast %26 : vector<8x1xf32> to vector<8x384xf32>
    %28 = arith.mulf %23, %27 : vector<8x384xf32>
    %29 = vector.broadcast %2 : vector<1x384xf32> to vector<8x384xf32>
    %30 = arith.mulf %28, %29 : vector<8x384xf32>
    %31 = vector.broadcast %3 : vector<1x384xf32> to vector<8x384xf32>
    %32 = arith.addf %30, %31 : vector<8x384xf32>
    %33 = arith.truncf %32 : vector<8x384xf32> to vector<8x384xbf16>
    %c0_10 = arith.constant 0 : index
    %c0_11 = arith.constant 0 : index
    %34 = vector.load %arg5[%c0_10, %c0_11] : memref<384x384xbf16, #tpu.memory_space<vmem>>, vector<384x384xbf16>
    %cst_12 = arith.constant dense<0.000000e+00> : vector<8x384xf32>
    %35 = tpu.matmul %33, %34, %cst_12 {dimension_numbers = #tpu.dot_dimension_numbers<[1], [0], [0], [1], [0, 0, 1, 1], [], []>} : vector<8x384xbf16>, vector<384x384xbf16>, vector<8x384xf32> -> vector<8x384xf32>
    %36 = arith.truncf %35 : vector<8x384xf32> to vector<8x384xbf16>
    %37 = tpu.iota {dimensions = array<i32: 0>} : vector<8x8xi32>
    %38 = vector.broadcast %1 : i32 to vector<8x8xi32>
    %39 = arith.addi %38, %37 : vector<8x8xi32>
    %40 = tpu.iota {dimensions = array<i32: 1>} : vector<8x8xi32>
    %c1_i32 = arith.constant 1 : i32
    %41 = arith.addi %arg1, %c1_i32 : i32
    %42 = vector.extract_strided_slice %36 {offsets = [0, 0], sizes = [8, 64], strides = [1, 1]} : vector<8x384xbf16> to vector<8x64xbf16>
    %cst_13 = arith.constant -1.000000e+30 : f32
    %43 = vector.broadcast %cst_13 : f32 to vector<8x1xf32>
    %cst_14 = arith.constant 0.000000e+00 : f32
    %44 = vector.broadcast %cst_14 : f32 to vector<8x1xf32>
    %cst_15 = arith.constant 0.000000e+00 : f32
    %45 = vector.broadcast %cst_15 : f32 to vector<8x64xf32>
    %c0_i32_16 = arith.constant 0 : i32
    %46 = arith.subi %41, %c0_i32_16 : i32
    %47 = arith.addi %c0_i32_16, %46 : i32
    %c1_i32_17 = arith.constant 1 : i32
    %48:3 = scf.for %arg18 = %c0_i32_16 to %47 step %c1_i32_17 iter_args(%arg19 = %43, %arg20 = %44, %arg21 = %45) -> (vector<8x1xf32>, vector<8x1xf32>, vector<8x64xf32>)  : i32 {
      %c8_i32_80 = arith.constant 8 : i32
      %163 = arith.muli %arg18, %c8_i32_80 : i32
      %164 = tpu.assume_multiple %163, 8 : i32
      %165 = arith.index_cast %164 : i32 to index
      %c0_81 = arith.constant 0 : index
      %166 = vector.load %arg16[%165, %c0_81] : memref<8x768xbf16, #tpu.memory_space<vmem>>, vector<8x64xbf16>
      %167 = arith.index_cast %164 : i32 to index
      %c384 = arith.constant 384 : index
      %168 = vector.load %arg16[%167, %c384] : memref<8x768xbf16, #tpu.memory_space<vmem>>, vector<8x64xbf16>
      %cst_82 = arith.constant dense<0.000000e+00> : vector<8x8xf32>
      %169 = tpu.matmul %42, %166, %cst_82 {dimension_numbers = #tpu.dot_dimension_numbers<[1], [1], [0], [0], [0, 0, 1, 0], [], []>} : vector<8x64xbf16>, vector<8x64xbf16>, vector<8x8xf32> -> vector<8x8xf32>
      %170 = vector.broadcast %164 : i32 to vector<8x8xi32>
      %171 = arith.addi %170, %40 : vector<8x8xi32>
      %172 = arith.cmpi sge, %39, %171 : vector<8x8xi32>
      %cst_83 = arith.constant -1.000000e+30 : f32
      %173 = vector.broadcast %cst_83 : f32 to vector<8x8xf32>
      %174 = arith.select %172, %169, %173 : vector<8x8xi1>, vector<8x8xf32>
      %cst_84 = arith.constant dense<0xFF800000> : vector<8xf32>
      %175 = vector.multi_reduction <maximumf>, %174, %cst_84 [1] : vector<8x8xf32> to vector<8xf32>
      %176 = vector.shape_cast %175 : vector<8xf32> to vector<8x1xf32>
      %177 = arith.maximumf %arg19, %176 : vector<8x1xf32>
      %178 = arith.subf %arg19, %177 : vector<8x1xf32>
      %179 = math.exp %178 : vector<8x1xf32>
      %180 = vector.broadcast %177 : vector<8x1xf32> to vector<8x8xf32>
      %181 = arith.subf %174, %180 : vector<8x8xf32>
      %182 = math.exp %181 : vector<8x8xf32>
      %183 = arith.mulf %179, %arg20 : vector<8x1xf32>
      %cst_85 = arith.constant dense<0.000000e+00> : vector<8xf32>
      %184 = vector.multi_reduction <add>, %182, %cst_85 [1] : vector<8x8xf32> to vector<8xf32>
      %185 = vector.shape_cast %184 : vector<8xf32> to vector<8x1xf32>
      %186 = arith.addf %183, %185 : vector<8x1xf32>
      %187 = vector.broadcast %179 : vector<8x1xf32> to vector<8x64xf32>
      %188 = arith.mulf %187, %arg21 : vector<8x64xf32>
      %189 = arith.truncf %182 : vector<8x8xf32> to vector<8x8xbf16>
      %cst_86 = arith.constant dense<0.000000e+00> : vector<8x64xf32>
      %190 = tpu.matmul %189, %168, %cst_86 {dimension_numbers = #tpu.dot_dimension_numbers<[1], [0], [0], [1], [0, 0, 1, 1], [], []>} : vector<8x8xbf16>, vector<8x64xbf16>, vector<8x64xf32> -> vector<8x64xf32>
      %191 = arith.addf %188, %190 : vector<8x64xf32>
      scf.yield %177, %186, %191 : vector<8x1xf32>, vector<8x1xf32>, vector<8x64xf32>
    }
    %49 = tpu.reciprocal %48#1 {approx = true} : vector<8x1xf32> -> vector<8x1xf32>
    %50 = vector.broadcast %49 : vector<8x1xf32> to vector<8x64xf32>
    %51 = arith.mulf %48#2, %50 : vector<8x64xf32>
    %52 = arith.truncf %51 : vector<8x64xf32> to vector<8x64xbf16>
    %c0_18 = arith.constant 0 : index
    %c0_19 = arith.constant 0 : index
    %53 = vector.load %arg17[%c0_18, %c0_19] : memref<8x384xbf16, #tpu.memory_space<vmem>>, vector<8x64xbf16>
    tpu.vector_store %arg17[%c0_18, %c0_19], %52 {strides = array<i32>} : memref<8x384xbf16, #tpu.memory_space<vmem>>, vector<8x64xbf16>,
    %54 = vector.extract_strided_slice %36 {offsets = [0, 64], sizes = [8, 64], strides = [1, 1]} : vector<8x384xbf16> to vector<8x64xbf16>
    %cst_20 = arith.constant -1.000000e+30 : f32
    %55 = vector.broadcast %cst_20 : f32 to vector<8x1xf32>
    %cst_21 = arith.constant 0.000000e+00 : f32
    %56 = vector.broadcast %cst_21 : f32 to vector<8x1xf32>
    %cst_22 = arith.constant 0.000000e+00 : f32
    %57 = vector.broadcast %cst_22 : f32 to vector<8x64xf32>
    %c0_i32_23 = arith.constant 0 : i32
    %58 = arith.subi %41, %c0_i32_23 : i32
    %59 = arith.addi %c0_i32_23, %58 : i32
    %c1_i32_24 = arith.constant 1 : i32
    %60:3 = scf.for %arg18 = %c0_i32_23 to %59 step %c1_i32_24 iter_args(%arg19 = %55, %arg20 = %56, %arg21 = %57) -> (vector<8x1xf32>, vector<8x1xf32>, vector<8x64xf32>)  : i32 {
      %c8_i32_80 = arith.constant 8 : i32
      %163 = arith.muli %arg18, %c8_i32_80 : i32
      %164 = tpu.assume_multiple %163, 8 : i32
      %165 = arith.index_cast %164 : i32 to index
      %c64_81 = arith.constant 64 : index
      %166 = vector.load %arg16[%165, %c64_81] : memref<8x768xbf16, #tpu.memory_space<vmem>>, vector<8x64xbf16>
      %167 = arith.index_cast %164 : i32 to index
      %c448 = arith.constant 448 : index
      %168 = vector.load %arg16[%167, %c448] : memref<8x768xbf16, #tpu.memory_space<vmem>>, vector<8x64xbf16>
      %cst_82 = arith.constant dense<0.000000e+00> : vector<8x8xf32>
      %169 = tpu.matmul %54, %166, %cst_82 {dimension_numbers = #tpu.dot_dimension_numbers<[1], [1], [0], [0], [0, 0, 1, 0], [], []>} : vector<8x64xbf16>, vector<8x64xbf16>, vector<8x8xf32> -> vector<8x8xf32>
      %170 = vector.broadcast %164 : i32 to vector<8x8xi32>
      %171 = arith.addi %170, %40 : vector<8x8xi32>
      %172 = arith.cmpi sge, %39, %171 : vector<8x8xi32>
      %cst_83 = arith.constant -1.000000e+30 : f32
      %173 = vector.broadcast %cst_83 : f32 to vector<8x8xf32>
      %174 = arith.select %172, %169, %173 : vector<8x8xi1>, vector<8x8xf32>
      %cst_84 = arith.constant dense<0xFF800000> : vector<8xf32>
      %175 = vector.multi_reduction <maximumf>, %174, %cst_84 [1] : vector<8x8xf32> to vector<8xf32>
      %176 = vector.shape_cast %175 : vector<8xf32> to vector<8x1xf32>
      %177 = arith.maximumf %arg19, %176 : vector<8x1xf32>
      %178 = arith.subf %arg19, %177 : vector<8x1xf32>
      %179 = math.exp %178 : vector<8x1xf32>
      %180 = vector.broadcast %177 : vector<8x1xf32> to vector<8x8xf32>
      %181 = arith.subf %174, %180 : vector<8x8xf32>
      %182 = math.exp %181 : vector<8x8xf32>
      %183 = arith.mulf %179, %arg20 : vector<8x1xf32>
      %cst_85 = arith.constant dense<0.000000e+00> : vector<8xf32>
      %184 = vector.multi_reduction <add>, %182, %cst_85 [1] : vector<8x8xf32> to vector<8xf32>
      %185 = vector.shape_cast %184 : vector<8xf32> to vector<8x1xf32>
      %186 = arith.addf %183, %185 : vector<8x1xf32>
      %187 = vector.broadcast %179 : vector<8x1xf32> to vector<8x64xf32>
      %188 = arith.mulf %187, %arg21 : vector<8x64xf32>
      %189 = arith.truncf %182 : vector<8x8xf32> to vector<8x8xbf16>
      %cst_86 = arith.constant dense<0.000000e+00> : vector<8x64xf32>
      %190 = tpu.matmul %189, %168, %cst_86 {dimension_numbers = #tpu.dot_dimension_numbers<[1], [0], [0], [1], [0, 0, 1, 1], [], []>} : vector<8x8xbf16>, vector<8x64xbf16>, vector<8x64xf32> -> vector<8x64xf32>
      %191 = arith.addf %188, %190 : vector<8x64xf32>
      scf.yield %177, %186, %191 : vector<8x1xf32>, vector<8x1xf32>, vector<8x64xf32>
    }
    %61 = tpu.reciprocal %60#1 {approx = true} : vector<8x1xf32> -> vector<8x1xf32>
    %62 = vector.broadcast %61 : vector<8x1xf32> to vector<8x64xf32>
    %63 = arith.mulf %60#2, %62 : vector<8x64xf32>
    %64 = arith.truncf %63 : vector<8x64xf32> to vector<8x64xbf16>
    %c0_25 = arith.constant 0 : index
    %c64 = arith.constant 64 : index
    %65 = vector.load %arg17[%c0_25, %c64] : memref<8x384xbf16, #tpu.memory_space<vmem>>, vector<8x64xbf16>
    tpu.vector_store %arg17[%c0_25, %c64], %64 {strides = array<i32>} : memref<8x384xbf16, #tpu.memory_space<vmem>>, vector<8x64xbf16>,
    %66 = vector.extract_strided_slice %36 {offsets = [0, 128], sizes = [8, 64], strides = [1, 1]} : vector<8x384xbf16> to vector<8x64xbf16>
    %cst_26 = arith.constant -1.000000e+30 : f32
    %67 = vector.broadcast %cst_26 : f32 to vector<8x1xf32>
    %cst_27 = arith.constant 0.000000e+00 : f32
    %68 = vector.broadcast %cst_27 : f32 to vector<8x1xf32>
    %cst_28 = arith.constant 0.000000e+00 : f32
    %69 = vector.broadcast %cst_28 : f32 to vector<8x64xf32>
    %c0_i32_29 = arith.constant 0 : i32
    %70 = arith.subi %41, %c0_i32_29 : i32
    %71 = arith.addi %c0_i32_29, %70 : i32
    %c1_i32_30 = arith.constant 1 : i32
    %72:3 = scf.for %arg18 = %c0_i32_29 to %71 step %c1_i32_30 iter_args(%arg19 = %67, %arg20 = %68, %arg21 = %69) -> (vector<8x1xf32>, vector<8x1xf32>, vector<8x64xf32>)  : i32 {
      %c8_i32_80 = arith.constant 8 : i32
      %163 = arith.muli %arg18, %c8_i32_80 : i32
      %164 = tpu.assume_multiple %163, 8 : i32
      %165 = arith.index_cast %164 : i32 to index
      %c128_81 = arith.constant 128 : index
      %166 = vector.load %arg16[%165, %c128_81] : memref<8x768xbf16, #tpu.memory_space<vmem>>, vector<8x64xbf16>
      %167 = arith.index_cast %164 : i32 to index
      %c512 = arith.constant 512 : index
      %168 = vector.load %arg16[%167, %c512] : memref<8x768xbf16, #tpu.memory_space<vmem>>, vector<8x64xbf16>
      %cst_82 = arith.constant dense<0.000000e+00> : vector<8x8xf32>
      %169 = tpu.matmul %66, %166, %cst_82 {dimension_numbers = #tpu.dot_dimension_numbers<[1], [1], [0], [0], [0, 0, 1, 0], [], []>} : vector<8x64xbf16>, vector<8x64xbf16>, vector<8x8xf32> -> vector<8x8xf32>
      %170 = vector.broadcast %164 : i32 to vector<8x8xi32>
      %171 = arith.addi %170, %40 : vector<8x8xi32>
      %172 = arith.cmpi sge, %39, %171 : vector<8x8xi32>
      %cst_83 = arith.constant -1.000000e+30 : f32
      %173 = vector.broadcast %cst_83 : f32 to vector<8x8xf32>
      %174 = arith.select %172, %169, %173 : vector<8x8xi1>, vector<8x8xf32>
      %cst_84 = arith.constant dense<0xFF800000> : vector<8xf32>
      %175 = vector.multi_reduction <maximumf>, %174, %cst_84 [1] : vector<8x8xf32> to vector<8xf32>
      %176 = vector.shape_cast %175 : vector<8xf32> to vector<8x1xf32>
      %177 = arith.maximumf %arg19, %176 : vector<8x1xf32>
      %178 = arith.subf %arg19, %177 : vector<8x1xf32>
      %179 = math.exp %178 : vector<8x1xf32>
      %180 = vector.broadcast %177 : vector<8x1xf32> to vector<8x8xf32>
      %181 = arith.subf %174, %180 : vector<8x8xf32>
      %182 = math.exp %181 : vector<8x8xf32>
      %183 = arith.mulf %179, %arg20 : vector<8x1xf32>
      %cst_85 = arith.constant dense<0.000000e+00> : vector<8xf32>
      %184 = vector.multi_reduction <add>, %182, %cst_85 [1] : vector<8x8xf32> to vector<8xf32>
      %185 = vector.shape_cast %184 : vector<8xf32> to vector<8x1xf32>
      %186 = arith.addf %183, %185 : vector<8x1xf32>
      %187 = vector.broadcast %179 : vector<8x1xf32> to vector<8x64xf32>
      %188 = arith.mulf %187, %arg21 : vector<8x64xf32>
      %189 = arith.truncf %182 : vector<8x8xf32> to vector<8x8xbf16>
      %cst_86 = arith.constant dense<0.000000e+00> : vector<8x64xf32>
      %190 = tpu.matmul %189, %168, %cst_86 {dimension_numbers = #tpu.dot_dimension_numbers<[1], [0], [0], [1], [0, 0, 1, 1], [], []>} : vector<8x8xbf16>, vector<8x64xbf16>, vector<8x64xf32> -> vector<8x64xf32>
      %191 = arith.addf %188, %190 : vector<8x64xf32>
      scf.yield %177, %186, %191 : vector<8x1xf32>, vector<8x1xf32>, vector<8x64xf32>
    }
    %73 = tpu.reciprocal %72#1 {approx = true} : vector<8x1xf32> -> vector<8x1xf32>
    %74 = vector.broadcast %73 : vector<8x1xf32> to vector<8x64xf32>
    %75 = arith.mulf %72#2, %74 : vector<8x64xf32>
    %76 = arith.truncf %75 : vector<8x64xf32> to vector<8x64xbf16>
    %c0_31 = arith.constant 0 : index
    %c128 = arith.constant 128 : index
    %77 = vector.load %arg17[%c0_31, %c128] : memref<8x384xbf16, #tpu.memory_space<vmem>>, vector<8x64xbf16>
    tpu.vector_store %arg17[%c0_31, %c128], %76 {strides = array<i32>} : memref<8x384xbf16, #tpu.memory_space<vmem>>, vector<8x64xbf16>,
    %78 = vector.extract_strided_slice %36 {offsets = [0, 192], sizes = [8, 64], strides = [1, 1]} : vector<8x384xbf16> to vector<8x64xbf16>
    %cst_32 = arith.constant -1.000000e+30 : f32
    %79 = vector.broadcast %cst_32 : f32 to vector<8x1xf32>
    %cst_33 = arith.constant 0.000000e+00 : f32
    %80 = vector.broadcast %cst_33 : f32 to vector<8x1xf32>
    %cst_34 = arith.constant 0.000000e+00 : f32
    %81 = vector.broadcast %cst_34 : f32 to vector<8x64xf32>
    %c0_i32_35 = arith.constant 0 : i32
    %82 = arith.subi %41, %c0_i32_35 : i32
    %83 = arith.addi %c0_i32_35, %82 : i32
    %c1_i32_36 = arith.constant 1 : i32
    %84:3 = scf.for %arg18 = %c0_i32_35 to %83 step %c1_i32_36 iter_args(%arg19 = %79, %arg20 = %80, %arg21 = %81) -> (vector<8x1xf32>, vector<8x1xf32>, vector<8x64xf32>)  : i32 {
      %c8_i32_80 = arith.constant 8 : i32
      %163 = arith.muli %arg18, %c8_i32_80 : i32
      %164 = tpu.assume_multiple %163, 8 : i32
      %165 = arith.index_cast %164 : i32 to index
      %c192_81 = arith.constant 192 : index
      %166 = vector.load %arg16[%165, %c192_81] : memref<8x768xbf16, #tpu.memory_space<vmem>>, vector<8x64xbf16>
      %167 = arith.index_cast %164 : i32 to index
      %c576 = arith.constant 576 : index
      %168 = vector.load %arg16[%167, %c576] : memref<8x768xbf16, #tpu.memory_space<vmem>>, vector<8x64xbf16>
      %cst_82 = arith.constant dense<0.000000e+00> : vector<8x8xf32>
      %169 = tpu.matmul %78, %166, %cst_82 {dimension_numbers = #tpu.dot_dimension_numbers<[1], [1], [0], [0], [0, 0, 1, 0], [], []>} : vector<8x64xbf16>, vector<8x64xbf16>, vector<8x8xf32> -> vector<8x8xf32>
      %170 = vector.broadcast %164 : i32 to vector<8x8xi32>
      %171 = arith.addi %170, %40 : vector<8x8xi32>
      %172 = arith.cmpi sge, %39, %171 : vector<8x8xi32>
      %cst_83 = arith.constant -1.000000e+30 : f32
      %173 = vector.broadcast %cst_83 : f32 to vector<8x8xf32>
      %174 = arith.select %172, %169, %173 : vector<8x8xi1>, vector<8x8xf32>
      %cst_84 = arith.constant dense<0xFF800000> : vector<8xf32>
      %175 = vector.multi_reduction <maximumf>, %174, %cst_84 [1] : vector<8x8xf32> to vector<8xf32>
      %176 = vector.shape_cast %175 : vector<8xf32> to vector<8x1xf32>
      %177 = arith.maximumf %arg19, %176 : vector<8x1xf32>
      %178 = arith.subf %arg19, %177 : vector<8x1xf32>
      %179 = math.exp %178 : vector<8x1xf32>
      %180 = vector.broadcast %177 : vector<8x1xf32> to vector<8x8xf32>
      %181 = arith.subf %174, %180 : vector<8x8xf32>
      %182 = math.exp %181 : vector<8x8xf32>
      %183 = arith.mulf %179, %arg20 : vector<8x1xf32>
      %cst_85 = arith.constant dense<0.000000e+00> : vector<8xf32>
      %184 = vector.multi_reduction <add>, %182, %cst_85 [1] : vector<8x8xf32> to vector<8xf32>
      %185 = vector.shape_cast %184 : vector<8xf32> to vector<8x1xf32>
      %186 = arith.addf %183, %185 : vector<8x1xf32>
      %187 = vector.broadcast %179 : vector<8x1xf32> to vector<8x64xf32>
      %188 = arith.mulf %187, %arg21 : vector<8x64xf32>
      %189 = arith.truncf %182 : vector<8x8xf32> to vector<8x8xbf16>
      %cst_86 = arith.constant dense<0.000000e+00> : vector<8x64xf32>
      %190 = tpu.matmul %189, %168, %cst_86 {dimension_numbers = #tpu.dot_dimension_numbers<[1], [0], [0], [1], [0, 0, 1, 1], [], []>} : vector<8x8xbf16>, vector<8x64xbf16>, vector<8x64xf32> -> vector<8x64xf32>
      %191 = arith.addf %188, %190 : vector<8x64xf32>
      scf.yield %177, %186, %191 : vector<8x1xf32>, vector<8x1xf32>, vector<8x64xf32>
    }
    %85 = tpu.reciprocal %84#1 {approx = true} : vector<8x1xf32> -> vector<8x1xf32>
    %86 = vector.broadcast %85 : vector<8x1xf32> to vector<8x64xf32>
    %87 = arith.mulf %84#2, %86 : vector<8x64xf32>
    %88 = arith.truncf %87 : vector<8x64xf32> to vector<8x64xbf16>
    %c0_37 = arith.constant 0 : index
    %c192 = arith.constant 192 : index
    %89 = vector.load %arg17[%c0_37, %c192] : memref<8x384xbf16, #tpu.memory_space<vmem>>, vector<8x64xbf16>
    tpu.vector_store %arg17[%c0_37, %c192], %88 {strides = array<i32>} : memref<8x384xbf16, #tpu.memory_space<vmem>>, vector<8x64xbf16>,
    %90 = vector.extract_strided_slice %36 {offsets = [0, 256], sizes = [8, 64], strides = [1, 1]} : vector<8x384xbf16> to vector<8x64xbf16>
    %cst_38 = arith.constant -1.000000e+30 : f32
    %91 = vector.broadcast %cst_38 : f32 to vector<8x1xf32>
    %cst_39 = arith.constant 0.000000e+00 : f32
    %92 = vector.broadcast %cst_39 : f32 to vector<8x1xf32>
    %cst_40 = arith.constant 0.000000e+00 : f32
    %93 = vector.broadcast %cst_40 : f32 to vector<8x64xf32>
    %c0_i32_41 = arith.constant 0 : i32
    %94 = arith.subi %41, %c0_i32_41 : i32
    %95 = arith.addi %c0_i32_41, %94 : i32
    %c1_i32_42 = arith.constant 1 : i32
    %96:3 = scf.for %arg18 = %c0_i32_41 to %95 step %c1_i32_42 iter_args(%arg19 = %91, %arg20 = %92, %arg21 = %93) -> (vector<8x1xf32>, vector<8x1xf32>, vector<8x64xf32>)  : i32 {
      %c8_i32_80 = arith.constant 8 : i32
      %163 = arith.muli %arg18, %c8_i32_80 : i32
      %164 = tpu.assume_multiple %163, 8 : i32
      %165 = arith.index_cast %164 : i32 to index
      %c256_81 = arith.constant 256 : index
      %166 = vector.load %arg16[%165, %c256_81] : memref<8x768xbf16, #tpu.memory_space<vmem>>, vector<8x64xbf16>
      %167 = arith.index_cast %164 : i32 to index
      %c640 = arith.constant 640 : index
      %168 = vector.load %arg16[%167, %c640] : memref<8x768xbf16, #tpu.memory_space<vmem>>, vector<8x64xbf16>
      %cst_82 = arith.constant dense<0.000000e+00> : vector<8x8xf32>
      %169 = tpu.matmul %90, %166, %cst_82 {dimension_numbers = #tpu.dot_dimension_numbers<[1], [1], [0], [0], [0, 0, 1, 0], [], []>} : vector<8x64xbf16>, vector<8x64xbf16>, vector<8x8xf32> -> vector<8x8xf32>
      %170 = vector.broadcast %164 : i32 to vector<8x8xi32>
      %171 = arith.addi %170, %40 : vector<8x8xi32>
      %172 = arith.cmpi sge, %39, %171 : vector<8x8xi32>
      %cst_83 = arith.constant -1.000000e+30 : f32
      %173 = vector.broadcast %cst_83 : f32 to vector<8x8xf32>
      %174 = arith.select %172, %169, %173 : vector<8x8xi1>, vector<8x8xf32>
      %cst_84 = arith.constant dense<0xFF800000> : vector<8xf32>
      %175 = vector.multi_reduction <maximumf>, %174, %cst_84 [1] : vector<8x8xf32> to vector<8xf32>
      %176 = vector.shape_cast %175 : vector<8xf32> to vector<8x1xf32>
      %177 = arith.maximumf %arg19, %176 : vector<8x1xf32>
      %178 = arith.subf %arg19, %177 : vector<8x1xf32>
      %179 = math.exp %178 : vector<8x1xf32>
      %180 = vector.broadcast %177 : vector<8x1xf32> to vector<8x8xf32>
      %181 = arith.subf %174, %180 : vector<8x8xf32>
      %182 = math.exp %181 : vector<8x8xf32>
      %183 = arith.mulf %179, %arg20 : vector<8x1xf32>
      %cst_85 = arith.constant dense<0.000000e+00> : vector<8xf32>
      %184 = vector.multi_reduction <add>, %182, %cst_85 [1] : vector<8x8xf32> to vector<8xf32>
      %185 = vector.shape_cast %184 : vector<8xf32> to vector<8x1xf32>
      %186 = arith.addf %183, %185 : vector<8x1xf32>
      %187 = vector.broadcast %179 : vector<8x1xf32> to vector<8x64xf32>
      %188 = arith.mulf %187, %arg21 : vector<8x64xf32>
      %189 = arith.truncf %182 : vector<8x8xf32> to vector<8x8xbf16>
      %cst_86 = arith.constant dense<0.000000e+00> : vector<8x64xf32>
      %190 = tpu.matmul %189, %168, %cst_86 {dimension_numbers = #tpu.dot_dimension_numbers<[1], [0], [0], [1], [0, 0, 1, 1], [], []>} : vector<8x8xbf16>, vector<8x64xbf16>, vector<8x64xf32> -> vector<8x64xf32>
      %191 = arith.addf %188, %190 : vector<8x64xf32>
      scf.yield %177, %186, %191 : vector<8x1xf32>, vector<8x1xf32>, vector<8x64xf32>
    }
    %97 = tpu.reciprocal %96#1 {approx = true} : vector<8x1xf32> -> vector<8x1xf32>
    %98 = vector.broadcast %97 : vector<8x1xf32> to vector<8x64xf32>
    %99 = arith.mulf %96#2, %98 : vector<8x64xf32>
    %100 = arith.truncf %99 : vector<8x64xf32> to vector<8x64xbf16>
    %c0_43 = arith.constant 0 : index
    %c256 = arith.constant 256 : index
    %101 = vector.load %arg17[%c0_43, %c256] : memref<8x384xbf16, #tpu.memory_space<vmem>>, vector<8x64xbf16>
    tpu.vector_store %arg17[%c0_43, %c256], %100 {strides = array<i32>} : memref<8x384xbf16, #tpu.memory_space<vmem>>, vector<8x64xbf16>,
    %102 = vector.extract_strided_slice %36 {offsets = [0, 320], sizes = [8, 64], strides = [1, 1]} : vector<8x384xbf16> to vector<8x64xbf16>
    %cst_44 = arith.constant -1.000000e+30 : f32
    %103 = vector.broadcast %cst_44 : f32 to vector<8x1xf32>
    %cst_45 = arith.constant 0.000000e+00 : f32
    %104 = vector.broadcast %cst_45 : f32 to vector<8x1xf32>
    %cst_46 = arith.constant 0.000000e+00 : f32
    %105 = vector.broadcast %cst_46 : f32 to vector<8x64xf32>
    %c0_i32_47 = arith.constant 0 : i32
    %106 = arith.subi %41, %c0_i32_47 : i32
    %107 = arith.addi %c0_i32_47, %106 : i32
    %c1_i32_48 = arith.constant 1 : i32
    %108:3 = scf.for %arg18 = %c0_i32_47 to %107 step %c1_i32_48 iter_args(%arg19 = %103, %arg20 = %104, %arg21 = %105) -> (vector<8x1xf32>, vector<8x1xf32>, vector<8x64xf32>)  : i32 {
      %c8_i32_80 = arith.constant 8 : i32
      %163 = arith.muli %arg18, %c8_i32_80 : i32
      %164 = tpu.assume_multiple %163, 8 : i32
      %165 = arith.index_cast %164 : i32 to index
      %c320_81 = arith.constant 320 : index
      %166 = vector.load %arg16[%165, %c320_81] : memref<8x768xbf16, #tpu.memory_space<vmem>>, vector<8x64xbf16>
      %167 = arith.index_cast %164 : i32 to index
      %c704 = arith.constant 704 : index
      %168 = vector.load %arg16[%167, %c704] : memref<8x768xbf16, #tpu.memory_space<vmem>>, vector<8x64xbf16>
      %cst_82 = arith.constant dense<0.000000e+00> : vector<8x8xf32>
      %169 = tpu.matmul %102, %166, %cst_82 {dimension_numbers = #tpu.dot_dimension_numbers<[1], [1], [0], [0], [0, 0, 1, 0], [], []>} : vector<8x64xbf16>, vector<8x64xbf16>, vector<8x8xf32> -> vector<8x8xf32>
      %170 = vector.broadcast %164 : i32 to vector<8x8xi32>
      %171 = arith.addi %170, %40 : vector<8x8xi32>
      %172 = arith.cmpi sge, %39, %171 : vector<8x8xi32>
      %cst_83 = arith.constant -1.000000e+30 : f32
      %173 = vector.broadcast %cst_83 : f32 to vector<8x8xf32>
      %174 = arith.select %172, %169, %173 : vector<8x8xi1>, vector<8x8xf32>
      %cst_84 = arith.constant dense<0xFF800000> : vector<8xf32>
      %175 = vector.multi_reduction <maximumf>, %174, %cst_84 [1] : vector<8x8xf32> to vector<8xf32>
      %176 = vector.shape_cast %175 : vector<8xf32> to vector<8x1xf32>
      %177 = arith.maximumf %arg19, %176 : vector<8x1xf32>
      %178 = arith.subf %arg19, %177 : vector<8x1xf32>
      %179 = math.exp %178 : vector<8x1xf32>
      %180 = vector.broadcast %177 : vector<8x1xf32> to vector<8x8xf32>
      %181 = arith.subf %174, %180 : vector<8x8xf32>
      %182 = math.exp %181 : vector<8x8xf32>
      %183 = arith.mulf %179, %arg20 : vector<8x1xf32>
      %cst_85 = arith.constant dense<0.000000e+00> : vector<8xf32>
      %184 = vector.multi_reduction <add>, %182, %cst_85 [1] : vector<8x8xf32> to vector<8xf32>
      %185 = vector.shape_cast %184 : vector<8xf32> to vector<8x1xf32>
      %186 = arith.addf %183, %185 : vector<8x1xf32>
      %187 = vector.broadcast %179 : vector<8x1xf32> to vector<8x64xf32>
      %188 = arith.mulf %187, %arg21 : vector<8x64xf32>
      %189 = arith.truncf %182 : vector<8x8xf32> to vector<8x8xbf16>
      %cst_86 = arith.constant dense<0.000000e+00> : vector<8x64xf32>
      %190 = tpu.matmul %189, %168, %cst_86 {dimension_numbers = #tpu.dot_dimension_numbers<[1], [0], [0], [1], [0, 0, 1, 1], [], []>} : vector<8x8xbf16>, vector<8x64xbf16>, vector<8x64xf32> -> vector<8x64xf32>
      %191 = arith.addf %188, %190 : vector<8x64xf32>
      scf.yield %177, %186, %191 : vector<8x1xf32>, vector<8x1xf32>, vector<8x64xf32>
    }
    %109 = tpu.reciprocal %108#1 {approx = true} : vector<8x1xf32> -> vector<8x1xf32>
    %110 = vector.broadcast %109 : vector<8x1xf32> to vector<8x64xf32>
    %111 = arith.mulf %108#2, %110 : vector<8x64xf32>
    %112 = arith.truncf %111 : vector<8x64xf32> to vector<8x64xbf16>
    %c0_49 = arith.constant 0 : index
    %c320 = arith.constant 320 : index
    %113 = vector.load %arg17[%c0_49, %c320] : memref<8x384xbf16, #tpu.memory_space<vmem>>, vector<8x64xbf16>
    tpu.vector_store %arg17[%c0_49, %c320], %112 {strides = array<i32>} : memref<8x384xbf16, #tpu.memory_space<vmem>>, vector<8x64xbf16>,
    %c0_50 = arith.constant 0 : index
    %c0_51 = arith.constant 0 : index
    %114 = vector.load %arg17[%c0_50, %c0_51] : memref<8x384xbf16, #tpu.memory_space<vmem>>, vector<8x384xbf16>
    %c0_52 = arith.constant 0 : index
    %c0_53 = arith.constant 0 : index
    %115 = vector.load %arg7[%c0_52, %c0_53] : memref<384x384xbf16, #tpu.memory_space<vmem>>, vector<384x384xbf16>
    %cst_54 = arith.constant dense<0.000000e+00> : vector<8x384xf32>
    %116 = tpu.matmul %114, %115, %cst_54 {dimension_numbers = #tpu.dot_dimension_numbers<[1], [0], [0], [1], [0, 0, 1, 1], [], []>} : vector<8x384xbf16>, vector<384x384xbf16>, vector<8x384xf32> -> vector<8x384xf32>
    %c0_55 = arith.constant 0 : index
    %c0_56 = arith.constant 0 : index
    %117 = vector.load %arg8[%c0_55, %c0_56] : memref<1x384xf32, #tpu.memory_space<vmem>>, vector<1x384xf32>
    %118 = vector.broadcast %117 : vector<1x384xf32> to vector<8x384xf32>
    %119 = arith.addf %116, %118 : vector<8x384xf32>
    %120 = arith.addf %10, %119 : vector<8x384xf32>
    %c0_57 = arith.constant 0 : index
    %c0_58 = arith.constant 0 : index
    %121 = vector.load %arg9[%c0_57, %c0_58] : memref<1x384xf32, #tpu.memory_space<vmem>>, vector<1x384xf32>
    %c0_59 = arith.constant 0 : index
    %c0_60 = arith.constant 0 : index
    %122 = vector.load %arg10[%c0_59, %c0_60] : memref<1x384xf32, #tpu.memory_space<vmem>>, vector<1x384xf32>
    %cst_61 = arith.constant dense<0.000000e+00> : vector<8xf32>
    %123 = vector.multi_reduction <add>, %120, %cst_61 [1] : vector<8x384xf32> to vector<8xf32>
    %124 = vector.shape_cast %123 : vector<8xf32> to vector<8x1xf32>
    %cst_62 = arith.constant 3.840000e+02 : f32
    %125 = vector.broadcast %cst_62 : f32 to vector<8x1xf32>
    %126 = arith.divf %124, %125 : vector<8x1xf32>
    %127 = vector.broadcast %126 : vector<8x1xf32> to vector<8x384xf32>
    %128 = arith.subf %120, %127 : vector<8x384xf32>
    %129 = arith.mulf %128, %128 : vector<8x384xf32>
    %cst_63 = arith.constant dense<0.000000e+00> : vector<8xf32>
    %130 = vector.multi_reduction <add>, %129, %cst_63 [1] : vector<8x384xf32> to vector<8xf32>
    %131 = vector.shape_cast %130 : vector<8xf32> to vector<8x1xf32>
    %cst_64 = arith.constant 3.840000e+02 : f32
    %132 = vector.broadcast %cst_64 : f32 to vector<8x1xf32>
    %133 = arith.divf %131, %132 : vector<8x1xf32>
    %134 = vector.broadcast %126 : vector<8x1xf32> to vector<8x384xf32>
    %135 = arith.subf %120, %134 : vector<8x384xf32>
    %cst_65 = arith.constant 9.99999974E-6 : f32
    %136 = vector.broadcast %cst_65 : f32 to vector<8x1xf32>
    %137 = arith.addf %133, %136 : vector<8x1xf32>
    %138 = math.rsqrt %137 : vector<8x1xf32>
    %139 = vector.broadcast %138 : vector<8x1xf32> to vector<8x384xf32>
    %140 = arith.mulf %135, %139 : vector<8x384xf32>
    %141 = vector.broadcast %121 : vector<1x384xf32> to vector<8x384xf32>
    %142 = arith.mulf %140, %141 : vector<8x384xf32>
    %143 = vector.broadcast %122 : vector<1x384xf32> to vector<8x384xf32>
    %144 = arith.addf %142, %143 : vector<8x384xf32>
    %145 = arith.truncf %144 : vector<8x384xf32> to vector<8x384xbf16>
    %c0_66 = arith.constant 0 : index
    %c0_67 = arith.constant 0 : index
    %146 = vector.load %arg11[%c0_66, %c0_67] : memref<384x1536xbf16, #tpu.memory_space<vmem>>, vector<384x1536xbf16>
    %cst_68 = arith.constant dense<0.000000e+00> : vector<8x1536xf32>
    %147 = tpu.matmul %145, %146, %cst_68 {dimension_numbers = #tpu.dot_dimension_numbers<[1], [0], [0], [1], [0, 0, 1, 1], [], []>} : vector<8x384xbf16>, vector<384x1536xbf16>, vector<8x1536xf32> -> vector<8x1536xf32>
    %c0_69 = arith.constant 0 : index
    %c0_70 = arith.constant 0 : index
    %148 = vector.load %arg12[%c0_69, %c0_70] : memref<1x1536xf32, #tpu.memory_space<vmem>>, vector<1x1536xf32>
    %149 = vector.broadcast %148 : vector<1x1536xf32> to vector<8x1536xf32>
    %150 = arith.addf %147, %149 : vector<8x1536xf32>
    %cst_71 = arith.constant 0.000000e+00 : f32
    %151 = vector.broadcast %cst_71 : f32 to vector<8x1536xf32>
    %152 = arith.maximumf %150, %151 : vector<8x1536xf32>
    %153 = arith.truncf %152 : vector<8x1536xf32> to vector<8x1536xbf16>
    %c0_72 = arith.constant 0 : index
    %c0_73 = arith.constant 0 : index
    %154 = vector.load %arg13[%c0_72, %c0_73] : memref<1536x384xbf16, #tpu.memory_space<vmem>>, vector<1536x384xbf16>
    %cst_74 = arith.constant dense<0.000000e+00> : vector<8x384xf32>
    %155 = tpu.matmul %153, %154, %cst_74 {dimension_numbers = #tpu.dot_dimension_numbers<[1], [0], [0], [1], [0, 0, 1, 1], [], []>} : vector<8x1536xbf16>, vector<1536x384xbf16>, vector<8x384xf32> -> vector<8x384xf32>
    %c0_75 = arith.constant 0 : index
    %c0_76 = arith.constant 0 : index
    %156 = vector.load %arg14[%c0_75, %c0_76] : memref<1x384xf32, #tpu.memory_space<vmem>>, vector<1x384xf32>
    %157 = vector.broadcast %156 : vector<1x384xf32> to vector<8x384xf32>
    %158 = arith.addf %155, %157 : vector<8x384xf32>
    %159 = arith.addf %120, %158 : vector<8x384xf32>
    %c0_77 = arith.constant 0 : index
    %c0_78 = arith.constant 0 : index
    %c0_79 = arith.constant 0 : index
    %160 = vector.load %arg15[%c0_77, %c0_78, %c0_79] : memref<1x8x384xf32, #tpu.memory_space<vmem>>, vector<1x8x384xf32>
    %161 = vector.shape_cast %160 : vector<1x8x384xf32> to vector<8x384xf32>
    %162 = vector.shape_cast %159 : vector<8x384xf32> to vector<1x8x384xf32>
    tpu.vector_store %arg15[%c0_77, %c0_78, %c0_79], %162 {strides = array<i32>} : memref<1x8x384xf32, #tpu.memory_space<vmem>>, vector<1x8x384xf32>,
    return
  }
  func.func @transform_0(%arg0: i32, %arg1: i32) -> (i32, i32, i32) {
    %c0_i32 = arith.constant 0 : i32
    %c0_i32_0 = arith.constant 0 : i32
    %c0_i32_1 = arith.constant 0 : i32
    return %arg0, %c0_i32, %c0_i32_0 : i32, i32, i32
  }
  func.func @transform_1(%arg0: i32, %arg1: i32) -> (i32, i32) {
    %c0_i32 = arith.constant 0 : i32
    %c0_i32_0 = arith.constant 0 : i32
    %c0_i32_1 = arith.constant 0 : i32
    return %c0_i32, %c0_i32_0 : i32, i32
  }
  func.func @transform_2(%arg0: i32, %arg1: i32) -> (i32, i32) {
    %c0_i32 = arith.constant 0 : i32
    %c0_i32_0 = arith.constant 0 : i32
    %c0_i32_1 = arith.constant 0 : i32
    return %c0_i32, %c0_i32_0 : i32, i32
  }
  func.func @transform_3(%arg0: i32, %arg1: i32) -> (i32, i32) {
    %c0_i32 = arith.constant 0 : i32
    %c0_i32_0 = arith.constant 0 : i32
    %c0_i32_1 = arith.constant 0 : i32
    return %c0_i32, %c0_i32_0 : i32, i32
  }
  func.func @transform_4(%arg0: i32, %arg1: i32) -> (i32, i32) {
    %c0_i32 = arith.constant 0 : i32
    %c0_i32_0 = arith.constant 0 : i32
    %c0_i32_1 = arith.constant 0 : i32
    return %c0_i32, %c0_i32_0 : i32, i32
  }
  func.func @transform_5(%arg0: i32, %arg1: i32) -> (i32, i32) {
    %c0_i32 = arith.constant 0 : i32
    %c0_i32_0 = arith.constant 0 : i32
    %c0_i32_1 = arith.constant 0 : i32
    return %c0_i32, %c0_i32_0 : i32, i32
  }
  func.func @transform_6(%arg0: i32, %arg1: i32) -> (i32, i32) {
    %c0_i32 = arith.constant 0 : i32
    %c0_i32_0 = arith.constant 0 : i32
    %c0_i32_1 = arith.constant 0 : i32
    return %c0_i32, %c0_i32_0 : i32, i32
  }
  func.func @transform_7(%arg0: i32, %arg1: i32) -> (i32, i32) {
    %c0_i32 = arith.constant 0 : i32
    %c0_i32_0 = arith.constant 0 : i32
    %c0_i32_1 = arith.constant 0 : i32
    return %c0_i32, %c0_i32_0 : i32, i32
  }
  func.func @transform_8(%arg0: i32, %arg1: i32) -> (i32, i32) {
    %c0_i32 = arith.constant 0 : i32
    %c0_i32_0 = arith.constant 0 : i32
    %c0_i32_1 = arith.constant 0 : i32
    return %c0_i32, %c0_i32_0 : i32, i32
  }
  func.func @transform_9(%arg0: i32, %arg1: i32) -> (i32, i32) {
    %c0_i32 = arith.constant 0 : i32
    %c0_i32_0 = arith.constant 0 : i32
    %c0_i32_1 = arith.constant 0 : i32
    return %c0_i32, %c0_i32_0 : i32, i32
  }
  func.func @transform_10(%arg0: i32, %arg1: i32) -> (i32, i32) {
    %c0_i32 = arith.constant 0 : i32
    %c0_i32_0 = arith.constant 0 : i32
    %c0_i32_1 = arith.constant 0 : i32
    return %c0_i32, %c0_i32_0 : i32, i32
  }
  func.func @transform_11(%arg0: i32, %arg1: i32) -> (i32, i32) {
    %c0_i32 = arith.constant 0 : i32
    %c0_i32_0 = arith.constant 0 : i32
    %c0_i32_1 = arith.constant 0 : i32
    return %c0_i32, %c0_i32_0 : i32, i32
  }
  func.func @transform_12(%arg0: i32, %arg1: i32) -> (i32, i32) {
    %c0_i32 = arith.constant 0 : i32
    %c0_i32_0 = arith.constant 0 : i32
    %c0_i32_1 = arith.constant 0 : i32
    return %c0_i32, %c0_i32_0 : i32, i32
  }
  func.func @transform_13(%arg0: i32, %arg1: i32) -> (i32, i32, i32) {
    %c0_i32 = arith.constant 0 : i32
    %c0_i32_0 = arith.constant 0 : i32
    return %arg0, %arg1, %c0_i32 : i32, i32, i32
  }
}

</mosaic_0001>

<llo_original>
// kernel: tpu_custom_call.1
$region0: #{tpu_custom_call.1}
  #allocation0 [shape = 'u32[]', space=smem, size = 0x4, offset = 0x4, fixed_abs, tag = 'smem constant byte address 0x4 - core index']
  #allocation1 [shape = 'u32[144,128]{1,0:T(1,128)}', space=vmem, size = 0x12000, scoped, tag = 'internal scratch']
  #allocation2 [shape = 'bf16[8,768]{1,0:T(8,128)(2,1)}', space=vmem, size = 0x3000, scoped, tag = 'scratch operand']
  #allocation3 [shape = 'bf16[8,384]{1,0:T(8,128)(2,1)}', space=vmem, size = 0x1800, scoped, tag = 'scratch operand']
  %s0 = inlined_call_operand.hbm [shape: bf16[2,8,384], index: 0, kind: input, shape index: {}]
  %s1 = inlined_call_operand.hbm [shape: f32[1,384], index: 1, kind: input, shape index: {}]
  %s2 = inlined_call_operand.hbm [shape: f32[1,384], index: 2, kind: input, shape index: {}]
  %s3 = inlined_call_operand.hbm [shape: bf16[384,384], index: 3, kind: input, shape index: {}]
  %s4 = inlined_call_operand.hbm [shape: bf16[384,768], index: 4, kind: input, shape index: {}]
  %s5 = inlined_call_operand.hbm [shape: bf16[384,384], index: 5, kind: input, shape index: {}]
  %s6 = inlined_call_operand.hbm [shape: f32[1,384], index: 6, kind: input, shape index: {}]
  %s7 = inlined_call_operand.hbm [shape: f32[1,384], index: 7, kind: input, shape index: {}]
  %s8 = inlined_call_operand.hbm [shape: f32[1,384], index: 8, kind: input, shape index: {}]
  %s9 = inlined_call_operand.hbm [shape: bf16[384,1536], index: 9, kind: input, shape index: {}]
  %s10 = inlined_call_operand.hbm [shape: f32[1,1536], index: 10, kind: input, shape index: {}]
  %s11 = inlined_call_operand.hbm [shape: bf16[1536,384], index: 11, kind: input, shape index: {}]
  %s12 = inlined_call_operand.hbm [shape: f32[1,384], index: 12, kind: input, shape index: {}]
  %s13 = inlined_call_operand.hbm [shape: f32[2,8,384], index: 13, kind: output, shape index: {}]
  %s14 = sld [smem:[#allocation0]]
  $region183: #{tpu_custom_call.1} parent=0
    _
  %s16 = ssub.s32 1, %s14
  %s17 = scalar_select 0, %s16, %s14
  $region1: #{tpu_custom_call.1} parent=0
    #allocation4 [shape = 'u8[12288]{0}', space=vmem, size = 0x3000, scoped, tag = 'input window, operand 0']
    #allocation5 [shape = 's32[2]{0}', space=sflag, size = 0x8, scoped, tag = 'scoped memory for tpu_custom_call.1']
    #allocation6 [shape = 's32[2]{0}', space=sflag, size = 0x8, scoped, tag = 'scoped memory for tpu_custom_call.1']
    #allocation7 [shape = 'u8[1536]{0}', space=vmem, size = 0x800, scoped, tag = 'input window, operand 1, single buffered']
    #allocation8 [shape = 's32[1]{0}', space=sflag, size = 0x4, scoped, tag = 'scoped memory for tpu_custom_call.1']
    #allocation9 [shape = 'u8[1536]{0}', space=vmem, size = 0x800, scoped, tag = 'input window, operand 2, single buffered']
    #allocation10 [shape = 'u8[294912]{0}', space=vmem, size = 0x48000, scoped, tag = 'input window, operand 3, single buffered']
    #allocation11 [shape = 's32[1]{0}', space=sflag, size = 0x4, scoped, tag = 'scoped memory for tpu_custom_call.1']
    #allocation12 [shape = 'u8[589824]{0}', space=vmem, size = 0x90000, scoped, tag = 'input window, operand 4, single buffered']
    #allocation13 [shape = 'u8[294912]{0}', space=vmem, size = 0x48000, scoped, tag = 'input window, operand 5, single buffered']
    #allocation14 [shape = 's32[1]{0}', space=sflag, size = 0x4, scoped, tag = 'scoped memory for tpu_custom_call.1']
    #allocation15 [shape = 'u8[1536]{0}', space=vmem, size = 0x800, scoped, tag = 'input window, operand 6, single buffered']
    #allocation16 [shape = 'u8[1536]{0}', space=vmem, size = 0x800, scoped, tag = 'input window, operand 7, single buffered']
    #allocation17 [shape = 's32[1]{0}', space=sflag, size = 0x4, scoped, tag = 'scoped memory for tpu_custom_call.1']
    #allocation18 [shape = 'u8[1536]{0}', space=vmem, size = 0x800, scoped, tag = 'input window, operand 8, single buffered']
    #allocation19 [shape = 'u8[1179648]{0}', space=vmem, size = 0x120000, scoped, tag = 'input window, operand 9, single buffered']
    #allocation20 [shape = 's32[1]{0}', space=sflag, size = 0x4, scoped, tag = 'scoped memory for tpu_custom_call.1']
    #allocation21 [shape = 'u8[6144]{0}', space=vmem, size = 0x1800, scoped, tag = 'input window, operand 10, single buffered']
    #allocation22 [shape = 'u8[1179648]{0}', space=vmem, size = 0x120000, scoped, tag = 'input window, operand 11, single buffered']
    #allocation23 [shape = 's32[1]{0}', space=sflag, size = 0x4, scoped, tag = 'scoped memory for tpu_custom_call.1']
    #allocation24 [shape = 'u8[1536]{0}', space=vmem, size = 0x800, scoped, tag = 'input window, operand 12, single buffered']
    #allocation25 [shape = 'u8[24576]{0}', space=vmem, size = 0x6000, scoped, tag = 'output window, operand 0']
    %18 = vsyncpa [#allocation5], 0
    %s19 = scalar_lea.sflag [#allocation5], 1
    %20 = vsyncpa %s19, 0
    %21 = vsyncpa [#allocation8], 0
    %22 = vsyncpa [#allocation11], 0
    %23 = vsyncpa [#allocation14], 0
    %24 = vsyncpa [#allocation17], 0
    %25 = vsyncpa [#allocation20], 0
    %26 = vsyncpa [#allocation23], 0
    %27 = vsyncpa [#allocation6], 0
    %s28 = scalar_lea.sflag [#allocation6], 1
    %29 = vsyncpa %s28, 0
    loop: start=0, step=1, limit=4
    $region2: #{tpu_custom_call.1} parent=1 // loop_pre_header
      _
    $region3: #{tpu_custom_call.1} parent=1 // loop_header
      %s31 = sphi 0, %s35
      %p32 = scmp.ge.s32.totalorder %s31, 4
      %s38 = sphi 0, %s50
      %s39 = sphi 0, %s46
      %s40 = sphi 0, %s38
      %s41 = sphi 0, %s39
      %s42 = sphi 0, %s40
      %s43 = sphi 0, %s41
      %s53 = sphi 0, %s55
      %s56 = sphi 0, %s53
      %s57 = sphi 0, %s56
      %s73 = sphi 0, %s57
      %s77 = sphi 0, %s77
      %s79 = sphi 0, %s77
      %s80 = sphi 0, %s79
      %s94 = sphi 0, %s80
      %s98 = sphi 0, %s98
      %s100 = sphi 0, %s98
      %s101 = sphi 0, %s100
      %s115 = sphi 0, %s101
      %s119 = sphi 0, %s119
      %s121 = sphi 0, %s119
      %s122 = sphi 0, %s121
      %s136 = sphi 0, %s122
      %s140 = sphi 0, %s140
      %s142 = sphi 0, %s140
      %s143 = sphi 0, %s142
      %s157 = sphi 0, %s143
      %s161 = sphi 0, %s161
      %s163 = sphi 0, %s161
      %s164 = sphi 0, %s163
      %s178 = sphi 0, %s164
      %s182 = sphi 0, %s182
      %s184 = sphi 0, %s182
      %s185 = sphi 0, %s184
      %s199 = sphi 0, %s185
      %s203 = sphi 0, %s203
      %s205 = sphi 0, %s203
      %s206 = sphi 0, %s205
      %s220 = sphi 0, %s206
      %s224 = sphi 0, %s224
      %s226 = sphi 0, %s224
      %s227 = sphi 0, %s226
      %s241 = sphi 0, %s227
      %s245 = sphi 0, %s245
      %s247 = sphi 0, %s245
      %s248 = sphi 0, %s247
      %s262 = sphi 0, %s248
      %s266 = sphi 0, %s266
      %s268 = sphi 0, %s266
      %s269 = sphi 0, %s268
      %s283 = sphi 0, %s269
      %s287 = sphi 0, %s287
      %s289 = sphi 0, %s287
      %s290 = sphi 0, %s289
      %s304 = sphi 0, %s290
      %s308 = sphi 0, %s308
      %s310 = sphi 0, %s308
      %s311 = sphi 0, %s310
      %s325 = sphi 0, %s311
      %s333 = sphi 0, %s335
      %s336 = sphi 0, %s333
      %s337 = sphi 0, %s336
      %s353 = sphi 0, %s337
    $region4: #{tpu_custom_call.1} parent=1 // loop_header_branch
      %34 = sbr.rel (%p32) target = $region8
    $region5: #{tpu_custom_call.1} parent=1 // loop_body
      %s36 = ssub.s32 %s31, 1
      %s37 = ssub.s32 %s31, 2
      %s44 = sadd.s32 1, %s39
      %p45 = scmp.ge.s32.totalorder %s44, 1
      %s46 = scalar_select %p45, 0, %s44
      %s47 = sadd.s32 1, %s38
      %s48 = scalar_select %p45, %s47, %s38
      %p49 = scmp.ge.s32.totalorder %s48, 2
      %s50 = scalar_select %p49, 0, %s48
      %s51 = ssub.s32 %s38, %s50
      %p52 = scmp.eq.s32.totalorder %s51, 0
      %s54 = sadd.s32 %s53, 1
      %s55 = scalar_select %p52, %s53, %s54
      %p58 = pneg %p52
      %p59 = scmp.eq.s32.totalorder %s31, 1
      %p60 = por %p58, %p59
      %p61 = scmp.ne.s32.totalorder %s53, %s56
      %p62 = scmp.eq.s32.totalorder %s31, 0
      %p63 = por %p61, %p62
      %p64 = scmp.ne.s32.totalorder %s53, %s56
      %p65 = scmp.eq.s32.totalorder %s36, 1
      %p66 = por %p64, %p65
      %p67 = scmp.ne.s32.totalorder %s56, %s57
      %p68 = scmp.eq.s32.totalorder %s36, 0
      %p69 = por %p67, %p68
      %p70 = scmp.ne.s32.totalorder %s56, %s57
      %p71 = scmp.eq.s32.totalorder %s37, 1
      %p72 = por %p70, %p71
      %p74 = scmp.ne.s32.totalorder %s57, %s73
      %p75 = scmp.eq.s32.totalorder %s37, 0
      %p76 = por %p74, %p75
      %s78 = sadd.s32 %s77, 1
      %p81 = scmp.eq.s32.totalorder %s31, 1
      %p82 = scmp.ne.s32.totalorder %s77, %s79
      %p83 = scmp.eq.s32.totalorder %s31, 0
      %p84 = por %p82, %p83
      %p85 = scmp.ne.s32.totalorder %s77, %s79
      %p86 = scmp.eq.s32.totalorder %s36, 1
      %p87 = por %p85, %p86
      %p88 = scmp.ne.s32.totalorder %s79, %s80
      %p89 = scmp.eq.s32.totalorder %s36, 0
      %p90 = por %p88, %p89
      %p91 = scmp.ne.s32.totalorder %s79, %s80
      %p92 = scmp.eq.s32.totalorder %s37, 1
      %p93 = por %p91, %p92
      %p95 = scmp.ne.s32.totalorder %s80, %s94
      %p96 = scmp.eq.s32.totalorder %s37, 0
      %p97 = por %p95, %p96
      %s99 = sadd.s32 %s98, 1
      %p102 = scmp.eq.s32.totalorder %s31, 1
      %p103 = scmp.ne.s32.totalorder %s98, %s100
      %p104 = scmp.eq.s32.totalorder %s31, 0
      %p105 = por %p103, %p104
      %p106 = scmp.ne.s32.totalorder %s98, %s100
      %p107 = scmp.eq.s32.totalorder %s36, 1
      %p108 = por %p106, %p107
      %p109 = scmp.ne.s32.totalorder %s100, %s101
      %p110 = scmp.eq.s32.totalorder %s36, 0
      %p111 = por %p109, %p110
      %p112 = scmp.ne.s32.totalorder %s100, %s101
      %p113 = scmp.eq.s32.totalorder %s37, 1
      %p114 = por %p112, %p113
      %p116 = scmp.ne.s32.totalorder %s101, %s115
      %p117 = scmp.eq.s32.totalorder %s37, 0
      %p118 = por %p116, %p117
      %s120 = sadd.s32 %s119, 1
      %p123 = scmp.eq.s32.totalorder %s31, 1
      %p124 = scmp.ne.s32.totalorder %s119, %s121
      %p125 = scmp.eq.s32.totalorder %s31, 0
      %p126 = por %p124, %p125
      %p127 = scmp.ne.s32.totalorder %s119, %s121
      %p128 = scmp.eq.s32.totalorder %s36, 1
      %p129 = por %p127, %p128
      %p130 = scmp.ne.s32.totalorder %s121, %s122
      %p131 = scmp.eq.s32.totalorder %s36, 0
      %p132 = por %p130, %p131
      %p133 = scmp.ne.s32.totalorder %s121, %s122
      %p134 = scmp.eq.s32.totalorder %s37, 1
      %p135 = por %p133, %p134
      %p137 = scmp.ne.s32.totalorder %s122, %s136
      %p138 = scmp.eq.s32.totalorder %s37, 0
      %p139 = por %p137, %p138
      %s141 = sadd.s32 %s140, 1
      %p144 = scmp.eq.s32.totalorder %s31, 1
      %p145 = scmp.ne.s32.totalorder %s140, %s142
      %p146 = scmp.eq.s32.totalorder %s31, 0
      %p147 = por %p145, %p146
      %p148 = scmp.ne.s32.totalorder %s140, %s142
      %p149 = scmp.eq.s32.totalorder %s36, 1
      %p150 = por %p148, %p149
      %p151 = scmp.ne.s32.totalorder %s142, %s143
      %p152 = scmp.eq.s32.totalorder %s36, 0
      %p153 = por %p151, %p152
      %p154 = scmp.ne.s32.totalorder %s142, %s143
      %p155 = scmp.eq.s32.totalorder %s37, 1
      %p156 = por %p154, %p155
      %p158 = scmp.ne.s32.totalorder %s143, %s157
      %p159 = scmp.eq.s32.totalorder %s37, 0
      %p160 = por %p158, %p159
      %s162 = sadd.s32 %s161, 1
      %p165 = scmp.eq.s32.totalorder %s31, 1
      %p166 = scmp.ne.s32.totalorder %s161, %s163
      %p167 = scmp.eq.s32.totalorder %s31, 0
      %p168 = por %p166, %p167
      %p169 = scmp.ne.s32.totalorder %s161, %s163
      %p170 = scmp.eq.s32.totalorder %s36, 1
      %p171 = por %p169, %p170
      %p172 = scmp.ne.s32.totalorder %s163, %s164
      %p173 = scmp.eq.s32.totalorder %s36, 0
      %p174 = por %p172, %p173
      %p175 = scmp.ne.s32.totalorder %s163, %s164
      %p176 = scmp.eq.s32.totalorder %s37, 1
      %p177 = por %p175, %p176
      %p179 = scmp.ne.s32.totalorder %s164, %s178
      %p180 = scmp.eq.s32.totalorder %s37, 0
      %p181 = por %p179, %p180
      %s183 = sadd.s32 %s182, 1
      %p186 = scmp.eq.s32.totalorder %s31, 1
      %p187 = scmp.ne.s32.totalorder %s182, %s184
      %p188 = scmp.eq.s32.totalorder %s31, 0
      %p189 = por %p187, %p188
      %p190 = scmp.ne.s32.totalorder %s182, %s184
      %p191 = scmp.eq.s32.totalorder %s36, 1
      %p192 = por %p190, %p191
      %p193 = scmp.ne.s32.totalorder %s184, %s185
      %p194 = scmp.eq.s32.totalorder %s36, 0
      %p195 = por %p193, %p194
      %p196 = scmp.ne.s32.totalorder %s184, %s185
      %p197 = scmp.eq.s32.totalorder %s37, 1
      %p198 = por %p196, %p197
      %p200 = scmp.ne.s32.totalorder %s185, %s199
      %p201 = scmp.eq.s32.totalorder %s37, 0
      %p202 = por %p200, %p201
      %s204 = sadd.s32 %s203, 1
      %p207 = scmp.eq.s32.totalorder %s31, 1
      %p208 = scmp.ne.s32.totalorder %s203, %s205
      %p209 = scmp.eq.s32.totalorder %s31, 0
      %p210 = por %p208, %p209
      %p211 = scmp.ne.s32.totalorder %s203, %s205
      %p212 = scmp.eq.s32.totalorder %s36, 1
      %p213 = por %p211, %p212
      %p214 = scmp.ne.s32.totalorder %s205, %s206
      %p215 = scmp.eq.s32.totalorder %s36, 0
      %p216 = por %p214, %p215
      %p217 = scmp.ne.s32.totalorder %s205, %s206
      %p218 = scmp.eq.s32.totalorder %s37, 1
      %p219 = por %p217, %p218
      %p221 = scmp.ne.s32.totalorder %s206, %s220
      %p222 = scmp.eq.s32.totalorder %s37, 0
      %p223 = por %p221, %p222
      %s225 = sadd.s32 %s224, 1
      %p228 = scmp.eq.s32.totalorder %s31, 1
      %p229 = scmp.ne.s32.totalorder %s224, %s226
      %p230 = scmp.eq.s32.totalorder %s31, 0
      %p231 = por %p229, %p230
      %p232 = scmp.ne.s32.totalorder %s224, %s226
      %p233 = scmp.eq.s32.totalorder %s36, 1
      %p234 = por %p232, %p233
      %p235 = scmp.ne.s32.totalorder %s226, %s227
      %p236 = scmp.eq.s32.totalorder %s36, 0
      %p237 = por %p235, %p236
      %p238 = scmp.ne.s32.totalorder %s226, %s227
      %p239 = scmp.eq.s32.totalorder %s37, 1
      %p240 = por %p238, %p239
      %p242 = scmp.ne.s32.totalorder %s227, %s241
      %p243 = scmp.eq.s32.totalorder %s37, 0
      %p244 = por %p242, %p243
      %s246 = sadd.s32 %s245, 1
      %p249 = scmp.eq.s32.totalorder %s31, 1
      %p250 = scmp.ne.s32.totalorder %s245, %s247
      %p251 = scmp.eq.s32.totalorder %s31, 0
      %p252 = por %p250, %p251
      %p253 = scmp.ne.s32.totalorder %s245, %s247
      %p254 = scmp.eq.s32.totalorder %s36, 1
      %p255 = por %p253, %p254
      %p256 = scmp.ne.s32.totalorder %s247, %s248
      %p257 = scmp.eq.s32.totalorder %s36, 0
      %p258 = por %p256, %p257
      %p259 = scmp.ne.s32.totalorder %s247, %s248
      %p260 = scmp.eq.s32.totalorder %s37, 1
      %p261 = por %p259, %p260
      %p263 = scmp.ne.s32.totalorder %s248, %s262
      %p264 = scmp.eq.s32.totalorder %s37, 0
      %p265 = por %p263, %p264
      %s267 = sadd.s32 %s266, 1
      %p270 = scmp.eq.s32.totalorder %s31, 1
      %p271 = scmp.ne.s32.totalorder %s266, %s268
      %p272 = scmp.eq.s32.totalorder %s31, 0
      %p273 = por %p271, %p272
      %p274 = scmp.ne.s32.totalorder %s266, %s268
      %p275 = scmp.eq.s32.totalorder %s36, 1
      %p276 = por %p274, %p275
      %p277 = scmp.ne.s32.totalorder %s268, %s269
      %p278 = scmp.eq.s32.totalorder %s36, 0
      %p279 = por %p277, %p278
      %p280 = scmp.ne.s32.totalorder %s268, %s269
      %p281 = scmp.eq.s32.totalorder %s37, 1
      %p282 = por %p280, %p281
      %p284 = scmp.ne.s32.totalorder %s269, %s283
      %p285 = scmp.eq.s32.totalorder %s37, 0
      %p286 = por %p284, %p285
      %s288 = sadd.s32 %s287, 1
      %p291 = scmp.eq.s32.totalorder %s31, 1
      %p292 = scmp.ne.s32.totalorder %s287, %s289
      %p293 = scmp.eq.s32.totalorder %s31, 0
      %p294 = por %p292, %p293
      %p295 = scmp.ne.s32.totalorder %s287, %s289
      %p296 = scmp.eq.s32.totalorder %s36, 1
      %p297 = por %p295, %p296
      %p298 = scmp.ne.s32.totalorder %s289, %s290
      %p299 = scmp.eq.s32.totalorder %s36, 0
      %p300 = por %p298, %p299
      %p301 = scmp.ne.s32.totalorder %s289, %s290
      %p302 = scmp.eq.s32.totalorder %s37, 1
      %p303 = por %p301, %p302
      %p305 = scmp.ne.s32.totalorder %s290, %s304
      %p306 = scmp.eq.s32.totalorder %s37, 0
      %p307 = por %p305, %p306
      %s309 = sadd.s32 %s308, 1
      %p312 = scmp.eq.s32.totalorder %s31, 1
      %p313 = scmp.ne.s32.totalorder %s308, %s310
      %p314 = scmp.eq.s32.totalorder %s31, 0
      %p315 = por %p313, %p314
      %p316 = scmp.ne.s32.totalorder %s308, %s310
      %p317 = scmp.eq.s32.totalorder %s36, 1
      %p318 = por %p316, %p317
      %p319 = scmp.ne.s32.totalorder %s310, %s311
      %p320 = scmp.eq.s32.totalorder %s36, 0
      %p321 = por %p319, %p320
      %p322 = scmp.ne.s32.totalorder %s310, %s311
      %p323 = scmp.eq.s32.totalorder %s37, 1
      %p324 = por %p322, %p323
      %p326 = scmp.ne.s32.totalorder %s311, %s325
      %p327 = scmp.eq.s32.totalorder %s37, 0
      %p328 = por %p326, %p327
      %s329 = ssub.s32 %s38, %s50
      %s330 = ssub.s32 %s39, %s46
      %s331 = sor.u32 %s329, %s330
      %p332 = scmp.eq.s32.totalorder %s331, 0
      %s334 = sadd.s32 %s333, 1
      %s335 = scalar_select %p332, %s333, %s334
      %p338 = pneg %p332
      %p339 = scmp.eq.s32.totalorder %s31, 1
      %p340 = por %p338, %p339
      %p341 = scmp.ne.s32.totalorder %s333, %s336
      %p342 = scmp.eq.s32.totalorder %s31, 0
      %p343 = por %p341, %p342
      %p344 = scmp.ne.s32.totalorder %s333, %s336
      %p345 = scmp.eq.s32.totalorder %s36, 1
      %p346 = por %p344, %p345
      %p347 = scmp.ne.s32.totalorder %s336, %s337
      %p348 = scmp.eq.s32.totalorder %s36, 0
      %p349 = por %p347, %p348
      %p350 = scmp.ne.s32.totalorder %s336, %s337
      %p351 = scmp.eq.s32.totalorder %s37, 1
      %p352 = por %p350, %p351
      %p354 = scmp.ne.s32.totalorder %s337, %s353
      %p355 = scmp.eq.s32.totalorder %s37, 0
      %p356 = por %p354, %p355
      %p357 = scmp.le.s32.totalorder 1, %s31
      %p358 = scmp.lt.s32.totalorder %s31, 3
      %p359 = pnand %p357, %p358
      %p360 = pneg %p359
      // Predicated region
      $region9: #{tpu_custom_call.1} parent=5 // pred_check
        _
      $region10: #{tpu_custom_call.1} parent=5 // pred_check_branch
        %362 = sbr.rel (%p359) target = $region12
      $region11: #{tpu_custom_call.1} parent=5 // pred_region
        %s363 = ssub.s32 %s31, 1
        // Predicated region
        $region13: #{tpu_custom_call.1} parent=11 // pred_check
          %p364 = pneg %p90
        $region14: #{tpu_custom_call.1} parent=11 // pred_check_branch
          %366 = sbr.rel (%p364) target = $region16
        $region15: #{tpu_custom_call.1} parent=11 // pred_region
          %s368 = ssub.s32 48, 48
          %369 = vsyncadd [#allocation8], %s368
          %s371 = sshll.u32 [#allocation7], 4
          %s372 = int_to_ptr.vmem [resolvable:$true] %s371
          %374 = dma.hbm_to_vmem [thread:$0]  %s1, 48, %s372, [#allocation8]
        $region16: #{tpu_custom_call.1} parent=11 // pred_fallthru
          _
        // Predicated region
        $region17: #{tpu_custom_call.1} parent=11 // pred_check
          %p375 = pneg %p111
        $region18: #{tpu_custom_call.1} parent=11 // pred_check_branch
          %377 = sbr.rel (%p375) target = $region20
        $region19: #{tpu_custom_call.1} parent=11 // pred_region
          %s379 = ssub.s32 48, 48
          %380 = vsyncadd [#allocation8], %s379
          %s382 = sshll.u32 [#allocation9], 4
          %s383 = int_to_ptr.vmem [resolvable:$true] %s382
          %385 = dma.hbm_to_vmem [thread:$0]  %s2, 48, %s383, [#allocation8]
        $region20: #{tpu_custom_call.1} parent=11 // pred_fallthru
          _
        // Predicated region
        $region21: #{tpu_custom_call.1} parent=11 // pred_check
          %p386 = pneg %p132
        $region22: #{tpu_custom_call.1} parent=11 // pred_check_branch
          %388 = sbr.rel (%p386) target = $region24
        $region23: #{tpu_custom_call.1} parent=11 // pred_region
          %s390 = ssub.s32 9216, 9216
          %391 = vsyncadd [#allocation11], %s390
          %s392 = sshll.u32 [#allocation10], 4
          %s393 = int_to_ptr.vmem [resolvable:$true] %s392
          %398 = dma.hbm_to_vmem [thread:$0]  %s3, 9216, %s393, [#allocation11], 192, 192, 12
        $region24: #{tpu_custom_call.1} parent=11 // pred_fallthru
          _
        // Predicated region
        $region25: #{tpu_custom_call.1} parent=11 // pred_check
          %p399 = pneg %p153
        $region26: #{tpu_custom_call.1} parent=11 // pred_check_branch
          %401 = sbr.rel (%p399) target = $region28
        $region27: #{tpu_custom_call.1} parent=11 // pred_region
          %s403 = ssub.s32 18432, 18432
          %404 = vsyncadd [#allocation11], %s403
          %s405 = sshll.u32 [#allocation12], 4
          %s406 = int_to_ptr.vmem [resolvable:$true] %s405
          %411 = dma.hbm_to_vmem [thread:$0]  %s4, 18432, %s406, [#allocation11], 384, 384, 24
        $region28: #{tpu_custom_call.1} parent=11 // pred_fallthru
          _
        // Predicated region
        $region29: #{tpu_custom_call.1} parent=11 // pred_check
          %p412 = pneg %p174
        $region30: #{tpu_custom_call.1} parent=11 // pred_check_branch
          %414 = sbr.rel (%p412) target = $region32
        $region31: #{tpu_custom_call.1} parent=11 // pred_region
          %s416 = ssub.s32 9216, 9216
          %417 = vsyncadd [#allocation14], %s416
          %s418 = sshll.u32 [#allocation13], 4
          %s419 = int_to_ptr.vmem [resolvable:$true] %s418
          %424 = dma.hbm_to_vmem [thread:$0]  %s5, 9216, %s419, [#allocation14], 192, 192, 12
        $region32: #{tpu_custom_call.1} parent=11 // pred_fallthru
          _
        // Predicated region
        $region33: #{tpu_custom_call.1} parent=11 // pred_check
          %p425 = pneg %p195
        $region34: #{tpu_custom_call.1} parent=11 // pred_check_branch
          %427 = sbr.rel (%p425) target = $region36
        $region35: #{tpu_custom_call.1} parent=11 // pred_region
          %s429 = ssub.s32 48, 48
          %430 = vsyncadd [#allocation14], %s429
          %s432 = sshll.u32 [#allocation15], 4
          %s433 = int_to_ptr.vmem [resolvable:$true] %s432
          %435 = dma.hbm_to_vmem [thread:$0]  %s6, 48, %s433, [#allocation14]
        $region36: #{tpu_custom_call.1} parent=11 // pred_fallthru
          _
        // Predicated region
        $region37: #{tpu_custom_call.1} parent=11 // pred_check
          %p436 = pneg %p216
        $region38: #{tpu_custom_call.1} parent=11 // pred_check_branch
          %438 = sbr.rel (%p436) target = $region40
        $region39: #{tpu_custom_call.1} parent=11 // pred_region
          %s440 = ssub.s32 48, 48
          %441 = vsyncadd [#allocation17], %s440
          %s443 = sshll.u32 [#allocation16], 4
          %s444 = int_to_ptr.vmem [resolvable:$true] %s443
          %446 = dma.hbm_to_vmem [thread:$0]  %s7, 48, %s444, [#allocation17]
        $region40: #{tpu_custom_call.1} parent=11 // pred_fallthru
          _
        // Predicated region
        $region41: #{tpu_custom_call.1} parent=11 // pred_check
          %p447 = pneg %p237
        $region42: #{tpu_custom_call.1} parent=11 // pred_check_branch
          %449 = sbr.rel (%p447) target = $region44
        $region43: #{tpu_custom_call.1} parent=11 // pred_region
          %s451 = ssub.s32 48, 48
          %452 = vsyncadd [#allocation17], %s451
          %s454 = sshll.u32 [#allocation18], 4
          %s455 = int_to_ptr.vmem [resolvable:$true] %s454
          %457 = dma.hbm_to_vmem [thread:$0]  %s8, 48, %s455, [#allocation17]
        $region44: #{tpu_custom_call.1} parent=11 // pred_fallthru
          _
        // Predicated region
        $region45: #{tpu_custom_call.1} parent=11 // pred_check
          %p458 = pneg %p258
        $region46: #{tpu_custom_call.1} parent=11 // pred_check_branch
          %460 = sbr.rel (%p458) target = $region48
        $region47: #{tpu_custom_call.1} parent=11 // pred_region
          %s462 = ssub.s32 36864, 36864
          %463 = vsyncadd [#allocation20], %s462
          %s464 = sshll.u32 [#allocation19], 4
          %s465 = int_to_ptr.vmem [resolvable:$true] %s464
          %470 = dma.hbm_to_vmem [thread:$0]  %s9, 36864, %s465, [#allocation20], 768, 768, 48
        $region48: #{tpu_custom_call.1} parent=11 // pred_fallthru
          _
        // Predicated region
        $region49: #{tpu_custom_call.1} parent=11 // pred_check
          %p471 = pneg %p279
        $region50: #{tpu_custom_call.1} parent=11 // pred_check_branch
          %473 = sbr.rel (%p471) target = $region52
        $region51: #{tpu_custom_call.1} parent=11 // pred_region
          %s475 = ssub.s32 192, 192
          %476 = vsyncadd [#allocation20], %s475
          %s478 = sshll.u32 [#allocation21], 4
          %s479 = int_to_ptr.vmem [resolvable:$true] %s478
          %481 = dma.hbm_to_vmem [thread:$0]  %s10, 192, %s479, [#allocation20]
        $region52: #{tpu_custom_call.1} parent=11 // pred_fallthru
          _
        // Predicated region
        $region53: #{tpu_custom_call.1} parent=11 // pred_check
          %p482 = pneg %p300
        $region54: #{tpu_custom_call.1} parent=11 // pred_check_branch
          %484 = sbr.rel (%p482) target = $region56
        $region55: #{tpu_custom_call.1} parent=11 // pred_region
          %s486 = ssub.s32 36864, 36864
          %487 = vsyncadd [#allocation23], %s486
          %s488 = sshll.u32 [#allocation22], 4
          %s489 = int_to_ptr.vmem [resolvable:$true] %s488
          %494 = dma.hbm_to_vmem [thread:$0]  %s11, 36864, %s489, [#allocation23], 192, 192, 12
        $region56: #{tpu_custom_call.1} parent=11 // pred_fallthru
          _
        // Predicated region
        $region57: #{tpu_custom_call.1} parent=11 // pred_check
          %p495 = pneg %p321
        $region58: #{tpu_custom_call.1} parent=11 // pred_check_branch
          %497 = sbr.rel (%p495) target = $region60
        $region59: #{tpu_custom_call.1} parent=11 // pred_region
          %s499 = ssub.s32 48, 48
          %500 = vsyncadd [#allocation23], %s499
          %s502 = sshll.u32 [#allocation24], 4
          %s503 = int_to_ptr.vmem [resolvable:$true] %s502
          %505 = dma.hbm_to_vmem [thread:$0]  %s12, 48, %s503, [#allocation23]
        $region60: #{tpu_custom_call.1} parent=11 // pred_fallthru
          _
      $region12: #{tpu_custom_call.1} parent=5 // pred_fallthru
        _
      %p506 = scmp.lt.s32.totalorder %s31, 2
      // Predicated region
      $region61: #{tpu_custom_call.1} parent=5 // pred_check
        %p507 = pneg %p506
      $region62: #{tpu_custom_call.1} parent=5 // pred_check_branch
        %509 = sbr.rel (%p507) target = $region64
      $region63: #{tpu_custom_call.1} parent=5 // pred_region
        // Predicated region
        $region65: #{tpu_custom_call.1} parent=63 // pred_check
          %p510 = pneg %p63
        $region66: #{tpu_custom_call.1} parent=63 // pred_check_branch
          %512 = sbr.rel (%p510) target = $region68
        $region67: #{tpu_custom_call.1} parent=63 // pred_region
          %s513 = sand.u32 %s53, 1
          %s514 = scalar_lea.sflag [#allocation5], %s513
          %s515 = sand.u32 %s53, 1
          %s516 = smul.addr %s515, 12
          %s517 = scalar_lea.vmem [#allocation4], %s516
          %s519 = ssub.s32 192, 192
          %520 = vsyncadd %s514, %s519
          %s521 = smul.addr %s38, 3
          %s522 = smul.addr %s521, 64
          %s523 = scalar_lea.hbm %s0, %s522
          %s525 = sshll.u32 %s517, 4
          %s526 = int_to_ptr.vmem [resolvable:$true] %s525
          %528 = dma.hbm_to_vmem [thread:$0]  %s523, 192, %s526, %s514
        $region68: #{tpu_custom_call.1} parent=63 // pred_fallthru
          _
      $region64: #{tpu_custom_call.1} parent=5 // pred_fallthru
        _
      %p529 = scmp.le.s32.totalorder 1, %s31
      %p530 = scmp.lt.s32.totalorder %s31, 3
      %p531 = pnand %p529, %p530
      %p532 = pneg %p531
      // Predicated region
      $region69: #{tpu_custom_call.1} parent=5 // pred_check
        _
      $region70: #{tpu_custom_call.1} parent=5 // pred_check_branch
        %534 = sbr.rel (%p531) target = $region72
      $region71: #{tpu_custom_call.1} parent=5 // pred_region
        %s535 = ssub.s32 %s31, 1
        %s536 = sand.u32 %s56, 1
        %s537 = scalar_lea.sflag [#allocation5], %s536
        %s538 = sand.u32 %s56, 1
        %s539 = smul.addr %s538, 12
        %s540 = scalar_lea.vmem [#allocation4], %s539
        // Predicated region
        $region73: #{tpu_custom_call.1} parent=71 // pred_check
          %p541 = pneg %p69
        $region74: #{tpu_custom_call.1} parent=71 // pred_check_branch
          %543 = sbr.rel (%p541) target = $region76
        $region75: #{tpu_custom_call.1} parent=71 // pred_region
          %544 = dma.done %s537, 192
        $region76: #{tpu_custom_call.1} parent=71 // pred_fallthru
          _
        // Predicated region
        $region77: #{tpu_custom_call.1} parent=71 // pred_check
          %p545 = pneg %p90
        $region78: #{tpu_custom_call.1} parent=71 // pred_check_branch
          %547 = sbr.rel (%p545) target = $region80
        $region79: #{tpu_custom_call.1} parent=71 // pred_region
          %548 = dma.done [#allocation8], 48
        $region80: #{tpu_custom_call.1} parent=71 // pred_fallthru
          _
        // Predicated region
        $region81: #{tpu_custom_call.1} parent=71 // pred_check
          %p549 = pneg %p111
        $region82: #{tpu_custom_call.1} parent=71 // pred_check_branch
          %551 = sbr.rel (%p549) target = $region84
        $region83: #{tpu_custom_call.1} parent=71 // pred_region
          %552 = dma.done [#allocation8], 48
        $region84: #{tpu_custom_call.1} parent=71 // pred_fallthru
          _
        // Predicated region
        $region85: #{tpu_custom_call.1} parent=71 // pred_check
          %p553 = pneg %p132
        $region86: #{tpu_custom_call.1} parent=71 // pred_check_branch
          %555 = sbr.rel (%p553) target = $region88
        $region87: #{tpu_custom_call.1} parent=71 // pred_region
          %556 = dma.done [#allocation11], 9216
        $region88: #{tpu_custom_call.1} parent=71 // pred_fallthru
          _
        // Predicated region
        $region89: #{tpu_custom_call.1} parent=71 // pred_check
          %p557 = pneg %p153
        $region90: #{tpu_custom_call.1} parent=71 // pred_check_branch
          %559 = sbr.rel (%p557) target = $region92
        $region91: #{tpu_custom_call.1} parent=71 // pred_region
          %560 = dma.done [#allocation11], 18432
        $region92: #{tpu_custom_call.1} parent=71 // pred_fallthru
          _
        // Predicated region
        $region93: #{tpu_custom_call.1} parent=71 // pred_check
          %p561 = pneg %p174
        $region94: #{tpu_custom_call.1} parent=71 // pred_check_branch
          %563 = sbr.rel (%p561) target = $region96
        $region95: #{tpu_custom_call.1} parent=71 // pred_region
          %564 = dma.done [#allocation14], 9216
        $region96: #{tpu_custom_call.1} parent=71 // pred_fallthru
          _
        // Predicated region
        $region97: #{tpu_custom_call.1} parent=71 // pred_check
          %p565 = pneg %p195
        $region98: #{tpu_custom_call.1} parent=71 // pred_check_branch
          %567 = sbr.rel (%p565) target = $region100
        $region99: #{tpu_custom_call.1} parent=71 // pred_region
          %568 = dma.done [#allocation14], 48
        $region100: #{tpu_custom_call.1} parent=71 // pred_fallthru
          _
        // Predicated region
        $region101: #{tpu_custom_call.1} parent=71 // pred_check
          %p569 = pneg %p216
        $region102: #{tpu_custom_call.1} parent=71 // pred_check_branch
          %571 = sbr.rel (%p569) target = $region104
        $region103: #{tpu_custom_call.1} parent=71 // pred_region
          %572 = dma.done [#allocation17], 48
        $region104: #{tpu_custom_call.1} parent=71 // pred_fallthru
          _
        // Predicated region
        $region105: #{tpu_custom_call.1} parent=71 // pred_check
          %p573 = pneg %p237
        $region106: #{tpu_custom_call.1} parent=71 // pred_check_branch
          %575 = sbr.rel (%p573) target = $region108
        $region107: #{tpu_custom_call.1} parent=71 // pred_region
          %576 = dma.done [#allocation17], 48
        $region108: #{tpu_custom_call.1} parent=71 // pred_fallthru
          _
        // Predicated region
        $region109: #{tpu_custom_call.1} parent=71 // pred_check
          %p577 = pneg %p258
        $region110: #{tpu_custom_call.1} parent=71 // pred_check_branch
          %579 = sbr.rel (%p577) target = $region112
        $region111: #{tpu_custom_call.1} parent=71 // pred_region
          %580 = dma.done [#allocation20], 36864
        $region112: #{tpu_custom_call.1} parent=71 // pred_fallthru
          _
        // Predicated region
        $region113: #{tpu_custom_call.1} parent=71 // pred_check
          %p581 = pneg %p279
        $region114: #{tpu_custom_call.1} parent=71 // pred_check_branch
          %583 = sbr.rel (%p581) target = $region116
        $region115: #{tpu_custom_call.1} parent=71 // pred_region
          %584 = dma.done [#allocation20], 192
        $region116: #{tpu_custom_call.1} parent=71 // pred_fallthru
          _
        // Predicated region
        $region117: #{tpu_custom_call.1} parent=71 // pred_check
          %p585 = pneg %p300
        $region118: #{tpu_custom_call.1} parent=71 // pred_check_branch
          %587 = sbr.rel (%p585) target = $region120
        $region119: #{tpu_custom_call.1} parent=71 // pred_region
          %588 = dma.done [#allocation23], 36864
        $region120: #{tpu_custom_call.1} parent=71 // pred_fallthru
          _
        // Predicated region
        $region121: #{tpu_custom_call.1} parent=71 // pred_check
          %p589 = pneg %p321
        $region122: #{tpu_custom_call.1} parent=71 // pred_check_branch
          %591 = sbr.rel (%p589) target = $region124
        $region123: #{tpu_custom_call.1} parent=71 // pred_region
          %592 = dma.done [#allocation23], 48
        $region124: #{tpu_custom_call.1} parent=71 // pred_fallthru
          _
        %s593 = sand.u32 %s56, 1
        %s594 = scalar_lea.sflag [#allocation5], %s593
        %s595 = sand.u32 %s56, 1
        %s596 = smul.addr %s595, 12
        %s597 = scalar_lea.vmem [#allocation4], %s596
        %p598 = pneg %p69
        %p599 = pneg %p66
        %p600 = pneg %p90
        %p601 = pneg %p87
        %p602 = pneg %p111
        %p603 = pneg %p108
        %p604 = pneg %p132
        %p605 = pneg %p129
        %p606 = pneg %p153
        %p607 = pneg %p150
        %p608 = pneg %p174
        %p609 = pneg %p171
        %p610 = pneg %p195
        %p611 = pneg %p192
        %p612 = pneg %p216
        %p613 = pneg %p213
        %p614 = pneg %p237
        %p615 = pneg %p234
        %p616 = pneg %p258
        %p617 = pneg %p255
        %p618 = pneg %p279
        %p619 = pneg %p276
        %p620 = pneg %p300
        %p621 = pneg %p297
        %p622 = pneg %p321
        %p623 = pneg %p318
        %p624 = pneg %p349
        %p625 = pneg %p346
        %s626 = sand.u32 %s336, 1
        %s627 = scalar_lea.sflag [#allocation6], %s626
        %s628 = sand.u32 %s336, 1
        %s629 = smul.addr %s628, 24
        %s630 = scalar_lea.vmem [#allocation25], %s629
        %s632 = smul.u32 %s41, 8
        %v633 = vld [vmem:[#allocation7] sm:$0x7]
        %v634 = vld [vmem:[#allocation9] sm:$0x7]
        %p635 = scmp.eq.s32.totalorder %s41, 0
        // Predicated region
        $region125: #{tpu_custom_call.1} parent=71 // pred_check
          %p636 = pneg %p635
        $region126: #{tpu_custom_call.1} parent=71 // pred_check_branch
          %638 = sbr.rel (%p636) target = $region128
        $region127: #{tpu_custom_call.1} parent=71 // pred_region
          %v639 = vld [vmem:[%s540] sm:$0xff]
          %v640 = vld [vmem:[%s540 + $0x8] sm:$0xf]
          %v641 = vunpack.c.l.bf16 %v639
          %v642 = vunpack.c.h.bf16 %v639
          %v643 = vunpack.c.l.bf16 %v640
          %v644 = vadd.f32 %v641, %v642
          %v645 = vadd.f32 %v644, %v643
          %646 = vadd.xlane.f32.xlu0 %v645
          %v647 = vpop.xlane.xlu0 %646
          %v648 = vrcp.pop 384.0
          %v649 = vmul.f32 %v647, %v648
          %v650 = vsub.f32 %v641, %v649
          %v651 = vsub.f32 %v642, %v649
          %v652 = vsub.f32 %v643, %v649
          %v653 = vmul.f32 %v650, %v650
          %v654 = vmul.f32 %v651, %v651
          %v655 = vmul.f32 %v652, %v652
          %v656 = vadd.f32 %v653, %v654
          %v657 = vadd.f32 %v656, %v655
          %658 = vadd.xlane.f32.xlu0 %v657
          %v659 = vpop.xlane.xlu0 %658
          %v660 = vmul.f32 %v659, %v648
          %v661 = vadd.f32 %v660, 1e-05
          %v662 = vrsqrt.pop %v661
          %v663 = vmul.f32 %v650, %v662
          %v664 = vmul.f32 %v651, %v662
          %v665 = vmul.f32 %v652, %v662
          %v667 = vlaneseq
          %v668 = vshrl.u32 %v667, 7
          %v669 = vsub.s32 0, %v668
          %v670 = vrot.slane %v633, %v669
          %v671 = vlaneseq
          %v672 = vshrl.u32 %v671, 7
          %v673 = vsub.s32 1, %v672
          %v674 = vrot.slane %v633, %v673
          %v675 = vlaneseq
          %v676 = vshrl.u32 %v675, 7
          %v677 = vsub.s32 2, %v676
          %v678 = vrot.slane %v633, %v677
          %v682 = vmul.f32 %v663, %v670
          %v683 = vmul.f32 %v664, %v674
          %v684 = vmul.f32 %v665, %v678
          %v686 = vlaneseq
          %v687 = vshrl.u32 %v686, 7
          %v688 = vsub.s32 0, %v687
          %v689 = vrot.slane %v634, %v688
          %v690 = vlaneseq
          %v691 = vshrl.u32 %v690, 7
          %v692 = vsub.s32 1, %v691
          %v693 = vrot.slane %v634, %v692
          %v694 = vlaneseq
          %v695 = vshrl.u32 %v694, 7
          %v696 = vsub.s32 2, %v695
          %v697 = vrot.slane %v634, %v696
          %v701 = vadd.f32 %v682, %v689
          %v702 = vadd.f32 %v683, %v693
          %v703 = vadd.f32 %v684, %v697
          %v704 = vpack.c.bf16 %v701, %v701
          %v705 = vpack.c.bf16 %v702, %v702
          %v706 = vpack.c.bf16 %v703, %v703
          %v707 = vld [vmem:[#allocation12] sm:$0xff]
          %v708 = vld [vmem:[#allocation12 + $0x8] sm:$0xff]
          %v709 = vld [vmem:[#allocation12 + $0x10] sm:$0xff]
          %v710 = vld [vmem:[#allocation12 + $0x18] sm:$0xff]
          %v711 = vld [vmem:[#allocation12 + $0x20] sm:$0xff]
          %v712 = vld [vmem:[#allocation12 + $0x28] sm:$0xff]
          %v713 = vld [vmem:[#allocation12 + $0x30] sm:$0xff]
          %v714 = vld [vmem:[#allocation12 + $0x38] sm:$0xff]
          %v715 = vld [vmem:[#allocation12 + $0x40] sm:$0xff]
          %v716 = vld [vmem:[#allocation12 + $0x48] sm:$0xff]
          %v717 = vld [vmem:[#allocation12 + $0x50] sm:$0xff]
          %v718 = vld [vmem:[#allocation12 + $0x58] sm:$0xff]
          %v719 = vld [vmem:[#allocation12 + $0x60] sm:$0xff]
          %v720 = vld [vmem:[#allocation12 + $0x68] sm:$0xff]
          %v721 = vld [vmem:[#allocation12 + $0x70] sm:$0xff]
          %v722 = vld [vmem:[#allocation12 + $0x78] sm:$0xff]
          %v723 = vld [vmem:[#allocation12 + $0x80] sm:$0xff]
          %v724 = vld [vmem:[#allocation12 + $0x88] sm:$0xff]
          %v725 = vld [vmem:[#allocation12 + $0x90] sm:$0xff]
          %v726 = vld [vmem:[#allocation12 + $0x98] sm:$0xff]
          %v727 = vld [vmem:[#allocation12 + $0xa0] sm:$0xff]
          %v728 = vld [vmem:[#allocation12 + $0xa8] sm:$0xff]
          %v729 = vld [vmem:[#allocation12 + $0xb0] sm:$0xff]
          %v730 = vld [vmem:[#allocation12 + $0xb8] sm:$0xff]
          %v731 = vld [vmem:[#allocation12 + $0xc0] sm:$0xff]
          %v732 = vld [vmem:[#allocation12 + $0xc8] sm:$0xff]
          %v733 = vld [vmem:[#allocation12 + $0xd0] sm:$0xff]
          %v734 = vld [vmem:[#allocation12 + $0xd8] sm:$0xff]
          %v735 = vld [vmem:[#allocation12 + $0xe0] sm:$0xff]
          %v736 = vld [vmem:[#allocation12 + $0xe8] sm:$0xff]
          %v737 = vld [vmem:[#allocation12 + $0xf0] sm:$0xff]
          %v738 = vld [vmem:[#allocation12 + $0xf8] sm:$0xff]
          %v739 = vld [vmem:[#allocation12 + $0x100] sm:$0xff]
          %v740 = vld [vmem:[#allocation12 + $0x108] sm:$0xff]
          %v741 = vld [vmem:[#allocation12 + $0x110] sm:$0xff]
          %v742 = vld [vmem:[#allocation12 + $0x118] sm:$0xff]
          %v743 = vld [vmem:[#allocation12 + $0x120] sm:$0xff]
          %v744 = vld [vmem:[#allocation12 + $0x128] sm:$0xff]
          %v745 = vld [vmem:[#allocation12 + $0x130] sm:$0xff]
          %v746 = vld [vmem:[#allocation12 + $0x138] sm:$0xff]
          %v747 = vld [vmem:[#allocation12 + $0x140] sm:$0xff]
          %v748 = vld [vmem:[#allocation12 + $0x148] sm:$0xff]
          %v749 = vld [vmem:[#allocation12 + $0x150] sm:$0xff]
          %v750 = vld [vmem:[#allocation12 + $0x158] sm:$0xff]
          %v751 = vld [vmem:[#allocation12 + $0x160] sm:$0xff]
          %v752 = vld [vmem:[#allocation12 + $0x168] sm:$0xff]
          %v753 = vld [vmem:[#allocation12 + $0x170] sm:$0xff]
          %v754 = vld [vmem:[#allocation12 + $0x178] sm:$0xff]
          %v755 = vld [vmem:[#allocation12 + $0x180] sm:$0xff]
          %v756 = vld [vmem:[#allocation12 + $0x188] sm:$0xff]
          %v757 = vld [vmem:[#allocation12 + $0x190] sm:$0xff]
          %v758 = vld [vmem:[#allocation12 + $0x198] sm:$0xff]
          %v759 = vld [vmem:[#allocation12 + $0x1a0] sm:$0xff]
          %v760 = vld [vmem:[#allocation12 + $0x1a8] sm:$0xff]
          %v761 = vld [vmem:[#allocation12 + $0x1b0] sm:$0xff]
          %v762 = vld [vmem:[#allocation12 + $0x1b8] sm:$0xff]
          %v763 = vld [vmem:[#allocation12 + $0x1c0] sm:$0xff]
          %v764 = vld [vmem:[#allocation12 + $0x1c8] sm:$0xff]
          %v765 = vld [vmem:[#allocation12 + $0x1d0] sm:$0xff]
          %v766 = vld [vmem:[#allocation12 + $0x1d8] sm:$0xff]
          %v767 = vld [vmem:[#allocation12 + $0x1e0] sm:$0xff]
          %v768 = vld [vmem:[#allocation12 + $0x1e8] sm:$0xff]
          %v769 = vld [vmem:[#allocation12 + $0x1f0] sm:$0xff]
          %v770 = vld [vmem:[#allocation12 + $0x1f8] sm:$0xff]
          %v771 = vld [vmem:[#allocation12 + $0x200] sm:$0xff]
          %v772 = vld [vmem:[#allocation12 + $0x208] sm:$0xff]
          %v773 = vld [vmem:[#allocation12 + $0x210] sm:$0xff]
          %v774 = vld [vmem:[#allocation12 + $0x218] sm:$0xff]
          %v775 = vld [vmem:[#allocation12 + $0x220] sm:$0xff]
          %v776 = vld [vmem:[#allocation12 + $0x228] sm:$0xff]
          %v777 = vld [vmem:[#allocation12 + $0x230] sm:$0xff]
          %v778 = vld [vmem:[#allocation12 + $0x238] sm:$0xff]
          %v779 = vld [vmem:[#allocation12 + $0x240] sm:$0xff]
          %v780 = vld [vmem:[#allocation12 + $0x248] sm:$0xff]
          %v781 = vld [vmem:[#allocation12 + $0x250] sm:$0xff]
          %v782 = vld [vmem:[#allocation12 + $0x258] sm:$0xff]
          %v783 = vld [vmem:[#allocation12 + $0x260] sm:$0xff]
          %v784 = vld [vmem:[#allocation12 + $0x268] sm:$0xff]
          %v785 = vld [vmem:[#allocation12 + $0x270] sm:$0xff]
          %v786 = vld [vmem:[#allocation12 + $0x278] sm:$0xff]
          %v787 = vld [vmem:[#allocation12 + $0x280] sm:$0xff]
          %v788 = vld [vmem:[#allocation12 + $0x288] sm:$0xff]
          %v789 = vld [vmem:[#allocation12 + $0x290] sm:$0xff]
          %v790 = vld [vmem:[#allocation12 + $0x298] sm:$0xff]
          %v791 = vld [vmem:[#allocation12 + $0x2a0] sm:$0xff]
          %v792 = vld [vmem:[#allocation12 + $0x2a8] sm:$0xff]
          %v793 = vld [vmem:[#allocation12 + $0x2b0] sm:$0xff]
          %v794 = vld [vmem:[#allocation12 + $0x2b8] sm:$0xff]
          %v795 = vld [vmem:[#allocation12 + $0x2c0] sm:$0xff]
          %v796 = vld [vmem:[#allocation12 + $0x2c8] sm:$0xff]
          %v797 = vld [vmem:[#allocation12 + $0x2d0] sm:$0xff]
          %v798 = vld [vmem:[#allocation12 + $0x2d8] sm:$0xff]
          %v799 = vld [vmem:[#allocation12 + $0x2e0] sm:$0xff]
          %v800 = vld [vmem:[#allocation12 + $0x2e8] sm:$0xff]
          %v801 = vld [vmem:[#allocation12 + $0x2f0] sm:$0xff]
          %v802 = vld [vmem:[#allocation12 + $0x2f8] sm:$0xff]
          %v803 = vld [vmem:[#allocation12 + $0x300] sm:$0xff]
          %v804 = vld [vmem:[#allocation12 + $0x308] sm:$0xff]
          %v805 = vld [vmem:[#allocation12 + $0x310] sm:$0xff]
          %v806 = vld [vmem:[#allocation12 + $0x318] sm:$0xff]
          %v807 = vld [vmem:[#allocation12 + $0x320] sm:$0xff]
          %v808 = vld [vmem:[#allocation12 + $0x328] sm:$0xff]
          %v809 = vld [vmem:[#allocation12 + $0x330] sm:$0xff]
          %v810 = vld [vmem:[#allocation12 + $0x338] sm:$0xff]
          %v811 = vld [vmem:[#allocation12 + $0x340] sm:$0xff]
          %v812 = vld [vmem:[#allocation12 + $0x348] sm:$0xff]
          %v813 = vld [vmem:[#allocation12 + $0x350] sm:$0xff]
          %v814 = vld [vmem:[#allocation12 + $0x358] sm:$0xff]
          %v815 = vld [vmem:[#allocation12 + $0x360] sm:$0xff]
          %v816 = vld [vmem:[#allocation12 + $0x368] sm:$0xff]
          %v817 = vld [vmem:[#allocation12 + $0x370] sm:$0xff]
          %v818 = vld [vmem:[#allocation12 + $0x378] sm:$0xff]
          %v819 = vld [vmem:[#allocation12 + $0x380] sm:$0xff]
          %v820 = vld [vmem:[#allocation12 + $0x388] sm:$0xff]
          %v821 = vld [vmem:[#allocation12 + $0x390] sm:$0xff]
          %v822 = vld [vmem:[#allocation12 + $0x398] sm:$0xff]
          %v823 = vld [vmem:[#allocation12 + $0x3a0] sm:$0xff]
          %v824 = vld [vmem:[#allocation12 + $0x3a8] sm:$0xff]
          %v825 = vld [vmem:[#allocation12 + $0x3b0] sm:$0xff]
          %v826 = vld [vmem:[#allocation12 + $0x3b8] sm:$0xff]
          %v827 = vld [vmem:[#allocation12 + $0x3c0] sm:$0xff]
          %v828 = vld [vmem:[#allocation12 + $0x3c8] sm:$0xff]
          %v829 = vld [vmem:[#allocation12 + $0x3d0] sm:$0xff]
          %v830 = vld [vmem:[#allocation12 + $0x3d8] sm:$0xff]
          %v831 = vld [vmem:[#allocation12 + $0x3e0] sm:$0xff]
          %v832 = vld [vmem:[#allocation12 + $0x3e8] sm:$0xff]
          %v833 = vld [vmem:[#allocation12 + $0x3f0] sm:$0xff]
          %v834 = vld [vmem:[#allocation12 + $0x3f8] sm:$0xff]
          %v835 = vld [vmem:[#allocation12 + $0x400] sm:$0xff]
          %v836 = vld [vmem:[#allocation12 + $0x408] sm:$0xff]
          %v837 = vld [vmem:[#allocation12 + $0x410] sm:$0xff]
          %v838 = vld [vmem:[#allocation12 + $0x418] sm:$0xff]
          %v839 = vld [vmem:[#allocation12 + $0x420] sm:$0xff]
          %v840 = vld [vmem:[#allocation12 + $0x428] sm:$0xff]
          %v841 = vld [vmem:[#allocation12 + $0x430] sm:$0xff]
          %v842 = vld [vmem:[#allocation12 + $0x438] sm:$0xff]
          %v843 = vld [vmem:[#allocation12 + $0x440] sm:$0xff]
          %v844 = vld [vmem:[#allocation12 + $0x448] sm:$0xff]
          %v845 = vld [vmem:[#allocation12 + $0x450] sm:$0xff]
          %v846 = vld [vmem:[#allocation12 + $0x458] sm:$0xff]
          %v847 = vld [vmem:[#allocation12 + $0x460] sm:$0xff]
          %v848 = vld [vmem:[#allocation12 + $0x468] sm:$0xff]
          %v849 = vld [vmem:[#allocation12 + $0x470] sm:$0xff]
          %v850 = vld [vmem:[#allocation12 + $0x478] sm:$0xff]
          %v995 = vunpack.c.l.b16 %v707
          %v996 = vunpack.c.h.b16 %v707
          %v997 = vunpack.c.l.b16 %v708
          %v998 = vunpack.c.h.b16 %v708
          %v999 = vunpack.c.l.b16 %v709
          %v1000 = vunpack.c.h.b16 %v709
          %v1001 = vunpack.c.l.b16 %v710
          %v1002 = vunpack.c.h.b16 %v710
          %v1003 = vunpack.c.l.b16 %v711
          %v1004 = vunpack.c.h.b16 %v711
          %v1005 = vunpack.c.l.b16 %v712
          %v1006 = vunpack.c.h.b16 %v712
          %v1007 = vunpack.c.l.b16 %v713
          %v1008 = vunpack.c.h.b16 %v713
          %v1009 = vunpack.c.l.b16 %v714
          %v1010 = vunpack.c.h.b16 %v714
          %v1011 = vunpack.c.l.b16 %v715
          %v1012 = vunpack.c.h.b16 %v715
          %v1013 = vunpack.c.l.b16 %v716
          %v1014 = vunpack.c.h.b16 %v716
          %v1015 = vunpack.c.l.b16 %v717
          %v1016 = vunpack.c.h.b16 %v717
          %v1017 = vunpack.c.l.b16 %v718
          %v1018 = vunpack.c.h.b16 %v718
          %v1019 = vunpack.c.l.b16 %v719
          %v1020 = vunpack.c.h.b16 %v719
          %v1021 = vunpack.c.l.b16 %v720
          %v1022 = vunpack.c.h.b16 %v720
          %v1023 = vunpack.c.l.b16 %v721
          %v1024 = vunpack.c.h.b16 %v721
          %v1025 = vunpack.c.l.b16 %v722
          %v1026 = vunpack.c.h.b16 %v722
          %v1027 = vunpack.c.l.b16 %v723
          %v1028 = vunpack.c.h.b16 %v723
          %v1029 = vunpack.c.l.b16 %v724
          %v1030 = vunpack.c.h.b16 %v724
          %v1031 = vunpack.c.l.b16 %v725
          %v1032 = vunpack.c.h.b16 %v725
          %v1033 = vunpack.c.l.b16 %v726
          %v1034 = vunpack.c.h.b16 %v726
          %v1035 = vunpack.c.l.b16 %v727
          %v1036 = vunpack.c.h.b16 %v727
          %v1037 = vunpack.c.l.b16 %v728
          %v1038 = vunpack.c.h.b16 %v728
          %v1039 = vunpack.c.l.b16 %v729
          %v1040 = vunpack.c.h.b16 %v729
          %v1041 = vunpack.c.l.b16 %v730
          %v1042 = vunpack.c.h.b16 %v730
          %v1043 = vunpack.c.l.b16 %v731
          %v1044 = vunpack.c.h.b16 %v731
          %v1045 = vunpack.c.l.b16 %v732
          %v1046 = vunpack.c.h.b16 %v732
          %v1047 = vunpack.c.l.b16 %v733
          %v1048 = vunpack.c.h.b16 %v733
          %v1049 = vunpack.c.l.b16 %v734
          %v1050 = vunpack.c.h.b16 %v734
          %v1051 = vunpack.c.l.b16 %v735
          %v1052 = vunpack.c.h.b16 %v735
          %v1053 = vunpack.c.l.b16 %v736
          %v1054 = vunpack.c.h.b16 %v736
          %v1055 = vunpack.c.l.b16 %v737
          %v1056 = vunpack.c.h.b16 %v737
          %v1057 = vunpack.c.l.b16 %v738
          %v1058 = vunpack.c.h.b16 %v738
          %v1059 = vunpack.c.l.b16 %v739
          %v1060 = vunpack.c.h.b16 %v739
          %v1061 = vunpack.c.l.b16 %v740
          %v1062 = vunpack.c.h.b16 %v740
          %v1063 = vunpack.c.l.b16 %v741
          %v1064 = vunpack.c.h.b16 %v741
          %v1065 = vunpack.c.l.b16 %v742
          %v1066 = vunpack.c.h.b16 %v742
          %v1067 = vunpack.c.l.b16 %v743
          %v1068 = vunpack.c.h.b16 %v743
          %v1069 = vunpack.c.l.b16 %v744
          %v1070 = vunpack.c.h.b16 %v744
          %v1071 = vunpack.c.l.b16 %v745
          %v1072 = vunpack.c.h.b16 %v745
          %v1073 = vunpack.c.l.b16 %v746
          %v1074 = vunpack.c.h.b16 %v746
          %v1075 = vunpack.c.l.b16 %v747
          %v1076 = vunpack.c.h.b16 %v747
          %v1077 = vunpack.c.l.b16 %v748
          %v1078 = vunpack.c.h.b16 %v748
          %v1079 = vunpack.c.l.b16 %v749
          %v1080 = vunpack.c.h.b16 %v749
          %v1081 = vunpack.c.l.b16 %v750
          %v1082 = vunpack.c.h.b16 %v750
          %v1083 = vunpack.c.l.b16 %v751
          %v1084 = vunpack.c.h.b16 %v751
          %v1085 = vunpack.c.l.b16 %v752
          %v1086 = vunpack.c.h.b16 %v752
          %v1087 = vunpack.c.l.b16 %v753
          %v1088 = vunpack.c.h.b16 %v753
          %v1089 = vunpack.c.l.b16 %v754
          %v1090 = vunpack.c.h.b16 %v754
          %v1091 = vunpack.c.l.b16 %v755
          %v1092 = vunpack.c.h.b16 %v755
          %v1093 = vunpack.c.l.b16 %v756
          %v1094 = vunpack.c.h.b16 %v756
          %v1095 = vunpack.c.l.b16 %v757
          %v1096 = vunpack.c.h.b16 %v757
          %v1097 = vunpack.c.l.b16 %v758
          %v1098 = vunpack.c.h.b16 %v758
          %v1099 = vunpack.c.l.b16 %v759
          %v1100 = vunpack.c.h.b16 %v759
          %v1101 = vunpack.c.l.b16 %v760
          %v1102 = vunpack.c.h.b16 %v760
          %v1103 = vunpack.c.l.b16 %v761
          %v1104 = vunpack.c.h.b16 %v761
          %v1105 = vunpack.c.l.b16 %v762
          %v1106 = vunpack.c.h.b16 %v762
          %v1107 = vunpack.c.l.b16 %v763
          %v1108 = vunpack.c.h.b16 %v763
          %v1109 = vunpack.c.l.b16 %v764
          %v1110 = vunpack.c.h.b16 %v764
          %v1111 = vunpack.c.l.b16 %v765
          %v1112 = vunpack.c.h.b16 %v765
          %v1113 = vunpack.c.l.b16 %v766
          %v1114 = vunpack.c.h.b16 %v766
          %v1115 = vunpack.c.l.b16 %v767
          %v1116 = vunpack.c.h.b16 %v767
          %v1117 = vunpack.c.l.b16 %v768
          %v1118 = vunpack.c.h.b16 %v768
          %v1119 = vunpack.c.l.b16 %v769
          %v1120 = vunpack.c.h.b16 %v769
          %v1121 = vunpack.c.l.b16 %v770
          %v1122 = vunpack.c.h.b16 %v770
          %v1123 = vunpack.c.l.b16 %v771
          %v1124 = vunpack.c.h.b16 %v771
          %v1125 = vunpack.c.l.b16 %v772
          %v1126 = vunpack.c.h.b16 %v772
          %v1127 = vunpack.c.l.b16 %v773
          %v1128 = vunpack.c.h.b16 %v773
          %v1129 = vunpack.c.l.b16 %v774
          %v1130 = vunpack.c.h.b16 %v774
          %v1131 = vunpack.c.l.b16 %v775
          %v1132 = vunpack.c.h.b16 %v775
          %v1133 = vunpack.c.l.b16 %v776
          %v1134 = vunpack.c.h.b16 %v776
          %v1135 = vunpack.c.l.b16 %v777
          %v1136 = vunpack.c.h.b16 %v777
          %v1137 = vunpack.c.l.b16 %v778
          %v1138 = vunpack.c.h.b16 %v778
          %v1139 = vunpack.c.l.b16 %v779
          %v1140 = vunpack.c.h.b16 %v779
          %v1141 = vunpack.c.l.b16 %v780
          %v1142 = vunpack.c.h.b16 %v780
          %v1143 = vunpack.c.l.b16 %v781
          %v1144 = vunpack.c.h.b16 %v781
          %v1145 = vunpack.c.l.b16 %v782
          %v1146 = vunpack.c.h.b16 %v782
          %v1147 = vunpack.c.l.b16 %v783
          %v1148 = vunpack.c.h.b16 %v783
          %v1149 = vunpack.c.l.b16 %v784
          %v1150 = vunpack.c.h.b16 %v784
          %v1151 = vunpack.c.l.b16 %v785
          %v1152 = vunpack.c.h.b16 %v785
          %v1153 = vunpack.c.l.b16 %v786
          %v1154 = vunpack.c.h.b16 %v786
          %v1155 = vunpack.c.l.b16 %v787
          %v1156 = vunpack.c.h.b16 %v787
          %v1157 = vunpack.c.l.b16 %v788
          %v1158 = vunpack.c.h.b16 %v788
          %v1159 = vunpack.c.l.b16 %v789
          %v1160 = vunpack.c.h.b16 %v789
          %v1161 = vunpack.c.l.b16 %v790
          %v1162 = vunpack.c.h.b16 %v790
          %v1163 = vunpack.c.l.b16 %v791
          %v1164 = vunpack.c.h.b16 %v791
          %v1165 = vunpack.c.l.b16 %v792
          %v1166 = vunpack.c.h.b16 %v792
          %v1167 = vunpack.c.l.b16 %v793
          %v1168 = vunpack.c.h.b16 %v793
          %v1169 = vunpack.c.l.b16 %v794
          %v1170 = vunpack.c.h.b16 %v794
          %v1171 = vunpack.c.l.b16 %v795
          %v1172 = vunpack.c.h.b16 %v795
          %v1173 = vunpack.c.l.b16 %v796
          %v1174 = vunpack.c.h.b16 %v796
          %v1175 = vunpack.c.l.b16 %v797
          %v1176 = vunpack.c.h.b16 %v797
          %v1177 = vunpack.c.l.b16 %v798
          %v1178 = vunpack.c.h.b16 %v798
          %v1179 = vunpack.c.l.b16 %v799
          %v1180 = vunpack.c.h.b16 %v799
          %v1181 = vunpack.c.l.b16 %v800
          %v1182 = vunpack.c.h.b16 %v800
          %v1183 = vunpack.c.l.b16 %v801
          %v1184 = vunpack.c.h.b16 %v801
          %v1185 = vunpack.c.l.b16 %v802
          %v1186 = vunpack.c.h.b16 %v802
          %v1187 = vunpack.c.l.b16 %v803
          %v1188 = vunpack.c.h.b16 %v803
          %v1189 = vunpack.c.l.b16 %v804
          %v1190 = vunpack.c.h.b16 %v804
          %v1191 = vunpack.c.l.b16 %v805
          %v1192 = vunpack.c.h.b16 %v805
          %v1193 = vunpack.c.l.b16 %v806
          %v1194 = vunpack.c.h.b16 %v806
          %v1195 = vunpack.c.l.b16 %v807
          %v1196 = vunpack.c.h.b16 %v807
          %v1197 = vunpack.c.l.b16 %v808
          %v1198 = vunpack.c.h.b16 %v808
          %v1199 = vunpack.c.l.b16 %v809
          %v1200 = vunpack.c.h.b16 %v809
          %v1201 = vunpack.c.l.b16 %v810
          %v1202 = vunpack.c.h.b16 %v810
          %v1203 = vunpack.c.l.b16 %v811
          %v1204 = vunpack.c.h.b16 %v811
          %v1205 = vunpack.c.l.b16 %v812
          %v1206 = vunpack.c.h.b16 %v812
          %v1207 = vunpack.c.l.b16 %v813
          %v1208 = vunpack.c.h.b16 %v813
          %v1209 = vunpack.c.l.b16 %v814
          %v1210 = vunpack.c.h.b16 %v814
          %v1211 = vunpack.c.l.b16 %v815
          %v1212 = vunpack.c.h.b16 %v815
          %v1213 = vunpack.c.l.b16 %v816
          %v1214 = vunpack.c.h.b16 %v816
          %v1215 = vunpack.c.l.b16 %v817
          %v1216 = vunpack.c.h.b16 %v817
          %v1217 = vunpack.c.l.b16 %v818
          %v1218 = vunpack.c.h.b16 %v818
          %v1219 = vunpack.c.l.b16 %v819
          %v1220 = vunpack.c.h.b16 %v819
          %v1221 = vunpack.c.l.b16 %v820
          %v1222 = vunpack.c.h.b16 %v820
          %v1223 = vunpack.c.l.b16 %v821
          %v1224 = vunpack.c.h.b16 %v821
          %v1225 = vunpack.c.l.b16 %v822
          %v1226 = vunpack.c.h.b16 %v822
          %v1227 = vunpack.c.l.b16 %v823
          %v1228 = vunpack.c.h.b16 %v823
          %v1229 = vunpack.c.l.b16 %v824
          %v1230 = vunpack.c.h.b16 %v824
          %v1231 = vunpack.c.l.b16 %v825
          %v1232 = vunpack.c.h.b16 %v825
          %v1233 = vunpack.c.l.b16 %v826
          %v1234 = vunpack.c.h.b16 %v826
          %v1235 = vunpack.c.l.b16 %v827
          %v1236 = vunpack.c.h.b16 %v827
          %v1237 = vunpack.c.l.b16 %v828
          %v1238 = vunpack.c.h.b16 %v828
          %v1239 = vunpack.c.l.b16 %v829
          %v1240 = vunpack.c.h.b16 %v829
          %v1241 = vunpack.c.l.b16 %v830
          %v1242 = vunpack.c.h.b16 %v830
          %v1243 = vunpack.c.l.b16 %v831
          %v1244 = vunpack.c.h.b16 %v831
          %v1245 = vunpack.c.l.b16 %v832
          %v1246 = vunpack.c.h.b16 %v832
          %v1247 = vunpack.c.l.b16 %v833
          %v1248 = vunpack.c.h.b16 %v833
          %v1249 = vunpack.c.l.b16 %v834
          %v1250 = vunpack.c.h.b16 %v834
          %v1251 = vunpack.c.l.b16 %v835
          %v1252 = vunpack.c.h.b16 %v835
          %v1253 = vunpack.c.l.b16 %v836
          %v1254 = vunpack.c.h.b16 %v836
          %v1255 = vunpack.c.l.b16 %v837
          %v1256 = vunpack.c.h.b16 %v837
          %v1257 = vunpack.c.l.b16 %v838
          %v1258 = vunpack.c.h.b16 %v838
          %v1259 = vunpack.c.l.b16 %v839
          %v1260 = vunpack.c.h.b16 %v839
          %v1261 = vunpack.c.l.b16 %v840
          %v1262 = vunpack.c.h.b16 %v840
          %v1263 = vunpack.c.l.b16 %v841
          %v1264 = vunpack.c.h.b16 %v841
          %v1265 = vunpack.c.l.b16 %v842
          %v1266 = vunpack.c.h.b16 %v842
          %v1267 = vunpack.c.l.b16 %v843
          %v1268 = vunpack.c.h.b16 %v843
          %v1269 = vunpack.c.l.b16 %v844
          %v1270 = vunpack.c.h.b16 %v844
          %v1271 = vunpack.c.l.b16 %v845
          %v1272 = vunpack.c.h.b16 %v845
          %v1273 = vunpack.c.l.b16 %v846
          %v1274 = vunpack.c.h.b16 %v846
          %v1275 = vunpack.c.l.b16 %v847
          %v1276 = vunpack.c.h.b16 %v847
          %v1277 = vunpack.c.l.b16 %v848
          %v1278 = vunpack.c.h.b16 %v848
          %v1279 = vunpack.c.l.b16 %v849
          %v1280 = vunpack.c.h.b16 %v849
          %v1281 = vunpack.c.l.b16 %v850
          %v1282 = vunpack.c.h.b16 %v850
          %v1283 = vpack.c.b16 %v1001, %v995
          %v1284 = vpack.c.b16 %v1002, %v996
          %v1285 = vpack.c.b16 %v1003, %v997
          %v1286 = vpack.c.b16 %v1004, %v998
          %v1287 = vpack.c.b16 %v1005, %v999
          %v1288 = vpack.c.b16 %v1006, %v1000
          %v1289 = vpack.c.b16 %v1013, %v1007
          %v1290 = vpack.c.b16 %v1014, %v1008
          %v1291 = vpack.c.b16 %v1015, %v1009
          %v1292 = vpack.c.b16 %v1016, %v1010
          %v1293 = vpack.c.b16 %v1017, %v1011
          %v1294 = vpack.c.b16 %v1018, %v1012
          %v1295 = vpack.c.b16 %v1025, %v1019
          %v1296 = vpack.c.b16 %v1026, %v1020
          %v1297 = vpack.c.b16 %v1027, %v1021
          %v1298 = vpack.c.b16 %v1028, %v1022
          %v1299 = vpack.c.b16 %v1029, %v1023
          %v1300 = vpack.c.b16 %v1030, %v1024
          %v1301 = vpack.c.b16 %v1037, %v1031
          %v1302 = vpack.c.b16 %v1038, %v1032
          %v1303 = vpack.c.b16 %v1039, %v1033
          %v1304 = vpack.c.b16 %v1040, %v1034
          %v1305 = vpack.c.b16 %v1041, %v1035
          %v1306 = vpack.c.b16 %v1042, %v1036
          %v1307 = vpack.c.b16 %v1049, %v1043
          %v1308 = vpack.c.b16 %v1050, %v1044
          %v1309 = vpack.c.b16 %v1051, %v1045
          %v1310 = vpack.c.b16 %v1052, %v1046
          %v1311 = vpack.c.b16 %v1053, %v1047
          %v1312 = vpack.c.b16 %v1054, %v1048
          %v1313 = vpack.c.b16 %v1061, %v1055
          %v1314 = vpack.c.b16 %v1062, %v1056
          %v1315 = vpack.c.b16 %v1063, %v1057
          %v1316 = vpack.c.b16 %v1064, %v1058
          %v1317 = vpack.c.b16 %v1065, %v1059
          %v1318 = vpack.c.b16 %v1066, %v1060
          %v1319 = vpack.c.b16 %v1073, %v1067
          %v1320 = vpack.c.b16 %v1074, %v1068
          %v1321 = vpack.c.b16 %v1075, %v1069
          %v1322 = vpack.c.b16 %v1076, %v1070
          %v1323 = vpack.c.b16 %v1077, %v1071
          %v1324 = vpack.c.b16 %v1078, %v1072
          %v1325 = vpack.c.b16 %v1085, %v1079
          %v1326 = vpack.c.b16 %v1086, %v1080
          %v1327 = vpack.c.b16 %v1087, %v1081
          %v1328 = vpack.c.b16 %v1088, %v1082
          %v1329 = vpack.c.b16 %v1089, %v1083
          %v1330 = vpack.c.b16 %v1090, %v1084
          %v1331 = vpack.c.b16 %v1097, %v1091
          %v1332 = vpack.c.b16 %v1098, %v1092
          %v1333 = vpack.c.b16 %v1099, %v1093
          %v1334 = vpack.c.b16 %v1100, %v1094
          %v1335 = vpack.c.b16 %v1101, %v1095
          %v1336 = vpack.c.b16 %v1102, %v1096
          %v1337 = vpack.c.b16 %v1109, %v1103
          %v1338 = vpack.c.b16 %v1110, %v1104
          %v1339 = vpack.c.b16 %v1111, %v1105
          %v1340 = vpack.c.b16 %v1112, %v1106
          %v1341 = vpack.c.b16 %v1113, %v1107
          %v1342 = vpack.c.b16 %v1114, %v1108
          %v1343 = vpack.c.b16 %v1121, %v1115
          %v1344 = vpack.c.b16 %v1122, %v1116
          %v1345 = vpack.c.b16 %v1123, %v1117
          %v1346 = vpack.c.b16 %v1124, %v1118
          %v1347 = vpack.c.b16 %v1125, %v1119
          %v1348 = vpack.c.b16 %v1126, %v1120
          %v1349 = vpack.c.b16 %v1133, %v1127
          %v1350 = vpack.c.b16 %v1134, %v1128
          %v1351 = vpack.c.b16 %v1135, %v1129
          %v1352 = vpack.c.b16 %v1136, %v1130
          %v1353 = vpack.c.b16 %v1137, %v1131
          %v1354 = vpack.c.b16 %v1138, %v1132
          %v1355 = vpack.c.b16 %v1145, %v1139
          %v1356 = vpack.c.b16 %v1146, %v1140
          %v1357 = vpack.c.b16 %v1147, %v1141
          %v1358 = vpack.c.b16 %v1148, %v1142
          %v1359 = vpack.c.b16 %v1149, %v1143
          %v1360 = vpack.c.b16 %v1150, %v1144
          %v1361 = vpack.c.b16 %v1157, %v1151
          %v1362 = vpack.c.b16 %v1158, %v1152
          %v1363 = vpack.c.b16 %v1159, %v1153
          %v1364 = vpack.c.b16 %v1160, %v1154
          %v1365 = vpack.c.b16 %v1161, %v1155
          %v1366 = vpack.c.b16 %v1162, %v1156
          %v1367 = vpack.c.b16 %v1169, %v1163
          %v1368 = vpack.c.b16 %v1170, %v1164
          %v1369 = vpack.c.b16 %v1171, %v1165
          %v1370 = vpack.c.b16 %v1172, %v1166
          %v1371 = vpack.c.b16 %v1173, %v1167
          %v1372 = vpack.c.b16 %v1174, %v1168
          %v1373 = vpack.c.b16 %v1181, %v1175
          %v1374 = vpack.c.b16 %v1182, %v1176
          %v1375 = vpack.c.b16 %v1183, %v1177
          %v1376 = vpack.c.b16 %v1184, %v1178
          %v1377 = vpack.c.b16 %v1185, %v1179
          %v1378 = vpack.c.b16 %v1186, %v1180
          %v1379 = vpack.c.b16 %v1193, %v1187
          %v1380 = vpack.c.b16 %v1194, %v1188
          %v1381 = vpack.c.b16 %v1195, %v1189
          %v1382 = vpack.c.b16 %v1196, %v1190
          %v1383 = vpack.c.b16 %v1197, %v1191
          %v1384 = vpack.c.b16 %v1198, %v1192
          %v1385 = vpack.c.b16 %v1205, %v1199
          %v1386 = vpack.c.b16 %v1206, %v1200
          %v1387 = vpack.c.b16 %v1207, %v1201
          %v1388 = vpack.c.b16 %v1208, %v1202
          %v1389 = vpack.c.b16 %v1209, %v1203
          %v1390 = vpack.c.b16 %v1210, %v1204
          %v1391 = vpack.c.b16 %v1217, %v1211
          %v1392 = vpack.c.b16 %v1218, %v1212
          %v1393 = vpack.c.b16 %v1219, %v1213
          %v1394 = vpack.c.b16 %v1220, %v1214
          %v1395 = vpack.c.b16 %v1221, %v1215
          %v1396 = vpack.c.b16 %v1222, %v1216
          %v1397 = vpack.c.b16 %v1229, %v1223
          %v1398 = vpack.c.b16 %v1230, %v1224
          %v1399 = vpack.c.b16 %v1231, %v1225
          %v1400 = vpack.c.b16 %v1232, %v1226
          %v1401 = vpack.c.b16 %v1233, %v1227
          %v1402 = vpack.c.b16 %v1234, %v1228
          %v1403 = vpack.c.b16 %v1241, %v1235
          %v1404 = vpack.c.b16 %v1242, %v1236
          %v1405 = vpack.c.b16 %v1243, %v1237
          %v1406 = vpack.c.b16 %v1244, %v1238
          %v1407 = vpack.c.b16 %v1245, %v1239
          %v1408 = vpack.c.b16 %v1246, %v1240
          %v1409 = vpack.c.b16 %v1253, %v1247
          %v1410 = vpack.c.b16 %v1254, %v1248
          %v1411 = vpack.c.b16 %v1255, %v1249
          %v1412 = vpack.c.b16 %v1256, %v1250
          %v1413 = vpack.c.b16 %v1257, %v1251
          %v1414 = vpack.c.b16 %v1258, %v1252
          %v1415 = vpack.c.b16 %v1265, %v1259
          %v1416 = vpack.c.b16 %v1266, %v1260
          %v1417 = vpack.c.b16 %v1267, %v1261
          %v1418 = vpack.c.b16 %v1268, %v1262
          %v1419 = vpack.c.b16 %v1269, %v1263
          %v1420 = vpack.c.b16 %v1270, %v1264
          %v1421 = vpack.c.b16 %v1277, %v1271
          %v1422 = vpack.c.b16 %v1278, %v1272
          %v1423 = vpack.c.b16 %v1279, %v1273
          %v1424 = vpack.c.b16 %v1280, %v1274
          %v1425 = vpack.c.b16 %v1281, %v1275
          %v1426 = vpack.c.b16 %v1282, %v1276
          %1571 = vmatprep.subr.bf16.mxu0 %v1326
          %1572 = vmatpush1.bf16.msra.mxu0 %v1325
          %1573 = vmatprep.subr.bf16.mxu0 %v1320
          %1574 = vmatpush1.bf16.msra.mxu0 %v1319
          %1575 = vmatprep.subr.bf16.mxu0 %v1314
          %1576 = vmatpush1.bf16.msra.mxu0 %v1313
          %1577 = vmatprep.subr.bf16.mxu0 %v1308
          %1578 = vmatpush1.bf16.msra.mxu0 %v1307
          %1579 = vmatprep.subr.bf16.mxu0 %v1302
          %1580 = vmatpush1.bf16.msra.mxu0 %v1301
          %1581 = vmatprep.subr.bf16.mxu0 %v1296
          %1582 = vmatpush1.bf16.msra.mxu0 %v1295
          %1583 = vmatprep.subr.bf16.mxu0 %v1290
          %1584 = vmatpush1.bf16.msra.mxu0 %v1289
          %1585 = vmatprep.subr.bf16.mxu0 %v1284
          %1586 = vmatpush1.bf16.msra.mxu0 %v1283
          %1587 = vmatprep.subr.bf16.mxu0 %v1374
          %1588 = vmatpush2.bf16.msra.mxu0 %v1373
          %1589 = vmatprep.subr.bf16.mxu0 %v1368
          %1590 = vmatpush2.bf16.msra.mxu0 %v1367
          %1591 = vmatprep.subr.bf16.mxu0 %v1362
          %1592 = vmatpush2.bf16.msra.mxu0 %v1361
          %1593 = vmatprep.subr.bf16.mxu0 %v1356
          %1594 = vmatpush2.bf16.msra.mxu0 %v1355
          %1595 = vmatprep.subr.bf16.mxu0 %v1350
          %1596 = vmatpush2.bf16.msra.mxu0 %v1349
          %1597 = vmatprep.subr.bf16.mxu0 %v1344
          %1598 = vmatpush2.bf16.msra.mxu0 %v1343
          %1599 = vmatprep.subr.bf16.mxu0 %v1338
          %1600 = vmatpush2.bf16.msra.mxu0 %v1337
          %1601 = vmatprep.subr.bf16.mxu0 %v1332
          %1602 = vmatpush2.bf16.msra.mxu0 %v1331
          %1603 = vmatprep.mubr.bf16.mxu0 %v705
          %1604 = vmatmul.mubr.bf16.gmra.mxu0 %v704
          %v1605 = vpop.f32.mrf.mxu0
          %v1606 = vadd.f32 0.0, %v1605
          %v1607 = vpop.f32.mrf.mxu0
          %v1608 = vadd.f32 0.0, %v1607
          %v1609 = vpop.f32.mrf.mxu0
          %v1610 = vpop.f32.mrf.mxu0
          %1611 = vdwg.mxu0
          %1612 = vmatprep.subr.bf16.mxu0 %v1422
          %1613 = vmatpush1.bf16.msra.mxu0 %v1421
          %1614 = vmatprep.subr.bf16.mxu0 %v1416
          %1615 = vmatpush1.bf16.msra.mxu0 %v1415
          %1616 = vmatprep.subr.bf16.mxu0 %v1410
          %1617 = vmatpush1.bf16.msra.mxu0 %v1409
          %1618 = vmatprep.subr.bf16.mxu0 %v1404
          %1619 = vmatpush1.bf16.msra.mxu0 %v1403
          %1620 = vmatprep.subr.bf16.mxu0 %v1398
          %1621 = vmatpush1.bf16.msra.mxu0 %v1397
          %1622 = vmatprep.subr.bf16.mxu0 %v1392
          %1623 = vmatpush1.bf16.msra.mxu0 %v1391
          %1624 = vmatprep.subr.bf16.mxu0 %v1386
          %1625 = vmatpush1.bf16.msra.mxu0 %v1385
          %1626 = vmatprep.subr.bf16.mxu0 %v1380
          %1627 = vmatpush1.bf16.msra.mxu0 %v1379
          %1628 = vmatprep.subr.bf16.mxu0 0
          %1629 = vmatpush2.bf16.msra.mxu0 0
          %1630 = vmatprep.subr.bf16.mxu0 0
          %1631 = vmatpush2.bf16.msra.mxu0 0
          %1632 = vmatprep.subr.bf16.mxu0 0
          %1633 = vmatpush2.bf16.msra.mxu0 0
          %1634 = vmatprep.subr.bf16.mxu0 0
          %1635 = vmatpush2.bf16.msra.mxu0 0
          %1636 = vmatprep.subr.bf16.mxu0 0
          %1637 = vmatpush2.bf16.msra.mxu0 0
          %1638 = vmatprep.subr.bf16.mxu0 0
          %1639 = vmatpush2.bf16.msra.mxu0 0
          %1640 = vmatprep.subr.bf16.mxu0 0
          %1641 = vmatpush2.bf16.msra.mxu0 0
          %1642 = vmatprep.subr.bf16.mxu0 0
          %1643 = vmatpush2.bf16.msra.mxu0 0
          %1644 = vmatprep.mubr.bf16.mxu0 0
          %1645 = vmatmul.mubr.bf16.gmra.mxu0 %v706
          %v1646 = vpop.f32.mrf.mxu0
          %v1647 = vadd.f32 %v1606, %v1646
          %v1648 = vpop.f32.mrf.mxu0
          %v1649 = vadd.f32 %v1608, %v1648
          %v1650 = vpop.f32.mrf.mxu0
          %v1651 = vpop.f32.mrf.mxu0
          %1652 = vdwg.mxu0
          %1653 = vmatprep.subr.bf16.mxu0 %v1328
          %1654 = vmatpush1.bf16.msra.mxu0 %v1327
          %1655 = vmatprep.subr.bf16.mxu0 %v1322
          %1656 = vmatpush1.bf16.msra.mxu0 %v1321
          %1657 = vmatprep.subr.bf16.mxu0 %v1316
          %1658 = vmatpush1.bf16.msra.mxu0 %v1315
          %1659 = vmatprep.subr.bf16.mxu0 %v1310
          %1660 = vmatpush1.bf16.msra.mxu0 %v1309
          %1661 = vmatprep.subr.bf16.mxu0 %v1304
          %1662 = vmatpush1.bf16.msra.mxu0 %v1303
          %1663 = vmatprep.subr.bf16.mxu0 %v1298
          %1664 = vmatpush1.bf16.msra.mxu0 %v1297
          %1665 = vmatprep.subr.bf16.mxu0 %v1292
          %1666 = vmatpush1.bf16.msra.mxu0 %v1291
          %1667 = vmatprep.subr.bf16.mxu0 %v1286
          %1668 = vmatpush1.bf16.msra.mxu0 %v1285
          %1669 = vmatprep.subr.bf16.mxu0 %v1376
          %1670 = vmatpush2.bf16.msra.mxu0 %v1375
          %1671 = vmatprep.subr.bf16.mxu0 %v1370
          %1672 = vmatpush2.bf16.msra.mxu0 %v1369
          %1673 = vmatprep.subr.bf16.mxu0 %v1364
          %1674 = vmatpush2.bf16.msra.mxu0 %v1363
          %1675 = vmatprep.subr.bf16.mxu0 %v1358
          %1676 = vmatpush2.bf16.msra.mxu0 %v1357
          %1677 = vmatprep.subr.bf16.mxu0 %v1352
          %1678 = vmatpush2.bf16.msra.mxu0 %v1351
          %1679 = vmatprep.subr.bf16.mxu0 %v1346
          %1680 = vmatpush2.bf16.msra.mxu0 %v1345
          %1681 = vmatprep.subr.bf16.mxu0 %v1340
          %1682 = vmatpush2.bf16.msra.mxu0 %v1339
          %1683 = vmatprep.subr.bf16.mxu0 %v1334
          %1684 = vmatpush2.bf16.msra.mxu0 %v1333
          %1685 = vmatprep.mubr.bf16.mxu0 %v705
          %1686 = vmatmul.mubr.bf16.gmra.mxu0 %v704
          %v1687 = vpop.f32.mrf.mxu0
          %v1688 = vadd.f32 0.0, %v1687
          %v1689 = vpop.f32.mrf.mxu0
          %v1690 = vadd.f32 0.0, %v1689
          %v1691 = vpop.f32.mrf.mxu0
          %v1692 = vpop.f32.mrf.mxu0
          %1693 = vdwg.mxu0
          %1694 = vmatprep.subr.bf16.mxu0 %v1424
          %1695 = vmatpush1.bf16.msra.mxu0 %v1423
          %1696 = vmatprep.subr.bf16.mxu0 %v1418
          %1697 = vmatpush1.bf16.msra.mxu0 %v1417
          %1698 = vmatprep.subr.bf16.mxu0 %v1412
          %1699 = vmatpush1.bf16.msra.mxu0 %v1411
          %1700 = vmatprep.subr.bf16.mxu0 %v1406
          %1701 = vmatpush1.bf16.msra.mxu0 %v1405
          %1702 = vmatprep.subr.bf16.mxu0 %v1400
          %1703 = vmatpush1.bf16.msra.mxu0 %v1399
          %1704 = vmatprep.subr.bf16.mxu0 %v1394
          %1705 = vmatpush1.bf16.msra.mxu0 %v1393
          %1706 = vmatprep.subr.bf16.mxu0 %v1388
          %1707 = vmatpush1.bf16.msra.mxu0 %v1387
          %1708 = vmatprep.subr.bf16.mxu0 %v1382
          %1709 = vmatpush1.bf16.msra.mxu0 %v1381
          %1710 = vmatprep.subr.bf16.mxu0 0
          %1711 = vmatpush2.bf16.msra.mxu0 0
          %1712 = vmatprep.subr.bf16.mxu0 0
          %1713 = vmatpush2.bf16.msra.mxu0 0
          %1714 = vmatprep.subr.bf16.mxu0 0
          %1715 = vmatpush2.bf16.msra.mxu0 0
          %1716 = vmatprep.subr.bf16.mxu0 0
          %1717 = vmatpush2.bf16.msra.mxu0 0
          %1718 = vmatprep.subr.bf16.mxu0 0
          %1719 = vmatpush2.bf16.msra.mxu0 0
          %1720 = vmatprep.subr.bf16.mxu0 0
          %1721 = vmatpush2.bf16.msra.mxu0 0
          %1722 = vmatprep.subr.bf16.mxu0 0
          %1723 = vmatpush2.bf16.msra.mxu0 0
          %1724 = vmatprep.subr.bf16.mxu0 0
          %1725 = vmatpush2.bf16.msra.mxu0 0
          %1726 = vmatprep.mubr.bf16.mxu0 0
          %1727 = vmatmul.mubr.bf16.gmra.mxu0 %v706
          %v1728 = vpop.f32.mrf.mxu0
          %v1729 = vadd.f32 %v1688, %v1728
          %v1730 = vpop.f32.mrf.mxu0
          %v1731 = vadd.f32 %v1690, %v1730
          %v1732 = vpop.f32.mrf.mxu0
          %v1733 = vpop.f32.mrf.mxu0
          %1734 = vdwg.mxu0
          %1735 = vmatprep.subr.bf16.mxu0 %v1330
          %1736 = vmatpush1.bf16.msra.mxu0 %v1329
          %1737 = vmatprep.subr.bf16.mxu0 %v1324
          %1738 = vmatpush1.bf16.msra.mxu0 %v1323
          %1739 = vmatprep.subr.bf16.mxu0 %v1318
          %1740 = vmatpush1.bf16.msra.mxu0 %v1317
          %1741 = vmatprep.subr.bf16.mxu0 %v1312
          %1742 = vmatpush1.bf16.msra.mxu0 %v1311
          %1743 = vmatprep.subr.bf16.mxu0 %v1306
          %1744 = vmatpush1.bf16.msra.mxu0 %v1305
          %1745 = vmatprep.subr.bf16.mxu0 %v1300
          %1746 = vmatpush1.bf16.msra.mxu0 %v1299
          %1747 = vmatprep.subr.bf16.mxu0 %v1294
          %1748 = vmatpush1.bf16.msra.mxu0 %v1293
          %1749 = vmatprep.subr.bf16.mxu0 %v1288
          %1750 = vmatpush1.bf16.msra.mxu0 %v1287
          %1751 = vmatprep.subr.bf16.mxu0 %v1378
          %1752 = vmatpush2.bf16.msra.mxu0 %v1377
          %1753 = vmatprep.subr.bf16.mxu0 %v1372
          %1754 = vmatpush2.bf16.msra.mxu0 %v1371
          %1755 = vmatprep.subr.bf16.mxu0 %v1366
          %1756 = vmatpush2.bf16.msra.mxu0 %v1365
          %1757 = vmatprep.subr.bf16.mxu0 %v1360
          %1758 = vmatpush2.bf16.msra.mxu0 %v1359
          %1759 = vmatprep.subr.bf16.mxu0 %v1354
          %1760 = vmatpush2.bf16.msra.mxu0 %v1353
          %1761 = vmatprep.subr.bf16.mxu0 %v1348
          %1762 = vmatpush2.bf16.msra.mxu0 %v1347
          %1763 = vmatprep.subr.bf16.mxu0 %v1342
          %1764 = vmatpush2.bf16.msra.mxu0 %v1341
          %1765 = vmatprep.subr.bf16.mxu0 %v1336
          %1766 = vmatpush2.bf16.msra.mxu0 %v1335
          %1767 = vmatprep.mubr.bf16.mxu0 %v705
          %1768 = vmatmul.mubr.bf16.gmra.mxu0 %v704
          %v1769 = vpop.f32.mrf.mxu0
          %v1770 = vadd.f32 0.0, %v1769
          %v1771 = vpop.f32.mrf.mxu0
          %v1772 = vadd.f32 0.0, %v1771
          %v1773 = vpop.f32.mrf.mxu0
          %v1774 = vpop.f32.mrf.mxu0
          %1775 = vdwg.mxu0
          %1776 = vmatprep.subr.bf16.mxu0 %v1426
          %1777 = vmatpush1.bf16.msra.mxu0 %v1425
          %1778 = vmatprep.subr.bf16.mxu0 %v1420
          %1779 = vmatpush1.bf16.msra.mxu0 %v1419
          %1780 = vmatprep.subr.bf16.mxu0 %v1414
          %1781 = vmatpush1.bf16.msra.mxu0 %v1413
          %1782 = vmatprep.subr.bf16.mxu0 %v1408
          %1783 = vmatpush1.bf16.msra.mxu0 %v1407
          %1784 = vmatprep.subr.bf16.mxu0 %v1402
          %1785 = vmatpush1.bf16.msra.mxu0 %v1401
          %1786 = vmatprep.subr.bf16.mxu0 %v1396
          %1787 = vmatpush1.bf16.msra.mxu0 %v1395
          %1788 = vmatprep.subr.bf16.mxu0 %v1390
          %1789 = vmatpush1.bf16.msra.mxu0 %v1389
          %1790 = vmatprep.subr.bf16.mxu0 %v1384
          %1791 = vmatpush1.bf16.msra.mxu0 %v1383
          %1792 = vmatprep.subr.bf16.mxu0 0
          %1793 = vmatpush2.bf16.msra.mxu0 0
          %1794 = vmatprep.subr.bf16.mxu0 0
          %1795 = vmatpush2.bf16.msra.mxu0 0
          %1796 = vmatprep.subr.bf16.mxu0 0
          %1797 = vmatpush2.bf16.msra.mxu0 0
          %1798 = vmatprep.subr.bf16.mxu0 0
          %1799 = vmatpush2.bf16.msra.mxu0 0
          %1800 = vmatprep.subr.bf16.mxu0 0
          %1801 = vmatpush2.bf16.msra.mxu0 0
          %1802 = vmatprep.subr.bf16.mxu0 0
          %1803 = vmatpush2.bf16.msra.mxu0 0
          %1804 = vmatprep.subr.bf16.mxu0 0
          %1805 = vmatpush2.bf16.msra.mxu0 0
          %1806 = vmatprep.subr.bf16.mxu0 0
          %1807 = vmatpush2.bf16.msra.mxu0 0
          %1808 = vmatprep.mubr.bf16.mxu0 0
          %1809 = vmatmul.mubr.bf16.gmra.mxu0 %v706
          %v1810 = vpop.f32.mrf.mxu0
          %v1811 = vadd.f32 %v1770, %v1810
          %v1812 = vpop.f32.mrf.mxu0
          %v1813 = vadd.f32 %v1772, %v1812
          %v1814 = vpop.f32.mrf.mxu0
          %v1815 = vpop.f32.mrf.mxu0
          %1816 = vdwg.mxu0
          %v1817 = vpack.c.bf16 %v1647, %v1647
          %v1818 = vpack.c.bf16 %v1649, %v1649
          %v1819 = vpack.c.bf16 %v1729, %v1729
          %v1820 = vpack.c.bf16 %v1731, %v1731
          %v1821 = vpack.c.bf16 %v1811, %v1811
          %v1822 = vpack.c.bf16 %v1813, %v1813
          %v1829 = vunpack.c.l.b16 %v1817
          %v1830 = vunpack.c.l.b16 %v1818
          %v1831 = vunpack.c.l.b16 %v1819
          %v1832 = vunpack.c.l.b16 %v1820
          %v1833 = vunpack.c.l.b16 %v1821
          %v1834 = vunpack.c.l.b16 %v1822
          %v1835 = vpack.c.b16 %v1830, %v1829
          %v1836 = vpack.c.b16 %v1832, %v1831
          %v1837 = vpack.c.b16 %v1834, %v1833
          %1841 = vst [vmem:[#allocation2] sm:$0xff] %v1835
          %1842 = vst [vmem:[#allocation2 + $0x8] sm:$0xff] %v1836
          %1843 = vst [vmem:[#allocation2 + $0x10] sm:$0xff] %v1837
        $region128: #{tpu_custom_call.1} parent=71 // pred_fallthru
          _
        %s1844 = sshra.s32 %s632, 3
        %s1845 = sand.u32 %s632, 7
        %s1846 = smul.u32 %s1844, 3
        %s1847 = smul.addr %s1846, 4
        %s1848 = scalar_lea.vmem %s540, %s1847 [#allocation4]
        %v1849 = vld [vmem:[%s1848] sm:$0xff]
        %v1850 = vld [vmem:[%s1848 + $0x8] sm:$0xf]
        %v1851 = vunpack.c.l.bf16 %v1849
        %v1852 = vunpack.c.h.bf16 %v1849
        %v1853 = vunpack.c.l.bf16 %v1850
        %v1854 = vadd.f32 %v1851, %v1852
        %v1855 = vadd.f32 %v1854, %v1853
        %1856 = vadd.xlane.f32.xlu0 %v1855
        %v1857 = vpop.xlane.xlu0 %1856
        %v1858 = vrcp.pop 384.0
        %v1859 = vmul.f32 %v1857, %v1858
        %v1860 = vsub.f32 %v1851, %v1859
        %v1861 = vsub.f32 %v1852, %v1859
        %v1862 = vsub.f32 %v1853, %v1859
        %v1863 = vmul.f32 %v1860, %v1860
        %v1864 = vmul.f32 %v1861, %v1861
        %v1865 = vmul.f32 %v1862, %v1862
        %v1866 = vadd.f32 %v1863, %v1864
        %v1867 = vadd.f32 %v1866, %v1865
        %1868 = vadd.xlane.f32.xlu0 %v1867
        %v1869 = vpop.xlane.xlu0 %1868
        %v1870 = vmul.f32 %v1869, %v1858
        %v1871 = vadd.f32 %v1870, 1e-05
        %v1872 = vrsqrt.pop %v1871
        %v1873 = vmul.f32 %v1860, %v1872
        %v1874 = vmul.f32 %v1861, %v1872
        %v1875 = vmul.f32 %v1862, %v1872
        %v1877 = vlaneseq
        %v1878 = vshrl.u32 %v1877, 7
        %v1879 = vsub.s32 0, %v1878
        %v1880 = vrot.slane %v633, %v1879
        %v1881 = vlaneseq
        %v1882 = vshrl.u32 %v1881, 7
        %v1883 = vsub.s32 1, %v1882
        %v1884 = vrot.slane %v633, %v1883
        %v1885 = vlaneseq
        %v1886 = vshrl.u32 %v1885, 7
        %v1887 = vsub.s32 2, %v1886
        %v1888 = vrot.slane %v633, %v1887
        %v1892 = vmul.f32 %v1873, %v1880
        %v1893 = vmul.f32 %v1874, %v1884
        %v1894 = vmul.f32 %v1875, %v1888
        %v1896 = vlaneseq
        %v1897 = vshrl.u32 %v1896, 7
        %v1898 = vsub.s32 0, %v1897
        %v1899 = vrot.slane %v634, %v1898
        %v1900 = vlaneseq
        %v1901 = vshrl.u32 %v1900, 7
        %v1902 = vsub.s32 1, %v1901
        %v1903 = vrot.slane %v634, %v1902
        %v1904 = vlaneseq
        %v1905 = vshrl.u32 %v1904, 7
        %v1906 = vsub.s32 2, %v1905
        %v1907 = vrot.slane %v634, %v1906
        %v1911 = vadd.f32 %v1892, %v1899
        %v1912 = vadd.f32 %v1893, %v1903
        %v1913 = vadd.f32 %v1894, %v1907
        %v1914 = vpack.c.bf16 %v1911, %v1911
        %v1915 = vpack.c.bf16 %v1912, %v1912
        %v1916 = vpack.c.bf16 %v1913, %v1913
        %v1917 = vld [vmem:[#allocation10] sm:$0xff]
        %v1918 = vld [vmem:[#allocation10 + $0x8] sm:$0xf]
        %v1919 = vld [vmem:[#allocation10 + $0xc] sm:$0xff]
        %v1920 = vld [vmem:[#allocation10 + $0x14] sm:$0xf]
        %v1921 = vld [vmem:[#allocation10 + $0x18] sm:$0xff]
        %v1922 = vld [vmem:[#allocation10 + $0x20] sm:$0xf]
        %v1923 = vld [vmem:[#allocation10 + $0x24] sm:$0xff]
        %v1924 = vld [vmem:[#allocation10 + $0x2c] sm:$0xf]
        %v1925 = vld [vmem:[#allocation10 + $0x30] sm:$0xff]
        %v1926 = vld [vmem:[#allocation10 + $0x38] sm:$0xf]
        %v1927 = vld [vmem:[#allocation10 + $0x3c] sm:$0xff]
        %v1928 = vld [vmem:[#allocation10 + $0x44] sm:$0xf]
        %v1929 = vld [vmem:[#allocation10 + $0x48] sm:$0xff]
        %v1930 = vld [vmem:[#allocation10 + $0x50] sm:$0xf]
        %v1931 = vld [vmem:[#allocation10 + $0x54] sm:$0xff]
        %v1932 = vld [vmem:[#allocation10 + $0x5c] sm:$0xf]
        %v1933 = vld [vmem:[#allocation10 + $0x60] sm:$0xff]
        %v1934 = vld [vmem:[#allocation10 + $0x68] sm:$0xf]
        %v1935 = vld [vmem:[#allocation10 + $0x6c] sm:$0xff]
        %v1936 = vld [vmem:[#allocation10 + $0x74] sm:$0xf]
        %v1937 = vld [vmem:[#allocation10 + $0x78] sm:$0xff]
        %v1938 = vld [vmem:[#allocation10 + $0x80] sm:$0xf]
        %v1939 = vld [vmem:[#allocation10 + $0x84] sm:$0xff]
        %v1940 = vld [vmem:[#allocation10 + $0x8c] sm:$0xf]
        %v1941 = vld [vmem:[#allocation10 + $0x90] sm:$0xff]
        %v1942 = vld [vmem:[#allocation10 + $0x98] sm:$0xf]
        %v1943 = vld [vmem:[#allocation10 + $0x9c] sm:$0xff]
        %v1944 = vld [vmem:[#allocation10 + $0xa4] sm:$0xf]
        %v1945 = vld [vmem:[#allocation10 + $0xa8] sm:$0xff]
        %v1946 = vld [vmem:[#allocation10 + $0xb0] sm:$0xf]
        %v1947 = vld [vmem:[#allocation10 + $0xb4] sm:$0xff]
        %v1948 = vld [vmem:[#allocation10 + $0xbc] sm:$0xf]
        %v1949 = vld [vmem:[#allocation10 + $0xc0] sm:$0xff]
        %v1950 = vld [vmem:[#allocation10 + $0xc8] sm:$0xf]
        %v1951 = vld [vmem:[#allocation10 + $0xcc] sm:$0xff]
        %v1952 = vld [vmem:[#allocation10 + $0xd4] sm:$0xf]
        %v1953 = vld [vmem:[#allocation10 + $0xd8] sm:$0xff]
        %v1954 = vld [vmem:[#allocation10 + $0xe0] sm:$0xf]
        %v1955 = vld [vmem:[#allocation10 + $0xe4] sm:$0xff]
        %v1956 = vld [vmem:[#allocation10 + $0xec] sm:$0xf]
        %v1957 = vld [vmem:[#allocation10 + $0xf0] sm:$0xff]
        %v1958 = vld [vmem:[#allocation10 + $0xf8] sm:$0xf]
        %v1959 = vld [vmem:[#allocation10 + $0xfc] sm:$0xff]
        %v1960 = vld [vmem:[#allocation10 + $0x104] sm:$0xf]
        %v1961 = vld [vmem:[#allocation10 + $0x108] sm:$0xff]
        %v1962 = vld [vmem:[#allocation10 + $0x110] sm:$0xf]
        %v1963 = vld [vmem:[#allocation10 + $0x114] sm:$0xff]
        %v1964 = vld [vmem:[#allocation10 + $0x11c] sm:$0xf]
        %v1965 = vld [vmem:[#allocation10 + $0x120] sm:$0xff]
        %v1966 = vld [vmem:[#allocation10 + $0x128] sm:$0xf]
        %v1967 = vld [vmem:[#allocation10 + $0x12c] sm:$0xff]
        %v1968 = vld [vmem:[#allocation10 + $0x134] sm:$0xf]
        %v1969 = vld [vmem:[#allocation10 + $0x138] sm:$0xff]
        %v1970 = vld [vmem:[#allocation10 + $0x140] sm:$0xf]
        %v1971 = vld [vmem:[#allocation10 + $0x144] sm:$0xff]
        %v1972 = vld [vmem:[#allocation10 + $0x14c] sm:$0xf]
        %v1973 = vld [vmem:[#allocation10 + $0x150] sm:$0xff]
        %v1974 = vld [vmem:[#allocation10 + $0x158] sm:$0xf]
        %v1975 = vld [vmem:[#allocation10 + $0x15c] sm:$0xff]
        %v1976 = vld [vmem:[#allocation10 + $0x164] sm:$0xf]
        %v1977 = vld [vmem:[#allocation10 + $0x168] sm:$0xff]
        %v1978 = vld [vmem:[#allocation10 + $0x170] sm:$0xf]
        %v1979 = vld [vmem:[#allocation10 + $0x174] sm:$0xff]
        %v1980 = vld [vmem:[#allocation10 + $0x17c] sm:$0xf]
        %v1981 = vld [vmem:[#allocation10 + $0x180] sm:$0xff]
        %v1982 = vld [vmem:[#allocation10 + $0x188] sm:$0xf]
        %v1983 = vld [vmem:[#allocation10 + $0x18c] sm:$0xff]
        %v1984 = vld [vmem:[#allocation10 + $0x194] sm:$0xf]
        %v1985 = vld [vmem:[#allocation10 + $0x198] sm:$0xff]
        %v1986 = vld [vmem:[#allocation10 + $0x1a0] sm:$0xf]
        %v1987 = vld [vmem:[#allocation10 + $0x1a4] sm:$0xff]
        %v1988 = vld [vmem:[#allocation10 + $0x1ac] sm:$0xf]
        %v1989 = vld [vmem:[#allocation10 + $0x1b0] sm:$0xff]
        %v1990 = vld [vmem:[#allocation10 + $0x1b8] sm:$0xf]
        %v1991 = vld [vmem:[#allocation10 + $0x1bc] sm:$0xff]
        %v1992 = vld [vmem:[#allocation10 + $0x1c4] sm:$0xf]
        %v1993 = vld [vmem:[#allocation10 + $0x1c8] sm:$0xff]
        %v1994 = vld [vmem:[#allocation10 + $0x1d0] sm:$0xf]
        %v1995 = vld [vmem:[#allocation10 + $0x1d4] sm:$0xff]
        %v1996 = vld [vmem:[#allocation10 + $0x1dc] sm:$0xf]
        %v1997 = vld [vmem:[#allocation10 + $0x1e0] sm:$0xff]
        %v1998 = vld [vmem:[#allocation10 + $0x1e8] sm:$0xf]
        %v1999 = vld [vmem:[#allocation10 + $0x1ec] sm:$0xff]
        %v2000 = vld [vmem:[#allocation10 + $0x1f4] sm:$0xf]
        %v2001 = vld [vmem:[#allocation10 + $0x1f8] sm:$0xff]
        %v2002 = vld [vmem:[#allocation10 + $0x200] sm:$0xf]
        %v2003 = vld [vmem:[#allocation10 + $0x204] sm:$0xff]
        %v2004 = vld [vmem:[#allocation10 + $0x20c] sm:$0xf]
        %v2005 = vld [vmem:[#allocation10 + $0x210] sm:$0xff]
        %v2006 = vld [vmem:[#allocation10 + $0x218] sm:$0xf]
        %v2007 = vld [vmem:[#allocation10 + $0x21c] sm:$0xff]
        %v2008 = vld [vmem:[#allocation10 + $0x224] sm:$0xf]
        %v2009 = vld [vmem:[#allocation10 + $0x228] sm:$0xff]
        %v2010 = vld [vmem:[#allocation10 + $0x230] sm:$0xf]
        %v2011 = vld [vmem:[#allocation10 + $0x234] sm:$0xff]
        %v2012 = vld [vmem:[#allocation10 + $0x23c] sm:$0xf]
        %v2109 = vunpack.c.l.b16 %v1917
        %v2110 = vunpack.c.h.b16 %v1917
        %v2111 = vunpack.c.l.b16 %v1918
        %v2112 = vunpack.c.l.b16 %v1919
        %v2113 = vunpack.c.h.b16 %v1919
        %v2114 = vunpack.c.l.b16 %v1920
        %v2115 = vunpack.c.l.b16 %v1921
        %v2116 = vunpack.c.h.b16 %v1921
        %v2117 = vunpack.c.l.b16 %v1922
        %v2118 = vunpack.c.l.b16 %v1923
        %v2119 = vunpack.c.h.b16 %v1923
        %v2120 = vunpack.c.l.b16 %v1924
        %v2121 = vunpack.c.l.b16 %v1925
        %v2122 = vunpack.c.h.b16 %v1925
        %v2123 = vunpack.c.l.b16 %v1926
        %v2124 = vunpack.c.l.b16 %v1927
        %v2125 = vunpack.c.h.b16 %v1927
        %v2126 = vunpack.c.l.b16 %v1928
        %v2127 = vunpack.c.l.b16 %v1929
        %v2128 = vunpack.c.h.b16 %v1929
        %v2129 = vunpack.c.l.b16 %v1930
        %v2130 = vunpack.c.l.b16 %v1931
        %v2131 = vunpack.c.h.b16 %v1931
        %v2132 = vunpack.c.l.b16 %v1932
        %v2133 = vunpack.c.l.b16 %v1933
        %v2134 = vunpack.c.h.b16 %v1933
        %v2135 = vunpack.c.l.b16 %v1934
        %v2136 = vunpack.c.l.b16 %v1935
        %v2137 = vunpack.c.h.b16 %v1935
        %v2138 = vunpack.c.l.b16 %v1936
        %v2139 = vunpack.c.l.b16 %v1937
        %v2140 = vunpack.c.h.b16 %v1937
        %v2141 = vunpack.c.l.b16 %v1938
        %v2142 = vunpack.c.l.b16 %v1939
        %v2143 = vunpack.c.h.b16 %v1939
        %v2144 = vunpack.c.l.b16 %v1940
        %v2145 = vunpack.c.l.b16 %v1941
        %v2146 = vunpack.c.h.b16 %v1941
        %v2147 = vunpack.c.l.b16 %v1942
        %v2148 = vunpack.c.l.b16 %v1943
        %v2149 = vunpack.c.h.b16 %v1943
        %v2150 = vunpack.c.l.b16 %v1944
        %v2151 = vunpack.c.l.b16 %v1945
        %v2152 = vunpack.c.h.b16 %v1945
        %v2153 = vunpack.c.l.b16 %v1946
        %v2154 = vunpack.c.l.b16 %v1947
        %v2155 = vunpack.c.h.b16 %v1947
        %v2156 = vunpack.c.l.b16 %v1948
        %v2157 = vunpack.c.l.b16 %v1949
        %v2158 = vunpack.c.h.b16 %v1949
        %v2159 = vunpack.c.l.b16 %v1950
        %v2160 = vunpack.c.l.b16 %v1951
        %v2161 = vunpack.c.h.b16 %v1951
        %v2162 = vunpack.c.l.b16 %v1952
        %v2163 = vunpack.c.l.b16 %v1953
        %v2164 = vunpack.c.h.b16 %v1953
        %v2165 = vunpack.c.l.b16 %v1954
        %v2166 = vunpack.c.l.b16 %v1955
        %v2167 = vunpack.c.h.b16 %v1955
        %v2168 = vunpack.c.l.b16 %v1956
        %v2169 = vunpack.c.l.b16 %v1957
        %v2170 = vunpack.c.h.b16 %v1957
        %v2171 = vunpack.c.l.b16 %v1958
        %v2172 = vunpack.c.l.b16 %v1959
        %v2173 = vunpack.c.h.b16 %v1959
        %v2174 = vunpack.c.l.b16 %v1960
        %v2175 = vunpack.c.l.b16 %v1961
        %v2176 = vunpack.c.h.b16 %v1961
        %v2177 = vunpack.c.l.b16 %v1962
        %v2178 = vunpack.c.l.b16 %v1963
        %v2179 = vunpack.c.h.b16 %v1963
        %v2180 = vunpack.c.l.b16 %v1964
        %v2181 = vunpack.c.l.b16 %v1965
        %v2182 = vunpack.c.h.b16 %v1965
        %v2183 = vunpack.c.l.b16 %v1966
        %v2184 = vunpack.c.l.b16 %v1967
        %v2185 = vunpack.c.h.b16 %v1967
        %v2186 = vunpack.c.l.b16 %v1968
        %v2187 = vunpack.c.l.b16 %v1969
        %v2188 = vunpack.c.h.b16 %v1969
        %v2189 = vunpack.c.l.b16 %v1970
        %v2190 = vunpack.c.l.b16 %v1971
        %v2191 = vunpack.c.h.b16 %v1971
        %v2192 = vunpack.c.l.b16 %v1972
        %v2193 = vunpack.c.l.b16 %v1973
        %v2194 = vunpack.c.h.b16 %v1973
        %v2195 = vunpack.c.l.b16 %v1974
        %v2196 = vunpack.c.l.b16 %v1975
        %v2197 = vunpack.c.h.b16 %v1975
        %v2198 = vunpack.c.l.b16 %v1976
        %v2199 = vunpack.c.l.b16 %v1977
        %v2200 = vunpack.c.h.b16 %v1977
        %v2201 = vunpack.c.l.b16 %v1978
        %v2202 = vunpack.c.l.b16 %v1979
        %v2203 = vunpack.c.h.b16 %v1979
        %v2204 = vunpack.c.l.b16 %v1980
        %v2205 = vunpack.c.l.b16 %v1981
        %v2206 = vunpack.c.h.b16 %v1981
        %v2207 = vunpack.c.l.b16 %v1982
        %v2208 = vunpack.c.l.b16 %v1983
        %v2209 = vunpack.c.h.b16 %v1983
        %v2210 = vunpack.c.l.b16 %v1984
        %v2211 = vunpack.c.l.b16 %v1985
        %v2212 = vunpack.c.h.b16 %v1985
        %v2213 = vunpack.c.l.b16 %v1986
        %v2214 = vunpack.c.l.b16 %v1987
        %v2215 = vunpack.c.h.b16 %v1987
        %v2216 = vunpack.c.l.b16 %v1988
        %v2217 = vunpack.c.l.b16 %v1989
        %v2218 = vunpack.c.h.b16 %v1989
        %v2219 = vunpack.c.l.b16 %v1990
        %v2220 = vunpack.c.l.b16 %v1991
        %v2221 = vunpack.c.h.b16 %v1991
        %v2222 = vunpack.c.l.b16 %v1992
        %v2223 = vunpack.c.l.b16 %v1993
        %v2224 = vunpack.c.h.b16 %v1993
        %v2225 = vunpack.c.l.b16 %v1994
        %v2226 = vunpack.c.l.b16 %v1995
        %v2227 = vunpack.c.h.b16 %v1995
        %v2228 = vunpack.c.l.b16 %v1996
        %v2229 = vunpack.c.l.b16 %v1997
        %v2230 = vunpack.c.h.b16 %v1997
        %v2231 = vunpack.c.l.b16 %v1998
        %v2232 = vunpack.c.l.b16 %v1999
        %v2233 = vunpack.c.h.b16 %v1999
        %v2234 = vunpack.c.l.b16 %v2000
        %v2235 = vunpack.c.l.b16 %v2001
        %v2236 = vunpack.c.h.b16 %v2001
        %v2237 = vunpack.c.l.b16 %v2002
        %v2238 = vunpack.c.l.b16 %v2003
        %v2239 = vunpack.c.h.b16 %v2003
        %v2240 = vunpack.c.l.b16 %v2004
        %v2241 = vunpack.c.l.b16 %v2005
        %v2242 = vunpack.c.h.b16 %v2005
        %v2243 = vunpack.c.l.b16 %v2006
        %v2244 = vunpack.c.l.b16 %v2007
        %v2245 = vunpack.c.h.b16 %v2007
        %v2246 = vunpack.c.l.b16 %v2008
        %v2247 = vunpack.c.l.b16 %v2009
        %v2248 = vunpack.c.h.b16 %v2009
        %v2249 = vunpack.c.l.b16 %v2010
        %v2250 = vunpack.c.l.b16 %v2011
        %v2251 = vunpack.c.h.b16 %v2011
        %v2252 = vunpack.c.l.b16 %v2012
        %v2253 = vpack.c.b16 %v2112, %v2109
        %v2254 = vpack.c.b16 %v2113, %v2110
        %v2255 = vpack.c.b16 %v2114, %v2111
        %v2256 = vpack.c.b16 %v2118, %v2115
        %v2257 = vpack.c.b16 %v2119, %v2116
        %v2258 = vpack.c.b16 %v2120, %v2117
        %v2259 = vpack.c.b16 %v2124, %v2121
        %v2260 = vpack.c.b16 %v2125, %v2122
        %v2261 = vpack.c.b16 %v2126, %v2123
        %v2262 = vpack.c.b16 %v2130, %v2127
        %v2263 = vpack.c.b16 %v2131, %v2128
        %v2264 = vpack.c.b16 %v2132, %v2129
        %v2265 = vpack.c.b16 %v2136, %v2133
        %v2266 = vpack.c.b16 %v2137, %v2134
        %v2267 = vpack.c.b16 %v2138, %v2135
        %v2268 = vpack.c.b16 %v2142, %v2139
        %v2269 = vpack.c.b16 %v2143, %v2140
        %v2270 = vpack.c.b16 %v2144, %v2141
        %v2271 = vpack.c.b16 %v2148, %v2145
        %v2272 = vpack.c.b16 %v2149, %v2146
        %v2273 = vpack.c.b16 %v2150, %v2147
        %v2274 = vpack.c.b16 %v2154, %v2151
        %v2275 = vpack.c.b16 %v2155, %v2152
        %v2276 = vpack.c.b16 %v2156, %v2153
        %v2277 = vpack.c.b16 %v2160, %v2157
        %v2278 = vpack.c.b16 %v2161, %v2158
        %v2279 = vpack.c.b16 %v2162, %v2159
        %v2280 = vpack.c.b16 %v2166, %v2163
        %v2281 = vpack.c.b16 %v2167, %v2164
        %v2282 = vpack.c.b16 %v2168, %v2165
        %v2283 = vpack.c.b16 %v2172, %v2169
        %v2284 = vpack.c.b16 %v2173, %v2170
        %v2285 = vpack.c.b16 %v2174, %v2171
        %v2286 = vpack.c.b16 %v2178, %v2175
        %v2287 = vpack.c.b16 %v2179, %v2176
        %v2288 = vpack.c.b16 %v2180, %v2177
        %v2289 = vpack.c.b16 %v2184, %v2181
        %v2290 = vpack.c.b16 %v2185, %v2182
        %v2291 = vpack.c.b16 %v2186, %v2183
        %v2292 = vpack.c.b16 %v2190, %v2187
        %v2293 = vpack.c.b16 %v2191, %v2188
        %v2294 = vpack.c.b16 %v2192, %v2189
        %v2295 = vpack.c.b16 %v2196, %v2193
        %v2296 = vpack.c.b16 %v2197, %v2194
        %v2297 = vpack.c.b16 %v2198, %v2195
        %v2298 = vpack.c.b16 %v2202, %v2199
        %v2299 = vpack.c.b16 %v2203, %v2200
        %v2300 = vpack.c.b16 %v2204, %v2201
        %v2301 = vpack.c.b16 %v2208, %v2205
        %v2302 = vpack.c.b16 %v2209, %v2206
        %v2303 = vpack.c.b16 %v2210, %v2207
        %v2304 = vpack.c.b16 %v2214, %v2211
        %v2305 = vpack.c.b16 %v2215, %v2212
        %v2306 = vpack.c.b16 %v2216, %v2213
        %v2307 = vpack.c.b16 %v2220, %v2217
        %v2308 = vpack.c.b16 %v2221, %v2218
        %v2309 = vpack.c.b16 %v2222, %v2219
        %v2310 = vpack.c.b16 %v2226, %v2223
        %v2311 = vpack.c.b16 %v2227, %v2224
        %v2312 = vpack.c.b16 %v2228, %v2225
        %v2313 = vpack.c.b16 %v2232, %v2229
        %v2314 = vpack.c.b16 %v2233, %v2230
        %v2315 = vpack.c.b16 %v2234, %v2231
        %v2316 = vpack.c.b16 %v2238, %v2235
        %v2317 = vpack.c.b16 %v2239, %v2236
        %v2318 = vpack.c.b16 %v2240, %v2237
        %v2319 = vpack.c.b16 %v2244, %v2241
        %v2320 = vpack.c.b16 %v2245, %v2242
        %v2321 = vpack.c.b16 %v2246, %v2243
        %v2322 = vpack.c.b16 %v2250, %v2247
        %v2323 = vpack.c.b16 %v2251, %v2248
        %v2324 = vpack.c.b16 %v2252, %v2249
        %2397 = vmatprep.subr.bf16.mxu0 %v2275
        %2398 = vmatpush1.bf16.msra.mxu0 %v2274
        %2399 = vmatprep.subr.bf16.mxu0 %v2272
        %2400 = vmatpush1.bf16.msra.mxu0 %v2271
        %2401 = vmatprep.subr.bf16.mxu0 %v2269
        %2402 = vmatpush1.bf16.msra.mxu0 %v2268
        %2403 = vmatprep.subr.bf16.mxu0 %v2266
        %2404 = vmatpush1.bf16.msra.mxu0 %v2265
        %2405 = vmatprep.subr.bf16.mxu0 %v2263
        %2406 = vmatpush1.bf16.msra.mxu0 %v2262
        %2407 = vmatprep.subr.bf16.mxu0 %v2260
        %2408 = vmatpush1.bf16.msra.mxu0 %v2259
        %2409 = vmatprep.subr.bf16.mxu0 %v2257
        %2410 = vmatpush1.bf16.msra.mxu0 %v2256
        %2411 = vmatprep.subr.bf16.mxu0 %v2254
        %2412 = vmatpush1.bf16.msra.mxu0 %v2253
        %2413 = vmatprep.subr.bf16.mxu0 %v2299
        %2414 = vmatpush2.bf16.msra.mxu0 %v2298
        %2415 = vmatprep.subr.bf16.mxu0 %v2296
        %2416 = vmatpush2.bf16.msra.mxu0 %v2295
        %2417 = vmatprep.subr.bf16.mxu0 %v2293
        %2418 = vmatpush2.bf16.msra.mxu0 %v2292
        %2419 = vmatprep.subr.bf16.mxu0 %v2290
        %2420 = vmatpush2.bf16.msra.mxu0 %v2289
        %2421 = vmatprep.subr.bf16.mxu0 %v2287
        %2422 = vmatpush2.bf16.msra.mxu0 %v2286
        %2423 = vmatprep.subr.bf16.mxu0 %v2284
        %2424 = vmatpush2.bf16.msra.mxu0 %v2283
        %2425 = vmatprep.subr.bf16.mxu0 %v2281
        %2426 = vmatpush2.bf16.msra.mxu0 %v2280
        %2427 = vmatprep.subr.bf16.mxu0 %v2278
        %2428 = vmatpush2.bf16.msra.mxu0 %v2277
        %2429 = vmatprep.mubr.bf16.mxu0 %v1915
        %2430 = vmatmul.mubr.bf16.gmra.mxu0 %v1914
        %v2431 = vpop.f32.mrf.mxu0
        %v2432 = vadd.f32 0.0, %v2431
        %v2433 = vpop.f32.mrf.mxu0
        %v2434 = vadd.f32 0.0, %v2433
        %v2435 = vpop.f32.mrf.mxu0
        %v2436 = vpop.f32.mrf.mxu0
        %2437 = vdwg.mxu0
        %2438 = vmatprep.subr.bf16.mxu0 %v2323
        %2439 = vmatpush1.bf16.msra.mxu0 %v2322
        %2440 = vmatprep.subr.bf16.mxu0 %v2320
        %2441 = vmatpush1.bf16.msra.mxu0 %v2319
        %2442 = vmatprep.subr.bf16.mxu0 %v2317
        %2443 = vmatpush1.bf16.msra.mxu0 %v2316
        %2444 = vmatprep.subr.bf16.mxu0 %v2314
        %2445 = vmatpush1.bf16.msra.mxu0 %v2313
        %2446 = vmatprep.subr.bf16.mxu0 %v2311
        %2447 = vmatpush1.bf16.msra.mxu0 %v2310
        %2448 = vmatprep.subr.bf16.mxu0 %v2308
        %2449 = vmatpush1.bf16.msra.mxu0 %v2307
        %2450 = vmatprep.subr.bf16.mxu0 %v2305
        %2451 = vmatpush1.bf16.msra.mxu0 %v2304
        %2452 = vmatprep.subr.bf16.mxu0 %v2302
        %2453 = vmatpush1.bf16.msra.mxu0 %v2301
        %2454 = vmatprep.subr.bf16.mxu0 0
        %2455 = vmatpush2.bf16.msra.mxu0 0
        %2456 = vmatprep.subr.bf16.mxu0 0
        %2457 = vmatpush2.bf16.msra.mxu0 0
        %2458 = vmatprep.subr.bf16.mxu0 0
        %2459 = vmatpush2.bf16.msra.mxu0 0
        %2460 = vmatprep.subr.bf16.mxu0 0
        %2461 = vmatpush2.bf16.msra.mxu0 0
        %2462 = vmatprep.subr.bf16.mxu0 0
        %2463 = vmatpush2.bf16.msra.mxu0 0
        %2464 = vmatprep.subr.bf16.mxu0 0
        %2465 = vmatpush2.bf16.msra.mxu0 0
        %2466 = vmatprep.subr.bf16.mxu0 0
        %2467 = vmatpush2.bf16.msra.mxu0 0
        %2468 = vmatprep.subr.bf16.mxu0 0
        %2469 = vmatpush2.bf16.msra.mxu0 0
        %2470 = vmatprep.mubr.bf16.mxu0 0
        %2471 = vmatmul.mubr.bf16.gmra.mxu0 %v1916
        %v2472 = vpop.f32.mrf.mxu0
        %v2473 = vadd.f32 %v2432, %v2472
        %v2474 = vpop.f32.mrf.mxu0
        %v2475 = vadd.f32 %v2434, %v2474
        %v2476 = vpop.f32.mrf.mxu0
        %v2477 = vpop.f32.mrf.mxu0
        %2478 = vdwg.mxu0
        %2479 = vmatprep.subr.bf16.mxu0 0
        %2480 = vmatpush1.bf16.msra.mxu0 %v2276
        %2481 = vmatprep.subr.bf16.mxu0 0
        %2482 = vmatpush1.bf16.msra.mxu0 %v2273
        %2483 = vmatprep.subr.bf16.mxu0 0
        %2484 = vmatpush1.bf16.msra.mxu0 %v2270
        %2485 = vmatprep.subr.bf16.mxu0 0
        %2486 = vmatpush1.bf16.msra.mxu0 %v2267
        %2487 = vmatprep.subr.bf16.mxu0 0
        %2488 = vmatpush1.bf16.msra.mxu0 %v2264
        %2489 = vmatprep.subr.bf16.mxu0 0
        %2490 = vmatpush1.bf16.msra.mxu0 %v2261
        %2491 = vmatprep.subr.bf16.mxu0 0
        %2492 = vmatpush1.bf16.msra.mxu0 %v2258
        %2493 = vmatprep.subr.bf16.mxu0 0
        %2494 = vmatpush1.bf16.msra.mxu0 %v2255
        %2495 = vmatprep.subr.bf16.mxu0 0
        %2496 = vmatpush2.bf16.msra.mxu0 %v2300
        %2497 = vmatprep.subr.bf16.mxu0 0
        %2498 = vmatpush2.bf16.msra.mxu0 %v2297
        %2499 = vmatprep.subr.bf16.mxu0 0
        %2500 = vmatpush2.bf16.msra.mxu0 %v2294
        %2501 = vmatprep.subr.bf16.mxu0 0
        %2502 = vmatpush2.bf16.msra.mxu0 %v2291
        %2503 = vmatprep.subr.bf16.mxu0 0
        %2504 = vmatpush2.bf16.msra.mxu0 %v2288
        %2505 = vmatprep.subr.bf16.mxu0 0
        %2506 = vmatpush2.bf16.msra.mxu0 %v2285
        %2507 = vmatprep.subr.bf16.mxu0 0
        %2508 = vmatpush2.bf16.msra.mxu0 %v2282
        %2509 = vmatprep.subr.bf16.mxu0 0
        %2510 = vmatpush2.bf16.msra.mxu0 %v2279
        %2511 = vmatprep.mubr.bf16.mxu0 %v1915
        %2512 = vmatmul.mubr.bf16.gmra.mxu0 %v1914
        %v2513 = vpop.f32.mrf.mxu0
        %v2514 = vadd.f32 0.0, %v2513
        %v2515 = vpop.f32.mrf.mxu0
        %v2516 = vpop.f32.mrf.mxu0
        %v2517 = vpop.f32.mrf.mxu0
        %2518 = vdwg.mxu0
        %2519 = vmatprep.subr.bf16.mxu0 0
        %2520 = vmatpush1.bf16.msra.mxu0 %v2324
        %2521 = vmatprep.subr.bf16.mxu0 0
        %2522 = vmatpush1.bf16.msra.mxu0 %v2321
        %2523 = vmatprep.subr.bf16.mxu0 0
        %2524 = vmatpush1.bf16.msra.mxu0 %v2318
        %2525 = vmatprep.subr.bf16.mxu0 0
        %2526 = vmatpush1.bf16.msra.mxu0 %v2315
        %2527 = vmatprep.subr.bf16.mxu0 0
        %2528 = vmatpush1.bf16.msra.mxu0 %v2312
        %2529 = vmatprep.subr.bf16.mxu0 0
        %2530 = vmatpush1.bf16.msra.mxu0 %v2309
        %2531 = vmatprep.subr.bf16.mxu0 0
        %2532 = vmatpush1.bf16.msra.mxu0 %v2306
        %2533 = vmatprep.subr.bf16.mxu0 0
        %2534 = vmatpush1.bf16.msra.mxu0 %v2303
        %2535 = vmatprep.subr.bf16.mxu0 0
        %2536 = vmatpush2.bf16.msra.mxu0 0
        %2537 = vmatprep.subr.bf16.mxu0 0
        %2538 = vmatpush2.bf16.msra.mxu0 0
        %2539 = vmatprep.subr.bf16.mxu0 0
        %2540 = vmatpush2.bf16.msra.mxu0 0
        %2541 = vmatprep.subr.bf16.mxu0 0
        %2542 = vmatpush2.bf16.msra.mxu0 0
        %2543 = vmatprep.subr.bf16.mxu0 0
        %2544 = vmatpush2.bf16.msra.mxu0 0
        %2545 = vmatprep.subr.bf16.mxu0 0
        %2546 = vmatpush2.bf16.msra.mxu0 0
        %2547 = vmatprep.subr.bf16.mxu0 0
        %2548 = vmatpush2.bf16.msra.mxu0 0
        %2549 = vmatprep.subr.bf16.mxu0 0
        %2550 = vmatpush2.bf16.msra.mxu0 0
        %2551 = vmatprep.mubr.bf16.mxu0 0
        %2552 = vmatmul.mubr.bf16.gmra.mxu0 %v1916
        %v2553 = vpop.f32.mrf.mxu0
        %v2554 = vadd.f32 %v2514, %v2553
        %v2555 = vpop.f32.mrf.mxu0
        %v2556 = vpop.f32.mrf.mxu0
        %v2557 = vpop.f32.mrf.mxu0
        %2558 = vdwg.mxu0
        %v2559 = vpack.c.bf16 %v2473, %v2473
        %v2560 = vpack.c.bf16 %v2475, %v2475
        %v2561 = vpack.c.bf16 %v2554, %v2554
        %v2562 = vlaneseq
        %v2563 = vshrl.u32 %v2562, 7
        %v2564 = vstv %s632
        %v2565 = vadd.s32 %v2564, %v2563
        %v2566 = vlaneseq
        %v2567 = vand.u32 %v2566, 127
        %s2568 = sadd.s32 %s41, 1
        // While loop
        $region129: #{tpu_custom_call.1} parent=71 // loop_pre_header
          _
        $region130: #{tpu_custom_call.1} parent=71 // loop_header
          %s2570 = sphi 0, %s2572
          %p2571 = scmp.ge.s32.totalorder %s2570, %s2568
          %v2575 = vphi -1e+30, %v2641
          %v2576 = vphi 0.0, %v2652
          %v2577 = vphi 0.0, %v2702
        $region131: #{tpu_custom_call.1} parent=71 // loop_header_branch
          %2574 = sbr.rel (%p2571) target = $region135
        $region132: #{tpu_custom_call.1} parent=71 // loop_body
          %s2578 = smul.u32 %s2570, 8
          %s2579 = sshra.s32 %s2578, 3
          %s2580 = sand.u32 %s2578, 7
          %s2581 = smul.u32 %s2579, 6
          %s2582 = smul.addr %s2581, 4
          %s2583 = scalar_lea.vmem [#allocation2], %s2582
          %v2584 = vld [vmem:[%s2583] sm:$0xf]
          %v2585 = vld [vmem:[%s2583 + $0xc] sm:$0xf]
          %vm2586 = vcmask 523264
          %v2588 = vsel %vm2586, %v2559, 0
          %v2591 = vsel %vm2586, %v2584, 0
          %2593 = vmatprep.subr.bf16.mxu0 0
          %2594 = vmatpush1.bf16.xpose.msra.mxu0 0
          %2595 = vmatprep.subr.bf16.mxu0 0
          %2596 = vmatpush1.bf16.xpose.msra.mxu0 0
          %2597 = vmatprep.subr.bf16.mxu0 0
          %2598 = vmatpush1.bf16.xpose.msra.mxu0 0
          %2599 = vmatprep.subr.bf16.mxu0 0
          %2600 = vmatpush1.bf16.xpose.msra.mxu0 0
          %2601 = vmatprep.subr.bf16.mxu0 0
          %2602 = vmatpush1.bf16.xpose.msra.mxu0 0
          %2603 = vmatprep.subr.bf16.mxu0 0
          %2604 = vmatpush1.bf16.xpose.msra.mxu0 0
          %2605 = vmatprep.subr.bf16.mxu0 0
          %2606 = vmatpush1.bf16.xpose.msra.mxu0 0
          %2607 = vmatprep.subr.bf16.mxu0 0
          %2608 = vmatpush1.bf16.xpose.msra.mxu0 %v2591
          %2609 = vmatprep.subr.bf16.mxu0 0
          %2610 = vmatpush2.bf16.xpose.msra.mxu0 0
          %2611 = vmatprep.subr.bf16.mxu0 0
          %2612 = vmatpush2.bf16.xpose.msra.mxu0 0
          %2613 = vmatprep.subr.bf16.mxu0 0
          %2614 = vmatpush2.bf16.xpose.msra.mxu0 0
          %2615 = vmatprep.subr.bf16.mxu0 0
          %2616 = vmatpush2.bf16.xpose.msra.mxu0 0
          %2617 = vmatprep.subr.bf16.mxu0 0
          %2618 = vmatpush2.bf16.xpose.msra.mxu0 0
          %2619 = vmatprep.subr.bf16.mxu0 0
          %2620 = vmatpush2.bf16.xpose.msra.mxu0 0
          %2621 = vmatprep.subr.bf16.mxu0 0
          %2622 = vmatpush2.bf16.xpose.msra.mxu0 0
          %2623 = vmatprep.subr.bf16.mxu0 0
          %2624 = vmatpush2.bf16.xpose.msra.mxu0 0
          %2625 = vmatprep.mubr.bf16.mxu0 0
          %2626 = vmatmul.mubr.bf16.gmra.mxu0 %v2588
          %v2627 = vpop.f32.mrf.mxu0
          %v2628 = vadd.f32 0.0, %v2627
          %v2629 = vpop.f32.mrf.mxu0
          %v2630 = vpop.f32.mrf.mxu0
          %v2631 = vpop.f32.mrf.mxu0
          %2632 = vdwg.mxu0
          %v2633 = vstv %s2578
          %v2634 = vadd.s32 %v2633, %v2567
          %vm2635 = vcmp.ge.s32.totalorder %v2565, %v2634
          %v2636 = vsel %vm2635, %v2628, -1e+30
          %vm2637 = vcmask 64512
          %v2638 = vsel %vm2637, %v2636, -inf
          %2639 = vmax.xlane.f32.xlu0 %v2638
          %v2640 = vpop.xlane.xlu0 %2639
          %v2641 = vmax.f32 %v2575, %v2640
          %v2642 = vsub.f32 %v2575, %v2641
          %v2643 = vmul.f32 %v2642, 1.442695
          %v2644 = vpow.pop %v2643
          %v2645 = vsub.f32 %v2636, %v2641
          %v2646 = vmul.f32 %v2645, 1.442695
          %v2647 = vpow.pop %v2646
          %v2648 = vmul.f32 %v2644, %v2576
          %v2649 = vsel %vm2637, %v2647, 0.0
          %2650 = vadd.xlane.f32.xlu0 %v2649
          %v2651 = vpop.xlane.xlu0 %2650
          %v2652 = vadd.f32 %v2648, %v2651
          %v2653 = vmul.f32 %v2644, %v2577
          %v2654 = vpack.c.bf16 %v2647, %v2647
          %v2656 = vsel %vm2637, %v2654, 0
          %vm2658 = vcmask 1043456
          %v2660 = vsel %vm2658, %v2585, 0
          %2662 = vmatprep.subr.bf16.mxu0 0
          %2663 = vmatpush1.bf16.msra.mxu0 0
          %2664 = vmatprep.subr.bf16.mxu0 0
          %2665 = vmatpush1.bf16.msra.mxu0 0
          %2666 = vmatprep.subr.bf16.mxu0 0
          %2667 = vmatpush1.bf16.msra.mxu0 0
          %2668 = vmatprep.subr.bf16.mxu0 0
          %2669 = vmatpush1.bf16.msra.mxu0 0
          %2670 = vmatprep.subr.bf16.mxu0 0
          %2671 = vmatpush1.bf16.msra.mxu0 0
          %2672 = vmatprep.subr.bf16.mxu0 0
          %2673 = vmatpush1.bf16.msra.mxu0 0
          %2674 = vmatprep.subr.bf16.mxu0 0
          %2675 = vmatpush1.bf16.msra.mxu0 0
          %2676 = vmatprep.subr.bf16.mxu0 0
          %2677 = vmatpush1.bf16.msra.mxu0 %v2660
          %2678 = vmatprep.subr.bf16.mxu0 0
          %2679 = vmatpush2.bf16.msra.mxu0 0
          %2680 = vmatprep.subr.bf16.mxu0 0
          %2681 = vmatpush2.bf16.msra.mxu0 0
          %2682 = vmatprep.subr.bf16.mxu0 0
          %2683 = vmatpush2.bf16.msra.mxu0 0
          %2684 = vmatprep.subr.bf16.mxu0 0
          %2685 = vmatpush2.bf16.msra.mxu0 0
          %2686 = vmatprep.subr.bf16.mxu0 0
          %2687 = vmatpush2.bf16.msra.mxu0 0
          %2688 = vmatprep.subr.bf16.mxu0 0
          %2689 = vmatpush2.bf16.msra.mxu0 0
          %2690 = vmatprep.subr.bf16.mxu0 0
          %2691 = vmatpush2.bf16.msra.mxu0 0
          %2692 = vmatprep.subr.bf16.mxu0 0
          %2693 = vmatpush2.bf16.msra.mxu0 0
          %2694 = vmatprep.mubr.bf16.mxu0 0
          %2695 = vmatmul.mubr.bf16.gmra.mxu0 %v2656
          %v2696 = vpop.f32.mrf.mxu0
          %v2697 = vadd.f32 0.0, %v2696
          %v2698 = vpop.f32.mrf.mxu0
          %v2699 = vpop.f32.mrf.mxu0
          %v2700 = vpop.f32.mrf.mxu0
          %2701 = vdwg.mxu0
          %v2702 = vadd.f32 %v2653, %v2697
        $region133: #{tpu_custom_call.1} parent=71 // loop_footer
          %s2572 = sadd.s32 %s2570, 1
        $region134: #{tpu_custom_call.1} parent=71 // loop_footer_branch
          %2569 = sbr.rel target = $region130
        $region135: #{tpu_custom_call.1} parent=71 // loop_exit
          _
        %v2703 = vrcp.pop %v2576
        %v2704 = vmul.f32 %v2577, %v2703
        %v2705 = vpack.c.bf16 %v2704, %v2704
        %vm2706 = vcmask 519168
        %2707 = vst.msk [vmem:[#allocation3] sm:$0xf] %vm2706, %v2705
        // While loop
        $region136: #{tpu_custom_call.1} parent=71 // loop_pre_header
          _
        $region137: #{tpu_custom_call.1} parent=71 // loop_header
          %s2709 = sphi 0, %s2711
          %p2710 = scmp.ge.s32.totalorder %s2709, %s2568
          %v2714 = vphi -1e+30, %v2788
          %v2715 = vphi 0.0, %v2799
          %v2716 = vphi 0.0, %v2854
        $region138: #{tpu_custom_call.1} parent=71 // loop_header_branch
          %2713 = sbr.rel (%p2710) target = $region142
        $region139: #{tpu_custom_call.1} parent=71 // loop_body
          %s2717 = smul.u32 %s2709, 8
          %s2718 = sshra.s32 %s2717, 3
          %s2719 = sand.u32 %s2717, 7
          %s2720 = smul.u32 %s2718, 6
          %s2721 = smul.addr %s2720, 4
          %s2722 = scalar_lea.vmem [#allocation2], %s2721
          %v2723 = vld [vmem:[%s2722] sm:$0xf]
          %v2724 = vld [vmem:[%s2722 + $0xc] sm:$0xf]
          %2726 = vrot.lane.b32.xlu0 %v2559, 64
          %v2727 = vpop.permute.xlu0 %2726
          %v2729 = vunpack.c.l.b16 %v2723
          %v2730 = vpack.c.b16 %v2729, %v2729
          %2731 = vrot.lane.b32.xlu0 %v2730, 64
          %v2732 = vpop.permute.xlu0 %2731
          %vm2733 = vcmask 523264
          %v2735 = vsel %vm2733, %v2727, 0
          %v2738 = vsel %vm2733, %v2732, 0
          %2740 = vmatprep.subr.bf16.mxu0 0
          %2741 = vmatpush1.bf16.xpose.msra.mxu0 0
          %2742 = vmatprep.subr.bf16.mxu0 0
          %2743 = vmatpush1.bf16.xpose.msra.mxu0 0
          %2744 = vmatprep.subr.bf16.mxu0 0
          %2745 = vmatpush1.bf16.xpose.msra.mxu0 0
          %2746 = vmatprep.subr.bf16.mxu0 0
          %2747 = vmatpush1.bf16.xpose.msra.mxu0 0
          %2748 = vmatprep.subr.bf16.mxu0 0
          %2749 = vmatpush1.bf16.xpose.msra.mxu0 0
          %2750 = vmatprep.subr.bf16.mxu0 0
          %2751 = vmatpush1.bf16.xpose.msra.mxu0 0
          %2752 = vmatprep.subr.bf16.mxu0 0
          %2753 = vmatpush1.bf16.xpose.msra.mxu0 0
          %2754 = vmatprep.subr.bf16.mxu0 0
          %2755 = vmatpush1.bf16.xpose.msra.mxu0 %v2738
          %2756 = vmatprep.subr.bf16.mxu0 0
          %2757 = vmatpush2.bf16.xpose.msra.mxu0 0
          %2758 = vmatprep.subr.bf16.mxu0 0
          %2759 = vmatpush2.bf16.xpose.msra.mxu0 0
          %2760 = vmatprep.subr.bf16.mxu0 0
          %2761 = vmatpush2.bf16.xpose.msra.mxu0 0
          %2762 = vmatprep.subr.bf16.mxu0 0
          %2763 = vmatpush2.bf16.xpose.msra.mxu0 0
          %2764 = vmatprep.subr.bf16.mxu0 0
          %2765 = vmatpush2.bf16.xpose.msra.mxu0 0
          %2766 = vmatprep.subr.bf16.mxu0 0
          %2767 = vmatpush2.bf16.xpose.msra.mxu0 0
          %2768 = vmatprep.subr.bf16.mxu0 0
          %2769 = vmatpush2.bf16.xpose.msra.mxu0 0
          %2770 = vmatprep.subr.bf16.mxu0 0
          %2771 = vmatpush2.bf16.xpose.msra.mxu0 0
          %2772 = vmatprep.mubr.bf16.mxu0 0
          %2773 = vmatmul.mubr.bf16.gmra.mxu0 %v2735
          %v2774 = vpop.f32.mrf.mxu0
          %v2775 = vadd.f32 0.0, %v2774
          %v2776 = vpop.f32.mrf.mxu0
          %v2777 = vpop.f32.mrf.mxu0
          %v2778 = vpop.f32.mrf.mxu0
          %2779 = vdwg.mxu0
          %v2780 = vstv %s2717
          %v2781 = vadd.s32 %v2780, %v2567
          %vm2782 = vcmp.ge.s32.totalorder %v2565, %v2781
          %v2783 = vsel %vm2782, %v2775, -1e+30
          %vm2784 = vcmask 64512
          %v2785 = vsel %vm2784, %v2783, -inf
          %2786 = vmax.xlane.f32.xlu0 %v2785
          %v2787 = vpop.xlane.xlu0 %2786
          %v2788 = vmax.f32 %v2714, %v2787
          %v2789 = vsub.f32 %v2714, %v2788
          %v2790 = vmul.f32 %v2789, 1.442695
          %v2791 = vpow.pop %v2790
          %v2792 = vsub.f32 %v2783, %v2788
          %v2793 = vmul.f32 %v2792, 1.442695
          %v2794 = vpow.pop %v2793
          %v2795 = vmul.f32 %v2791, %v2715
          %v2796 = vsel %vm2784, %v2794, 0.0
          %2797 = vadd.xlane.f32.xlu0 %v2796
          %v2798 = vpop.xlane.xlu0 %2797
          %v2799 = vadd.f32 %v2795, %v2798
          %v2800 = vmul.f32 %v2791, %v2716
          %v2801 = vpack.c.bf16 %v2794, %v2794
          %v2803 = vunpack.c.l.b16 %v2724
          %v2804 = vpack.c.b16 %v2803, %v2803
          %2805 = vrot.lane.b32.xlu0 %v2804, 64
          %v2806 = vpop.permute.xlu0 %2805
          %v2808 = vsel %vm2784, %v2801, 0
          %vm2810 = vcmask 1043456
          %v2812 = vsel %vm2810, %v2806, 0
          %2814 = vmatprep.subr.bf16.mxu0 0
          %2815 = vmatpush1.bf16.msra.mxu0 0
          %2816 = vmatprep.subr.bf16.mxu0 0
          %2817 = vmatpush1.bf16.msra.mxu0 0
          %2818 = vmatprep.subr.bf16.mxu0 0
          %2819 = vmatpush1.bf16.msra.mxu0 0
          %2820 = vmatprep.subr.bf16.mxu0 0
          %2821 = vmatpush1.bf16.msra.mxu0 0
          %2822 = vmatprep.subr.bf16.mxu0 0
          %2823 = vmatpush1.bf16.msra.mxu0 0
          %2824 = vmatprep.subr.bf16.mxu0 0
          %2825 = vmatpush1.bf16.msra.mxu0 0
          %2826 = vmatprep.subr.bf16.mxu0 0
          %2827 = vmatpush1.bf16.msra.mxu0 0
          %2828 = vmatprep.subr.bf16.mxu0 0
          %2829 = vmatpush1.bf16.msra.mxu0 %v2812
          %2830 = vmatprep.subr.bf16.mxu0 0
          %2831 = vmatpush2.bf16.msra.mxu0 0
          %2832 = vmatprep.subr.bf16.mxu0 0
          %2833 = vmatpush2.bf16.msra.mxu0 0
          %2834 = vmatprep.subr.bf16.mxu0 0
          %2835 = vmatpush2.bf16.msra.mxu0 0
          %2836 = vmatprep.subr.bf16.mxu0 0
          %2837 = vmatpush2.bf16.msra.mxu0 0
          %2838 = vmatprep.subr.bf16.mxu0 0
          %2839 = vmatpush2.bf16.msra.mxu0 0
          %2840 = vmatprep.subr.bf16.mxu0 0
          %2841 = vmatpush2.bf16.msra.mxu0 0
          %2842 = vmatprep.subr.bf16.mxu0 0
          %2843 = vmatpush2.bf16.msra.mxu0 0
          %2844 = vmatprep.subr.bf16.mxu0 0
          %2845 = vmatpush2.bf16.msra.mxu0 0
          %2846 = vmatprep.mubr.bf16.mxu0 0
          %2847 = vmatmul.mubr.bf16.gmra.mxu0 %v2808
          %v2848 = vpop.f32.mrf.mxu0
          %v2849 = vadd.f32 0.0, %v2848
          %v2850 = vpop.f32.mrf.mxu0
          %v2851 = vpop.f32.mrf.mxu0
          %v2852 = vpop.f32.mrf.mxu0
          %2853 = vdwg.mxu0
          %v2854 = vadd.f32 %v2800, %v2849
        $region140: #{tpu_custom_call.1} parent=71 // loop_footer
          %s2711 = sadd.s32 %s2709, 1
        $region141: #{tpu_custom_call.1} parent=71 // loop_footer_branch
          %2708 = sbr.rel target = $region137
        $region142: #{tpu_custom_call.1} parent=71 // loop_exit
          _
        %v2855 = vrcp.pop %v2715
        %v2856 = vmul.f32 %v2716, %v2855
        %v2857 = vpack.c.bf16 %v2856, %v2856
        %v2859 = vunpack.c.l.b16 %v2857
        %v2860 = vpack.c.b16 %v2859, %v2859
        %2861 = vrot.lane.b32.xlu0 %v2860, 64
        %v2862 = vpop.permute.xlu0 %2861
        %vm2864 = vcmask 1043968
        %2865 = vst.msk [vmem:[#allocation3] sm:$0xf] %vm2864, %v2862
        // While loop
        $region143: #{tpu_custom_call.1} parent=71 // loop_pre_header
          _
        $region144: #{tpu_custom_call.1} parent=71 // loop_header
          %s2867 = sphi 0, %s2869
          %p2868 = scmp.ge.s32.totalorder %s2867, %s2568
          %v2872 = vphi -1e+30, %v2938
          %v2873 = vphi 0.0, %v2949
          %v2874 = vphi 0.0, %v2999
        $region145: #{tpu_custom_call.1} parent=71 // loop_header_branch
          %2871 = sbr.rel (%p2868) target = $region149
        $region146: #{tpu_custom_call.1} parent=71 // loop_body
          %s2875 = smul.u32 %s2867, 8
          %s2876 = sshra.s32 %s2875, 3
          %s2877 = sand.u32 %s2875, 7
          %s2878 = smul.u32 %s2876, 6
          %s2879 = smul.addr %s2878, 4
          %s2880 = scalar_lea.vmem [#allocation2], %s2879
          %v2881 = vld [vmem:[%s2880 + $0x4] sm:$0xf]
          %v2882 = vld [vmem:[%s2880 + $0x10] sm:$0xf]
          %vm2883 = vcmask 523264
          %v2885 = vsel %vm2883, %v2560, 0
          %v2888 = vsel %vm2883, %v2881, 0
          %2890 = vmatprep.subr.bf16.mxu0 0
          %2891 = vmatpush1.bf16.xpose.msra.mxu0 0
          %2892 = vmatprep.subr.bf16.mxu0 0
          %2893 = vmatpush1.bf16.xpose.msra.mxu0 0
          %2894 = vmatprep.subr.bf16.mxu0 0
          %2895 = vmatpush1.bf16.xpose.msra.mxu0 0
          %2896 = vmatprep.subr.bf16.mxu0 0
          %2897 = vmatpush1.bf16.xpose.msra.mxu0 0
          %2898 = vmatprep.subr.bf16.mxu0 0
          %2899 = vmatpush1.bf16.xpose.msra.mxu0 0
          %2900 = vmatprep.subr.bf16.mxu0 0
          %2901 = vmatpush1.bf16.xpose.msra.mxu0 0
          %2902 = vmatprep.subr.bf16.mxu0 0
          %2903 = vmatpush1.bf16.xpose.msra.mxu0 0
          %2904 = vmatprep.subr.bf16.mxu0 0
          %2905 = vmatpush1.bf16.xpose.msra.mxu0 %v2888
          %2906 = vmatprep.subr.bf16.mxu0 0
          %2907 = vmatpush2.bf16.xpose.msra.mxu0 0
          %2908 = vmatprep.subr.bf16.mxu0 0
          %2909 = vmatpush2.bf16.xpose.msra.mxu0 0
          %2910 = vmatprep.subr.bf16.mxu0 0
          %2911 = vmatpush2.bf16.xpose.msra.mxu0 0
          %2912 = vmatprep.subr.bf16.mxu0 0
          %2913 = vmatpush2.bf16.xpose.msra.mxu0 0
          %2914 = vmatprep.subr.bf16.mxu0 0
          %2915 = vmatpush2.bf16.xpose.msra.mxu0 0
          %2916 = vmatprep.subr.bf16.mxu0 0
          %2917 = vmatpush2.bf16.xpose.msra.mxu0 0
          %2918 = vmatprep.subr.bf16.mxu0 0
          %2919 = vmatpush2.bf16.xpose.msra.mxu0 0
          %2920 = vmatprep.subr.bf16.mxu0 0
          %2921 = vmatpush2.bf16.xpose.msra.mxu0 0
          %2922 = vmatprep.mubr.bf16.mxu0 0
          %2923 = vmatmul.mubr.bf16.gmra.mxu0 %v2885
          %v2924 = vpop.f32.mrf.mxu0
          %v2925 = vadd.f32 0.0, %v2924
          %v2926 = vpop.f32.mrf.mxu0
          %v2927 = vpop.f32.mrf.mxu0
          %v2928 = vpop.f32.mrf.mxu0
          %2929 = vdwg.mxu0
          %v2930 = vstv %s2875
          %v2931 = vadd.s32 %v2930, %v2567
          %vm2932 = vcmp.ge.s32.totalorder %v2565, %v2931
          %v2933 = vsel %vm2932, %v2925, -1e+30
          %vm2934 = vcmask 64512
          %v2935 = vsel %vm2934, %v2933, -inf
          %2936 = vmax.xlane.f32.xlu0 %v2935
          %v2937 = vpop.xlane.xlu0 %2936
          %v2938 = vmax.f32 %v2872, %v2937
          %v2939 = vsub.f32 %v2872, %v2938
          %v2940 = vmul.f32 %v2939, 1.442695
          %v2941 = vpow.pop %v2940
          %v2942 = vsub.f32 %v2933, %v2938
          %v2943 = vmul.f32 %v2942, 1.442695
          %v2944 = vpow.pop %v2943
          %v2945 = vmul.f32 %v2941, %v2873
          %v2946 = vsel %vm2934, %v2944, 0.0
          %2947 = vadd.xlane.f32.xlu0 %v2946
          %v2948 = vpop.xlane.xlu0 %2947
          %v2949 = vadd.f32 %v2945, %v2948
          %v2950 = vmul.f32 %v2941, %v2874
          %v2951 = vpack.c.bf16 %v2944, %v2944
          %v2953 = vsel %vm2934, %v2951, 0
          %vm2955 = vcmask 1043456
          %v2957 = vsel %vm2955, %v2882, 0
          %2959 = vmatprep.subr.bf16.mxu0 0
          %2960 = vmatpush1.bf16.msra.mxu0 0
          %2961 = vmatprep.subr.bf16.mxu0 0
          %2962 = vmatpush1.bf16.msra.mxu0 0
          %2963 = vmatprep.subr.bf16.mxu0 0
          %2964 = vmatpush1.bf16.msra.mxu0 0
          %2965 = vmatprep.subr.bf16.mxu0 0
          %2966 = vmatpush1.bf16.msra.mxu0 0
          %2967 = vmatprep.subr.bf16.mxu0 0
          %2968 = vmatpush1.bf16.msra.mxu0 0
          %2969 = vmatprep.subr.bf16.mxu0 0
          %2970 = vmatpush1.bf16.msra.mxu0 0
          %2971 = vmatprep.subr.bf16.mxu0 0
          %2972 = vmatpush1.bf16.msra.mxu0 0
          %2973 = vmatprep.subr.bf16.mxu0 0
          %2974 = vmatpush1.bf16.msra.mxu0 %v2957
          %2975 = vmatprep.subr.bf16.mxu0 0
          %2976 = vmatpush2.bf16.msra.mxu0 0
          %2977 = vmatprep.subr.bf16.mxu0 0
          %2978 = vmatpush2.bf16.msra.mxu0 0
          %2979 = vmatprep.subr.bf16.mxu0 0
          %2980 = vmatpush2.bf16.msra.mxu0 0
          %2981 = vmatprep.subr.bf16.mxu0 0
          %2982 = vmatpush2.bf16.msra.mxu0 0
          %2983 = vmatprep.subr.bf16.mxu0 0
          %2984 = vmatpush2.bf16.msra.mxu0 0
          %2985 = vmatprep.subr.bf16.mxu0 0
          %2986 = vmatpush2.bf16.msra.mxu0 0
          %2987 = vmatprep.subr.bf16.mxu0 0
          %2988 = vmatpush2.bf16.msra.mxu0 0
          %2989 = vmatprep.subr.bf16.mxu0 0
          %2990 = vmatpush2.bf16.msra.mxu0 0
          %2991 = vmatprep.mubr.bf16.mxu0 0
          %2992 = vmatmul.mubr.bf16.gmra.mxu0 %v2953
          %v2993 = vpop.f32.mrf.mxu0
          %v2994 = vadd.f32 0.0, %v2993
          %v2995 = vpop.f32.mrf.mxu0
          %v2996 = vpop.f32.mrf.mxu0
          %v2997 = vpop.f32.mrf.mxu0
          %2998 = vdwg.mxu0
          %v2999 = vadd.f32 %v2950, %v2994
        $region147: #{tpu_custom_call.1} parent=71 // loop_footer
          %s2869 = sadd.s32 %s2867, 1
        $region148: #{tpu_custom_call.1} parent=71 // loop_footer_branch
          %2866 = sbr.rel target = $region144
        $region149: #{tpu_custom_call.1} parent=71 // loop_exit
          _
        %v3000 = vrcp.pop %v2873
        %v3001 = vmul.f32 %v2874, %v3000
        %v3002 = vpack.c.bf16 %v3001, %v3001
        %3003 = vst.msk [vmem:[#allocation3 + $0x4] sm:$0xf] %vm2706, %v3002
        // While loop
        $region150: #{tpu_custom_call.1} parent=71 // loop_pre_header
          _
        $region151: #{tpu_custom_call.1} parent=71 // loop_header
          %s3005 = sphi 0, %s3007
          %p3006 = scmp.ge.s32.totalorder %s3005, %s2568
          %v3010 = vphi -1e+30, %v3084
          %v3011 = vphi 0.0, %v3095
          %v3012 = vphi 0.0, %v3150
        $region152: #{tpu_custom_call.1} parent=71 // loop_header_branch
          %3009 = sbr.rel (%p3006) target = $region156
        $region153: #{tpu_custom_call.1} parent=71 // loop_body
          %s3013 = smul.u32 %s3005, 8
          %s3014 = sshra.s32 %s3013, 3
          %s3015 = sand.u32 %s3013, 7
          %s3016 = smul.u32 %s3014, 6
          %s3017 = smul.addr %s3016, 4
          %s3018 = scalar_lea.vmem [#allocation2], %s3017
          %v3019 = vld [vmem:[%s3018 + $0x4] sm:$0xf]
          %v3020 = vld [vmem:[%s3018 + $0x10] sm:$0xf]
          %3022 = vrot.lane.b32.xlu0 %v2560, 64
          %v3023 = vpop.permute.xlu0 %3022
          %v3025 = vunpack.c.l.b16 %v3019
          %v3026 = vpack.c.b16 %v3025, %v3025
          %3027 = vrot.lane.b32.xlu0 %v3026, 64
          %v3028 = vpop.permute.xlu0 %3027
          %vm3029 = vcmask 523264
          %v3031 = vsel %vm3029, %v3023, 0
          %v3034 = vsel %vm3029, %v3028, 0
          %3036 = vmatprep.subr.bf16.mxu0 0
          %3037 = vmatpush1.bf16.xpose.msra.mxu0 0
          %3038 = vmatprep.subr.bf16.mxu0 0
          %3039 = vmatpush1.bf16.xpose.msra.mxu0 0
          %3040 = vmatprep.subr.bf16.mxu0 0
          %3041 = vmatpush1.bf16.xpose.msra.mxu0 0
          %3042 = vmatprep.subr.bf16.mxu0 0
          %3043 = vmatpush1.bf16.xpose.msra.mxu0 0
          %3044 = vmatprep.subr.bf16.mxu0 0
          %3045 = vmatpush1.bf16.xpose.msra.mxu0 0
          %3046 = vmatprep.subr.bf16.mxu0 0
          %3047 = vmatpush1.bf16.xpose.msra.mxu0 0
          %3048 = vmatprep.subr.bf16.mxu0 0
          %3049 = vmatpush1.bf16.xpose.msra.mxu0 0
          %3050 = vmatprep.subr.bf16.mxu0 0
          %3051 = vmatpush1.bf16.xpose.msra.mxu0 %v3034
          %3052 = vmatprep.subr.bf16.mxu0 0
          %3053 = vmatpush2.bf16.xpose.msra.mxu0 0
          %3054 = vmatprep.subr.bf16.mxu0 0
          %3055 = vmatpush2.bf16.xpose.msra.mxu0 0
          %3056 = vmatprep.subr.bf16.mxu0 0
          %3057 = vmatpush2.bf16.xpose.msra.mxu0 0
          %3058 = vmatprep.subr.bf16.mxu0 0
          %3059 = vmatpush2.bf16.xpose.msra.mxu0 0
          %3060 = vmatprep.subr.bf16.mxu0 0
          %3061 = vmatpush2.bf16.xpose.msra.mxu0 0
          %3062 = vmatprep.subr.bf16.mxu0 0
          %3063 = vmatpush2.bf16.xpose.msra.mxu0 0
          %3064 = vmatprep.subr.bf16.mxu0 0
          %3065 = vmatpush2.bf16.xpose.msra.mxu0 0
          %3066 = vmatprep.subr.bf16.mxu0 0
          %3067 = vmatpush2.bf16.xpose.msra.mxu0 0
          %3068 = vmatprep.mubr.bf16.mxu0 0
          %3069 = vmatmul.mubr.bf16.gmra.mxu0 %v3031
          %v3070 = vpop.f32.mrf.mxu0
          %v3071 = vadd.f32 0.0, %v3070
          %v3072 = vpop.f32.mrf.mxu0
          %v3073 = vpop.f32.mrf.mxu0
          %v3074 = vpop.f32.mrf.mxu0
          %3075 = vdwg.mxu0
          %v3076 = vstv %s3013
          %v3077 = vadd.s32 %v3076, %v2567
          %vm3078 = vcmp.ge.s32.totalorder %v2565, %v3077
          %v3079 = vsel %vm3078, %v3071, -1e+30
          %vm3080 = vcmask 64512
          %v3081 = vsel %vm3080, %v3079, -inf
          %3082 = vmax.xlane.f32.xlu0 %v3081
          %v3083 = vpop.xlane.xlu0 %3082
          %v3084 = vmax.f32 %v3010, %v3083
          %v3085 = vsub.f32 %v3010, %v3084
          %v3086 = vmul.f32 %v3085, 1.442695
          %v3087 = vpow.pop %v3086
          %v3088 = vsub.f32 %v3079, %v3084
          %v3089 = vmul.f32 %v3088, 1.442695
          %v3090 = vpow.pop %v3089
          %v3091 = vmul.f32 %v3087, %v3011
          %v3092 = vsel %vm3080, %v3090, 0.0
          %3093 = vadd.xlane.f32.xlu0 %v3092
          %v3094 = vpop.xlane.xlu0 %3093
          %v3095 = vadd.f32 %v3091, %v3094
          %v3096 = vmul.f32 %v3087, %v3012
          %v3097 = vpack.c.bf16 %v3090, %v3090
          %v3099 = vunpack.c.l.b16 %v3020
          %v3100 = vpack.c.b16 %v3099, %v3099
          %3101 = vrot.lane.b32.xlu0 %v3100, 64
          %v3102 = vpop.permute.xlu0 %3101
          %v3104 = vsel %vm3080, %v3097, 0
          %vm3106 = vcmask 1043456
          %v3108 = vsel %vm3106, %v3102, 0
          %3110 = vmatprep.subr.bf16.mxu0 0
          %3111 = vmatpush1.bf16.msra.mxu0 0
          %3112 = vmatprep.subr.bf16.mxu0 0
          %3113 = vmatpush1.bf16.msra.mxu0 0
          %3114 = vmatprep.subr.bf16.mxu0 0
          %3115 = vmatpush1.bf16.msra.mxu0 0
          %3116 = vmatprep.subr.bf16.mxu0 0
          %3117 = vmatpush1.bf16.msra.mxu0 0
          %3118 = vmatprep.subr.bf16.mxu0 0
          %3119 = vmatpush1.bf16.msra.mxu0 0
          %3120 = vmatprep.subr.bf16.mxu0 0
          %3121 = vmatpush1.bf16.msra.mxu0 0
          %3122 = vmatprep.subr.bf16.mxu0 0
          %3123 = vmatpush1.bf16.msra.mxu0 0
          %3124 = vmatprep.subr.bf16.mxu0 0
          %3125 = vmatpush1.bf16.msra.mxu0 %v3108
          %3126 = vmatprep.subr.bf16.mxu0 0
          %3127 = vmatpush2.bf16.msra.mxu0 0
          %3128 = vmatprep.subr.bf16.mxu0 0
          %3129 = vmatpush2.bf16.msra.mxu0 0
          %3130 = vmatprep.subr.bf16.mxu0 0
          %3131 = vmatpush2.bf16.msra.mxu0 0
          %3132 = vmatprep.subr.bf16.mxu0 0
          %3133 = vmatpush2.bf16.msra.mxu0 0
          %3134 = vmatprep.subr.bf16.mxu0 0
          %3135 = vmatpush2.bf16.msra.mxu0 0
          %3136 = vmatprep.subr.bf16.mxu0 0
          %3137 = vmatpush2.bf16.msra.mxu0 0
          %3138 = vmatprep.subr.bf16.mxu0 0
          %3139 = vmatpush2.bf16.msra.mxu0 0
          %3140 = vmatprep.subr.bf16.mxu0 0
          %3141 = vmatpush2.bf16.msra.mxu0 0
          %3142 = vmatprep.mubr.bf16.mxu0 0
          %3143 = vmatmul.mubr.bf16.gmra.mxu0 %v3104
          %v3144 = vpop.f32.mrf.mxu0
          %v3145 = vadd.f32 0.0, %v3144
          %v3146 = vpop.f32.mrf.mxu0
          %v3147 = vpop.f32.mrf.mxu0
          %v3148 = vpop.f32.mrf.mxu0
          %3149 = vdwg.mxu0
          %v3150 = vadd.f32 %v3096, %v3145
        $region154: #{tpu_custom_call.1} parent=71 // loop_footer
          %s3007 = sadd.s32 %s3005, 1
        $region155: #{tpu_custom_call.1} parent=71 // loop_footer_branch
          %3004 = sbr.rel target = $region151
        $region156: #{tpu_custom_call.1} parent=71 // loop_exit
          _
        %v3151 = vrcp.pop %v3011
        %v3152 = vmul.f32 %v3012, %v3151
        %v3153 = vpack.c.bf16 %v3152, %v3152
        %v3155 = vunpack.c.l.b16 %v3153
        %v3156 = vpack.c.b16 %v3155, %v3155
        %3157 = vrot.lane.b32.xlu0 %v3156, 64
        %v3158 = vpop.permute.xlu0 %3157
        %3160 = vst.msk [vmem:[#allocation3 + $0x4] sm:$0xf] %vm2864, %v3158
        // While loop
        $region157: #{tpu_custom_call.1} parent=71 // loop_pre_header
          _
        $region158: #{tpu_custom_call.1} parent=71 // loop_header
          %s3162 = sphi 0, %s3164
          %p3163 = scmp.ge.s32.totalorder %s3162, %s2568
          %v3167 = vphi -1e+30, %v3233
          %v3168 = vphi 0.0, %v3244
          %v3169 = vphi 0.0, %v3294
        $region159: #{tpu_custom_call.1} parent=71 // loop_header_branch
          %3166 = sbr.rel (%p3163) target = $region163
        $region160: #{tpu_custom_call.1} parent=71 // loop_body
          %s3170 = smul.u32 %s3162, 8
          %s3171 = sshra.s32 %s3170, 3
          %s3172 = sand.u32 %s3170, 7
          %s3173 = smul.u32 %s3171, 6
          %s3174 = smul.addr %s3173, 4
          %s3175 = scalar_lea.vmem [#allocation2], %s3174
          %v3176 = vld [vmem:[%s3175 + $0x8] sm:$0xf]
          %v3177 = vld [vmem:[%s3175 + $0x14] sm:$0xf]
          %vm3178 = vcmask 523264
          %v3180 = vsel %vm3178, %v2561, 0
          %v3183 = vsel %vm3178, %v3176, 0
          %3185 = vmatprep.subr.bf16.mxu0 0
          %3186 = vmatpush1.bf16.xpose.msra.mxu0 0
          %3187 = vmatprep.subr.bf16.mxu0 0
          %3188 = vmatpush1.bf16.xpose.msra.mxu0 0
          %3189 = vmatprep.subr.bf16.mxu0 0
          %3190 = vmatpush1.bf16.xpose.msra.mxu0 0
          %3191 = vmatprep.subr.bf16.mxu0 0
          %3192 = vmatpush1.bf16.xpose.msra.mxu0 0
          %3193 = vmatprep.subr.bf16.mxu0 0
          %3194 = vmatpush1.bf16.xpose.msra.mxu0 0
          %3195 = vmatprep.subr.bf16.mxu0 0
          %3196 = vmatpush1.bf16.xpose.msra.mxu0 0
          %3197 = vmatprep.subr.bf16.mxu0 0
          %3198 = vmatpush1.bf16.xpose.msra.mxu0 0
          %3199 = vmatprep.subr.bf16.mxu0 0
          %3200 = vmatpush1.bf16.xpose.msra.mxu0 %v3183
          %3201 = vmatprep.subr.bf16.mxu0 0
          %3202 = vmatpush2.bf16.xpose.msra.mxu0 0
          %3203 = vmatprep.subr.bf16.mxu0 0
          %3204 = vmatpush2.bf16.xpose.msra.mxu0 0
          %3205 = vmatprep.subr.bf16.mxu0 0
          %3206 = vmatpush2.bf16.xpose.msra.mxu0 0
          %3207 = vmatprep.subr.bf16.mxu0 0
          %3208 = vmatpush2.bf16.xpose.msra.mxu0 0
          %3209 = vmatprep.subr.bf16.mxu0 0
          %3210 = vmatpush2.bf16.xpose.msra.mxu0 0
          %3211 = vmatprep.subr.bf16.mxu0 0
          %3212 = vmatpush2.bf16.xpose.msra.mxu0 0
          %3213 = vmatprep.subr.bf16.mxu0 0
          %3214 = vmatpush2.bf16.xpose.msra.mxu0 0
          %3215 = vmatprep.subr.bf16.mxu0 0
          %3216 = vmatpush2.bf16.xpose.msra.mxu0 0
          %3217 = vmatprep.mubr.bf16.mxu0 0
          %3218 = vmatmul.mubr.bf16.gmra.mxu0 %v3180
          %v3219 = vpop.f32.mrf.mxu0
          %v3220 = vadd.f32 0.0, %v3219
          %v3221 = vpop.f32.mrf.mxu0
          %v3222 = vpop.f32.mrf.mxu0
          %v3223 = vpop.f32.mrf.mxu0
          %3224 = vdwg.mxu0
          %v3225 = vstv %s3170
          %v3226 = vadd.s32 %v3225, %v2567
          %vm3227 = vcmp.ge.s32.totalorder %v2565, %v3226
          %v3228 = vsel %vm3227, %v3220, -1e+30
          %vm3229 = vcmask 64512
          %v3230 = vsel %vm3229, %v3228, -inf
          %3231 = vmax.xlane.f32.xlu0 %v3230
          %v3232 = vpop.xlane.xlu0 %3231
          %v3233 = vmax.f32 %v3167, %v3232
          %v3234 = vsub.f32 %v3167, %v3233
          %v3235 = vmul.f32 %v3234, 1.442695
          %v3236 = vpow.pop %v3235
          %v3237 = vsub.f32 %v3228, %v3233
          %v3238 = vmul.f32 %v3237, 1.442695
          %v3239 = vpow.pop %v3238
          %v3240 = vmul.f32 %v3236, %v3168
          %v3241 = vsel %vm3229, %v3239, 0.0
          %3242 = vadd.xlane.f32.xlu0 %v3241
          %v3243 = vpop.xlane.xlu0 %3242
          %v3244 = vadd.f32 %v3240, %v3243
          %v3245 = vmul.f32 %v3236, %v3169
          %v3246 = vpack.c.bf16 %v3239, %v3239
          %v3248 = vsel %vm3229, %v3246, 0
          %vm3250 = vcmask 1043456
          %v3252 = vsel %vm3250, %v3177, 0
          %3254 = vmatprep.subr.bf16.mxu0 0
          %3255 = vmatpush1.bf16.msra.mxu0 0
          %3256 = vmatprep.subr.bf16.mxu0 0
          %3257 = vmatpush1.bf16.msra.mxu0 0
          %3258 = vmatprep.subr.bf16.mxu0 0
          %3259 = vmatpush1.bf16.msra.mxu0 0
          %3260 = vmatprep.subr.bf16.mxu0 0
          %3261 = vmatpush1.bf16.msra.mxu0 0
          %3262 = vmatprep.subr.bf16.mxu0 0
          %3263 = vmatpush1.bf16.msra.mxu0 0
          %3264 = vmatprep.subr.bf16.mxu0 0
          %3265 = vmatpush1.bf16.msra.mxu0 0
          %3266 = vmatprep.subr.bf16.mxu0 0
          %3267 = vmatpush1.bf16.msra.mxu0 0
          %3268 = vmatprep.subr.bf16.mxu0 0
          %3269 = vmatpush1.bf16.msra.mxu0 %v3252
          %3270 = vmatprep.subr.bf16.mxu0 0
          %3271 = vmatpush2.bf16.msra.mxu0 0
          %3272 = vmatprep.subr.bf16.mxu0 0
          %3273 = vmatpush2.bf16.msra.mxu0 0
          %3274 = vmatprep.subr.bf16.mxu0 0
          %3275 = vmatpush2.bf16.msra.mxu0 0
          %3276 = vmatprep.subr.bf16.mxu0 0
          %3277 = vmatpush2.bf16.msra.mxu0 0
          %3278 = vmatprep.subr.bf16.mxu0 0
          %3279 = vmatpush2.bf16.msra.mxu0 0
          %3280 = vmatprep.subr.bf16.mxu0 0
          %3281 = vmatpush2.bf16.msra.mxu0 0
          %3282 = vmatprep.subr.bf16.mxu0 0
          %3283 = vmatpush2.bf16.msra.mxu0 0
          %3284 = vmatprep.subr.bf16.mxu0 0
          %3285 = vmatpush2.bf16.msra.mxu0 0
          %3286 = vmatprep.mubr.bf16.mxu0 0
          %3287 = vmatmul.mubr.bf16.gmra.mxu0 %v3248
          %v3288 = vpop.f32.mrf.mxu0
          %v3289 = vadd.f32 0.0, %v3288
          %v3290 = vpop.f32.mrf.mxu0
          %v3291 = vpop.f32.mrf.mxu0
          %v3292 = vpop.f32.mrf.mxu0
          %3293 = vdwg.mxu0
          %v3294 = vadd.f32 %v3245, %v3289
        $region161: #{tpu_custom_call.1} parent=71 // loop_footer
          %s3164 = sadd.s32 %s3162, 1
        $region162: #{tpu_custom_call.1} parent=71 // loop_footer_branch
          %3161 = sbr.rel target = $region158
        $region163: #{tpu_custom_call.1} parent=71 // loop_exit
          _
        %v3295 = vrcp.pop %v3168
        %v3296 = vmul.f32 %v3169, %v3295
        %v3297 = vpack.c.bf16 %v3296, %v3296
        %3298 = vst.msk [vmem:[#allocation3 + $0x8] sm:$0xf] %vm2706, %v3297
        // While loop
        $region164: #{tpu_custom_call.1} parent=71 // loop_pre_header
          _
        $region165: #{tpu_custom_call.1} parent=71 // loop_header
          %s3300 = sphi 0, %s3302
          %p3301 = scmp.ge.s32.totalorder %s3300, %s2568
          %v3305 = vphi -1e+30, %v3379
          %v3306 = vphi 0.0, %v3390
          %v3307 = vphi 0.0, %v3445
        $region166: #{tpu_custom_call.1} parent=71 // loop_header_branch
          %3304 = sbr.rel (%p3301) target = $region170
        $region167: #{tpu_custom_call.1} parent=71 // loop_body
          %s3308 = smul.u32 %s3300, 8
          %s3309 = sshra.s32 %s3308, 3
          %s3310 = sand.u32 %s3308, 7
          %s3311 = smul.u32 %s3309, 6
          %s3312 = smul.addr %s3311, 4
          %s3313 = scalar_lea.vmem [#allocation2], %s3312
          %v3314 = vld [vmem:[%s3313 + $0x8] sm:$0xf]
          %v3315 = vld [vmem:[%s3313 + $0x14] sm:$0xf]
          %3317 = vrot.lane.b32.xlu0 %v2561, 64
          %v3318 = vpop.permute.xlu0 %3317
          %v3320 = vunpack.c.l.b16 %v3314
          %v3321 = vpack.c.b16 %v3320, %v3320
          %3322 = vrot.lane.b32.xlu0 %v3321, 64
          %v3323 = vpop.permute.xlu0 %3322
          %vm3324 = vcmask 523264
          %v3326 = vsel %vm3324, %v3318, 0
          %v3329 = vsel %vm3324, %v3323, 0
          %3331 = vmatprep.subr.bf16.mxu0 0
          %3332 = vmatpush1.bf16.xpose.msra.mxu0 0
          %3333 = vmatprep.subr.bf16.mxu0 0
          %3334 = vmatpush1.bf16.xpose.msra.mxu0 0
          %3335 = vmatprep.subr.bf16.mxu0 0
          %3336 = vmatpush1.bf16.xpose.msra.mxu0 0
          %3337 = vmatprep.subr.bf16.mxu0 0
          %3338 = vmatpush1.bf16.xpose.msra.mxu0 0
          %3339 = vmatprep.subr.bf16.mxu0 0
          %3340 = vmatpush1.bf16.xpose.msra.mxu0 0
          %3341 = vmatprep.subr.bf16.mxu0 0
          %3342 = vmatpush1.bf16.xpose.msra.mxu0 0
          %3343 = vmatprep.subr.bf16.mxu0 0
          %3344 = vmatpush1.bf16.xpose.msra.mxu0 0
          %3345 = vmatprep.subr.bf16.mxu0 0
          %3346 = vmatpush1.bf16.xpose.msra.mxu0 %v3329
          %3347 = vmatprep.subr.bf16.mxu0 0
          %3348 = vmatpush2.bf16.xpose.msra.mxu0 0
          %3349 = vmatprep.subr.bf16.mxu0 0
          %3350 = vmatpush2.bf16.xpose.msra.mxu0 0
          %3351 = vmatprep.subr.bf16.mxu0 0
          %3352 = vmatpush2.bf16.xpose.msra.mxu0 0
          %3353 = vmatprep.subr.bf16.mxu0 0
          %3354 = vmatpush2.bf16.xpose.msra.mxu0 0
          %3355 = vmatprep.subr.bf16.mxu0 0
          %3356 = vmatpush2.bf16.xpose.msra.mxu0 0
          %3357 = vmatprep.subr.bf16.mxu0 0
          %3358 = vmatpush2.bf16.xpose.msra.mxu0 0
          %3359 = vmatprep.subr.bf16.mxu0 0
          %3360 = vmatpush2.bf16.xpose.msra.mxu0 0
          %3361 = vmatprep.subr.bf16.mxu0 0
          %3362 = vmatpush2.bf16.xpose.msra.mxu0 0
          %3363 = vmatprep.mubr.bf16.mxu0 0
          %3364 = vmatmul.mubr.bf16.gmra.mxu0 %v3326
          %v3365 = vpop.f32.mrf.mxu0
          %v3366 = vadd.f32 0.0, %v3365
          %v3367 = vpop.f32.mrf.mxu0
          %v3368 = vpop.f32.mrf.mxu0
          %v3369 = vpop.f32.mrf.mxu0
          %3370 = vdwg.mxu0
          %v3371 = vstv %s3308
          %v3372 = vadd.s32 %v3371, %v2567
          %vm3373 = vcmp.ge.s32.totalorder %v2565, %v3372
          %v3374 = vsel %vm3373, %v3366, -1e+30
          %vm3375 = vcmask 64512
          %v3376 = vsel %vm3375, %v3374, -inf
          %3377 = vmax.xlane.f32.xlu0 %v3376
          %v3378 = vpop.xlane.xlu0 %3377
          %v3379 = vmax.f32 %v3305, %v3378
          %v3380 = vsub.f32 %v3305, %v3379
          %v3381 = vmul.f32 %v3380, 1.442695
          %v3382 = vpow.pop %v3381
          %v3383 = vsub.f32 %v3374, %v3379
          %v3384 = vmul.f32 %v3383, 1.442695
          %v3385 = vpow.pop %v3384
          %v3386 = vmul.f32 %v3382, %v3306
          %v3387 = vsel %vm3375, %v3385, 0.0
          %3388 = vadd.xlane.f32.xlu0 %v3387
          %v3389 = vpop.xlane.xlu0 %3388
          %v3390 = vadd.f32 %v3386, %v3389
          %v3391 = vmul.f32 %v3382, %v3307
          %v3392 = vpack.c.bf16 %v3385, %v3385
          %v3394 = vunpack.c.l.b16 %v3315
          %v3395 = vpack.c.b16 %v3394, %v3394
          %3396 = vrot.lane.b32.xlu0 %v3395, 64
          %v3397 = vpop.permute.xlu0 %3396
          %v3399 = vsel %vm3375, %v3392, 0
          %vm3401 = vcmask 1043456
          %v3403 = vsel %vm3401, %v3397, 0
          %3405 = vmatprep.subr.bf16.mxu0 0
          %3406 = vmatpush1.bf16.msra.mxu0 0
          %3407 = vmatprep.subr.bf16.mxu0 0
          %3408 = vmatpush1.bf16.msra.mxu0 0
          %3409 = vmatprep.subr.bf16.mxu0 0
          %3410 = vmatpush1.bf16.msra.mxu0 0
          %3411 = vmatprep.subr.bf16.mxu0 0
          %3412 = vmatpush1.bf16.msra.mxu0 0
          %3413 = vmatprep.subr.bf16.mxu0 0
          %3414 = vmatpush1.bf16.msra.mxu0 0
          %3415 = vmatprep.subr.bf16.mxu0 0
          %3416 = vmatpush1.bf16.msra.mxu0 0
          %3417 = vmatprep.subr.bf16.mxu0 0
          %3418 = vmatpush1.bf16.msra.mxu0 0
          %3419 = vmatprep.subr.bf16.mxu0 0
          %3420 = vmatpush1.bf16.msra.mxu0 %v3403
          %3421 = vmatprep.subr.bf16.mxu0 0
          %3422 = vmatpush2.bf16.msra.mxu0 0
          %3423 = vmatprep.subr.bf16.mxu0 0
          %3424 = vmatpush2.bf16.msra.mxu0 0
          %3425 = vmatprep.subr.bf16.mxu0 0
          %3426 = vmatpush2.bf16.msra.mxu0 0
          %3427 = vmatprep.subr.bf16.mxu0 0
          %3428 = vmatpush2.bf16.msra.mxu0 0
          %3429 = vmatprep.subr.bf16.mxu0 0
          %3430 = vmatpush2.bf16.msra.mxu0 0
          %3431 = vmatprep.subr.bf16.mxu0 0
          %3432 = vmatpush2.bf16.msra.mxu0 0
          %3433 = vmatprep.subr.bf16.mxu0 0
          %3434 = vmatpush2.bf16.msra.mxu0 0
          %3435 = vmatprep.subr.bf16.mxu0 0
          %3436 = vmatpush2.bf16.msra.mxu0 0
          %3437 = vmatprep.mubr.bf16.mxu0 0
          %3438 = vmatmul.mubr.bf16.gmra.mxu0 %v3399
          %v3439 = vpop.f32.mrf.mxu0
          %v3440 = vadd.f32 0.0, %v3439
          %v3441 = vpop.f32.mrf.mxu0
          %v3442 = vpop.f32.mrf.mxu0
          %v3443 = vpop.f32.mrf.mxu0
          %3444 = vdwg.mxu0
          %v3445 = vadd.f32 %v3391, %v3440
        $region168: #{tpu_custom_call.1} parent=71 // loop_footer
          %s3302 = sadd.s32 %s3300, 1
        $region169: #{tpu_custom_call.1} parent=71 // loop_footer_branch
          %3299 = sbr.rel target = $region165
        $region170: #{tpu_custom_call.1} parent=71 // loop_exit
          _
        %v3446 = vrcp.pop %v3306
        %v3447 = vmul.f32 %v3307, %v3446
        %v3448 = vpack.c.bf16 %v3447, %v3447
        %v3450 = vunpack.c.l.b16 %v3448
        %v3451 = vpack.c.b16 %v3450, %v3450
        %3452 = vrot.lane.b32.xlu0 %v3451, 64
        %v3453 = vpop.permute.xlu0 %3452
        %3455 = vst.msk [vmem:[#allocation3 + $0x8] sm:$0xf] %vm2864, %v3453
        %v3456 = vld [vmem:[#allocation3] sm:$0xff]
        %v3457 = vld [vmem:[#allocation3 + $0x8] sm:$0xf]
        %v3458 = vld [vmem:[#allocation13] sm:$0xff]
        %v3459 = vld [vmem:[#allocation13 + $0x8] sm:$0xf]
        %v3460 = vld [vmem:[#allocation13 + $0xc] sm:$0xff]
        %v3461 = vld [vmem:[#allocation13 + $0x14] sm:$0xf]
        %v3462 = vld [vmem:[#allocation13 + $0x18] sm:$0xff]
        %v3463 = vld [vmem:[#allocation13 + $0x20] sm:$0xf]
        %v3464 = vld [vmem:[#allocation13 + $0x24] sm:$0xff]
        %v3465 = vld [vmem:[#allocation13 + $0x2c] sm:$0xf]
        %v3466 = vld [vmem:[#allocation13 + $0x30] sm:$0xff]
        %v3467 = vld [vmem:[#allocation13 + $0x38] sm:$0xf]
        %v3468 = vld [vmem:[#allocation13 + $0x3c] sm:$0xff]
        %v3469 = vld [vmem:[#allocation13 + $0x44] sm:$0xf]
        %v3470 = vld [vmem:[#allocation13 + $0x48] sm:$0xff]
        %v3471 = vld [vmem:[#allocation13 + $0x50] sm:$0xf]
        %v3472 = vld [vmem:[#allocation13 + $0x54] sm:$0xff]
        %v3473 = vld [vmem:[#allocation13 + $0x5c] sm:$0xf]
        %v3474 = vld [vmem:[#allocation13 + $0x60] sm:$0xff]
        %v3475 = vld [vmem:[#allocation13 + $0x68] sm:$0xf]
        %v3476 = vld [vmem:[#allocation13 + $0x6c] sm:$0xff]
        %v3477 = vld [vmem:[#allocation13 + $0x74] sm:$0xf]
        %v3478 = vld [vmem:[#allocation13 + $0x78] sm:$0xff]
        %v3479 = vld [vmem:[#allocation13 + $0x80] sm:$0xf]
        %v3480 = vld [vmem:[#allocation13 + $0x84] sm:$0xff]
        %v3481 = vld [vmem:[#allocation13 + $0x8c] sm:$0xf]
        %v3482 = vld [vmem:[#allocation13 + $0x90] sm:$0xff]
        %v3483 = vld [vmem:[#allocation13 + $0x98] sm:$0xf]
        %v3484 = vld [vmem:[#allocation13 + $0x9c] sm:$0xff]
        %v3485 = vld [vmem:[#allocation13 + $0xa4] sm:$0xf]
        %v3486 = vld [vmem:[#allocation13 + $0xa8] sm:$0xff]
        %v3487 = vld [vmem:[#allocation13 + $0xb0] sm:$0xf]
        %v3488 = vld [vmem:[#allocation13 + $0xb4] sm:$0xff]
        %v3489 = vld [vmem:[#allocation13 + $0xbc] sm:$0xf]
        %v3490 = vld [vmem:[#allocation13 + $0xc0] sm:$0xff]
        %v3491 = vld [vmem:[#allocation13 + $0xc8] sm:$0xf]
        %v3492 = vld [vmem:[#allocation13 + $0xcc] sm:$0xff]
        %v3493 = vld [vmem:[#allocation13 + $0xd4] sm:$0xf]
        %v3494 = vld [vmem:[#allocation13 + $0xd8] sm:$0xff]
        %v3495 = vld [vmem:[#allocation13 + $0xe0] sm:$0xf]
        %v3496 = vld [vmem:[#allocation13 + $0xe4] sm:$0xff]
        %v3497 = vld [vmem:[#allocation13 + $0xec] sm:$0xf]
        %v3498 = vld [vmem:[#allocation13 + $0xf0] sm:$0xff]
        %v3499 = vld [vmem:[#allocation13 + $0xf8] sm:$0xf]
        %v3500 = vld [vmem:[#allocation13 + $0xfc] sm:$0xff]
        %v3501 = vld [vmem:[#allocation13 + $0x104] sm:$0xf]
        %v3502 = vld [vmem:[#allocation13 + $0x108] sm:$0xff]
        %v3503 = vld [vmem:[#allocation13 + $0x110] sm:$0xf]
        %v3504 = vld [vmem:[#allocation13 + $0x114] sm:$0xff]
        %v3505 = vld [vmem:[#allocation13 + $0x11c] sm:$0xf]
        %v3506 = vld [vmem:[#allocation13 + $0x120] sm:$0xff]
        %v3507 = vld [vmem:[#allocation13 + $0x128] sm:$0xf]
        %v3508 = vld [vmem:[#allocation13 + $0x12c] sm:$0xff]
        %v3509 = vld [vmem:[#allocation13 + $0x134] sm:$0xf]
        %v3510 = vld [vmem:[#allocation13 + $0x138] sm:$0xff]
        %v3511 = vld [vmem:[#allocation13 + $0x140] sm:$0xf]
        %v3512 = vld [vmem:[#allocation13 + $0x144] sm:$0xff]
        %v3513 = vld [vmem:[#allocation13 + $0x14c] sm:$0xf]
        %v3514 = vld [vmem:[#allocation13 + $0x150] sm:$0xff]
        %v3515 = vld [vmem:[#allocation13 + $0x158] sm:$0xf]
        %v3516 = vld [vmem:[#allocation13 + $0x15c] sm:$0xff]
        %v3517 = vld [vmem:[#allocation13 + $0x164] sm:$0xf]
        %v3518 = vld [vmem:[#allocation13 + $0x168] sm:$0xff]
        %v3519 = vld [vmem:[#allocation13 + $0x170] sm:$0xf]
        %v3520 = vld [vmem:[#allocation13 + $0x174] sm:$0xff]
        %v3521 = vld [vmem:[#allocation13 + $0x17c] sm:$0xf]
        %v3522 = vld [vmem:[#allocation13 + $0x180] sm:$0xff]
        %v3523 = vld [vmem:[#allocation13 + $0x188] sm:$0xf]
        %v3524 = vld [vmem:[#allocation13 + $0x18c] sm:$0xff]
        %v3525 = vld [vmem:[#allocation13 + $0x194] sm:$0xf]
        %v3526 = vld [vmem:[#allocation13 + $0x198] sm:$0xff]
        %v3527 = vld [vmem:[#allocation13 + $0x1a0] sm:$0xf]
        %v3528 = vld [vmem:[#allocation13 + $0x1a4] sm:$0xff]
        %v3529 = vld [vmem:[#allocation13 + $0x1ac] sm:$0xf]
        %v3530 = vld [vmem:[#allocation13 + $0x1b0] sm:$0xff]
        %v3531 = vld [vmem:[#allocation13 + $0x1b8] sm:$0xf]
        %v3532 = vld [vmem:[#allocation13 + $0x1bc] sm:$0xff]
        %v3533 = vld [vmem:[#allocation13 + $0x1c4] sm:$0xf]
        %v3534 = vld [vmem:[#allocation13 + $0x1c8] sm:$0xff]
        %v3535 = vld [vmem:[#allocation13 + $0x1d0] sm:$0xf]
        %v3536 = vld [vmem:[#allocation13 + $0x1d4] sm:$0xff]
        %v3537 = vld [vmem:[#allocation13 + $0x1dc] sm:$0xf]
        %v3538 = vld [vmem:[#allocation13 + $0x1e0] sm:$0xff]
        %v3539 = vld [vmem:[#allocation13 + $0x1e8] sm:$0xf]
        %v3540 = vld [vmem:[#allocation13 + $0x1ec] sm:$0xff]
        %v3541 = vld [vmem:[#allocation13 + $0x1f4] sm:$0xf]
        %v3542 = vld [vmem:[#allocation13 + $0x1f8] sm:$0xff]
        %v3543 = vld [vmem:[#allocation13 + $0x200] sm:$0xf]
        %v3544 = vld [vmem:[#allocation13 + $0x204] sm:$0xff]
        %v3545 = vld [vmem:[#allocation13 + $0x20c] sm:$0xf]
        %v3546 = vld [vmem:[#allocation13 + $0x210] sm:$0xff]
        %v3547 = vld [vmem:[#allocation13 + $0x218] sm:$0xf]
        %v3548 = vld [vmem:[#allocation13 + $0x21c] sm:$0xff]
        %v3549 = vld [vmem:[#allocation13 + $0x224] sm:$0xf]
        %v3550 = vld [vmem:[#allocation13 + $0x228] sm:$0xff]
        %v3551 = vld [vmem:[#allocation13 + $0x230] sm:$0xf]
        %v3552 = vld [vmem:[#allocation13 + $0x234] sm:$0xff]
        %v3553 = vld [vmem:[#allocation13 + $0x23c] sm:$0xf]
        %v3554 = vld [vmem:[#allocation15] sm:$0x7]
        %v3556 = vlaneseq
        %v3557 = vshrl.u32 %v3556, 7
        %v3558 = vsub.s32 0, %v3557
        %v3559 = vrot.slane %v3554, %v3558
        %v3560 = vlaneseq
        %v3561 = vshrl.u32 %v3560, 7
        %v3562 = vsub.s32 1, %v3561
        %v3563 = vrot.slane %v3554, %v3562
        %v3564 = vlaneseq
        %v3565 = vshrl.u32 %v3564, 7
        %v3566 = vsub.s32 2, %v3565
        %v3567 = vrot.slane %v3554, %v3566
        %v3573 = vunpack.c.l.b16 %v3456
        %v3574 = vunpack.c.h.b16 %v3456
        %v3575 = vunpack.c.l.b16 %v3457
        %v3576 = vpack.c.b16 %v3573, %v3573
        %v3577 = vpack.c.b16 %v3574, %v3574
        %v3578 = vpack.c.b16 %v3575, %v3575
        %v3678 = vunpack.c.l.b16 %v3458
        %v3679 = vunpack.c.h.b16 %v3458
        %v3680 = vunpack.c.l.b16 %v3459
        %v3681 = vunpack.c.l.b16 %v3460
        %v3682 = vunpack.c.h.b16 %v3460
        %v3683 = vunpack.c.l.b16 %v3461
        %v3684 = vunpack.c.l.b16 %v3462
        %v3685 = vunpack.c.h.b16 %v3462
        %v3686 = vunpack.c.l.b16 %v3463
        %v3687 = vunpack.c.l.b16 %v3464
        %v3688 = vunpack.c.h.b16 %v3464
        %v3689 = vunpack.c.l.b16 %v3465
        %v3690 = vunpack.c.l.b16 %v3466
        %v3691 = vunpack.c.h.b16 %v3466
        %v3692 = vunpack.c.l.b16 %v3467
        %v3693 = vunpack.c.l.b16 %v3468
        %v3694 = vunpack.c.h.b16 %v3468
        %v3695 = vunpack.c.l.b16 %v3469
        %v3696 = vunpack.c.l.b16 %v3470
        %v3697 = vunpack.c.h.b16 %v3470
        %v3698 = vunpack.c.l.b16 %v3471
        %v3699 = vunpack.c.l.b16 %v3472
        %v3700 = vunpack.c.h.b16 %v3472
        %v3701 = vunpack.c.l.b16 %v3473
        %v3702 = vunpack.c.l.b16 %v3474
        %v3703 = vunpack.c.h.b16 %v3474
        %v3704 = vunpack.c.l.b16 %v3475
        %v3705 = vunpack.c.l.b16 %v3476
        %v3706 = vunpack.c.h.b16 %v3476
        %v3707 = vunpack.c.l.b16 %v3477
        %v3708 = vunpack.c.l.b16 %v3478
        %v3709 = vunpack.c.h.b16 %v3478
        %v3710 = vunpack.c.l.b16 %v3479
        %v3711 = vunpack.c.l.b16 %v3480
        %v3712 = vunpack.c.h.b16 %v3480
        %v3713 = vunpack.c.l.b16 %v3481
        %v3714 = vunpack.c.l.b16 %v3482
        %v3715 = vunpack.c.h.b16 %v3482
        %v3716 = vunpack.c.l.b16 %v3483
        %v3717 = vunpack.c.l.b16 %v3484
        %v3718 = vunpack.c.h.b16 %v3484
        %v3719 = vunpack.c.l.b16 %v3485
        %v3720 = vunpack.c.l.b16 %v3486
        %v3721 = vunpack.c.h.b16 %v3486
        %v3722 = vunpack.c.l.b16 %v3487
        %v3723 = vunpack.c.l.b16 %v3488
        %v3724 = vunpack.c.h.b16 %v3488
        %v3725 = vunpack.c.l.b16 %v3489
        %v3726 = vunpack.c.l.b16 %v3490
        %v3727 = vunpack.c.h.b16 %v3490
        %v3728 = vunpack.c.l.b16 %v3491
        %v3729 = vunpack.c.l.b16 %v3492
        %v3730 = vunpack.c.h.b16 %v3492
        %v3731 = vunpack.c.l.b16 %v3493
        %v3732 = vunpack.c.l.b16 %v3494
        %v3733 = vunpack.c.h.b16 %v3494
        %v3734 = vunpack.c.l.b16 %v3495
        %v3735 = vunpack.c.l.b16 %v3496
        %v3736 = vunpack.c.h.b16 %v3496
        %v3737 = vunpack.c.l.b16 %v3497
        %v3738 = vunpack.c.l.b16 %v3498
        %v3739 = vunpack.c.h.b16 %v3498
        %v3740 = vunpack.c.l.b16 %v3499
        %v3741 = vunpack.c.l.b16 %v3500
        %v3742 = vunpack.c.h.b16 %v3500
        %v3743 = vunpack.c.l.b16 %v3501
        %v3744 = vunpack.c.l.b16 %v3502
        %v3745 = vunpack.c.h.b16 %v3502
        %v3746 = vunpack.c.l.b16 %v3503
        %v3747 = vunpack.c.l.b16 %v3504
        %v3748 = vunpack.c.h.b16 %v3504
        %v3749 = vunpack.c.l.b16 %v3505
        %v3750 = vunpack.c.l.b16 %v3506
        %v3751 = vunpack.c.h.b16 %v3506
        %v3752 = vunpack.c.l.b16 %v3507
        %v3753 = vunpack.c.l.b16 %v3508
        %v3754 = vunpack.c.h.b16 %v3508
        %v3755 = vunpack.c.l.b16 %v3509
        %v3756 = vunpack.c.l.b16 %v3510
        %v3757 = vunpack.c.h.b16 %v3510
        %v3758 = vunpack.c.l.b16 %v3511
        %v3759 = vunpack.c.l.b16 %v3512
        %v3760 = vunpack.c.h.b16 %v3512
        %v3761 = vunpack.c.l.b16 %v3513
        %v3762 = vunpack.c.l.b16 %v3514
        %v3763 = vunpack.c.h.b16 %v3514
        %v3764 = vunpack.c.l.b16 %v3515
        %v3765 = vunpack.c.l.b16 %v3516
        %v3766 = vunpack.c.h.b16 %v3516
        %v3767 = vunpack.c.l.b16 %v3517
        %v3768 = vunpack.c.l.b16 %v3518
        %v3769 = vunpack.c.h.b16 %v3518
        %v3770 = vunpack.c.l.b16 %v3519
        %v3771 = vunpack.c.l.b16 %v3520
        %v3772 = vunpack.c.h.b16 %v3520
        %v3773 = vunpack.c.l.b16 %v3521
        %v3774 = vunpack.c.l.b16 %v3522
        %v3775 = vunpack.c.h.b16 %v3522
        %v3776 = vunpack.c.l.b16 %v3523
        %v3777 = vunpack.c.l.b16 %v3524
        %v3778 = vunpack.c.h.b16 %v3524
        %v3779 = vunpack.c.l.b16 %v3525
        %v3780 = vunpack.c.l.b16 %v3526
        %v3781 = vunpack.c.h.b16 %v3526
        %v3782 = vunpack.c.l.b16 %v3527
        %v3783 = vunpack.c.l.b16 %v3528
        %v3784 = vunpack.c.h.b16 %v3528
        %v3785 = vunpack.c.l.b16 %v3529
        %v3786 = vunpack.c.l.b16 %v3530
        %v3787 = vunpack.c.h.b16 %v3530
        %v3788 = vunpack.c.l.b16 %v3531
        %v3789 = vunpack.c.l.b16 %v3532
        %v3790 = vunpack.c.h.b16 %v3532
        %v3791 = vunpack.c.l.b16 %v3533
        %v3792 = vunpack.c.l.b16 %v3534
        %v3793 = vunpack.c.h.b16 %v3534
        %v3794 = vunpack.c.l.b16 %v3535
        %v3795 = vunpack.c.l.b16 %v3536
        %v3796 = vunpack.c.h.b16 %v3536
        %v3797 = vunpack.c.l.b16 %v3537
        %v3798 = vunpack.c.l.b16 %v3538
        %v3799 = vunpack.c.h.b16 %v3538
        %v3800 = vunpack.c.l.b16 %v3539
        %v3801 = vunpack.c.l.b16 %v3540
        %v3802 = vunpack.c.h.b16 %v3540
        %v3803 = vunpack.c.l.b16 %v3541
        %v3804 = vunpack.c.l.b16 %v3542
        %v3805 = vunpack.c.h.b16 %v3542
        %v3806 = vunpack.c.l.b16 %v3543
        %v3807 = vunpack.c.l.b16 %v3544
        %v3808 = vunpack.c.h.b16 %v3544
        %v3809 = vunpack.c.l.b16 %v3545
        %v3810 = vunpack.c.l.b16 %v3546
        %v3811 = vunpack.c.h.b16 %v3546
        %v3812 = vunpack.c.l.b16 %v3547
        %v3813 = vunpack.c.l.b16 %v3548
        %v3814 = vunpack.c.h.b16 %v3548
        %v3815 = vunpack.c.l.b16 %v3549
        %v3816 = vunpack.c.l.b16 %v3550
        %v3817 = vunpack.c.h.b16 %v3550
        %v3818 = vunpack.c.l.b16 %v3551
        %v3819 = vunpack.c.l.b16 %v3552
        %v3820 = vunpack.c.h.b16 %v3552
        %v3821 = vunpack.c.l.b16 %v3553
        %v3822 = vpack.c.b16 %v3681, %v3678
        %v3823 = vpack.c.b16 %v3682, %v3679
        %v3824 = vpack.c.b16 %v3683, %v3680
        %v3825 = vpack.c.b16 %v3687, %v3684
        %v3826 = vpack.c.b16 %v3688, %v3685
        %v3827 = vpack.c.b16 %v3689, %v3686
        %v3828 = vpack.c.b16 %v3693, %v3690
        %v3829 = vpack.c.b16 %v3694, %v3691
        %v3830 = vpack.c.b16 %v3695, %v3692
        %v3831 = vpack.c.b16 %v3699, %v3696
        %v3832 = vpack.c.b16 %v3700, %v3697
        %v3833 = vpack.c.b16 %v3701, %v3698
        %v3834 = vpack.c.b16 %v3705, %v3702
        %v3835 = vpack.c.b16 %v3706, %v3703
        %v3836 = vpack.c.b16 %v3707, %v3704
        %v3837 = vpack.c.b16 %v3711, %v3708
        %v3838 = vpack.c.b16 %v3712, %v3709
        %v3839 = vpack.c.b16 %v3713, %v3710
        %v3840 = vpack.c.b16 %v3717, %v3714
        %v3841 = vpack.c.b16 %v3718, %v3715
        %v3842 = vpack.c.b16 %v3719, %v3716
        %v3843 = vpack.c.b16 %v3723, %v3720
        %v3844 = vpack.c.b16 %v3724, %v3721
        %v3845 = vpack.c.b16 %v3725, %v3722
        %v3846 = vpack.c.b16 %v3729, %v3726
        %v3847 = vpack.c.b16 %v3730, %v3727
        %v3848 = vpack.c.b16 %v3731, %v3728
        %v3849 = vpack.c.b16 %v3735, %v3732
        %v3850 = vpack.c.b16 %v3736, %v3733
        %v3851 = vpack.c.b16 %v3737, %v3734
        %v3852 = vpack.c.b16 %v3741, %v3738
        %v3853 = vpack.c.b16 %v3742, %v3739
        %v3854 = vpack.c.b16 %v3743, %v3740
        %v3855 = vpack.c.b16 %v3747, %v3744
        %v3856 = vpack.c.b16 %v3748, %v3745
        %v3857 = vpack.c.b16 %v3749, %v3746
        %v3858 = vpack.c.b16 %v3753, %v3750
        %v3859 = vpack.c.b16 %v3754, %v3751
        %v3860 = vpack.c.b16 %v3755, %v3752
        %v3861 = vpack.c.b16 %v3759, %v3756
        %v3862 = vpack.c.b16 %v3760, %v3757
        %v3863 = vpack.c.b16 %v3761, %v3758
        %v3864 = vpack.c.b16 %v3765, %v3762
        %v3865 = vpack.c.b16 %v3766, %v3763
        %v3866 = vpack.c.b16 %v3767, %v3764
        %v3867 = vpack.c.b16 %v3771, %v3768
        %v3868 = vpack.c.b16 %v3772, %v3769
        %v3869 = vpack.c.b16 %v3773, %v3770
        %v3870 = vpack.c.b16 %v3777, %v3774
        %v3871 = vpack.c.b16 %v3778, %v3775
        %v3872 = vpack.c.b16 %v3779, %v3776
        %v3873 = vpack.c.b16 %v3783, %v3780
        %v3874 = vpack.c.b16 %v3784, %v3781
        %v3875 = vpack.c.b16 %v3785, %v3782
        %v3876 = vpack.c.b16 %v3789, %v3786
        %v3877 = vpack.c.b16 %v3790, %v3787
        %v3878 = vpack.c.b16 %v3791, %v3788
        %v3879 = vpack.c.b16 %v3795, %v3792
        %v3880 = vpack.c.b16 %v3796, %v3793
        %v3881 = vpack.c.b16 %v3797, %v3794
        %v3882 = vpack.c.b16 %v3801, %v3798
        %v3883 = vpack.c.b16 %v3802, %v3799
        %v3884 = vpack.c.b16 %v3803, %v3800
        %v3885 = vpack.c.b16 %v3807, %v3804
        %v3886 = vpack.c.b16 %v3808, %v3805
        %v3887 = vpack.c.b16 %v3809, %v3806
        %v3888 = vpack.c.b16 %v3813, %v3810
        %v3889 = vpack.c.b16 %v3814, %v3811
        %v3890 = vpack.c.b16 %v3815, %v3812
        %v3891 = vpack.c.b16 %v3819, %v3816
        %v3892 = vpack.c.b16 %v3820, %v3817
        %v3893 = vpack.c.b16 %v3821, %v3818
        %3966 = vmatprep.subr.bf16.mxu0 %v3844
        %3967 = vmatpush1.bf16.msra.mxu0 %v3843
        %3968 = vmatprep.subr.bf16.mxu0 %v3841
        %3969 = vmatpush1.bf16.msra.mxu0 %v3840
        %3970 = vmatprep.subr.bf16.mxu0 %v3838
        %3971 = vmatpush1.bf16.msra.mxu0 %v3837
        %3972 = vmatprep.subr.bf16.mxu0 %v3835
        %3973 = vmatpush1.bf16.msra.mxu0 %v3834
        %3974 = vmatprep.subr.bf16.mxu0 %v3832
        %3975 = vmatpush1.bf16.msra.mxu0 %v3831
        %3976 = vmatprep.subr.bf16.mxu0 %v3829
        %3977 = vmatpush1.bf16.msra.mxu0 %v3828
        %3978 = vmatprep.subr.bf16.mxu0 %v3826
        %3979 = vmatpush1.bf16.msra.mxu0 %v3825
        %3980 = vmatprep.subr.bf16.mxu0 %v3823
        %3981 = vmatpush1.bf16.msra.mxu0 %v3822
        %3982 = vmatprep.subr.bf16.mxu0 %v3868
        %3983 = vmatpush2.bf16.msra.mxu0 %v3867
        %3984 = vmatprep.subr.bf16.mxu0 %v3865
        %3985 = vmatpush2.bf16.msra.mxu0 %v3864
        %3986 = vmatprep.subr.bf16.mxu0 %v3862
        %3987 = vmatpush2.bf16.msra.mxu0 %v3861
        %3988 = vmatprep.subr.bf16.mxu0 %v3859
        %3989 = vmatpush2.bf16.msra.mxu0 %v3858
        %3990 = vmatprep.subr.bf16.mxu0 %v3856
        %3991 = vmatpush2.bf16.msra.mxu0 %v3855
        %3992 = vmatprep.subr.bf16.mxu0 %v3853
        %3993 = vmatpush2.bf16.msra.mxu0 %v3852
        %3994 = vmatprep.subr.bf16.mxu0 %v3850
        %3995 = vmatpush2.bf16.msra.mxu0 %v3849
        %3996 = vmatprep.subr.bf16.mxu0 %v3847
        %3997 = vmatpush2.bf16.msra.mxu0 %v3846
        %3998 = vmatprep.mubr.bf16.mxu0 %v3577
        %3999 = vmatmul.mubr.bf16.gmra.mxu0 %v3576
        %v4000 = vpop.f32.mrf.mxu0
        %v4001 = vadd.f32 %v3559, %v4000
        %v4002 = vpop.f32.mrf.mxu0
        %v4003 = vadd.f32 %v3563, %v4002
        %v4004 = vpop.f32.mrf.mxu0
        %v4005 = vpop.f32.mrf.mxu0
        %4006 = vdwg.mxu0
        %4007 = vmatprep.subr.bf16.mxu0 %v3892
        %4008 = vmatpush1.bf16.msra.mxu0 %v3891
        %4009 = vmatprep.subr.bf16.mxu0 %v3889
        %4010 = vmatpush1.bf16.msra.mxu0 %v3888
        %4011 = vmatprep.subr.bf16.mxu0 %v3886
        %4012 = vmatpush1.bf16.msra.mxu0 %v3885
        %4013 = vmatprep.subr.bf16.mxu0 %v3883
        %4014 = vmatpush1.bf16.msra.mxu0 %v3882
        %4015 = vmatprep.subr.bf16.mxu0 %v3880
        %4016 = vmatpush1.bf16.msra.mxu0 %v3879
        %4017 = vmatprep.subr.bf16.mxu0 %v3877
        %4018 = vmatpush1.bf16.msra.mxu0 %v3876
        %4019 = vmatprep.subr.bf16.mxu0 %v3874
        %4020 = vmatpush1.bf16.msra.mxu0 %v3873
        %4021 = vmatprep.subr.bf16.mxu0 %v3871
        %4022 = vmatpush1.bf16.msra.mxu0 %v3870
        %4023 = vmatprep.subr.bf16.mxu0 0
        %4024 = vmatpush2.bf16.msra.mxu0 0
        %4025 = vmatprep.subr.bf16.mxu0 0
        %4026 = vmatpush2.bf16.msra.mxu0 0
        %4027 = vmatprep.subr.bf16.mxu0 0
        %4028 = vmatpush2.bf16.msra.mxu0 0
        %4029 = vmatprep.subr.bf16.mxu0 0
        %4030 = vmatpush2.bf16.msra.mxu0 0
        %4031 = vmatprep.subr.bf16.mxu0 0
        %4032 = vmatpush2.bf16.msra.mxu0 0
        %4033 = vmatprep.subr.bf16.mxu0 0
        %4034 = vmatpush2.bf16.msra.mxu0 0
        %4035 = vmatprep.subr.bf16.mxu0 0
        %4036 = vmatpush2.bf16.msra.mxu0 0
        %4037 = vmatprep.subr.bf16.mxu0 0
        %4038 = vmatpush2.bf16.msra.mxu0 0
        %4039 = vmatprep.mubr.bf16.mxu0 0
        %4040 = vmatmul.mubr.bf16.gmra.mxu0 %v3578
        %v4041 = vpop.f32.mrf.mxu0
        %v4042 = vadd.f32 %v4001, %v4041
        %v4043 = vpop.f32.mrf.mxu0
        %v4044 = vadd.f32 %v4003, %v4043
        %v4045 = vpop.f32.mrf.mxu0
        %v4046 = vpop.f32.mrf.mxu0
        %4047 = vdwg.mxu0
        %4048 = vmatprep.subr.bf16.mxu0 0
        %4049 = vmatpush1.bf16.msra.mxu0 %v3845
        %4050 = vmatprep.subr.bf16.mxu0 0
        %4051 = vmatpush1.bf16.msra.mxu0 %v3842
        %4052 = vmatprep.subr.bf16.mxu0 0
        %4053 = vmatpush1.bf16.msra.mxu0 %v3839
        %4054 = vmatprep.subr.bf16.mxu0 0
        %4055 = vmatpush1.bf16.msra.mxu0 %v3836
        %4056 = vmatprep.subr.bf16.mxu0 0
        %4057 = vmatpush1.bf16.msra.mxu0 %v3833
        %4058 = vmatprep.subr.bf16.mxu0 0
        %4059 = vmatpush1.bf16.msra.mxu0 %v3830
        %4060 = vmatprep.subr.bf16.mxu0 0
        %4061 = vmatpush1.bf16.msra.mxu0 %v3827
        %4062 = vmatprep.subr.bf16.mxu0 0
        %4063 = vmatpush1.bf16.msra.mxu0 %v3824
        %4064 = vmatprep.subr.bf16.mxu0 0
        %4065 = vmatpush2.bf16.msra.mxu0 %v3869
        %4066 = vmatprep.subr.bf16.mxu0 0
        %4067 = vmatpush2.bf16.msra.mxu0 %v3866
        %4068 = vmatprep.subr.bf16.mxu0 0
        %4069 = vmatpush2.bf16.msra.mxu0 %v3863
        %4070 = vmatprep.subr.bf16.mxu0 0
        %4071 = vmatpush2.bf16.msra.mxu0 %v3860
        %4072 = vmatprep.subr.bf16.mxu0 0
        %4073 = vmatpush2.bf16.msra.mxu0 %v3857
        %4074 = vmatprep.subr.bf16.mxu0 0
        %4075 = vmatpush2.bf16.msra.mxu0 %v3854
        %4076 = vmatprep.subr.bf16.mxu0 0
        %4077 = vmatpush2.bf16.msra.mxu0 %v3851
        %4078 = vmatprep.subr.bf16.mxu0 0
        %4079 = vmatpush2.bf16.msra.mxu0 %v3848
        %4080 = vmatprep.mubr.bf16.mxu0 %v3577
        %4081 = vmatmul.mubr.bf16.gmra.mxu0 %v3576
        %v4082 = vpop.f32.mrf.mxu0
        %v4083 = vadd.f32 %v3567, %v4082
        %v4084 = vpop.f32.mrf.mxu0
        %v4085 = vpop.f32.mrf.mxu0
        %v4086 = vpop.f32.mrf.mxu0
        %4087 = vdwg.mxu0
        %4088 = vmatprep.subr.bf16.mxu0 0
        %4089 = vmatpush1.bf16.msra.mxu0 %v3893
        %4090 = vmatprep.subr.bf16.mxu0 0
        %4091 = vmatpush1.bf16.msra.mxu0 %v3890
        %4092 = vmatprep.subr.bf16.mxu0 0
        %4093 = vmatpush1.bf16.msra.mxu0 %v3887
        %4094 = vmatprep.subr.bf16.mxu0 0
        %4095 = vmatpush1.bf16.msra.mxu0 %v3884
        %4096 = vmatprep.subr.bf16.mxu0 0
        %4097 = vmatpush1.bf16.msra.mxu0 %v3881
        %4098 = vmatprep.subr.bf16.mxu0 0
        %4099 = vmatpush1.bf16.msra.mxu0 %v3878
        %4100 = vmatprep.subr.bf16.mxu0 0
        %4101 = vmatpush1.bf16.msra.mxu0 %v3875
        %4102 = vmatprep.subr.bf16.mxu0 0
        %4103 = vmatpush1.bf16.msra.mxu0 %v3872
        %4104 = vmatprep.subr.bf16.mxu0 0
        %4105 = vmatpush2.bf16.msra.mxu0 0
        %4106 = vmatprep.subr.bf16.mxu0 0
        %4107 = vmatpush2.bf16.msra.mxu0 0
        %4108 = vmatprep.subr.bf16.mxu0 0
        %4109 = vmatpush2.bf16.msra.mxu0 0
        %4110 = vmatprep.subr.bf16.mxu0 0
        %4111 = vmatpush2.bf16.msra.mxu0 0
        %4112 = vmatprep.subr.bf16.mxu0 0
        %4113 = vmatpush2.bf16.msra.mxu0 0
        %4114 = vmatprep.subr.bf16.mxu0 0
        %4115 = vmatpush2.bf16.msra.mxu0 0
        %4116 = vmatprep.subr.bf16.mxu0 0
        %4117 = vmatpush2.bf16.msra.mxu0 0
        %4118 = vmatprep.subr.bf16.mxu0 0
        %4119 = vmatpush2.bf16.msra.mxu0 0
        %4120 = vmatprep.mubr.bf16.mxu0 0
        %4121 = vmatmul.mubr.bf16.gmra.mxu0 %v3578
        %v4122 = vpop.f32.mrf.mxu0
        %v4123 = vadd.f32 %v4083, %v4122
        %v4124 = vpop.f32.mrf.mxu0
        %v4125 = vpop.f32.mrf.mxu0
        %v4126 = vpop.f32.mrf.mxu0
        %4127 = vdwg.mxu0
        %v4128 = vadd.f32 %v1851, %v4042
        %v4129 = vadd.f32 %v1852, %v4044
        %v4130 = vadd.f32 %v1853, %v4123
        %v4131 = vld [vmem:[#allocation16] sm:$0x7]
        %v4132 = vld [vmem:[#allocation18] sm:$0x7]
        %v4133 = vadd.f32 %v4128, %v4129
        %v4134 = vadd.f32 %v4133, %v4130
        %4135 = vadd.xlane.f32.xlu0 %v4134
        %v4136 = vpop.xlane.xlu0 %4135
        %v4137 = vmul.f32 %v4136, %v1858
        %v4138 = vsub.f32 %v4128, %v4137
        %v4139 = vsub.f32 %v4129, %v4137
        %v4140 = vsub.f32 %v4130, %v4137
        %v4141 = vmul.f32 %v4138, %v4138
        %v4142 = vmul.f32 %v4139, %v4139
        %v4143 = vmul.f32 %v4140, %v4140
        %v4144 = vadd.f32 %v4141, %v4142
        %v4145 = vadd.f32 %v4144, %v4143
        %4146 = vadd.xlane.f32.xlu0 %v4145
        %v4147 = vpop.xlane.xlu0 %4146
        %v4148 = vmul.f32 %v4147, %v1858
        %v4149 = vadd.f32 %v4148, 1e-05
        %v4150 = vrsqrt.pop %v4149
        %v4151 = vmul.f32 %v4138, %v4150
        %v4152 = vmul.f32 %v4139, %v4150
        %v4153 = vmul.f32 %v4140, %v4150
        %v4155 = vlaneseq
        %v4156 = vshrl.u32 %v4155, 7
        %v4157 = vsub.s32 0, %v4156
        %v4158 = vrot.slane %v4131, %v4157
        %v4159 = vlaneseq
        %v4160 = vshrl.u32 %v4159, 7
        %v4161 = vsub.s32 1, %v4160
        %v4162 = vrot.slane %v4131, %v4161
        %v4163 = vlaneseq
        %v4164 = vshrl.u32 %v4163, 7
        %v4165 = vsub.s32 2, %v4164
        %v4166 = vrot.slane %v4131, %v4165
        %v4170 = vmul.f32 %v4151, %v4158
        %v4171 = vmul.f32 %v4152, %v4162
        %v4172 = vmul.f32 %v4153, %v4166
        %v4174 = vlaneseq
        %v4175 = vshrl.u32 %v4174, 7
        %v4176 = vsub.s32 0, %v4175
        %v4177 = vrot.slane %v4132, %v4176
        %v4178 = vlaneseq
        %v4179 = vshrl.u32 %v4178, 7
        %v4180 = vsub.s32 1, %v4179
        %v4181 = vrot.slane %v4132, %v4180
        %v4182 = vlaneseq
        %v4183 = vshrl.u32 %v4182, 7
        %v4184 = vsub.s32 2, %v4183
        %v4185 = vrot.slane %v4132, %v4184
        %v4189 = vadd.f32 %v4170, %v4177
        %v4190 = vadd.f32 %v4171, %v4181
        %v4191 = vadd.f32 %v4172, %v4185
        %v4192 = vpack.c.bf16 %v4189, %v4189
        %v4193 = vpack.c.bf16 %v4190, %v4190
        %v4194 = vpack.c.bf16 %v4191, %v4191
        %v4195 = vld [vmem:[#allocation19] sm:$0xff]
        %v4196 = vld [vmem:[#allocation19 + $0x8] sm:$0xff]
        %v4197 = vld [vmem:[#allocation19 + $0x10] sm:$0xff]
        %v4198 = vld [vmem:[#allocation19 + $0x18] sm:$0xff]
        %v4199 = vld [vmem:[#allocation19 + $0x20] sm:$0xff]
        %v4200 = vld [vmem:[#allocation19 + $0x28] sm:$0xff]
        %v4201 = vld [vmem:[#allocation19 + $0x30] sm:$0xff]
        %v4202 = vld [vmem:[#allocation19 + $0x38] sm:$0xff]
        %v4203 = vld [vmem:[#allocation19 + $0x40] sm:$0xff]
        %v4204 = vld [vmem:[#allocation19 + $0x48] sm:$0xff]
        %v4205 = vld [vmem:[#allocation19 + $0x50] sm:$0xff]
        %v4206 = vld [vmem:[#allocation19 + $0x58] sm:$0xff]
        %v4207 = vld [vmem:[#allocation19 + $0x60] sm:$0xff]
        %v4208 = vld [vmem:[#allocation19 + $0x68] sm:$0xff]
        %v4209 = vld [vmem:[#allocation19 + $0x70] sm:$0xff]
        %v4210 = vld [vmem:[#allocation19 + $0x78] sm:$0xff]
        %v4211 = vld [vmem:[#allocation19 + $0x80] sm:$0xff]
        %v4212 = vld [vmem:[#allocation19 + $0x88] sm:$0xff]
        %v4213 = vld [vmem:[#allocation19 + $0x90] sm:$0xff]
        %v4214 = vld [vmem:[#allocation19 + $0x98] sm:$0xff]
        %v4215 = vld [vmem:[#allocation19 + $0xa0] sm:$0xff]
        %v4216 = vld [vmem:[#allocation19 + $0xa8] sm:$0xff]
        %v4217 = vld [vmem:[#allocation19 + $0xb0] sm:$0xff]
        %v4218 = vld [vmem:[#allocation19 + $0xb8] sm:$0xff]
        %v4219 = vld [vmem:[#allocation19 + $0xc0] sm:$0xff]
        %v4220 = vld [vmem:[#allocation19 + $0xc8] sm:$0xff]
        %v4221 = vld [vmem:[#allocation19 + $0xd0] sm:$0xff]
        %v4222 = vld [vmem:[#allocation19 + $0xd8] sm:$0xff]
        %v4223 = vld [vmem:[#allocation19 + $0xe0] sm:$0xff]
        %v4224 = vld [vmem:[#allocation19 + $0xe8] sm:$0xff]
        %v4225 = vld [vmem:[#allocation19 + $0xf0] sm:$0xff]
        %v4226 = vld [vmem:[#allocation19 + $0xf8] sm:$0xff]
        %v4227 = vld [vmem:[#allocation19 + $0x100] sm:$0xff]
        %v4228 = vld [vmem:[#allocation19 + $0x108] sm:$0xff]
        %v4229 = vld [vmem:[#allocation19 + $0x110] sm:$0xff]
        %v4230 = vld [vmem:[#allocation19 + $0x118] sm:$0xff]
        %v4231 = vld [vmem:[#allocation19 + $0x120] sm:$0xff]
        %v4232 = vld [vmem:[#allocation19 + $0x128] sm:$0xff]
        %v4233 = vld [vmem:[#allocation19 + $0x130] sm:$0xff]
        %v4234 = vld [vmem:[#allocation19 + $0x138] sm:$0xff]
        %v4235 = vld [vmem:[#allocation19 + $0x140] sm:$0xff]
        %v4236 = vld [vmem:[#allocation19 + $0x148] sm:$0xff]
        %v4237 = vld [vmem:[#allocation19 + $0x150] sm:$0xff]
        %v4238 = vld [vmem:[#allocation19 + $0x158] sm:$0xff]
        %v4239 = vld [vmem:[#allocation19 + $0x160] sm:$0xff]
        %v4240 = vld [vmem:[#allocation19 + $0x168] sm:$0xff]
        %v4241 = vld [vmem:[#allocation19 + $0x170] sm:$0xff]
        %v4242 = vld [vmem:[#allocation19 + $0x178] sm:$0xff]
        %v4243 = vld [vmem:[#allocation19 + $0x180] sm:$0xff]
        %v4244 = vld [vmem:[#allocation19 + $0x188] sm:$0xff]
        %v4245 = vld [vmem:[#allocation19 + $0x190] sm:$0xff]
        %v4246 = vld [vmem:[#allocation19 + $0x198] sm:$0xff]
        %v4247 = vld [vmem:[#allocation19 + $0x1a0] sm:$0xff]
        %v4248 = vld [vmem:[#allocation19 + $0x1a8] sm:$0xff]
        %v4249 = vld [vmem:[#allocation19 + $0x1b0] sm:$0xff]
        %v4250 = vld [vmem:[#allocation19 + $0x1b8] sm:$0xff]
        %v4251 = vld [vmem:[#allocation19 + $0x1c0] sm:$0xff]
        %v4252 = vld [vmem:[#allocation19 + $0x1c8] sm:$0xff]
        %v4253 = vld [vmem:[#allocation19 + $0x1d0] sm:$0xff]
        %v4254 = vld [vmem:[#allocation19 + $0x1d8] sm:$0xff]
        %v4255 = vld [vmem:[#allocation19 + $0x1e0] sm:$0xff]
        %v4256 = vld [vmem:[#allocation19 + $0x1e8] sm:$0xff]
        %v4257 = vld [vmem:[#allocation19 + $0x1f0] sm:$0xff]
        %v4258 = vld [vmem:[#allocation19 + $0x1f8] sm:$0xff]
        %v4259 = vld [vmem:[#allocation19 + $0x200] sm:$0xff]
        %v4260 = vld [vmem:[#allocation19 + $0x208] sm:$0xff]
        %v4261 = vld [vmem:[#allocation19 + $0x210] sm:$0xff]
        %v4262 = vld [vmem:[#allocation19 + $0x218] sm:$0xff]
        %v4263 = vld [vmem:[#allocation19 + $0x220] sm:$0xff]
        %v4264 = vld [vmem:[#allocation19 + $0x228] sm:$0xff]
        %v4265 = vld [vmem:[#allocation19 + $0x230] sm:$0xff]
        %v4266 = vld [vmem:[#allocation19 + $0x238] sm:$0xff]
        %v4267 = vld [vmem:[#allocation19 + $0x240] sm:$0xff]
        %v4268 = vld [vmem:[#allocation19 + $0x248] sm:$0xff]
        %v4269 = vld [vmem:[#allocation19 + $0x250] sm:$0xff]
        %v4270 = vld [vmem:[#allocation19 + $0x258] sm:$0xff]
        %v4271 = vld [vmem:[#allocation19 + $0x260] sm:$0xff]
        %v4272 = vld [vmem:[#allocation19 + $0x268] sm:$0xff]
        %v4273 = vld [vmem:[#allocation19 + $0x270] sm:$0xff]
        %v4274 = vld [vmem:[#allocation19 + $0x278] sm:$0xff]
        %v4275 = vld [vmem:[#allocation19 + $0x280] sm:$0xff]
        %v4276 = vld [vmem:[#allocation19 + $0x288] sm:$0xff]
        %v4277 = vld [vmem:[#allocation19 + $0x290] sm:$0xff]
        %v4278 = vld [vmem:[#allocation19 + $0x298] sm:$0xff]
        %v4279 = vld [vmem:[#allocation19 + $0x2a0] sm:$0xff]
        %v4280 = vld [vmem:[#allocation19 + $0x2a8] sm:$0xff]
        %v4281 = vld [vmem:[#allocation19 + $0x2b0] sm:$0xff]
        %v4282 = vld [vmem:[#allocation19 + $0x2b8] sm:$0xff]
        %v4283 = vld [vmem:[#allocation19 + $0x2c0] sm:$0xff]
        %v4284 = vld [vmem:[#allocation19 + $0x2c8] sm:$0xff]
        %v4285 = vld [vmem:[#allocation19 + $0x2d0] sm:$0xff]
        %v4286 = vld [vmem:[#allocation19 + $0x2d8] sm:$0xff]
        %v4287 = vld [vmem:[#allocation19 + $0x2e0] sm:$0xff]
        %v4288 = vld [vmem:[#allocation19 + $0x2e8] sm:$0xff]
        %v4289 = vld [vmem:[#allocation19 + $0x2f0] sm:$0xff]
        %v4290 = vld [vmem:[#allocation19 + $0x2f8] sm:$0xff]
        %v4291 = vld [vmem:[#allocation19 + $0x300] sm:$0xff]
        %v4292 = vld [vmem:[#allocation19 + $0x308] sm:$0xff]
        %v4293 = vld [vmem:[#allocation19 + $0x310] sm:$0xff]
        %v4294 = vld [vmem:[#allocation19 + $0x318] sm:$0xff]
        %v4295 = vld [vmem:[#allocation19 + $0x320] sm:$0xff]
        %v4296 = vld [vmem:[#allocation19 + $0x328] sm:$0xff]
        %v4297 = vld [vmem:[#allocation19 + $0x330] sm:$0xff]
        %v4298 = vld [vmem:[#allocation19 + $0x338] sm:$0xff]
        %v4299 = vld [vmem:[#allocation19 + $0x340] sm:$0xff]
        %v4300 = vld [vmem:[#allocation19 + $0x348] sm:$0xff]
        %v4301 = vld [vmem:[#allocation19 + $0x350] sm:$0xff]
        %v4302 = vld [vmem:[#allocation19 + $0x358] sm:$0xff]
        %v4303 = vld [vmem:[#allocation19 + $0x360] sm:$0xff]
        %v4304 = vld [vmem:[#allocation19 + $0x368] sm:$0xff]
        %v4305 = vld [vmem:[#allocation19 + $0x370] sm:$0xff]
        %v4306 = vld [vmem:[#allocation19 + $0x378] sm:$0xff]
        %v4307 = vld [vmem:[#allocation19 + $0x380] sm:$0xff]
        %v4308 = vld [vmem:[#allocation19 + $0x388] sm:$0xff]
        %v4309 = vld [vmem:[#allocation19 + $0x390] sm:$0xff]
        %v4310 = vld [vmem:[#allocation19 + $0x398] sm:$0xff]
        %v4311 = vld [vmem:[#allocation19 + $0x3a0] sm:$0xff]
        %v4312 = vld [vmem:[#allocation19 + $0x3a8] sm:$0xff]
        %v4313 = vld [vmem:[#allocation19 + $0x3b0] sm:$0xff]
        %v4314 = vld [vmem:[#allocation19 + $0x3b8] sm:$0xff]
        %v4315 = vld [vmem:[#allocation19 + $0x3c0] sm:$0xff]
        %v4316 = vld [vmem:[#allocation19 + $0x3c8] sm:$0xff]
        %v4317 = vld [vmem:[#allocation19 + $0x3d0] sm:$0xff]
        %v4318 = vld [vmem:[#allocation19 + $0x3d8] sm:$0xff]
        %v4319 = vld [vmem:[#allocation19 + $0x3e0] sm:$0xff]
        %v4320 = vld [vmem:[#allocation19 + $0x3e8] sm:$0xff]
        %v4321 = vld [vmem:[#allocation19 + $0x3f0] sm:$0xff]
        %v4322 = vld [vmem:[#allocation19 + $0x3f8] sm:$0xff]
        %v4323 = vld [vmem:[#allocation19 + $0x400] sm:$0xff]
        %v4324 = vld [vmem:[#allocation19 + $0x408] sm:$0xff]
        %v4325 = vld [vmem:[#allocation19 + $0x410] sm:$0xff]
        %v4326 = vld [vmem:[#allocation19 + $0x418] sm:$0xff]
        %v4327 = vld [vmem:[#allocation19 + $0x420] sm:$0xff]
        %v4328 = vld [vmem:[#allocation19 + $0x428] sm:$0xff]
        %v4329 = vld [vmem:[#allocation19 + $0x430] sm:$0xff]
        %v4330 = vld [vmem:[#allocation19 + $0x438] sm:$0xff]
        %v4331 = vld [vmem:[#allocation19 + $0x440] sm:$0xff]
        %v4332 = vld [vmem:[#allocation19 + $0x448] sm:$0xff]
        %v4333 = vld [vmem:[#allocation19 + $0x450] sm:$0xff]
        %v4334 = vld [vmem:[#allocation19 + $0x458] sm:$0xff]
        %v4335 = vld [vmem:[#allocation19 + $0x460] sm:$0xff]
        %v4336 = vld [vmem:[#allocation19 + $0x468] sm:$0xff]
        %v4337 = vld [vmem:[#allocation19 + $0x470] sm:$0xff]
        %v4338 = vld [vmem:[#allocation19 + $0x478] sm:$0xff]
        %v4339 = vld [vmem:[#allocation19 + $0x480] sm:$0xff]
        %v4340 = vld [vmem:[#allocation19 + $0x488] sm:$0xff]
        %v4341 = vld [vmem:[#allocation19 + $0x490] sm:$0xff]
        %v4342 = vld [vmem:[#allocation19 + $0x498] sm:$0xff]
        %v4343 = vld [vmem:[#allocation19 + $0x4a0] sm:$0xff]
        %v4344 = vld [vmem:[#allocation19 + $0x4a8] sm:$0xff]
        %v4345 = vld [vmem:[#allocation19 + $0x4b0] sm:$0xff]
        %v4346 = vld [vmem:[#allocation19 + $0x4b8] sm:$0xff]
        %v4347 = vld [vmem:[#allocation19 + $0x4c0] sm:$0xff]
        %v4348 = vld [vmem:[#allocation19 + $0x4c8] sm:$0xff]
        %v4349 = vld [vmem:[#allocation19 + $0x4d0] sm:$0xff]
        %v4350 = vld [vmem:[#allocation19 + $0x4d8] sm:$0xff]
        %v4351 = vld [vmem:[#allocation19 + $0x4e0] sm:$0xff]
        %v4352 = vld [vmem:[#allocation19 + $0x4e8] sm:$0xff]
        %v4353 = vld [vmem:[#allocation19 + $0x4f0] sm:$0xff]
        %v4354 = vld [vmem:[#allocation19 + $0x4f8] sm:$0xff]
        %v4355 = vld [vmem:[#allocation19 + $0x500] sm:$0xff]
        %v4356 = vld [vmem:[#allocation19 + $0x508] sm:$0xff]
        %v4357 = vld [vmem:[#allocation19 + $0x510] sm:$0xff]
        %v4358 = vld [vmem:[#allocation19 + $0x518] sm:$0xff]
        %v4359 = vld [vmem:[#allocation19 + $0x520] sm:$0xff]
        %v4360 = vld [vmem:[#allocation19 + $0x528] sm:$0xff]
        %v4361 = vld [vmem:[#allocation19 + $0x530] sm:$0xff]
        %v4362 = vld [vmem:[#allocation19 + $0x538] sm:$0xff]
        %v4363 = vld [vmem:[#allocation19 + $0x540] sm:$0xff]
        %v4364 = vld [vmem:[#allocation19 + $0x548] sm:$0xff]
        %v4365 = vld [vmem:[#allocation19 + $0x550] sm:$0xff]
        %v4366 = vld [vmem:[#allocation19 + $0x558] sm:$0xff]
        %v4367 = vld [vmem:[#allocation19 + $0x560] sm:$0xff]
        %v4368 = vld [vmem:[#allocation19 + $0x568] sm:$0xff]
        %v4369 = vld [vmem:[#allocation19 + $0x570] sm:$0xff]
        %v4370 = vld [vmem:[#allocation19 + $0x578] sm:$0xff]
        %v4371 = vld [vmem:[#allocation19 + $0x580] sm:$0xff]
        %v4372 = vld [vmem:[#allocation19 + $0x588] sm:$0xff]
        %v4373 = vld [vmem:[#allocation19 + $0x590] sm:$0xff]
        %v4374 = vld [vmem:[#allocation19 + $0x598] sm:$0xff]
        %v4375 = vld [vmem:[#allocation19 + $0x5a0] sm:$0xff]
        %v4376 = vld [vmem:[#allocation19 + $0x5a8] sm:$0xff]
        %v4377 = vld [vmem:[#allocation19 + $0x5b0] sm:$0xff]
        %v4378 = vld [vmem:[#allocation19 + $0x5b8] sm:$0xff]
        %v4379 = vld [vmem:[#allocation19 + $0x5c0] sm:$0xff]
        %v4380 = vld [vmem:[#allocation19 + $0x5c8] sm:$0xff]
        %v4381 = vld [vmem:[#allocation19 + $0x5d0] sm:$0xff]
        %v4382 = vld [vmem:[#allocation19 + $0x5d8] sm:$0xff]
        %v4383 = vld [vmem:[#allocation19 + $0x5e0] sm:$0xff]
        %v4384 = vld [vmem:[#allocation19 + $0x5e8] sm:$0xff]
        %v4385 = vld [vmem:[#allocation19 + $0x5f0] sm:$0xff]
        %v4386 = vld [vmem:[#allocation19 + $0x5f8] sm:$0xff]
        %v4387 = vld [vmem:[#allocation19 + $0x600] sm:$0xff]
        %v4388 = vld [vmem:[#allocation19 + $0x608] sm:$0xff]
        %v4389 = vld [vmem:[#allocation19 + $0x610] sm:$0xff]
        %v4390 = vld [vmem:[#allocation19 + $0x618] sm:$0xff]
        %v4391 = vld [vmem:[#allocation19 + $0x620] sm:$0xff]
        %v4392 = vld [vmem:[#allocation19 + $0x628] sm:$0xff]
        %v4393 = vld [vmem:[#allocation19 + $0x630] sm:$0xff]
        %v4394 = vld [vmem:[#allocation19 + $0x638] sm:$0xff]
        %v4395 = vld [vmem:[#allocation19 + $0x640] sm:$0xff]
        %v4396 = vld [vmem:[#allocation19 + $0x648] sm:$0xff]
        %v4397 = vld [vmem:[#allocation19 + $0x650] sm:$0xff]
        %v4398 = vld [vmem:[#allocation19 + $0x658] sm:$0xff]
        %v4399 = vld [vmem:[#allocation19 + $0x660] sm:$0xff]
        %v4400 = vld [vmem:[#allocation19 + $0x668] sm:$0xff]
        %v4401 = vld [vmem:[#allocation19 + $0x670] sm:$0xff]
        %v4402 = vld [vmem:[#allocation19 + $0x678] sm:$0xff]
        %v4403 = vld [vmem:[#allocation19 + $0x680] sm:$0xff]
        %v4404 = vld [vmem:[#allocation19 + $0x688] sm:$0xff]
        %v4405 = vld [vmem:[#allocation19 + $0x690] sm:$0xff]
        %v4406 = vld [vmem:[#allocation19 + $0x698] sm:$0xff]
        %v4407 = vld [vmem:[#allocation19 + $0x6a0] sm:$0xff]
        %v4408 = vld [vmem:[#allocation19 + $0x6a8] sm:$0xff]
        %v4409 = vld [vmem:[#allocation19 + $0x6b0] sm:$0xff]
        %v4410 = vld [vmem:[#allocation19 + $0x6b8] sm:$0xff]
        %v4411 = vld [vmem:[#allocation19 + $0x6c0] sm:$0xff]
        %v4412 = vld [vmem:[#allocation19 + $0x6c8] sm:$0xff]
        %v4413 = vld [vmem:[#allocation19 + $0x6d0] sm:$0xff]
        %v4414 = vld [vmem:[#allocation19 + $0x6d8] sm:$0xff]
        %v4415 = vld [vmem:[#allocation19 + $0x6e0] sm:$0xff]
        %v4416 = vld [vmem:[#allocation19 + $0x6e8] sm:$0xff]
        %v4417 = vld [vmem:[#allocation19 + $0x6f0] sm:$0xff]
        %v4418 = vld [vmem:[#allocation19 + $0x6f8] sm:$0xff]
        %v4419 = vld [vmem:[#allocation19 + $0x700] sm:$0xff]
        %v4420 = vld [vmem:[#allocation19 + $0x708] sm:$0xff]
        %v4421 = vld [vmem:[#allocation19 + $0x710] sm:$0xff]
        %v4422 = vld [vmem:[#allocation19 + $0x718] sm:$0xff]
        %v4423 = vld [vmem:[#allocation19 + $0x720] sm:$0xff]
        %v4424 = vld [vmem:[#allocation19 + $0x728] sm:$0xff]
        %v4425 = vld [vmem:[#allocation19 + $0x730] sm:$0xff]
        %v4426 = vld [vmem:[#allocation19 + $0x738] sm:$0xff]
        %v4427 = vld [vmem:[#allocation19 + $0x740] sm:$0xff]
        %v4428 = vld [vmem:[#allocation19 + $0x748] sm:$0xff]
        %v4429 = vld [vmem:[#allocation19 + $0x750] sm:$0xff]
        %v4430 = vld [vmem:[#allocation19 + $0x758] sm:$0xff]
        %v4431 = vld [vmem:[#allocation19 + $0x760] sm:$0xff]
        %v4432 = vld [vmem:[#allocation19 + $0x768] sm:$0xff]
        %v4433 = vld [vmem:[#allocation19 + $0x770] sm:$0xff]
        %v4434 = vld [vmem:[#allocation19 + $0x778] sm:$0xff]
        %v4435 = vld [vmem:[#allocation19 + $0x780] sm:$0xff]
        %v4436 = vld [vmem:[#allocation19 + $0x788] sm:$0xff]
        %v4437 = vld [vmem:[#allocation19 + $0x790] sm:$0xff]
        %v4438 = vld [vmem:[#allocation19 + $0x798] sm:$0xff]
        %v4439 = vld [vmem:[#allocation19 + $0x7a0] sm:$0xff]
        %v4440 = vld [vmem:[#allocation19 + $0x7a8] sm:$0xff]
        %v4441 = vld [vmem:[#allocation19 + $0x7b0] sm:$0xff]
        %v4442 = vld [vmem:[#allocation19 + $0x7b8] sm:$0xff]
        %v4443 = vld [vmem:[#allocation19 + $0x7c0] sm:$0xff]
        %v4444 = vld [vmem:[#allocation19 + $0x7c8] sm:$0xff]
        %v4445 = vld [vmem:[#allocation19 + $0x7d0] sm:$0xff]
        %v4446 = vld [vmem:[#allocation19 + $0x7d8] sm:$0xff]
        %v4447 = vld [vmem:[#allocation19 + $0x7e0] sm:$0xff]
        %v4448 = vld [vmem:[#allocation19 + $0x7e8] sm:$0xff]
        %v4449 = vld [vmem:[#allocation19 + $0x7f0] sm:$0xff]
        %v4450 = vld [vmem:[#allocation19 + $0x7f8] sm:$0xff]
        %v4451 = vld [vmem:[#allocation19 + $0x800] sm:$0xff]
        %v4452 = vld [vmem:[#allocation19 + $0x808] sm:$0xff]
        %v4453 = vld [vmem:[#allocation19 + $0x810] sm:$0xff]
        %v4454 = vld [vmem:[#allocation19 + $0x818] sm:$0xff]
        %v4455 = vld [vmem:[#allocation19 + $0x820] sm:$0xff]
        %v4456 = vld [vmem:[#allocation19 + $0x828] sm:$0xff]
        %v4457 = vld [vmem:[#allocation19 + $0x830] sm:$0xff]
        %v4458 = vld [vmem:[#allocation19 + $0x838] sm:$0xff]
        %v4459 = vld [vmem:[#allocation19 + $0x840] sm:$0xff]
        %v4460 = vld [vmem:[#allocation19 + $0x848] sm:$0xff]
        %v4461 = vld [vmem:[#allocation19 + $0x850] sm:$0xff]
        %v4462 = vld [vmem:[#allocation19 + $0x858] sm:$0xff]
        %v4463 = vld [vmem:[#allocation19 + $0x860] sm:$0xff]
        %v4464 = vld [vmem:[#allocation19 + $0x868] sm:$0xff]
        %v4465 = vld [vmem:[#allocation19 + $0x870] sm:$0xff]
        %v4466 = vld [vmem:[#allocation19 + $0x878] sm:$0xff]
        %v4467 = vld [vmem:[#allocation19 + $0x880] sm:$0xff]
        %v4468 = vld [vmem:[#allocation19 + $0x888] sm:$0xff]
        %v4469 = vld [vmem:[#allocation19 + $0x890] sm:$0xff]
        %v4470 = vld [vmem:[#allocation19 + $0x898] sm:$0xff]
        %v4471 = vld [vmem:[#allocation19 + $0x8a0] sm:$0xff]
        %v4472 = vld [vmem:[#allocation19 + $0x8a8] sm:$0xff]
        %v4473 = vld [vmem:[#allocation19 + $0x8b0] sm:$0xff]
        %v4474 = vld [vmem:[#allocation19 + $0x8b8] sm:$0xff]
        %v4475 = vld [vmem:[#allocation19 + $0x8c0] sm:$0xff]
        %v4476 = vld [vmem:[#allocation19 + $0x8c8] sm:$0xff]
        %v4477 = vld [vmem:[#allocation19 + $0x8d0] sm:$0xff]
        %v4478 = vld [vmem:[#allocation19 + $0x8d8] sm:$0xff]
        %v4479 = vld [vmem:[#allocation19 + $0x8e0] sm:$0xff]
        %v4480 = vld [vmem:[#allocation19 + $0x8e8] sm:$0xff]
        %v4481 = vld [vmem:[#allocation19 + $0x8f0] sm:$0xff]
        %v4482 = vld [vmem:[#allocation19 + $0x8f8] sm:$0xff]
        %v4483 = vld [vmem:[#allocation21] sm:$0xff]
        %v4484 = vld [vmem:[#allocation21 + $0x8] sm:$0xf]
        %v4487 = vlaneseq
        %v4488 = vshrl.u32 %v4487, 7
        %v4489 = vsub.s32 0, %v4488
        %v4490 = vrot.slane %v4483, %v4489
        %v4491 = vlaneseq
        %v4492 = vshrl.u32 %v4491, 7
        %v4493 = vsub.s32 1, %v4492
        %v4494 = vrot.slane %v4483, %v4493
        %v4495 = vlaneseq
        %v4496 = vshrl.u32 %v4495, 7
        %v4497 = vsub.s32 2, %v4496
        %v4498 = vrot.slane %v4483, %v4497
        %v4499 = vlaneseq
        %v4500 = vshrl.u32 %v4499, 7
        %v4501 = vsub.s32 3, %v4500
        %v4502 = vrot.slane %v4483, %v4501
        %v4503 = vlaneseq
        %v4504 = vshrl.u32 %v4503, 7
        %v4505 = vsub.s32 4, %v4504
        %v4506 = vrot.slane %v4483, %v4505
        %v4507 = vlaneseq
        %v4508 = vshrl.u32 %v4507, 7
        %v4509 = vsub.s32 5, %v4508
        %v4510 = vrot.slane %v4483, %v4509
        %v4511 = vlaneseq
        %v4512 = vshrl.u32 %v4511, 7
        %v4513 = vsub.s32 6, %v4512
        %v4514 = vrot.slane %v4483, %v4513
        %v4515 = vlaneseq
        %v4516 = vshrl.u32 %v4515, 7
        %v4517 = vsub.s32 7, %v4516
        %v4518 = vrot.slane %v4483, %v4517
        %v4519 = vlaneseq
        %v4520 = vshrl.u32 %v4519, 7
        %v4521 = vsub.s32 0, %v4520
        %v4522 = vrot.slane %v4484, %v4521
        %v4523 = vlaneseq
        %v4524 = vshrl.u32 %v4523, 7
        %v4525 = vsub.s32 1, %v4524
        %v4526 = vrot.slane %v4484, %v4525
        %v4527 = vlaneseq
        %v4528 = vshrl.u32 %v4527, 7
        %v4529 = vsub.s32 2, %v4528
        %v4530 = vrot.slane %v4484, %v4529
        %v4531 = vlaneseq
        %v4532 = vshrl.u32 %v4531, 7
        %v4533 = vsub.s32 3, %v4532
        %v4534 = vrot.slane %v4484, %v4533
        %v4835 = vunpack.c.l.b16 %v4195
        %v4836 = vunpack.c.h.b16 %v4195
        %v4837 = vunpack.c.l.b16 %v4196
        %v4838 = vunpack.c.h.b16 %v4196
        %v4839 = vunpack.c.l.b16 %v4197
        %v4840 = vunpack.c.h.b16 %v4197
        %v4841 = vunpack.c.l.b16 %v4198
        %v4842 = vunpack.c.h.b16 %v4198
        %v4843 = vunpack.c.l.b16 %v4199
        %v4844 = vunpack.c.h.b16 %v4199
        %v4845 = vunpack.c.l.b16 %v4200
        %v4846 = vunpack.c.h.b16 %v4200
        %v4847 = vunpack.c.l.b16 %v4201
        %v4848 = vunpack.c.h.b16 %v4201
        %v4849 = vunpack.c.l.b16 %v4202
        %v4850 = vunpack.c.h.b16 %v4202
        %v4851 = vunpack.c.l.b16 %v4203
        %v4852 = vunpack.c.h.b16 %v4203
        %v4853 = vunpack.c.l.b16 %v4204
        %v4854 = vunpack.c.h.b16 %v4204
        %v4855 = vunpack.c.l.b16 %v4205
        %v4856 = vunpack.c.h.b16 %v4205
        %v4857 = vunpack.c.l.b16 %v4206
        %v4858 = vunpack.c.h.b16 %v4206
        %v4859 = vunpack.c.l.b16 %v4207
        %v4860 = vunpack.c.h.b16 %v4207
        %v4861 = vunpack.c.l.b16 %v4208
        %v4862 = vunpack.c.h.b16 %v4208
        %v4863 = vunpack.c.l.b16 %v4209
        %v4864 = vunpack.c.h.b16 %v4209
        %v4865 = vunpack.c.l.b16 %v4210
        %v4866 = vunpack.c.h.b16 %v4210
        %v4867 = vunpack.c.l.b16 %v4211
        %v4868 = vunpack.c.h.b16 %v4211
        %v4869 = vunpack.c.l.b16 %v4212
        %v4870 = vunpack.c.h.b16 %v4212
        %v4871 = vunpack.c.l.b16 %v4213
        %v4872 = vunpack.c.h.b16 %v4213
        %v4873 = vunpack.c.l.b16 %v4214
        %v4874 = vunpack.c.h.b16 %v4214
        %v4875 = vunpack.c.l.b16 %v4215
        %v4876 = vunpack.c.h.b16 %v4215
        %v4877 = vunpack.c.l.b16 %v4216
        %v4878 = vunpack.c.h.b16 %v4216
        %v4879 = vunpack.c.l.b16 %v4217
        %v4880 = vunpack.c.h.b16 %v4217
        %v4881 = vunpack.c.l.b16 %v4218
        %v4882 = vunpack.c.h.b16 %v4218
        %v4883 = vunpack.c.l.b16 %v4219
        %v4884 = vunpack.c.h.b16 %v4219
        %v4885 = vunpack.c.l.b16 %v4220
        %v4886 = vunpack.c.h.b16 %v4220
        %v4887 = vunpack.c.l.b16 %v4221
        %v4888 = vunpack.c.h.b16 %v4221
        %v4889 = vunpack.c.l.b16 %v4222
        %v4890 = vunpack.c.h.b16 %v4222
        %v4891 = vunpack.c.l.b16 %v4223
        %v4892 = vunpack.c.h.b16 %v4223
        %v4893 = vunpack.c.l.b16 %v4224
        %v4894 = vunpack.c.h.b16 %v4224
        %v4895 = vunpack.c.l.b16 %v4225
        %v4896 = vunpack.c.h.b16 %v4225
        %v4897 = vunpack.c.l.b16 %v4226
        %v4898 = vunpack.c.h.b16 %v4226
        %v4899 = vunpack.c.l.b16 %v4227
        %v4900 = vunpack.c.h.b16 %v4227
        %v4901 = vunpack.c.l.b16 %v4228
        %v4902 = vunpack.c.h.b16 %v4228
        %v4903 = vunpack.c.l.b16 %v4229
        %v4904 = vunpack.c.h.b16 %v4229
        %v4905 = vunpack.c.l.b16 %v4230
        %v4906 = vunpack.c.h.b16 %v4230
        %v4907 = vunpack.c.l.b16 %v4231
        %v4908 = vunpack.c.h.b16 %v4231
        %v4909 = vunpack.c.l.b16 %v4232
        %v4910 = vunpack.c.h.b16 %v4232
        %v4911 = vunpack.c.l.b16 %v4233
        %v4912 = vunpack.c.h.b16 %v4233
        %v4913 = vunpack.c.l.b16 %v4234
        %v4914 = vunpack.c.h.b16 %v4234
        %v4915 = vunpack.c.l.b16 %v4235
        %v4916 = vunpack.c.h.b16 %v4235
        %v4917 = vunpack.c.l.b16 %v4236
        %v4918 = vunpack.c.h.b16 %v4236
        %v4919 = vunpack.c.l.b16 %v4237
        %v4920 = vunpack.c.h.b16 %v4237
        %v4921 = vunpack.c.l.b16 %v4238
        %v4922 = vunpack.c.h.b16 %v4238
        %v4923 = vunpack.c.l.b16 %v4239
        %v4924 = vunpack.c.h.b16 %v4239
        %v4925 = vunpack.c.l.b16 %v4240
        %v4926 = vunpack.c.h.b16 %v4240
        %v4927 = vunpack.c.l.b16 %v4241
        %v4928 = vunpack.c.h.b16 %v4241
        %v4929 = vunpack.c.l.b16 %v4242
        %v4930 = vunpack.c.h.b16 %v4242
        %v4931 = vunpack.c.l.b16 %v4243
        %v4932 = vunpack.c.h.b16 %v4243
        %v4933 = vunpack.c.l.b16 %v4244
        %v4934 = vunpack.c.h.b16 %v4244
        %v4935 = vunpack.c.l.b16 %v4245
        %v4936 = vunpack.c.h.b16 %v4245
        %v4937 = vunpack.c.l.b16 %v4246
        %v4938 = vunpack.c.h.b16 %v4246
        %v4939 = vunpack.c.l.b16 %v4247
        %v4940 = vunpack.c.h.b16 %v4247
        %v4941 = vunpack.c.l.b16 %v4248
        %v4942 = vunpack.c.h.b16 %v4248
        %v4943 = vunpack.c.l.b16 %v4249
        %v4944 = vunpack.c.h.b16 %v4249
        %v4945 = vunpack.c.l.b16 %v4250
        %v4946 = vunpack.c.h.b16 %v4250
        %v4947 = vunpack.c.l.b16 %v4251
        %v4948 = vunpack.c.h.b16 %v4251
        %v4949 = vunpack.c.l.b16 %v4252
        %v4950 = vunpack.c.h.b16 %v4252
        %v4951 = vunpack.c.l.b16 %v4253
        %v4952 = vunpack.c.h.b16 %v4253
        %v4953 = vunpack.c.l.b16 %v4254
        %v4954 = vunpack.c.h.b16 %v4254
        %v4955 = vunpack.c.l.b16 %v4255
        %v4956 = vunpack.c.h.b16 %v4255
        %v4957 = vunpack.c.l.b16 %v4256
        %v4958 = vunpack.c.h.b16 %v4256
        %v4959 = vunpack.c.l.b16 %v4257
        %v4960 = vunpack.c.h.b16 %v4257
        %v4961 = vunpack.c.l.b16 %v4258
        %v4962 = vunpack.c.h.b16 %v4258
        %v4963 = vunpack.c.l.b16 %v4259
        %v4964 = vunpack.c.h.b16 %v4259
        %v4965 = vunpack.c.l.b16 %v4260
        %v4966 = vunpack.c.h.b16 %v4260
        %v4967 = vunpack.c.l.b16 %v4261
        %v4968 = vunpack.c.h.b16 %v4261
        %v4969 = vunpack.c.l.b16 %v4262
        %v4970 = vunpack.c.h.b16 %v4262
        %v4971 = vunpack.c.l.b16 %v4263
        %v4972 = vunpack.c.h.b16 %v4263
        %v4973 = vunpack.c.l.b16 %v4264
        %v4974 = vunpack.c.h.b16 %v4264
        %v4975 = vunpack.c.l.b16 %v4265
        %v4976 = vunpack.c.h.b16 %v4265
        %v4977 = vunpack.c.l.b16 %v4266
        %v4978 = vunpack.c.h.b16 %v4266
        %v4979 = vunpack.c.l.b16 %v4267
        %v4980 = vunpack.c.h.b16 %v4267
        %v4981 = vunpack.c.l.b16 %v4268
        %v4982 = vunpack.c.h.b16 %v4268
        %v4983 = vunpack.c.l.b16 %v4269
        %v4984 = vunpack.c.h.b16 %v4269
        %v4985 = vunpack.c.l.b16 %v4270
        %v4986 = vunpack.c.h.b16 %v4270
        %v4987 = vunpack.c.l.b16 %v4271
        %v4988 = vunpack.c.h.b16 %v4271
        %v4989 = vunpack.c.l.b16 %v4272
        %v4990 = vunpack.c.h.b16 %v4272
        %v4991 = vunpack.c.l.b16 %v4273
        %v4992 = vunpack.c.h.b16 %v4273
        %v4993 = vunpack.c.l.b16 %v4274
        %v4994 = vunpack.c.h.b16 %v4274
        %v4995 = vunpack.c.l.b16 %v4275
        %v4996 = vunpack.c.h.b16 %v4275
        %v4997 = vunpack.c.l.b16 %v4276
        %v4998 = vunpack.c.h.b16 %v4276
        %v4999 = vunpack.c.l.b16 %v4277
        %v5000 = vunpack.c.h.b16 %v4277
        %v5001 = vunpack.c.l.b16 %v4278
        %v5002 = vunpack.c.h.b16 %v4278
        %v5003 = vunpack.c.l.b16 %v4279
        %v5004 = vunpack.c.h.b16 %v4279
        %v5005 = vunpack.c.l.b16 %v4280
        %v5006 = vunpack.c.h.b16 %v4280
        %v5007 = vunpack.c.l.b16 %v4281
        %v5008 = vunpack.c.h.b16 %v4281
        %v5009 = vunpack.c.l.b16 %v4282
        %v5010 = vunpack.c.h.b16 %v4282
        %v5011 = vunpack.c.l.b16 %v4283
        %v5012 = vunpack.c.h.b16 %v4283
        %v5013 = vunpack.c.l.b16 %v4284
        %v5014 = vunpack.c.h.b16 %v4284
        %v5015 = vunpack.c.l.b16 %v4285
        %v5016 = vunpack.c.h.b16 %v4285
        %v5017 = vunpack.c.l.b16 %v4286
        %v5018 = vunpack.c.h.b16 %v4286
        %v5019 = vunpack.c.l.b16 %v4287
        %v5020 = vunpack.c.h.b16 %v4287
        %v5021 = vunpack.c.l.b16 %v4288
        %v5022 = vunpack.c.h.b16 %v4288
        %v5023 = vunpack.c.l.b16 %v4289
        %v5024 = vunpack.c.h.b16 %v4289
        %v5025 = vunpack.c.l.b16 %v4290
        %v5026 = vunpack.c.h.b16 %v4290
        %v5027 = vunpack.c.l.b16 %v4291
        %v5028 = vunpack.c.h.b16 %v4291
        %v5029 = vunpack.c.l.b16 %v4292
        %v5030 = vunpack.c.h.b16 %v4292
        %v5031 = vunpack.c.l.b16 %v4293
        %v5032 = vunpack.c.h.b16 %v4293
        %v5033 = vunpack.c.l.b16 %v4294
        %v5034 = vunpack.c.h.b16 %v4294
        %v5035 = vunpack.c.l.b16 %v4295
        %v5036 = vunpack.c.h.b16 %v4295
        %v5037 = vunpack.c.l.b16 %v4296
        %v5038 = vunpack.c.h.b16 %v4296
        %v5039 = vunpack.c.l.b16 %v4297
        %v5040 = vunpack.c.h.b16 %v4297
        %v5041 = vunpack.c.l.b16 %v4298
        %v5042 = vunpack.c.h.b16 %v4298
        %v5043 = vunpack.c.l.b16 %v4299
        %v5044 = vunpack.c.h.b16 %v4299
        %v5045 = vunpack.c.l.b16 %v4300
        %v5046 = vunpack.c.h.b16 %v4300
        %v5047 = vunpack.c.l.b16 %v4301
        %v5048 = vunpack.c.h.b16 %v4301
        %v5049 = vunpack.c.l.b16 %v4302
        %v5050 = vunpack.c.h.b16 %v4302
        %v5051 = vunpack.c.l.b16 %v4303
        %v5052 = vunpack.c.h.b16 %v4303
        %v5053 = vunpack.c.l.b16 %v4304
        %v5054 = vunpack.c.h.b16 %v4304
        %v5055 = vunpack.c.l.b16 %v4305
        %v5056 = vunpack.c.h.b16 %v4305
        %v5057 = vunpack.c.l.b16 %v4306
        %v5058 = vunpack.c.h.b16 %v4306
        %v5059 = vunpack.c.l.b16 %v4307
        %v5060 = vunpack.c.h.b16 %v4307
        %v5061 = vunpack.c.l.b16 %v4308
        %v5062 = vunpack.c.h.b16 %v4308
        %v5063 = vunpack.c.l.b16 %v4309
        %v5064 = vunpack.c.h.b16 %v4309
        %v5065 = vunpack.c.l.b16 %v4310
        %v5066 = vunpack.c.h.b16 %v4310
        %v5067 = vunpack.c.l.b16 %v4311
        %v5068 = vunpack.c.h.b16 %v4311
        %v5069 = vunpack.c.l.b16 %v4312
        %v5070 = vunpack.c.h.b16 %v4312
        %v5071 = vunpack.c.l.b16 %v4313
        %v5072 = vunpack.c.h.b16 %v4313
        %v5073 = vunpack.c.l.b16 %v4314
        %v5074 = vunpack.c.h.b16 %v4314
        %v5075 = vunpack.c.l.b16 %v4315
        %v5076 = vunpack.c.h.b16 %v4315
        %v5077 = vunpack.c.l.b16 %v4316
        %v5078 = vunpack.c.h.b16 %v4316
        %v5079 = vunpack.c.l.b16 %v4317
        %v5080 = vunpack.c.h.b16 %v4317
        %v5081 = vunpack.c.l.b16 %v4318
        %v5082 = vunpack.c.h.b16 %v4318
        %v5083 = vunpack.c.l.b16 %v4319
        %v5084 = vunpack.c.h.b16 %v4319
        %v5085 = vunpack.c.l.b16 %v4320
        %v5086 = vunpack.c.h.b16 %v4320
        %v5087 = vunpack.c.l.b16 %v4321
        %v5088 = vunpack.c.h.b16 %v4321
        %v5089 = vunpack.c.l.b16 %v4322
        %v5090 = vunpack.c.h.b16 %v4322
        %v5091 = vunpack.c.l.b16 %v4323
        %v5092 = vunpack.c.h.b16 %v4323
        %v5093 = vunpack.c.l.b16 %v4324
        %v5094 = vunpack.c.h.b16 %v4324
        %v5095 = vunpack.c.l.b16 %v4325
        %v5096 = vunpack.c.h.b16 %v4325
        %v5097 = vunpack.c.l.b16 %v4326
        %v5098 = vunpack.c.h.b16 %v4326
        %v5099 = vunpack.c.l.b16 %v4327
        %v5100 = vunpack.c.h.b16 %v4327
        %v5101 = vunpack.c.l.b16 %v4328
        %v5102 = vunpack.c.h.b16 %v4328
        %v5103 = vunpack.c.l.b16 %v4329
        %v5104 = vunpack.c.h.b16 %v4329
        %v5105 = vunpack.c.l.b16 %v4330
        %v5106 = vunpack.c.h.b16 %v4330
        %v5107 = vunpack.c.l.b16 %v4331
        %v5108 = vunpack.c.h.b16 %v4331
        %v5109 = vunpack.c.l.b16 %v4332
        %v5110 = vunpack.c.h.b16 %v4332
        %v5111 = vunpack.c.l.b16 %v4333
        %v5112 = vunpack.c.h.b16 %v4333
        %v5113 = vunpack.c.l.b16 %v4334
        %v5114 = vunpack.c.h.b16 %v4334
        %v5115 = vunpack.c.l.b16 %v4335
        %v5116 = vunpack.c.h.b16 %v4335
        %v5117 = vunpack.c.l.b16 %v4336
        %v5118 = vunpack.c.h.b16 %v4336
        %v5119 = vunpack.c.l.b16 %v4337
        %v5120 = vunpack.c.h.b16 %v4337
        %v5121 = vunpack.c.l.b16 %v4338
        %v5122 = vunpack.c.h.b16 %v4338
        %v5123 = vunpack.c.l.b16 %v4339
        %v5124 = vunpack.c.h.b16 %v4339
        %v5125 = vunpack.c.l.b16 %v4340
        %v5126 = vunpack.c.h.b16 %v4340
        %v5127 = vunpack.c.l.b16 %v4341
        %v5128 = vunpack.c.h.b16 %v4341
        %v5129 = vunpack.c.l.b16 %v4342
        %v5130 = vunpack.c.h.b16 %v4342
        %v5131 = vunpack.c.l.b16 %v4343
        %v5132 = vunpack.c.h.b16 %v4343
        %v5133 = vunpack.c.l.b16 %v4344
        %v5134 = vunpack.c.h.b16 %v4344
        %v5135 = vunpack.c.l.b16 %v4345
        %v5136 = vunpack.c.h.b16 %v4345
        %v5137 = vunpack.c.l.b16 %v4346
        %v5138 = vunpack.c.h.b16 %v4346
        %v5139 = vunpack.c.l.b16 %v4347
        %v5140 = vunpack.c.h.b16 %v4347
        %v5141 = vunpack.c.l.b16 %v4348
        %v5142 = vunpack.c.h.b16 %v4348
        %v5143 = vunpack.c.l.b16 %v4349
        %v5144 = vunpack.c.h.b16 %v4349
        %v5145 = vunpack.c.l.b16 %v4350
        %v5146 = vunpack.c.h.b16 %v4350
        %v5147 = vunpack.c.l.b16 %v4351
        %v5148 = vunpack.c.h.b16 %v4351
        %v5149 = vunpack.c.l.b16 %v4352
        %v5150 = vunpack.c.h.b16 %v4352
        %v5151 = vunpack.c.l.b16 %v4353
        %v5152 = vunpack.c.h.b16 %v4353
        %v5153 = vunpack.c.l.b16 %v4354
        %v5154 = vunpack.c.h.b16 %v4354
        %v5155 = vunpack.c.l.b16 %v4355
        %v5156 = vunpack.c.h.b16 %v4355
        %v5157 = vunpack.c.l.b16 %v4356
        %v5158 = vunpack.c.h.b16 %v4356
        %v5159 = vunpack.c.l.b16 %v4357
        %v5160 = vunpack.c.h.b16 %v4357
        %v5161 = vunpack.c.l.b16 %v4358
        %v5162 = vunpack.c.h.b16 %v4358
        %v5163 = vunpack.c.l.b16 %v4359
        %v5164 = vunpack.c.h.b16 %v4359
        %v5165 = vunpack.c.l.b16 %v4360
        %v5166 = vunpack.c.h.b16 %v4360
        %v5167 = vunpack.c.l.b16 %v4361
        %v5168 = vunpack.c.h.b16 %v4361
        %v5169 = vunpack.c.l.b16 %v4362
        %v5170 = vunpack.c.h.b16 %v4362
        %v5171 = vunpack.c.l.b16 %v4363
        %v5172 = vunpack.c.h.b16 %v4363
        %v5173 = vunpack.c.l.b16 %v4364
        %v5174 = vunpack.c.h.b16 %v4364
        %v5175 = vunpack.c.l.b16 %v4365
        %v5176 = vunpack.c.h.b16 %v4365
        %v5177 = vunpack.c.l.b16 %v4366
        %v5178 = vunpack.c.h.b16 %v4366
        %v5179 = vunpack.c.l.b16 %v4367
        %v5180 = vunpack.c.h.b16 %v4367
        %v5181 = vunpack.c.l.b16 %v4368
        %v5182 = vunpack.c.h.b16 %v4368
        %v5183 = vunpack.c.l.b16 %v4369
        %v5184 = vunpack.c.h.b16 %v4369
        %v5185 = vunpack.c.l.b16 %v4370
        %v5186 = vunpack.c.h.b16 %v4370
        %v5187 = vunpack.c.l.b16 %v4371
        %v5188 = vunpack.c.h.b16 %v4371
        %v5189 = vunpack.c.l.b16 %v4372
        %v5190 = vunpack.c.h.b16 %v4372
        %v5191 = vunpack.c.l.b16 %v4373
        %v5192 = vunpack.c.h.b16 %v4373
        %v5193 = vunpack.c.l.b16 %v4374
        %v5194 = vunpack.c.h.b16 %v4374
        %v5195 = vunpack.c.l.b16 %v4375
        %v5196 = vunpack.c.h.b16 %v4375
        %v5197 = vunpack.c.l.b16 %v4376
        %v5198 = vunpack.c.h.b16 %v4376
        %v5199 = vunpack.c.l.b16 %v4377
        %v5200 = vunpack.c.h.b16 %v4377
        %v5201 = vunpack.c.l.b16 %v4378
        %v5202 = vunpack.c.h.b16 %v4378
        %v5203 = vunpack.c.l.b16 %v4379
        %v5204 = vunpack.c.h.b16 %v4379
        %v5205 = vunpack.c.l.b16 %v4380
        %v5206 = vunpack.c.h.b16 %v4380
        %v5207 = vunpack.c.l.b16 %v4381
        %v5208 = vunpack.c.h.b16 %v4381
        %v5209 = vunpack.c.l.b16 %v4382
        %v5210 = vunpack.c.h.b16 %v4382
        %v5211 = vunpack.c.l.b16 %v4383
        %v5212 = vunpack.c.h.b16 %v4383
        %v5213 = vunpack.c.l.b16 %v4384
        %v5214 = vunpack.c.h.b16 %v4384
        %v5215 = vunpack.c.l.b16 %v4385
        %v5216 = vunpack.c.h.b16 %v4385
        %v5217 = vunpack.c.l.b16 %v4386
        %v5218 = vunpack.c.h.b16 %v4386
        %v5219 = vunpack.c.l.b16 %v4387
        %v5220 = vunpack.c.h.b16 %v4387
        %v5221 = vunpack.c.l.b16 %v4388
        %v5222 = vunpack.c.h.b16 %v4388
        %v5223 = vunpack.c.l.b16 %v4389
        %v5224 = vunpack.c.h.b16 %v4389
        %v5225 = vunpack.c.l.b16 %v4390
        %v5226 = vunpack.c.h.b16 %v4390
        %v5227 = vunpack.c.l.b16 %v4391
        %v5228 = vunpack.c.h.b16 %v4391
        %v5229 = vunpack.c.l.b16 %v4392
        %v5230 = vunpack.c.h.b16 %v4392
        %v5231 = vunpack.c.l.b16 %v4393
        %v5232 = vunpack.c.h.b16 %v4393
        %v5233 = vunpack.c.l.b16 %v4394
        %v5234 = vunpack.c.h.b16 %v4394
        %v5235 = vunpack.c.l.b16 %v4395
        %v5236 = vunpack.c.h.b16 %v4395
        %v5237 = vunpack.c.l.b16 %v4396
        %v5238 = vunpack.c.h.b16 %v4396
        %v5239 = vunpack.c.l.b16 %v4397
        %v5240 = vunpack.c.h.b16 %v4397
        %v5241 = vunpack.c.l.b16 %v4398
        %v5242 = vunpack.c.h.b16 %v4398
        %v5243 = vunpack.c.l.b16 %v4399
        %v5244 = vunpack.c.h.b16 %v4399
        %v5245 = vunpack.c.l.b16 %v4400
        %v5246 = vunpack.c.h.b16 %v4400
        %v5247 = vunpack.c.l.b16 %v4401
        %v5248 = vunpack.c.h.b16 %v4401
        %v5249 = vunpack.c.l.b16 %v4402
        %v5250 = vunpack.c.h.b16 %v4402
        %v5251 = vunpack.c.l.b16 %v4403
        %v5252 = vunpack.c.h.b16 %v4403
        %v5253 = vunpack.c.l.b16 %v4404
        %v5254 = vunpack.c.h.b16 %v4404
        %v5255 = vunpack.c.l.b16 %v4405
        %v5256 = vunpack.c.h.b16 %v4405
        %v5257 = vunpack.c.l.b16 %v4406
        %v5258 = vunpack.c.h.b16 %v4406
        %v5259 = vunpack.c.l.b16 %v4407
        %v5260 = vunpack.c.h.b16 %v4407
        %v5261 = vunpack.c.l.b16 %v4408
        %v5262 = vunpack.c.h.b16 %v4408
        %v5263 = vunpack.c.l.b16 %v4409
        %v5264 = vunpack.c.h.b16 %v4409
        %v5265 = vunpack.c.l.b16 %v4410
        %v5266 = vunpack.c.h.b16 %v4410
        %v5267 = vunpack.c.l.b16 %v4411
        %v5268 = vunpack.c.h.b16 %v4411
        %v5269 = vunpack.c.l.b16 %v4412
        %v5270 = vunpack.c.h.b16 %v4412
        %v5271 = vunpack.c.l.b16 %v4413
        %v5272 = vunpack.c.h.b16 %v4413
        %v5273 = vunpack.c.l.b16 %v4414
        %v5274 = vunpack.c.h.b16 %v4414
        %v5275 = vunpack.c.l.b16 %v4415
        %v5276 = vunpack.c.h.b16 %v4415
        %v5277 = vunpack.c.l.b16 %v4416
        %v5278 = vunpack.c.h.b16 %v4416
        %v5279 = vunpack.c.l.b16 %v4417
        %v5280 = vunpack.c.h.b16 %v4417
        %v5281 = vunpack.c.l.b16 %v4418
        %v5282 = vunpack.c.h.b16 %v4418
        %v5283 = vunpack.c.l.b16 %v4419
        %v5284 = vunpack.c.h.b16 %v4419
        %v5285 = vunpack.c.l.b16 %v4420
        %v5286 = vunpack.c.h.b16 %v4420
        %v5287 = vunpack.c.l.b16 %v4421
        %v5288 = vunpack.c.h.b16 %v4421
        %v5289 = vunpack.c.l.b16 %v4422
        %v5290 = vunpack.c.h.b16 %v4422
        %v5291 = vunpack.c.l.b16 %v4423
        %v5292 = vunpack.c.h.b16 %v4423
        %v5293 = vunpack.c.l.b16 %v4424
        %v5294 = vunpack.c.h.b16 %v4424
        %v5295 = vunpack.c.l.b16 %v4425
        %v5296 = vunpack.c.h.b16 %v4425
        %v5297 = vunpack.c.l.b16 %v4426
        %v5298 = vunpack.c.h.b16 %v4426
        %v5299 = vunpack.c.l.b16 %v4427
        %v5300 = vunpack.c.h.b16 %v4427
        %v5301 = vunpack.c.l.b16 %v4428
        %v5302 = vunpack.c.h.b16 %v4428
        %v5303 = vunpack.c.l.b16 %v4429
        %v5304 = vunpack.c.h.b16 %v4429
        %v5305 = vunpack.c.l.b16 %v4430
        %v5306 = vunpack.c.h.b16 %v4430
        %v5307 = vunpack.c.l.b16 %v4431
        %v5308 = vunpack.c.h.b16 %v4431
        %v5309 = vunpack.c.l.b16 %v4432
        %v5310 = vunpack.c.h.b16 %v4432
        %v5311 = vunpack.c.l.b16 %v4433
        %v5312 = vunpack.c.h.b16 %v4433
        %v5313 = vunpack.c.l.b16 %v4434
        %v5314 = vunpack.c.h.b16 %v4434
        %v5315 = vunpack.c.l.b16 %v4435
        %v5316 = vunpack.c.h.b16 %v4435
        %v5317 = vunpack.c.l.b16 %v4436
        %v5318 = vunpack.c.h.b16 %v4436
        %v5319 = vunpack.c.l.b16 %v4437
        %v5320 = vunpack.c.h.b16 %v4437
        %v5321 = vunpack.c.l.b16 %v4438
        %v5322 = vunpack.c.h.b16 %v4438
        %v5323 = vunpack.c.l.b16 %v4439
        %v5324 = vunpack.c.h.b16 %v4439
        %v5325 = vunpack.c.l.b16 %v4440
        %v5326 = vunpack.c.h.b16 %v4440
        %v5327 = vunpack.c.l.b16 %v4441
        %v5328 = vunpack.c.h.b16 %v4441
        %v5329 = vunpack.c.l.b16 %v4442
        %v5330 = vunpack.c.h.b16 %v4442
        %v5331 = vunpack.c.l.b16 %v4443
        %v5332 = vunpack.c.h.b16 %v4443
        %v5333 = vunpack.c.l.b16 %v4444
        %v5334 = vunpack.c.h.b16 %v4444
        %v5335 = vunpack.c.l.b16 %v4445
        %v5336 = vunpack.c.h.b16 %v4445
        %v5337 = vunpack.c.l.b16 %v4446
        %v5338 = vunpack.c.h.b16 %v4446
        %v5339 = vunpack.c.l.b16 %v4447
        %v5340 = vunpack.c.h.b16 %v4447
        %v5341 = vunpack.c.l.b16 %v4448
        %v5342 = vunpack.c.h.b16 %v4448
        %v5343 = vunpack.c.l.b16 %v4449
        %v5344 = vunpack.c.h.b16 %v4449
        %v5345 = vunpack.c.l.b16 %v4450
        %v5346 = vunpack.c.h.b16 %v4450
        %v5347 = vunpack.c.l.b16 %v4451
        %v5348 = vunpack.c.h.b16 %v4451
        %v5349 = vunpack.c.l.b16 %v4452
        %v5350 = vunpack.c.h.b16 %v4452
        %v5351 = vunpack.c.l.b16 %v4453
        %v5352 = vunpack.c.h.b16 %v4453
        %v5353 = vunpack.c.l.b16 %v4454
        %v5354 = vunpack.c.h.b16 %v4454
        %v5355 = vunpack.c.l.b16 %v4455
        %v5356 = vunpack.c.h.b16 %v4455
        %v5357 = vunpack.c.l.b16 %v4456
        %v5358 = vunpack.c.h.b16 %v4456
        %v5359 = vunpack.c.l.b16 %v4457
        %v5360 = vunpack.c.h.b16 %v4457
        %v5361 = vunpack.c.l.b16 %v4458
        %v5362 = vunpack.c.h.b16 %v4458
        %v5363 = vunpack.c.l.b16 %v4459
        %v5364 = vunpack.c.h.b16 %v4459
        %v5365 = vunpack.c.l.b16 %v4460
        %v5366 = vunpack.c.h.b16 %v4460
        %v5367 = vunpack.c.l.b16 %v4461
        %v5368 = vunpack.c.h.b16 %v4461
        %v5369 = vunpack.c.l.b16 %v4462
        %v5370 = vunpack.c.h.b16 %v4462
        %v5371 = vunpack.c.l.b16 %v4463
        %v5372 = vunpack.c.h.b16 %v4463
        %v5373 = vunpack.c.l.b16 %v4464
        %v5374 = vunpack.c.h.b16 %v4464
        %v5375 = vunpack.c.l.b16 %v4465
        %v5376 = vunpack.c.h.b16 %v4465
        %v5377 = vunpack.c.l.b16 %v4466
        %v5378 = vunpack.c.h.b16 %v4466
        %v5379 = vunpack.c.l.b16 %v4467
        %v5380 = vunpack.c.h.b16 %v4467
        %v5381 = vunpack.c.l.b16 %v4468
        %v5382 = vunpack.c.h.b16 %v4468
        %v5383 = vunpack.c.l.b16 %v4469
        %v5384 = vunpack.c.h.b16 %v4469
        %v5385 = vunpack.c.l.b16 %v4470
        %v5386 = vunpack.c.h.b16 %v4470
        %v5387 = vunpack.c.l.b16 %v4471
        %v5388 = vunpack.c.h.b16 %v4471
        %v5389 = vunpack.c.l.b16 %v4472
        %v5390 = vunpack.c.h.b16 %v4472
        %v5391 = vunpack.c.l.b16 %v4473
        %v5392 = vunpack.c.h.b16 %v4473
        %v5393 = vunpack.c.l.b16 %v4474
        %v5394 = vunpack.c.h.b16 %v4474
        %v5395 = vunpack.c.l.b16 %v4475
        %v5396 = vunpack.c.h.b16 %v4475
        %v5397 = vunpack.c.l.b16 %v4476
        %v5398 = vunpack.c.h.b16 %v4476
        %v5399 = vunpack.c.l.b16 %v4477
        %v5400 = vunpack.c.h.b16 %v4477
        %v5401 = vunpack.c.l.b16 %v4478
        %v5402 = vunpack.c.h.b16 %v4478
        %v5403 = vunpack.c.l.b16 %v4479
        %v5404 = vunpack.c.h.b16 %v4479
        %v5405 = vunpack.c.l.b16 %v4480
        %v5406 = vunpack.c.h.b16 %v4480
        %v5407 = vunpack.c.l.b16 %v4481
        %v5408 = vunpack.c.h.b16 %v4481
        %v5409 = vunpack.c.l.b16 %v4482
        %v5410 = vunpack.c.h.b16 %v4482
        %v5411 = vpack.c.b16 %v4847, %v4835
        %v5412 = vpack.c.b16 %v4848, %v4836
        %v5413 = vpack.c.b16 %v4849, %v4837
        %v5414 = vpack.c.b16 %v4850, %v4838
        %v5415 = vpack.c.b16 %v4851, %v4839
        %v5416 = vpack.c.b16 %v4852, %v4840
        %v5417 = vpack.c.b16 %v4853, %v4841
        %v5418 = vpack.c.b16 %v4854, %v4842
        %v5419 = vpack.c.b16 %v4855, %v4843
        %v5420 = vpack.c.b16 %v4856, %v4844
        %v5421 = vpack.c.b16 %v4857, %v4845
        %v5422 = vpack.c.b16 %v4858, %v4846
        %v5423 = vpack.c.b16 %v4871, %v4859
        %v5424 = vpack.c.b16 %v4872, %v4860
        %v5425 = vpack.c.b16 %v4873, %v4861
        %v5426 = vpack.c.b16 %v4874, %v4862
        %v5427 = vpack.c.b16 %v4875, %v4863
        %v5428 = vpack.c.b16 %v4876, %v4864
        %v5429 = vpack.c.b16 %v4877, %v4865
        %v5430 = vpack.c.b16 %v4878, %v4866
        %v5431 = vpack.c.b16 %v4879, %v4867
        %v5432 = vpack.c.b16 %v4880, %v4868
        %v5433 = vpack.c.b16 %v4881, %v4869
        %v5434 = vpack.c.b16 %v4882, %v4870
        %v5435 = vpack.c.b16 %v4895, %v4883
        %v5436 = vpack.c.b16 %v4896, %v4884
        %v5437 = vpack.c.b16 %v4897, %v4885
        %v5438 = vpack.c.b16 %v4898, %v4886
        %v5439 = vpack.c.b16 %v4899, %v4887
        %v5440 = vpack.c.b16 %v4900, %v4888
        %v5441 = vpack.c.b16 %v4901, %v4889
        %v5442 = vpack.c.b16 %v4902, %v4890
        %v5443 = vpack.c.b16 %v4903, %v4891
        %v5444 = vpack.c.b16 %v4904, %v4892
        %v5445 = vpack.c.b16 %v4905, %v4893
        %v5446 = vpack.c.b16 %v4906, %v4894
        %v5447 = vpack.c.b16 %v4919, %v4907
        %v5448 = vpack.c.b16 %v4920, %v4908
        %v5449 = vpack.c.b16 %v4921, %v4909
        %v5450 = vpack.c.b16 %v4922, %v4910
        %v5451 = vpack.c.b16 %v4923, %v4911
        %v5452 = vpack.c.b16 %v4924, %v4912
        %v5453 = vpack.c.b16 %v4925, %v4913
        %v5454 = vpack.c.b16 %v4926, %v4914
        %v5455 = vpack.c.b16 %v4927, %v4915
        %v5456 = vpack.c.b16 %v4928, %v4916
        %v5457 = vpack.c.b16 %v4929, %v4917
        %v5458 = vpack.c.b16 %v4930, %v4918
        %v5459 = vpack.c.b16 %v4943, %v4931
        %v5460 = vpack.c.b16 %v4944, %v4932
        %v5461 = vpack.c.b16 %v4945, %v4933
        %v5462 = vpack.c.b16 %v4946, %v4934
        %v5463 = vpack.c.b16 %v4947, %v4935
        %v5464 = vpack.c.b16 %v4948, %v4936
        %v5465 = vpack.c.b16 %v4949, %v4937
        %v5466 = vpack.c.b16 %v4950, %v4938
        %v5467 = vpack.c.b16 %v4951, %v4939
        %v5468 = vpack.c.b16 %v4952, %v4940
        %v5469 = vpack.c.b16 %v4953, %v4941
        %v5470 = vpack.c.b16 %v4954, %v4942
        %v5471 = vpack.c.b16 %v4967, %v4955
        %v5472 = vpack.c.b16 %v4968, %v4956
        %v5473 = vpack.c.b16 %v4969, %v4957
        %v5474 = vpack.c.b16 %v4970, %v4958
        %v5475 = vpack.c.b16 %v4971, %v4959
        %v5476 = vpack.c.b16 %v4972, %v4960
        %v5477 = vpack.c.b16 %v4973, %v4961
        %v5478 = vpack.c.b16 %v4974, %v4962
        %v5479 = vpack.c.b16 %v4975, %v4963
        %v5480 = vpack.c.b16 %v4976, %v4964
        %v5481 = vpack.c.b16 %v4977, %v4965
        %v5482 = vpack.c.b16 %v4978, %v4966
        %v5483 = vpack.c.b16 %v4991, %v4979
        %v5484 = vpack.c.b16 %v4992, %v4980
        %v5485 = vpack.c.b16 %v4993, %v4981
        %v5486 = vpack.c.b16 %v4994, %v4982
        %v5487 = vpack.c.b16 %v4995, %v4983
        %v5488 = vpack.c.b16 %v4996, %v4984
        %v5489 = vpack.c.b16 %v4997, %v4985
        %v5490 = vpack.c.b16 %v4998, %v4986
        %v5491 = vpack.c.b16 %v4999, %v4987
        %v5492 = vpack.c.b16 %v5000, %v4988
        %v5493 = vpack.c.b16 %v5001, %v4989
        %v5494 = vpack.c.b16 %v5002, %v4990
        %v5495 = vpack.c.b16 %v5015, %v5003
        %v5496 = vpack.c.b16 %v5016, %v5004
        %v5497 = vpack.c.b16 %v5017, %v5005
        %v5498 = vpack.c.b16 %v5018, %v5006
        %v5499 = vpack.c.b16 %v5019, %v5007
        %v5500 = vpack.c.b16 %v5020, %v5008
        %v5501 = vpack.c.b16 %v5021, %v5009
        %v5502 = vpack.c.b16 %v5022, %v5010
        %v5503 = vpack.c.b16 %v5023, %v5011
        %v5504 = vpack.c.b16 %v5024, %v5012
        %v5505 = vpack.c.b16 %v5025, %v5013
        %v5506 = vpack.c.b16 %v5026, %v5014
        %v5507 = vpack.c.b16 %v5039, %v5027
        %v5508 = vpack.c.b16 %v5040, %v5028
        %v5509 = vpack.c.b16 %v5041, %v5029
        %v5510 = vpack.c.b16 %v5042, %v5030
        %v5511 = vpack.c.b16 %v5043, %v5031
        %v5512 = vpack.c.b16 %v5044, %v5032
        %v5513 = vpack.c.b16 %v5045, %v5033
        %v5514 = vpack.c.b16 %v5046, %v5034
        %v5515 = vpack.c.b16 %v5047, %v5035
        %v5516 = vpack.c.b16 %v5048, %v5036
        %v5517 = vpack.c.b16 %v5049, %v5037
        %v5518 = vpack.c.b16 %v5050, %v5038
        %v5519 = vpack.c.b16 %v5063, %v5051
        %v5520 = vpack.c.b16 %v5064, %v5052
        %v5521 = vpack.c.b16 %v5065, %v5053
        %v5522 = vpack.c.b16 %v5066, %v5054
        %v5523 = vpack.c.b16 %v5067, %v5055
        %v5524 = vpack.c.b16 %v5068, %v5056
        %v5525 = vpack.c.b16 %v5069, %v5057
        %v5526 = vpack.c.b16 %v5070, %v5058
        %v5527 = vpack.c.b16 %v5071, %v5059
        %v5528 = vpack.c.b16 %v5072, %v5060
        %v5529 = vpack.c.b16 %v5073, %v5061
        %v5530 = vpack.c.b16 %v5074, %v5062
        %v5531 = vpack.c.b16 %v5087, %v5075
        %v5532 = vpack.c.b16 %v5088, %v5076
        %v5533 = vpack.c.b16 %v5089, %v5077
        %v5534 = vpack.c.b16 %v5090, %v5078
        %v5535 = vpack.c.b16 %v5091, %v5079
        %v5536 = vpack.c.b16 %v5092, %v5080
        %v5537 = vpack.c.b16 %v5093, %v5081
        %v5538 = vpack.c.b16 %v5094, %v5082
        %v5539 = vpack.c.b16 %v5095, %v5083
        %v5540 = vpack.c.b16 %v5096, %v5084
        %v5541 = vpack.c.b16 %v5097, %v5085
        %v5542 = vpack.c.b16 %v5098, %v5086
        %v5543 = vpack.c.b16 %v5111, %v5099
        %v5544 = vpack.c.b16 %v5112, %v5100
        %v5545 = vpack.c.b16 %v5113, %v5101
        %v5546 = vpack.c.b16 %v5114, %v5102
        %v5547 = vpack.c.b16 %v5115, %v5103
        %v5548 = vpack.c.b16 %v5116, %v5104
        %v5549 = vpack.c.b16 %v5117, %v5105
        %v5550 = vpack.c.b16 %v5118, %v5106
        %v5551 = vpack.c.b16 %v5119, %v5107
        %v5552 = vpack.c.b16 %v5120, %v5108
        %v5553 = vpack.c.b16 %v5121, %v5109
        %v5554 = vpack.c.b16 %v5122, %v5110
        %v5555 = vpack.c.b16 %v5135, %v5123
        %v5556 = vpack.c.b16 %v5136, %v5124
        %v5557 = vpack.c.b16 %v5137, %v5125
        %v5558 = vpack.c.b16 %v5138, %v5126
        %v5559 = vpack.c.b16 %v5139, %v5127
        %v5560 = vpack.c.b16 %v5140, %v5128
        %v5561 = vpack.c.b16 %v5141, %v5129
        %v5562 = vpack.c.b16 %v5142, %v5130
        %v5563 = vpack.c.b16 %v5143, %v5131
        %v5564 = vpack.c.b16 %v5144, %v5132
        %v5565 = vpack.c.b16 %v5145, %v5133
        %v5566 = vpack.c.b16 %v5146, %v5134
        %v5567 = vpack.c.b16 %v5159, %v5147
        %v5568 = vpack.c.b16 %v5160, %v5148
        %v5569 = vpack.c.b16 %v5161, %v5149
        %v5570 = vpack.c.b16 %v5162, %v5150
        %v5571 = vpack.c.b16 %v5163, %v5151
        %v5572 = vpack.c.b16 %v5164, %v5152
        %v5573 = vpack.c.b16 %v5165, %v5153
        %v5574 = vpack.c.b16 %v5166, %v5154
        %v5575 = vpack.c.b16 %v5167, %v5155
        %v5576 = vpack.c.b16 %v5168, %v5156
        %v5577 = vpack.c.b16 %v5169, %v5157
        %v5578 = vpack.c.b16 %v5170, %v5158
        %v5579 = vpack.c.b16 %v5183, %v5171
        %v5580 = vpack.c.b16 %v5184, %v5172
        %v5581 = vpack.c.b16 %v5185, %v5173
        %v5582 = vpack.c.b16 %v5186, %v5174
        %v5583 = vpack.c.b16 %v5187, %v5175
        %v5584 = vpack.c.b16 %v5188, %v5176
        %v5585 = vpack.c.b16 %v5189, %v5177
        %v5586 = vpack.c.b16 %v5190, %v5178
        %v5587 = vpack.c.b16 %v5191, %v5179
        %v5588 = vpack.c.b16 %v5192, %v5180
        %v5589 = vpack.c.b16 %v5193, %v5181
        %v5590 = vpack.c.b16 %v5194, %v5182
        %v5591 = vpack.c.b16 %v5207, %v5195
        %v5592 = vpack.c.b16 %v5208, %v5196
        %v5593 = vpack.c.b16 %v5209, %v5197
        %v5594 = vpack.c.b16 %v5210, %v5198
        %v5595 = vpack.c.b16 %v5211, %v5199
        %v5596 = vpack.c.b16 %v5212, %v5200
        %v5597 = vpack.c.b16 %v5213, %v5201
        %v5598 = vpack.c.b16 %v5214, %v5202
        %v5599 = vpack.c.b16 %v5215, %v5203
        %v5600 = vpack.c.b16 %v5216, %v5204
        %v5601 = vpack.c.b16 %v5217, %v5205
        %v5602 = vpack.c.b16 %v5218, %v5206
        %v5603 = vpack.c.b16 %v5231, %v5219
        %v5604 = vpack.c.b16 %v5232, %v5220
        %v5605 = vpack.c.b16 %v5233, %v5221
        %v5606 = vpack.c.b16 %v5234, %v5222
        %v5607 = vpack.c.b16 %v5235, %v5223
        %v5608 = vpack.c.b16 %v5236, %v5224
        %v5609 = vpack.c.b16 %v5237, %v5225
        %v5610 = vpack.c.b16 %v5238, %v5226
        %v5611 = vpack.c.b16 %v5239, %v5227
        %v5612 = vpack.c.b16 %v5240, %v5228
        %v5613 = vpack.c.b16 %v5241, %v5229
        %v5614 = vpack.c.b16 %v5242, %v5230
        %v5615 = vpack.c.b16 %v5255, %v5243
        %v5616 = vpack.c.b16 %v5256, %v5244
        %v5617 = vpack.c.b16 %v5257, %v5245
        %v5618 = vpack.c.b16 %v5258, %v5246
        %v5619 = vpack.c.b16 %v5259, %v5247
        %v5620 = vpack.c.b16 %v5260, %v5248
        %v5621 = vpack.c.b16 %v5261, %v5249
        %v5622 = vpack.c.b16 %v5262, %v5250
        %v5623 = vpack.c.b16 %v5263, %v5251
        %v5624 = vpack.c.b16 %v5264, %v5252
        %v5625 = vpack.c.b16 %v5265, %v5253
        %v5626 = vpack.c.b16 %v5266, %v5254
        %v5627 = vpack.c.b16 %v5279, %v5267
        %v5628 = vpack.c.b16 %v5280, %v5268
        %v5629 = vpack.c.b16 %v5281, %v5269
        %v5630 = vpack.c.b16 %v5282, %v5270
        %v5631 = vpack.c.b16 %v5283, %v5271
        %v5632 = vpack.c.b16 %v5284, %v5272
        %v5633 = vpack.c.b16 %v5285, %v5273
        %v5634 = vpack.c.b16 %v5286, %v5274
        %v5635 = vpack.c.b16 %v5287, %v5275
        %v5636 = vpack.c.b16 %v5288, %v5276
        %v5637 = vpack.c.b16 %v5289, %v5277
        %v5638 = vpack.c.b16 %v5290, %v5278
        %v5639 = vpack.c.b16 %v5303, %v5291
        %v5640 = vpack.c.b16 %v5304, %v5292
        %v5641 = vpack.c.b16 %v5305, %v5293
        %v5642 = vpack.c.b16 %v5306, %v5294
        %v5643 = vpack.c.b16 %v5307, %v5295
        %v5644 = vpack.c.b16 %v5308, %v5296
        %v5645 = vpack.c.b16 %v5309, %v5297
        %v5646 = vpack.c.b16 %v5310, %v5298
        %v5647 = vpack.c.b16 %v5311, %v5299
        %v5648 = vpack.c.b16 %v5312, %v5300
        %v5649 = vpack.c.b16 %v5313, %v5301
        %v5650 = vpack.c.b16 %v5314, %v5302
        %v5651 = vpack.c.b16 %v5327, %v5315
        %v5652 = vpack.c.b16 %v5328, %v5316
        %v5653 = vpack.c.b16 %v5329, %v5317
        %v5654 = vpack.c.b16 %v5330, %v5318
        %v5655 = vpack.c.b16 %v5331, %v5319
        %v5656 = vpack.c.b16 %v5332, %v5320
        %v5657 = vpack.c.b16 %v5333, %v5321
        %v5658 = vpack.c.b16 %v5334, %v5322
        %v5659 = vpack.c.b16 %v5335, %v5323
        %v5660 = vpack.c.b16 %v5336, %v5324
        %v5661 = vpack.c.b16 %v5337, %v5325
        %v5662 = vpack.c.b16 %v5338, %v5326
        %v5663 = vpack.c.b16 %v5351, %v5339
        %v5664 = vpack.c.b16 %v5352, %v5340
        %v5665 = vpack.c.b16 %v5353, %v5341
        %v5666 = vpack.c.b16 %v5354, %v5342
        %v5667 = vpack.c.b16 %v5355, %v5343
        %v5668 = vpack.c.b16 %v5356, %v5344
        %v5669 = vpack.c.b16 %v5357, %v5345
        %v5670 = vpack.c.b16 %v5358, %v5346
        %v5671 = vpack.c.b16 %v5359, %v5347
        %v5672 = vpack.c.b16 %v5360, %v5348
        %v5673 = vpack.c.b16 %v5361, %v5349
        %v5674 = vpack.c.b16 %v5362, %v5350
        %v5675 = vpack.c.b16 %v5375, %v5363
        %v5676 = vpack.c.b16 %v5376, %v5364
        %v5677 = vpack.c.b16 %v5377, %v5365
        %v5678 = vpack.c.b16 %v5378, %v5366
        %v5679 = vpack.c.b16 %v5379, %v5367
        %v5680 = vpack.c.b16 %v5380, %v5368
        %v5681 = vpack.c.b16 %v5381, %v5369
        %v5682 = vpack.c.b16 %v5382, %v5370
        %v5683 = vpack.c.b16 %v5383, %v5371
        %v5684 = vpack.c.b16 %v5384, %v5372
        %v5685 = vpack.c.b16 %v5385, %v5373
        %v5686 = vpack.c.b16 %v5386, %v5374
        %v5687 = vpack.c.b16 %v5399, %v5387
        %v5688 = vpack.c.b16 %v5400, %v5388
        %v5689 = vpack.c.b16 %v5401, %v5389
        %v5690 = vpack.c.b16 %v5402, %v5390
        %v5691 = vpack.c.b16 %v5403, %v5391
        %v5692 = vpack.c.b16 %v5404, %v5392
        %v5693 = vpack.c.b16 %v5405, %v5393
        %v5694 = vpack.c.b16 %v5406, %v5394
        %v5695 = vpack.c.b16 %v5407, %v5395
        %v5696 = vpack.c.b16 %v5408, %v5396
        %v5697 = vpack.c.b16 %v5409, %v5397
        %v5698 = vpack.c.b16 %v5410, %v5398
        %5987 = vmatprep.subr.bf16.mxu0 %v5496
        %5988 = vmatpush1.bf16.msra.mxu0 %v5495
        %5989 = vmatprep.subr.bf16.mxu0 %v5484
        %5990 = vmatpush1.bf16.msra.mxu0 %v5483
        %5991 = vmatprep.subr.bf16.mxu0 %v5472
        %5992 = vmatpush1.bf16.msra.mxu0 %v5471
        %5993 = vmatprep.subr.bf16.mxu0 %v5460
        %5994 = vmatpush1.bf16.msra.mxu0 %v5459
        %5995 = vmatprep.subr.bf16.mxu0 %v5448
        %5996 = vmatpush1.bf16.msra.mxu0 %v5447
        %5997 = vmatprep.subr.bf16.mxu0 %v5436
        %5998 = vmatpush1.bf16.msra.mxu0 %v5435
        %5999 = vmatprep.subr.bf16.mxu0 %v5424
        %6000 = vmatpush1.bf16.msra.mxu0 %v5423
        %6001 = vmatprep.subr.bf16.mxu0 %v5412
        %6002 = vmatpush1.bf16.msra.mxu0 %v5411
        %6003 = vmatprep.subr.bf16.mxu0 %v5592
        %6004 = vmatpush2.bf16.msra.mxu0 %v5591
        %6005 = vmatprep.subr.bf16.mxu0 %v5580
        %6006 = vmatpush2.bf16.msra.mxu0 %v5579
        %6007 = vmatprep.subr.bf16.mxu0 %v5568
        %6008 = vmatpush2.bf16.msra.mxu0 %v5567
        %6009 = vmatprep.subr.bf16.mxu0 %v5556
        %6010 = vmatpush2.bf16.msra.mxu0 %v5555
        %6011 = vmatprep.subr.bf16.mxu0 %v5544
        %6012 = vmatpush2.bf16.msra.mxu0 %v5543
        %6013 = vmatprep.subr.bf16.mxu0 %v5532
        %6014 = vmatpush2.bf16.msra.mxu0 %v5531
        %6015 = vmatprep.subr.bf16.mxu0 %v5520
        %6016 = vmatpush2.bf16.msra.mxu0 %v5519
        %6017 = vmatprep.subr.bf16.mxu0 %v5508
        %6018 = vmatpush2.bf16.msra.mxu0 %v5507
        %6019 = vmatprep.mubr.bf16.mxu0 %v4193
        %6020 = vmatmul.mubr.bf16.gmra.mxu0 %v4192
        %v6021 = vpop.f32.mrf.mxu0
        %v6022 = vadd.f32 %v4490, %v6021
        %v6023 = vpop.f32.mrf.mxu0
        %v6024 = vadd.f32 %v4494, %v6023
        %v6025 = vpop.f32.mrf.mxu0
        %v6026 = vpop.f32.mrf.mxu0
        %6027 = vdwg.mxu0
        %6028 = vmatprep.subr.bf16.mxu0 %v5688
        %6029 = vmatpush1.bf16.msra.mxu0 %v5687
        %6030 = vmatprep.subr.bf16.mxu0 %v5676
        %6031 = vmatpush1.bf16.msra.mxu0 %v5675
        %6032 = vmatprep.subr.bf16.mxu0 %v5664
        %6033 = vmatpush1.bf16.msra.mxu0 %v5663
        %6034 = vmatprep.subr.bf16.mxu0 %v5652
        %6035 = vmatpush1.bf16.msra.mxu0 %v5651
        %6036 = vmatprep.subr.bf16.mxu0 %v5640
        %6037 = vmatpush1.bf16.msra.mxu0 %v5639
        %6038 = vmatprep.subr.bf16.mxu0 %v5628
        %6039 = vmatpush1.bf16.msra.mxu0 %v5627
        %6040 = vmatprep.subr.bf16.mxu0 %v5616
        %6041 = vmatpush1.bf16.msra.mxu0 %v5615
        %6042 = vmatprep.subr.bf16.mxu0 %v5604
        %6043 = vmatpush1.bf16.msra.mxu0 %v5603
        %6044 = vmatprep.subr.bf16.mxu0 0
        %6045 = vmatpush2.bf16.msra.mxu0 0
        %6046 = vmatprep.subr.bf16.mxu0 0
        %6047 = vmatpush2.bf16.msra.mxu0 0
        %6048 = vmatprep.subr.bf16.mxu0 0
        %6049 = vmatpush2.bf16.msra.mxu0 0
        %6050 = vmatprep.subr.bf16.mxu0 0
        %6051 = vmatpush2.bf16.msra.mxu0 0
        %6052 = vmatprep.subr.bf16.mxu0 0
        %6053 = vmatpush2.bf16.msra.mxu0 0
        %6054 = vmatprep.subr.bf16.mxu0 0
        %6055 = vmatpush2.bf16.msra.mxu0 0
        %6056 = vmatprep.subr.bf16.mxu0 0
        %6057 = vmatpush2.bf16.msra.mxu0 0
        %6058 = vmatprep.subr.bf16.mxu0 0
        %6059 = vmatpush2.bf16.msra.mxu0 0
        %6060 = vmatprep.mubr.bf16.mxu0 0
        %6061 = vmatmul.mubr.bf16.gmra.mxu0 %v4194
        %v6062 = vpop.f32.mrf.mxu0
        %v6063 = vadd.f32 %v6022, %v6062
        %v6064 = vpop.f32.mrf.mxu0
        %v6065 = vadd.f32 %v6024, %v6064
        %v6066 = vpop.f32.mrf.mxu0
        %v6067 = vpop.f32.mrf.mxu0
        %6068 = vdwg.mxu0
        %6069 = vmatprep.subr.bf16.mxu0 %v5498
        %6070 = vmatpush1.bf16.msra.mxu0 %v5497
        %6071 = vmatprep.subr.bf16.mxu0 %v5486
        %6072 = vmatpush1.bf16.msra.mxu0 %v5485
        %6073 = vmatprep.subr.bf16.mxu0 %v5474
        %6074 = vmatpush1.bf16.msra.mxu0 %v5473
        %6075 = vmatprep.subr.bf16.mxu0 %v5462
        %6076 = vmatpush1.bf16.msra.mxu0 %v5461
        %6077 = vmatprep.subr.bf16.mxu0 %v5450
        %6078 = vmatpush1.bf16.msra.mxu0 %v5449
        %6079 = vmatprep.subr.bf16.mxu0 %v5438
        %6080 = vmatpush1.bf16.msra.mxu0 %v5437
        %6081 = vmatprep.subr.bf16.mxu0 %v5426
        %6082 = vmatpush1.bf16.msra.mxu0 %v5425
        %6083 = vmatprep.subr.bf16.mxu0 %v5414
        %6084 = vmatpush1.bf16.msra.mxu0 %v5413
        %6085 = vmatprep.subr.bf16.mxu0 %v5594
        %6086 = vmatpush2.bf16.msra.mxu0 %v5593
        %6087 = vmatprep.subr.bf16.mxu0 %v5582
        %6088 = vmatpush2.bf16.msra.mxu0 %v5581
        %6089 = vmatprep.subr.bf16.mxu0 %v5570
        %6090 = vmatpush2.bf16.msra.mxu0 %v5569
        %6091 = vmatprep.subr.bf16.mxu0 %v5558
        %6092 = vmatpush2.bf16.msra.mxu0 %v5557
        %6093 = vmatprep.subr.bf16.mxu0 %v5546
        %6094 = vmatpush2.bf16.msra.mxu0 %v5545
        %6095 = vmatprep.subr.bf16.mxu0 %v5534
        %6096 = vmatpush2.bf16.msra.mxu0 %v5533
        %6097 = vmatprep.subr.bf16.mxu0 %v5522
        %6098 = vmatpush2.bf16.msra.mxu0 %v5521
        %6099 = vmatprep.subr.bf16.mxu0 %v5510
        %6100 = vmatpush2.bf16.msra.mxu0 %v5509
        %6101 = vmatprep.mubr.bf16.mxu0 %v4193
        %6102 = vmatmul.mubr.bf16.gmra.mxu0 %v4192
        %v6103 = vpop.f32.mrf.mxu0
        %v6104 = vadd.f32 %v4498, %v6103
        %v6105 = vpop.f32.mrf.mxu0
        %v6106 = vadd.f32 %v4502, %v6105
        %v6107 = vpop.f32.mrf.mxu0
        %v6108 = vpop.f32.mrf.mxu0
        %6109 = vdwg.mxu0
        %6110 = vmatprep.subr.bf16.mxu0 %v5690
        %6111 = vmatpush1.bf16.msra.mxu0 %v5689
        %6112 = vmatprep.subr.bf16.mxu0 %v5678
        %6113 = vmatpush1.bf16.msra.mxu0 %v5677
        %6114 = vmatprep.subr.bf16.mxu0 %v5666
        %6115 = vmatpush1.bf16.msra.mxu0 %v5665
        %6116 = vmatprep.subr.bf16.mxu0 %v5654
        %6117 = vmatpush1.bf16.msra.mxu0 %v5653
        %6118 = vmatprep.subr.bf16.mxu0 %v5642
        %6119 = vmatpush1.bf16.msra.mxu0 %v5641
        %6120 = vmatprep.subr.bf16.mxu0 %v5630
        %6121 = vmatpush1.bf16.msra.mxu0 %v5629
        %6122 = vmatprep.subr.bf16.mxu0 %v5618
        %6123 = vmatpush1.bf16.msra.mxu0 %v5617
        %6124 = vmatprep.subr.bf16.mxu0 %v5606
        %6125 = vmatpush1.bf16.msra.mxu0 %v5605
        %6126 = vmatprep.subr.bf16.mxu0 0
        %6127 = vmatpush2.bf16.msra.mxu0 0
        %6128 = vmatprep.subr.bf16.mxu0 0
        %6129 = vmatpush2.bf16.msra.mxu0 0
        %6130 = vmatprep.subr.bf16.mxu0 0
        %6131 = vmatpush2.bf16.msra.mxu0 0
        %6132 = vmatprep.subr.bf16.mxu0 0
        %6133 = vmatpush2.bf16.msra.mxu0 0
        %6134 = vmatprep.subr.bf16.mxu0 0
        %6135 = vmatpush2.bf16.msra.mxu0 0
        %6136 = vmatprep.subr.bf16.mxu0 0
        %6137 = vmatpush2.bf16.msra.mxu0 0
        %6138 = vmatprep.subr.bf16.mxu0 0
        %6139 = vmatpush2.bf16.msra.mxu0 0
        %6140 = vmatprep.subr.bf16.mxu0 0
        %6141 = vmatpush2.bf16.msra.mxu0 0
        %6142 = vmatprep.mubr.bf16.mxu0 0
        %6143 = vmatmul.mubr.bf16.gmra.mxu0 %v4194
        %v6144 = vpop.f32.mrf.mxu0
        %v6145 = vadd.f32 %v6104, %v6144
        %v6146 = vpop.f32.mrf.mxu0
        %v6147 = vadd.f32 %v6106, %v6146
        %v6148 = vpop.f32.mrf.mxu0
        %v6149 = vpop.f32.mrf.mxu0
        %6150 = vdwg.mxu0
        %6151 = vmatprep.subr.bf16.mxu0 %v5500
        %6152 = vmatpush1.bf16.msra.mxu0 %v5499
        %6153 = vmatprep.subr.bf16.mxu0 %v5488
        %6154 = vmatpush1.bf16.msra.mxu0 %v5487
        %6155 = vmatprep.subr.bf16.mxu0 %v5476
        %6156 = vmatpush1.bf16.msra.mxu0 %v5475
        %6157 = vmatprep.subr.bf16.mxu0 %v5464
        %6158 = vmatpush1.bf16.msra.mxu0 %v5463
        %6159 = vmatprep.subr.bf16.mxu0 %v5452
        %6160 = vmatpush1.bf16.msra.mxu0 %v5451
        %6161 = vmatprep.subr.bf16.mxu0 %v5440
        %6162 = vmatpush1.bf16.msra.mxu0 %v5439
        %6163 = vmatprep.subr.bf16.mxu0 %v5428
        %6164 = vmatpush1.bf16.msra.mxu0 %v5427
        %6165 = vmatprep.subr.bf16.mxu0 %v5416
        %6166 = vmatpush1.bf16.msra.mxu0 %v5415
        %6167 = vmatprep.subr.bf16.mxu0 %v5596
        %6168 = vmatpush2.bf16.msra.mxu0 %v5595
        %6169 = vmatprep.subr.bf16.mxu0 %v5584
        %6170 = vmatpush2.bf16.msra.mxu0 %v5583
        %6171 = vmatprep.subr.bf16.mxu0 %v5572
        %6172 = vmatpush2.bf16.msra.mxu0 %v5571
        %6173 = vmatprep.subr.bf16.mxu0 %v5560
        %6174 = vmatpush2.bf16.msra.mxu0 %v5559
        %6175 = vmatprep.subr.bf16.mxu0 %v5548
        %6176 = vmatpush2.bf16.msra.mxu0 %v5547
        %6177 = vmatprep.subr.bf16.mxu0 %v5536
        %6178 = vmatpush2.bf16.msra.mxu0 %v5535
        %6179 = vmatprep.subr.bf16.mxu0 %v5524
        %6180 = vmatpush2.bf16.msra.mxu0 %v5523
        %6181 = vmatprep.subr.bf16.mxu0 %v5512
        %6182 = vmatpush2.bf16.msra.mxu0 %v5511
        %6183 = vmatprep.mubr.bf16.mxu0 %v4193
        %6184 = vmatmul.mubr.bf16.gmra.mxu0 %v4192
        %v6185 = vpop.f32.mrf.mxu0
        %v6186 = vadd.f32 %v4506, %v6185
        %v6187 = vpop.f32.mrf.mxu0
        %v6188 = vadd.f32 %v4510, %v6187
        %v6189 = vpop.f32.mrf.mxu0
        %v6190 = vpop.f32.mrf.mxu0
        %6191 = vdwg.mxu0
        %6192 = vmatprep.subr.bf16.mxu0 %v5692
        %6193 = vmatpush1.bf16.msra.mxu0 %v5691
        %6194 = vmatprep.subr.bf16.mxu0 %v5680
        %6195 = vmatpush1.bf16.msra.mxu0 %v5679
        %6196 = vmatprep.subr.bf16.mxu0 %v5668
        %6197 = vmatpush1.bf16.msra.mxu0 %v5667
        %6198 = vmatprep.subr.bf16.mxu0 %v5656
        %6199 = vmatpush1.bf16.msra.mxu0 %v5655
        %6200 = vmatprep.subr.bf16.mxu0 %v5644
        %6201 = vmatpush1.bf16.msra.mxu0 %v5643
        %6202 = vmatprep.subr.bf16.mxu0 %v5632
        %6203 = vmatpush1.bf16.msra.mxu0 %v5631
        %6204 = vmatprep.subr.bf16.mxu0 %v5620
        %6205 = vmatpush1.bf16.msra.mxu0 %v5619
        %6206 = vmatprep.subr.bf16.mxu0 %v5608
        %6207 = vmatpush1.bf16.msra.mxu0 %v5607
        %6208 = vmatprep.subr.bf16.mxu0 0
        %6209 = vmatpush2.bf16.msra.mxu0 0
        %6210 = vmatprep.subr.bf16.mxu0 0
        %6211 = vmatpush2.bf16.msra.mxu0 0
        %6212 = vmatprep.subr.bf16.mxu0 0
        %6213 = vmatpush2.bf16.msra.mxu0 0
        %6214 = vmatprep.subr.bf16.mxu0 0
        %6215 = vmatpush2.bf16.msra.mxu0 0
        %6216 = vmatprep.subr.bf16.mxu0 0
        %6217 = vmatpush2.bf16.msra.mxu0 0
        %6218 = vmatprep.subr.bf16.mxu0 0
        %6219 = vmatpush2.bf16.msra.mxu0 0
        %6220 = vmatprep.subr.bf16.mxu0 0
        %6221 = vmatpush2.bf16.msra.mxu0 0
        %6222 = vmatprep.subr.bf16.mxu0 0
        %6223 = vmatpush2.bf16.msra.mxu0 0
        %6224 = vmatprep.mubr.bf16.mxu0 0
        %6225 = vmatmul.mubr.bf16.gmra.mxu0 %v4194
        %v6226 = vpop.f32.mrf.mxu0
        %v6227 = vadd.f32 %v6186, %v6226
        %v6228 = vpop.f32.mrf.mxu0
        %v6229 = vadd.f32 %v6188, %v6228
        %v6230 = vpop.f32.mrf.mxu0
        %v6231 = vpop.f32.mrf.mxu0
        %6232 = vdwg.mxu0
        %6233 = vmatprep.subr.bf16.mxu0 %v5502
        %6234 = vmatpush1.bf16.msra.mxu0 %v5501
        %6235 = vmatprep.subr.bf16.mxu0 %v5490
        %6236 = vmatpush1.bf16.msra.mxu0 %v5489
        %6237 = vmatprep.subr.bf16.mxu0 %v5478
        %6238 = vmatpush1.bf16.msra.mxu0 %v5477
        %6239 = vmatprep.subr.bf16.mxu0 %v5466
        %6240 = vmatpush1.bf16.msra.mxu0 %v5465
        %6241 = vmatprep.subr.bf16.mxu0 %v5454
        %6242 = vmatpush1.bf16.msra.mxu0 %v5453
        %6243 = vmatprep.subr.bf16.mxu0 %v5442
        %6244 = vmatpush1.bf16.msra.mxu0 %v5441
        %6245 = vmatprep.subr.bf16.mxu0 %v5430
        %6246 = vmatpush1.bf16.msra.mxu0 %v5429
        %6247 = vmatprep.subr.bf16.mxu0 %v5418
        %6248 = vmatpush1.bf16.msra.mxu0 %v5417
        %6249 = vmatprep.subr.bf16.mxu0 %v5598
        %6250 = vmatpush2.bf16.msra.mxu0 %v5597
        %6251 = vmatprep.subr.bf16.mxu0 %v5586
        %6252 = vmatpush2.bf16.msra.mxu0 %v5585
        %6253 = vmatprep.subr.bf16.mxu0 %v5574
        %6254 = vmatpush2.bf16.msra.mxu0 %v5573
        %6255 = vmatprep.subr.bf16.mxu0 %v5562
        %6256 = vmatpush2.bf16.msra.mxu0 %v5561
        %6257 = vmatprep.subr.bf16.mxu0 %v5550
        %6258 = vmatpush2.bf16.msra.mxu0 %v5549
        %6259 = vmatprep.subr.bf16.mxu0 %v5538
        %6260 = vmatpush2.bf16.msra.mxu0 %v5537
        %6261 = vmatprep.subr.bf16.mxu0 %v5526
        %6262 = vmatpush2.bf16.msra.mxu0 %v5525
        %6263 = vmatprep.subr.bf16.mxu0 %v5514
        %6264 = vmatpush2.bf16.msra.mxu0 %v5513
        %6265 = vmatprep.mubr.bf16.mxu0 %v4193
        %6266 = vmatmul.mubr.bf16.gmra.mxu0 %v4192
        %v6267 = vpop.f32.mrf.mxu0
        %v6268 = vadd.f32 %v4514, %v6267
        %v6269 = vpop.f32.mrf.mxu0
        %v6270 = vadd.f32 %v4518, %v6269
        %v6271 = vpop.f32.mrf.mxu0
        %v6272 = vpop.f32.mrf.mxu0
        %6273 = vdwg.mxu0
        %6274 = vmatprep.subr.bf16.mxu0 %v5694
        %6275 = vmatpush1.bf16.msra.mxu0 %v5693
        %6276 = vmatprep.subr.bf16.mxu0 %v5682
        %6277 = vmatpush1.bf16.msra.mxu0 %v5681
        %6278 = vmatprep.subr.bf16.mxu0 %v5670
        %6279 = vmatpush1.bf16.msra.mxu0 %v5669
        %6280 = vmatprep.subr.bf16.mxu0 %v5658
        %6281 = vmatpush1.bf16.msra.mxu0 %v5657
        %6282 = vmatprep.subr.bf16.mxu0 %v5646
        %6283 = vmatpush1.bf16.msra.mxu0 %v5645
        %6284 = vmatprep.subr.bf16.mxu0 %v5634
        %6285 = vmatpush1.bf16.msra.mxu0 %v5633
        %6286 = vmatprep.subr.bf16.mxu0 %v5622
        %6287 = vmatpush1.bf16.msra.mxu0 %v5621
        %6288 = vmatprep.subr.bf16.mxu0 %v5610
        %6289 = vmatpush1.bf16.msra.mxu0 %v5609
        %6290 = vmatprep.subr.bf16.mxu0 0
        %6291 = vmatpush2.bf16.msra.mxu0 0
        %6292 = vmatprep.subr.bf16.mxu0 0
        %6293 = vmatpush2.bf16.msra.mxu0 0
        %6294 = vmatprep.subr.bf16.mxu0 0
        %6295 = vmatpush2.bf16.msra.mxu0 0
        %6296 = vmatprep.subr.bf16.mxu0 0
        %6297 = vmatpush2.bf16.msra.mxu0 0
        %6298 = vmatprep.subr.bf16.mxu0 0
        %6299 = vmatpush2.bf16.msra.mxu0 0
        %6300 = vmatprep.subr.bf16.mxu0 0
        %6301 = vmatpush2.bf16.msra.mxu0 0
        %6302 = vmatprep.subr.bf16.mxu0 0
        %6303 = vmatpush2.bf16.msra.mxu0 0
        %6304 = vmatprep.subr.bf16.mxu0 0
        %6305 = vmatpush2.bf16.msra.mxu0 0
        %6306 = vmatprep.mubr.bf16.mxu0 0
        %6307 = vmatmul.mubr.bf16.gmra.mxu0 %v4194
        %v6308 = vpop.f32.mrf.mxu0
        %v6309 = vadd.f32 %v6268, %v6308
        %v6310 = vpop.f32.mrf.mxu0
        %v6311 = vadd.f32 %v6270, %v6310
        %v6312 = vpop.f32.mrf.mxu0
        %v6313 = vpop.f32.mrf.mxu0
        %6314 = vdwg.mxu0
        %6315 = vmatprep.subr.bf16.mxu0 %v5504
        %6316 = vmatpush1.bf16.msra.mxu0 %v5503
        %6317 = vmatprep.subr.bf16.mxu0 %v5492
        %6318 = vmatpush1.bf16.msra.mxu0 %v5491
        %6319 = vmatprep.subr.bf16.mxu0 %v5480
        %6320 = vmatpush1.bf16.msra.mxu0 %v5479
        %6321 = vmatprep.subr.bf16.mxu0 %v5468
        %6322 = vmatpush1.bf16.msra.mxu0 %v5467
        %6323 = vmatprep.subr.bf16.mxu0 %v5456
        %6324 = vmatpush1.bf16.msra.mxu0 %v5455
        %6325 = vmatprep.subr.bf16.mxu0 %v5444
        %6326 = vmatpush1.bf16.msra.mxu0 %v5443
        %6327 = vmatprep.subr.bf16.mxu0 %v5432
        %6328 = vmatpush1.bf16.msra.mxu0 %v5431
        %6329 = vmatprep.subr.bf16.mxu0 %v5420
        %6330 = vmatpush1.bf16.msra.mxu0 %v5419
        %6331 = vmatprep.subr.bf16.mxu0 %v5600
        %6332 = vmatpush2.bf16.msra.mxu0 %v5599
        %6333 = vmatprep.subr.bf16.mxu0 %v5588
        %6334 = vmatpush2.bf16.msra.mxu0 %v5587
        %6335 = vmatprep.subr.bf16.mxu0 %v5576
        %6336 = vmatpush2.bf16.msra.mxu0 %v5575
        %6337 = vmatprep.subr.bf16.mxu0 %v5564
        %6338 = vmatpush2.bf16.msra.mxu0 %v5563
        %6339 = vmatprep.subr.bf16.mxu0 %v5552
        %6340 = vmatpush2.bf16.msra.mxu0 %v5551
        %6341 = vmatprep.subr.bf16.mxu0 %v5540
        %6342 = vmatpush2.bf16.msra.mxu0 %v5539
        %6343 = vmatprep.subr.bf16.mxu0 %v5528
        %6344 = vmatpush2.bf16.msra.mxu0 %v5527
        %6345 = vmatprep.subr.bf16.mxu0 %v5516
        %6346 = vmatpush2.bf16.msra.mxu0 %v5515
        %6347 = vmatprep.mubr.bf16.mxu0 %v4193
        %6348 = vmatmul.mubr.bf16.gmra.mxu0 %v4192
        %v6349 = vpop.f32.mrf.mxu0
        %v6350 = vadd.f32 %v4522, %v6349
        %v6351 = vpop.f32.mrf.mxu0
        %v6352 = vadd.f32 %v4526, %v6351
        %v6353 = vpop.f32.mrf.mxu0
        %v6354 = vpop.f32.mrf.mxu0
        %6355 = vdwg.mxu0
        %6356 = vmatprep.subr.bf16.mxu0 %v5696
        %6357 = vmatpush1.bf16.msra.mxu0 %v5695
        %6358 = vmatprep.subr.bf16.mxu0 %v5684
        %6359 = vmatpush1.bf16.msra.mxu0 %v5683
        %6360 = vmatprep.subr.bf16.mxu0 %v5672
        %6361 = vmatpush1.bf16.msra.mxu0 %v5671
        %6362 = vmatprep.subr.bf16.mxu0 %v5660
        %6363 = vmatpush1.bf16.msra.mxu0 %v5659
        %6364 = vmatprep.subr.bf16.mxu0 %v5648
        %6365 = vmatpush1.bf16.msra.mxu0 %v5647
        %6366 = vmatprep.subr.bf16.mxu0 %v5636
        %6367 = vmatpush1.bf16.msra.mxu0 %v5635
        %6368 = vmatprep.subr.bf16.mxu0 %v5624
        %6369 = vmatpush1.bf16.msra.mxu0 %v5623
        %6370 = vmatprep.subr.bf16.mxu0 %v5612
        %6371 = vmatpush1.bf16.msra.mxu0 %v5611
        %6372 = vmatprep.subr.bf16.mxu0 0
        %6373 = vmatpush2.bf16.msra.mxu0 0
        %6374 = vmatprep.subr.bf16.mxu0 0
        %6375 = vmatpush2.bf16.msra.mxu0 0
        %6376 = vmatprep.subr.bf16.mxu0 0
        %6377 = vmatpush2.bf16.msra.mxu0 0
        %6378 = vmatprep.subr.bf16.mxu0 0
        %6379 = vmatpush2.bf16.msra.mxu0 0
        %6380 = vmatprep.subr.bf16.mxu0 0
        %6381 = vmatpush2.bf16.msra.mxu0 0
        %6382 = vmatprep.subr.bf16.mxu0 0
        %6383 = vmatpush2.bf16.msra.mxu0 0
        %6384 = vmatprep.subr.bf16.mxu0 0
        %6385 = vmatpush2.bf16.msra.mxu0 0
        %6386 = vmatprep.subr.bf16.mxu0 0
        %6387 = vmatpush2.bf16.msra.mxu0 0
        %6388 = vmatprep.mubr.bf16.mxu0 0
        %6389 = vmatmul.mubr.bf16.gmra.mxu0 %v4194
        %v6390 = vpop.f32.mrf.mxu0
        %v6391 = vadd.f32 %v6350, %v6390
        %v6392 = vpop.f32.mrf.mxu0
        %v6393 = vadd.f32 %v6352, %v6392
        %v6394 = vpop.f32.mrf.mxu0
        %v6395 = vpop.f32.mrf.mxu0
        %6396 = vdwg.mxu0
        %6397 = vmatprep.subr.bf16.mxu0 %v5506
        %6398 = vmatpush1.bf16.msra.mxu0 %v5505
        %6399 = vmatprep.subr.bf16.mxu0 %v5494
        %6400 = vmatpush1.bf16.msra.mxu0 %v5493
        %6401 = vmatprep.subr.bf16.mxu0 %v5482
        %6402 = vmatpush1.bf16.msra.mxu0 %v5481
        %6403 = vmatprep.subr.bf16.mxu0 %v5470
        %6404 = vmatpush1.bf16.msra.mxu0 %v5469
        %6405 = vmatprep.subr.bf16.mxu0 %v5458
        %6406 = vmatpush1.bf16.msra.mxu0 %v5457
        %6407 = vmatprep.subr.bf16.mxu0 %v5446
        %6408 = vmatpush1.bf16.msra.mxu0 %v5445
        %6409 = vmatprep.subr.bf16.mxu0 %v5434
        %6410 = vmatpush1.bf16.msra.mxu0 %v5433
        %6411 = vmatprep.subr.bf16.mxu0 %v5422
        %6412 = vmatpush1.bf16.msra.mxu0 %v5421
        %6413 = vmatprep.subr.bf16.mxu0 %v5602
        %6414 = vmatpush2.bf16.msra.mxu0 %v5601
        %6415 = vmatprep.subr.bf16.mxu0 %v5590
        %6416 = vmatpush2.bf16.msra.mxu0 %v5589
        %6417 = vmatprep.subr.bf16.mxu0 %v5578
        %6418 = vmatpush2.bf16.msra.mxu0 %v5577
        %6419 = vmatprep.subr.bf16.mxu0 %v5566
        %6420 = vmatpush2.bf16.msra.mxu0 %v5565
        %6421 = vmatprep.subr.bf16.mxu0 %v5554
        %6422 = vmatpush2.bf16.msra.mxu0 %v5553
        %6423 = vmatprep.subr.bf16.mxu0 %v5542
        %6424 = vmatpush2.bf16.msra.mxu0 %v5541
        %6425 = vmatprep.subr.bf16.mxu0 %v5530
        %6426 = vmatpush2.bf16.msra.mxu0 %v5529
        %6427 = vmatprep.subr.bf16.mxu0 %v5518
        %6428 = vmatpush2.bf16.msra.mxu0 %v5517
        %6429 = vmatprep.mubr.bf16.mxu0 %v4193
        %6430 = vmatmul.mubr.bf16.gmra.mxu0 %v4192
        %v6431 = vpop.f32.mrf.mxu0
        %v6432 = vadd.f32 %v4530, %v6431
        %v6433 = vpop.f32.mrf.mxu0
        %v6434 = vadd.f32 %v4534, %v6433
        %v6435 = vpop.f32.mrf.mxu0
        %v6436 = vpop.f32.mrf.mxu0
        %6437 = vdwg.mxu0
        %6438 = vmatprep.subr.bf16.mxu0 %v5698
        %6439 = vmatpush1.bf16.msra.mxu0 %v5697
        %6440 = vmatprep.subr.bf16.mxu0 %v5686
        %6441 = vmatpush1.bf16.msra.mxu0 %v5685
        %6442 = vmatprep.subr.bf16.mxu0 %v5674
        %6443 = vmatpush1.bf16.msra.mxu0 %v5673
        %6444 = vmatprep.subr.bf16.mxu0 %v5662
        %6445 = vmatpush1.bf16.msra.mxu0 %v5661
        %6446 = vmatprep.subr.bf16.mxu0 %v5650
        %6447 = vmatpush1.bf16.msra.mxu0 %v5649
        %6448 = vmatprep.subr.bf16.mxu0 %v5638
        %6449 = vmatpush1.bf16.msra.mxu0 %v5637
        %6450 = vmatprep.subr.bf16.mxu0 %v5626
        %6451 = vmatpush1.bf16.msra.mxu0 %v5625
        %6452 = vmatprep.subr.bf16.mxu0 %v5614
        %6453 = vmatpush1.bf16.msra.mxu0 %v5613
        %6454 = vmatprep.subr.bf16.mxu0 0
        %6455 = vmatpush2.bf16.msra.mxu0 0
        %6456 = vmatprep.subr.bf16.mxu0 0
        %6457 = vmatpush2.bf16.msra.mxu0 0
        %6458 = vmatprep.subr.bf16.mxu0 0
        %6459 = vmatpush2.bf16.msra.mxu0 0
        %6460 = vmatprep.subr.bf16.mxu0 0
        %6461 = vmatpush2.bf16.msra.mxu0 0
        %6462 = vmatprep.subr.bf16.mxu0 0
        %6463 = vmatpush2.bf16.msra.mxu0 0
        %6464 = vmatprep.subr.bf16.mxu0 0
        %6465 = vmatpush2.bf16.msra.mxu0 0
        %6466 = vmatprep.subr.bf16.mxu0 0
        %6467 = vmatpush2.bf16.msra.mxu0 0
        %6468 = vmatprep.subr.bf16.mxu0 0
        %6469 = vmatpush2.bf16.msra.mxu0 0
        %6470 = vmatprep.mubr.bf16.mxu0 0
        %6471 = vmatmul.mubr.bf16.gmra.mxu0 %v4194
        %v6472 = vpop.f32.mrf.mxu0
        %v6473 = vadd.f32 %v6432, %v6472
        %v6474 = vpop.f32.mrf.mxu0
        %v6475 = vadd.f32 %v6434, %v6474
        %v6476 = vpop.f32.mrf.mxu0
        %v6477 = vpop.f32.mrf.mxu0
        %6478 = vdwg.mxu0
        %v6479 = vmax.f32 %v6063, 0.0
        %v6480 = vmax.f32 %v6065, 0.0
        %v6481 = vmax.f32 %v6145, 0.0
        %v6482 = vmax.f32 %v6147, 0.0
        %v6483 = vmax.f32 %v6227, 0.0
        %v6484 = vmax.f32 %v6229, 0.0
        %v6485 = vmax.f32 %v6309, 0.0
        %v6486 = vmax.f32 %v6311, 0.0
        %v6487 = vmax.f32 %v6391, 0.0
        %v6488 = vmax.f32 %v6393, 0.0
        %v6489 = vmax.f32 %v6473, 0.0
        %v6490 = vmax.f32 %v6475, 0.0
        %v6491 = vpack.c.bf16 %v6479, %v6479
        %v6492 = vpack.c.bf16 %v6480, %v6480
        %v6493 = vpack.c.bf16 %v6481, %v6481
        %v6494 = vpack.c.bf16 %v6482, %v6482
        %v6495 = vpack.c.bf16 %v6483, %v6483
        %v6496 = vpack.c.bf16 %v6484, %v6484
        %v6497 = vpack.c.bf16 %v6485, %v6485
        %v6498 = vpack.c.bf16 %v6486, %v6486
        %v6499 = vpack.c.bf16 %v6487, %v6487
        %v6500 = vpack.c.bf16 %v6488, %v6488
        %v6501 = vpack.c.bf16 %v6489, %v6489
        %v6502 = vpack.c.bf16 %v6490, %v6490
        %v6503 = vld [vmem:[#allocation22] sm:$0xff]
        %v6504 = vld [vmem:[#allocation22 + $0x8] sm:$0xf]
        %v6505 = vld [vmem:[#allocation22 + $0xc] sm:$0xff]
        %v6506 = vld [vmem:[#allocation22 + $0x14] sm:$0xf]
        %v6507 = vld [vmem:[#allocation22 + $0x18] sm:$0xff]
        %v6508 = vld [vmem:[#allocation22 + $0x20] sm:$0xf]
        %v6509 = vld [vmem:[#allocation22 + $0x24] sm:$0xff]
        %v6510 = vld [vmem:[#allocation22 + $0x2c] sm:$0xf]
        %v6511 = vld [vmem:[#allocation22 + $0x30] sm:$0xff]
        %v6512 = vld [vmem:[#allocation22 + $0x38] sm:$0xf]
        %v6513 = vld [vmem:[#allocation22 + $0x3c] sm:$0xff]
        %v6514 = vld [vmem:[#allocation22 + $0x44] sm:$0xf]
        %v6515 = vld [vmem:[#allocation22 + $0x48] sm:$0xff]
        %v6516 = vld [vmem:[#allocation22 + $0x50] sm:$0xf]
        %v6517 = vld [vmem:[#allocation22 + $0x54] sm:$0xff]
        %v6518 = vld [vmem:[#allocation22 + $0x5c] sm:$0xf]
        %v6519 = vld [vmem:[#allocation22 + $0x60] sm:$0xff]
        %v6520 = vld [vmem:[#allocation22 + $0x68] sm:$0xf]
        %v6521 = vld [vmem:[#allocation22 + $0x6c] sm:$0xff]
        %v6522 = vld [vmem:[#allocation22 + $0x74] sm:$0xf]
        %v6523 = vld [vmem:[#allocation22 + $0x78] sm:$0xff]
        %v6524 = vld [vmem:[#allocation22 + $0x80] sm:$0xf]
        %v6525 = vld [vmem:[#allocation22 + $0x84] sm:$0xff]
        %v6526 = vld [vmem:[#allocation22 + $0x8c] sm:$0xf]
        %v6527 = vld [vmem:[#allocation22 + $0x90] sm:$0xff]
        %v6528 = vld [vmem:[#allocation22 + $0x98] sm:$0xf]
        %v6529 = vld [vmem:[#allocation22 + $0x9c] sm:$0xff]
        %v6530 = vld [vmem:[#allocation22 + $0xa4] sm:$0xf]
        %v6531 = vld [vmem:[#allocation22 + $0xa8] sm:$0xff]
        %v6532 = vld [vmem:[#allocation22 + $0xb0] sm:$0xf]
        %v6533 = vld [vmem:[#allocation22 + $0xb4] sm:$0xff]
        %v6534 = vld [vmem:[#allocation22 + $0xbc] sm:$0xf]
        %v6535 = vld [vmem:[#allocation22 + $0xc0] sm:$0xff]
        %v6536 = vld [vmem:[#allocation22 + $0xc8] sm:$0xf]
        %v6537 = vld [vmem:[#allocation22 + $0xcc] sm:$0xff]
        %v6538 = vld [vmem:[#allocation22 + $0xd4] sm:$0xf]
        %v6539 = vld [vmem:[#allocation22 + $0xd8] sm:$0xff]
        %v6540 = vld [vmem:[#allocation22 + $0xe0] sm:$0xf]
        %v6541 = vld [vmem:[#allocation22 + $0xe4] sm:$0xff]
        %v6542 = vld [vmem:[#allocation22 + $0xec] sm:$0xf]
        %v6543 = vld [vmem:[#allocation22 + $0xf0] sm:$0xff]
        %v6544 = vld [vmem:[#allocation22 + $0xf8] sm:$0xf]
        %v6545 = vld [vmem:[#allocation22 + $0xfc] sm:$0xff]
        %v6546 = vld [vmem:[#allocation22 + $0x104] sm:$0xf]
        %v6547 = vld [vmem:[#allocation22 + $0x108] sm:$0xff]
        %v6548 = vld [vmem:[#allocation22 + $0x110] sm:$0xf]
        %v6549 = vld [vmem:[#allocation22 + $0x114] sm:$0xff]
        %v6550 = vld [vmem:[#allocation22 + $0x11c] sm:$0xf]
        %v6551 = vld [vmem:[#allocation22 + $0x120] sm:$0xff]
        %v6552 = vld [vmem:[#allocation22 + $0x128] sm:$0xf]
        %v6553 = vld [vmem:[#allocation22 + $0x12c] sm:$0xff]
        %v6554 = vld [vmem:[#allocation22 + $0x134] sm:$0xf]
        %v6555 = vld [vmem:[#allocation22 + $0x138] sm:$0xff]
        %v6556 = vld [vmem:[#allocation22 + $0x140] sm:$0xf]
        %v6557 = vld [vmem:[#allocation22 + $0x144] sm:$0xff]
        %v6558 = vld [vmem:[#allocation22 + $0x14c] sm:$0xf]
        %v6559 = vld [vmem:[#allocation22 + $0x150] sm:$0xff]
        %v6560 = vld [vmem:[#allocation22 + $0x158] sm:$0xf]
        %v6561 = vld [vmem:[#allocation22 + $0x15c] sm:$0xff]
        %v6562 = vld [vmem:[#allocation22 + $0x164] sm:$0xf]
        %v6563 = vld [vmem:[#allocation22 + $0x168] sm:$0xff]
        %v6564 = vld [vmem:[#allocation22 + $0x170] sm:$0xf]
        %v6565 = vld [vmem:[#allocation22 + $0x174] sm:$0xff]
        %v6566 = vld [vmem:[#allocation22 + $0x17c] sm:$0xf]
        %v6567 = vld [vmem:[#allocation22 + $0x180] sm:$0xff]
        %v6568 = vld [vmem:[#allocation22 + $0x188] sm:$0xf]
        %v6569 = vld [vmem:[#allocation22 + $0x18c] sm:$0xff]
        %v6570 = vld [vmem:[#allocation22 + $0x194] sm:$0xf]
        %v6571 = vld [vmem:[#allocation22 + $0x198] sm:$0xff]
        %v6572 = vld [vmem:[#allocation22 + $0x1a0] sm:$0xf]
        %v6573 = vld [vmem:[#allocation22 + $0x1a4] sm:$0xff]
        %v6574 = vld [vmem:[#allocation22 + $0x1ac] sm:$0xf]
        %v6575 = vld [vmem:[#allocation22 + $0x1b0] sm:$0xff]
        %v6576 = vld [vmem:[#allocation22 + $0x1b8] sm:$0xf]
        %v6577 = vld [vmem:[#allocation22 + $0x1bc] sm:$0xff]
        %v6578 = vld [vmem:[#allocation22 + $0x1c4] sm:$0xf]
        %v6579 = vld [vmem:[#allocation22 + $0x1c8] sm:$0xff]
        %v6580 = vld [vmem:[#allocation22 + $0x1d0] sm:$0xf]
        %v6581 = vld [vmem:[#allocation22 + $0x1d4] sm:$0xff]
        %v6582 = vld [vmem:[#allocation22 + $0x1dc] sm:$0xf]
        %v6583 = vld [vmem:[#allocation22 + $0x1e0] sm:$0xff]
        %v6584 = vld [vmem:[#allocation22 + $0x1e8] sm:$0xf]
        %v6585 = vld [vmem:[#allocation22 + $0x1ec] sm:$0xff]
        %v6586 = vld [vmem:[#allocation22 + $0x1f4] sm:$0xf]
        %v6587 = vld [vmem:[#allocation22 + $0x1f8] sm:$0xff]
        %v6588 = vld [vmem:[#allocation22 + $0x200] sm:$0xf]
        %v6589 = vld [vmem:[#allocation22 + $0x204] sm:$0xff]
        %v6590 = vld [vmem:[#allocation22 + $0x20c] sm:$0xf]
        %v6591 = vld [vmem:[#allocation22 + $0x210] sm:$0xff]
        %v6592 = vld [vmem:[#allocation22 + $0x218] sm:$0xf]
        %v6593 = vld [vmem:[#allocation22 + $0x21c] sm:$0xff]
        %v6594 = vld [vmem:[#allocation22 + $0x224] sm:$0xf]
        %v6595 = vld [vmem:[#allocation22 + $0x228] sm:$0xff]
        %v6596 = vld [vmem:[#allocation22 + $0x230] sm:$0xf]
        %v6597 = vld [vmem:[#allocation22 + $0x234] sm:$0xff]
        %v6598 = vld [vmem:[#allocation22 + $0x23c] sm:$0xf]
        %v6599 = vld [vmem:[#allocation22 + $0x240] sm:$0xff]
        %v6600 = vld [vmem:[#allocation22 + $0x248] sm:$0xf]
        %v6601 = vld [vmem:[#allocation22 + $0x24c] sm:$0xff]
        %v6602 = vld [vmem:[#allocation22 + $0x254] sm:$0xf]
        %v6603 = vld [vmem:[#allocation22 + $0x258] sm:$0xff]
        %v6604 = vld [vmem:[#allocation22 + $0x260] sm:$0xf]
        %v6605 = vld [vmem:[#allocation22 + $0x264] sm:$0xff]
        %v6606 = vld [vmem:[#allocation22 + $0x26c] sm:$0xf]
        %v6607 = vld [vmem:[#allocation22 + $0x270] sm:$0xff]
        %v6608 = vld [vmem:[#allocation22 + $0x278] sm:$0xf]
        %v6609 = vld [vmem:[#allocation22 + $0x27c] sm:$0xff]
        %v6610 = vld [vmem:[#allocation22 + $0x284] sm:$0xf]
        %v6611 = vld [vmem:[#allocation22 + $0x288] sm:$0xff]
        %v6612 = vld [vmem:[#allocation22 + $0x290] sm:$0xf]
        %v6613 = vld [vmem:[#allocation22 + $0x294] sm:$0xff]
        %v6614 = vld [vmem:[#allocation22 + $0x29c] sm:$0xf]
        %v6615 = vld [vmem:[#allocation22 + $0x2a0] sm:$0xff]
        %v6616 = vld [vmem:[#allocation22 + $0x2a8] sm:$0xf]
        %v6617 = vld [vmem:[#allocation22 + $0x2ac] sm:$0xff]
        %v6618 = vld [vmem:[#allocation22 + $0x2b4] sm:$0xf]
        %v6619 = vld [vmem:[#allocation22 + $0x2b8] sm:$0xff]
        %v6620 = vld [vmem:[#allocation22 + $0x2c0] sm:$0xf]
        %v6621 = vld [vmem:[#allocation22 + $0x2c4] sm:$0xff]
        %v6622 = vld [vmem:[#allocation22 + $0x2cc] sm:$0xf]
        %v6623 = vld [vmem:[#allocation22 + $0x2d0] sm:$0xff]
        %v6624 = vld [vmem:[#allocation22 + $0x2d8] sm:$0xf]
        %v6625 = vld [vmem:[#allocation22 + $0x2dc] sm:$0xff]
        %v6626 = vld [vmem:[#allocation22 + $0x2e4] sm:$0xf]
        %v6627 = vld [vmem:[#allocation22 + $0x2e8] sm:$0xff]
        %v6628 = vld [vmem:[#allocation22 + $0x2f0] sm:$0xf]
        %v6629 = vld [vmem:[#allocation22 + $0x2f4] sm:$0xff]
        %v6630 = vld [vmem:[#allocation22 + $0x2fc] sm:$0xf]
        %v6631 = vld [vmem:[#allocation22 + $0x300] sm:$0xff]
        %v6632 = vld [vmem:[#allocation22 + $0x308] sm:$0xf]
        %v6633 = vld [vmem:[#allocation22 + $0x30c] sm:$0xff]
        %v6634 = vld [vmem:[#allocation22 + $0x314] sm:$0xf]
        %v6635 = vld [vmem:[#allocation22 + $0x318] sm:$0xff]
        %v6636 = vld [vmem:[#allocation22 + $0x320] sm:$0xf]
        %v6637 = vld [vmem:[#allocation22 + $0x324] sm:$0xff]
        %v6638 = vld [vmem:[#allocation22 + $0x32c] sm:$0xf]
        %v6639 = vld [vmem:[#allocation22 + $0x330] sm:$0xff]
        %v6640 = vld [vmem:[#allocation22 + $0x338] sm:$0xf]
        %v6641 = vld [vmem:[#allocation22 + $0x33c] sm:$0xff]
        %v6642 = vld [vmem:[#allocation22 + $0x344] sm:$0xf]
        %v6643 = vld [vmem:[#allocation22 + $0x348] sm:$0xff]
        %v6644 = vld [vmem:[#allocation22 + $0x350] sm:$0xf]
        %v6645 = vld [vmem:[#allocation22 + $0x354] sm:$0xff]
        %v6646 = vld [vmem:[#allocation22 + $0x35c] sm:$0xf]
        %v6647 = vld [vmem:[#allocation22 + $0x360] sm:$0xff]
        %v6648 = vld [vmem:[#allocation22 + $0x368] sm:$0xf]
        %v6649 = vld [vmem:[#allocation22 + $0x36c] sm:$0xff]
        %v6650 = vld [vmem:[#allocation22 + $0x374] sm:$0xf]
        %v6651 = vld [vmem:[#allocation22 + $0x378] sm:$0xff]
        %v6652 = vld [vmem:[#allocation22 + $0x380] sm:$0xf]
        %v6653 = vld [vmem:[#allocation22 + $0x384] sm:$0xff]
        %v6654 = vld [vmem:[#allocation22 + $0x38c] sm:$0xf]
        %v6655 = vld [vmem:[#allocation22 + $0x390] sm:$0xff]
        %v6656 = vld [vmem:[#allocation22 + $0x398] sm:$0xf]
        %v6657 = vld [vmem:[#allocation22 + $0x39c] sm:$0xff]
        %v6658 = vld [vmem:[#allocation22 + $0x3a4] sm:$0xf]
        %v6659 = vld [vmem:[#allocation22 + $0x3a8] sm:$0xff]
        %v6660 = vld [vmem:[#allocation22 + $0x3b0] sm:$0xf]
        %v6661 = vld [vmem:[#allocation22 + $0x3b4] sm:$0xff]
        %v6662 = vld [vmem:[#allocation22 + $0x3bc] sm:$0xf]
        %v6663 = vld [vmem:[#allocation22 + $0x3c0] sm:$0xff]
        %v6664 = vld [vmem:[#allocation22 + $0x3c8] sm:$0xf]
        %v6665 = vld [vmem:[#allocation22 + $0x3cc] sm:$0xff]
        %v6666 = vld [vmem:[#allocation22 + $0x3d4] sm:$0xf]
        %v6667 = vld [vmem:[#allocation22 + $0x3d8] sm:$0xff]
        %v6668 = vld [vmem:[#allocation22 + $0x3e0] sm:$0xf]
        %v6669 = vld [vmem:[#allocation22 + $0x3e4] sm:$0xff]
        %v6670 = vld [vmem:[#allocation22 + $0x3ec] sm:$0xf]
        %v6671 = vld [vmem:[#allocation22 + $0x3f0] sm:$0xff]
        %v6672 = vld [vmem:[#allocation22 + $0x3f8] sm:$0xf]
        %v6673 = vld [vmem:[#allocation22 + $0x3fc] sm:$0xff]
        %v6674 = vld [vmem:[#allocation22 + $0x404] sm:$0xf]
        %v6675 = vld [vmem:[#allocation22 + $0x408] sm:$0xff]
        %v6676 = vld [vmem:[#allocation22 + $0x410] sm:$0xf]
        %v6677 = vld [vmem:[#allocation22 + $0x414] sm:$0xff]
        %v6678 = vld [vmem:[#allocation22 + $0x41c] sm:$0xf]
        %v6679 = vld [vmem:[#allocation22 + $0x420] sm:$0xff]
        %v6680 = vld [vmem:[#allocation22 + $0x428] sm:$0xf]
        %v6681 = vld [vmem:[#allocation22 + $0x42c] sm:$0xff]
        %v6682 = vld [vmem:[#allocation22 + $0x434] sm:$0xf]
        %v6683 = vld [vmem:[#allocation22 + $0x438] sm:$0xff]
        %v6684 = vld [vmem:[#allocation22 + $0x440] sm:$0xf]
        %v6685 = vld [vmem:[#allocation22 + $0x444] sm:$0xff]
        %v6686 = vld [vmem:[#allocation22 + $0x44c] sm:$0xf]
        %v6687 = vld [vmem:[#allocation22 + $0x450] sm:$0xff]
        %v6688 = vld [vmem:[#allocation22 + $0x458] sm:$0xf]
        %v6689 = vld [vmem:[#allocation22 + $0x45c] sm:$0xff]
        %v6690 = vld [vmem:[#allocation22 + $0x464] sm:$0xf]
        %v6691 = vld [vmem:[#allocation22 + $0x468] sm:$0xff]
        %v6692 = vld [vmem:[#allocation22 + $0x470] sm:$0xf]
        %v6693 = vld [vmem:[#allocation22 + $0x474] sm:$0xff]
        %v6694 = vld [vmem:[#allocation22 + $0x47c] sm:$0xf]
        %v6695 = vld [vmem:[#allocation22 + $0x480] sm:$0xff]
        %v6696 = vld [vmem:[#allocation22 + $0x488] sm:$0xf]
        %v6697 = vld [vmem:[#allocation22 + $0x48c] sm:$0xff]
        %v6698 = vld [vmem:[#allocation22 + $0x494] sm:$0xf]
        %v6699 = vld [vmem:[#allocation22 + $0x498] sm:$0xff]
        %v6700 = vld [vmem:[#allocation22 + $0x4a0] sm:$0xf]
        %v6701 = vld [vmem:[#allocation22 + $0x4a4] sm:$0xff]
        %v6702 = vld [vmem:[#allocation22 + $0x4ac] sm:$0xf]
        %v6703 = vld [vmem:[#allocation22 + $0x4b0] sm:$0xff]
        %v6704 = vld [vmem:[#allocation22 + $0x4b8] sm:$0xf]
        %v6705 = vld [vmem:[#allocation22 + $0x4bc] sm:$0xff]
        %v6706 = vld [vmem:[#allocation22 + $0x4c4] sm:$0xf]
        %v6707 = vld [vmem:[#allocation22 + $0x4c8] sm:$0xff]
        %v6708 = vld [vmem:[#allocation22 + $0x4d0] sm:$0xf]
        %v6709 = vld [vmem:[#allocation22 + $0x4d4] sm:$0xff]
        %v6710 = vld [vmem:[#allocation22 + $0x4dc] sm:$0xf]
        %v6711 = vld [vmem:[#allocation22 + $0x4e0] sm:$0xff]
        %v6712 = vld [vmem:[#allocation22 + $0x4e8] sm:$0xf]
        %v6713 = vld [vmem:[#allocation22 + $0x4ec] sm:$0xff]
        %v6714 = vld [vmem:[#allocation22 + $0x4f4] sm:$0xf]
        %v6715 = vld [vmem:[#allocation22 + $0x4f8] sm:$0xff]
        %v6716 = vld [vmem:[#allocation22 + $0x500] sm:$0xf]
        %v6717 = vld [vmem:[#allocation22 + $0x504] sm:$0xff]
        %v6718 = vld [vmem:[#allocation22 + $0x50c] sm:$0xf]
        %v6719 = vld [vmem:[#allocation22 + $0x510] sm:$0xff]
        %v6720 = vld [vmem:[#allocation22 + $0x518] sm:$0xf]
        %v6721 = vld [vmem:[#allocation22 + $0x51c] sm:$0xff]
        %v6722 = vld [vmem:[#allocation22 + $0x524] sm:$0xf]
        %v6723 = vld [vmem:[#allocation22 + $0x528] sm:$0xff]
        %v6724 = vld [vmem:[#allocation22 + $0x530] sm:$0xf]
        %v6725 = vld [vmem:[#allocation22 + $0x534] sm:$0xff]
        %v6726 = vld [vmem:[#allocation22 + $0x53c] sm:$0xf]
        %v6727 = vld [vmem:[#allocation22 + $0x540] sm:$0xff]
        %v6728 = vld [vmem:[#allocation22 + $0x548] sm:$0xf]
        %v6729 = vld [vmem:[#allocation22 + $0x54c] sm:$0xff]
        %v6730 = vld [vmem:[#allocation22 + $0x554] sm:$0xf]
        %v6731 = vld [vmem:[#allocation22 + $0x558] sm:$0xff]
        %v6732 = vld [vmem:[#allocation22 + $0x560] sm:$0xf]
        %v6733 = vld [vmem:[#allocation22 + $0x564] sm:$0xff]
        %v6734 = vld [vmem:[#allocation22 + $0x56c] sm:$0xf]
        %v6735 = vld [vmem:[#allocation22 + $0x570] sm:$0xff]
        %v6736 = vld [vmem:[#allocation22 + $0x578] sm:$0xf]
        %v6737 = vld [vmem:[#allocation22 + $0x57c] sm:$0xff]
        %v6738 = vld [vmem:[#allocation22 + $0x584] sm:$0xf]
        %v6739 = vld [vmem:[#allocation22 + $0x588] sm:$0xff]
        %v6740 = vld [vmem:[#allocation22 + $0x590] sm:$0xf]
        %v6741 = vld [vmem:[#allocation22 + $0x594] sm:$0xff]
        %v6742 = vld [vmem:[#allocation22 + $0x59c] sm:$0xf]
        %v6743 = vld [vmem:[#allocation22 + $0x5a0] sm:$0xff]
        %v6744 = vld [vmem:[#allocation22 + $0x5a8] sm:$0xf]
        %v6745 = vld [vmem:[#allocation22 + $0x5ac] sm:$0xff]
        %v6746 = vld [vmem:[#allocation22 + $0x5b4] sm:$0xf]
        %v6747 = vld [vmem:[#allocation22 + $0x5b8] sm:$0xff]
        %v6748 = vld [vmem:[#allocation22 + $0x5c0] sm:$0xf]
        %v6749 = vld [vmem:[#allocation22 + $0x5c4] sm:$0xff]
        %v6750 = vld [vmem:[#allocation22 + $0x5cc] sm:$0xf]
        %v6751 = vld [vmem:[#allocation22 + $0x5d0] sm:$0xff]
        %v6752 = vld [vmem:[#allocation22 + $0x5d8] sm:$0xf]
        %v6753 = vld [vmem:[#allocation22 + $0x5dc] sm:$0xff]
        %v6754 = vld [vmem:[#allocation22 + $0x5e4] sm:$0xf]
        %v6755 = vld [vmem:[#allocation22 + $0x5e8] sm:$0xff]
        %v6756 = vld [vmem:[#allocation22 + $0x5f0] sm:$0xf]
        %v6757 = vld [vmem:[#allocation22 + $0x5f4] sm:$0xff]
        %v6758 = vld [vmem:[#allocation22 + $0x5fc] sm:$0xf]
        %v6759 = vld [vmem:[#allocation22 + $0x600] sm:$0xff]
        %v6760 = vld [vmem:[#allocation22 + $0x608] sm:$0xf]
        %v6761 = vld [vmem:[#allocation22 + $0x60c] sm:$0xff]
        %v6762 = vld [vmem:[#allocation22 + $0x614] sm:$0xf]
        %v6763 = vld [vmem:[#allocation22 + $0x618] sm:$0xff]
        %v6764 = vld [vmem:[#allocation22 + $0x620] sm:$0xf]
        %v6765 = vld [vmem:[#allocation22 + $0x624] sm:$0xff]
        %v6766 = vld [vmem:[#allocation22 + $0x62c] sm:$0xf]
        %v6767 = vld [vmem:[#allocation22 + $0x630] sm:$0xff]
        %v6768 = vld [vmem:[#allocation22 + $0x638] sm:$0xf]
        %v6769 = vld [vmem:[#allocation22 + $0x63c] sm:$0xff]
        %v6770 = vld [vmem:[#allocation22 + $0x644] sm:$0xf]
        %v6771 = vld [vmem:[#allocation22 + $0x648] sm:$0xff]
        %v6772 = vld [vmem:[#allocation22 + $0x650] sm:$0xf]
        %v6773 = vld [vmem:[#allocation22 + $0x654] sm:$0xff]
        %v6774 = vld [vmem:[#allocation22 + $0x65c] sm:$0xf]
        %v6775 = vld [vmem:[#allocation22 + $0x660] sm:$0xff]
        %v6776 = vld [vmem:[#allocation22 + $0x668] sm:$0xf]
        %v6777 = vld [vmem:[#allocation22 + $0x66c] sm:$0xff]
        %v6778 = vld [vmem:[#allocation22 + $0x674] sm:$0xf]
        %v6779 = vld [vmem:[#allocation22 + $0x678] sm:$0xff]
        %v6780 = vld [vmem:[#allocation22 + $0x680] sm:$0xf]
        %v6781 = vld [vmem:[#allocation22 + $0x684] sm:$0xff]
        %v6782 = vld [vmem:[#allocation22 + $0x68c] sm:$0xf]
        %v6783 = vld [vmem:[#allocation22 + $0x690] sm:$0xff]
        %v6784 = vld [vmem:[#allocation22 + $0x698] sm:$0xf]
        %v6785 = vld [vmem:[#allocation22 + $0x69c] sm:$0xff]
        %v6786 = vld [vmem:[#allocation22 + $0x6a4] sm:$0xf]
        %v6787 = vld [vmem:[#allocation22 + $0x6a8] sm:$0xff]
        %v6788 = vld [vmem:[#allocation22 + $0x6b0] sm:$0xf]
        %v6789 = vld [vmem:[#allocation22 + $0x6b4] sm:$0xff]
        %v6790 = vld [vmem:[#allocation22 + $0x6bc] sm:$0xf]
        %v6791 = vld [vmem:[#allocation22 + $0x6c0] sm:$0xff]
        %v6792 = vld [vmem:[#allocation22 + $0x6c8] sm:$0xf]
        %v6793 = vld [vmem:[#allocation22 + $0x6cc] sm:$0xff]
        %v6794 = vld [vmem:[#allocation22 + $0x6d4] sm:$0xf]
        %v6795 = vld [vmem:[#allocation22 + $0x6d8] sm:$0xff]
        %v6796 = vld [vmem:[#allocation22 + $0x6e0] sm:$0xf]
        %v6797 = vld [vmem:[#allocation22 + $0x6e4] sm:$0xff]
        %v6798 = vld [vmem:[#allocation22 + $0x6ec] sm:$0xf]
        %v6799 = vld [vmem:[#allocation22 + $0x6f0] sm:$0xff]
        %v6800 = vld [vmem:[#allocation22 + $0x6f8] sm:$0xf]
        %v6801 = vld [vmem:[#allocation22 + $0x6fc] sm:$0xff]
        %v6802 = vld [vmem:[#allocation22 + $0x704] sm:$0xf]
        %v6803 = vld [vmem:[#allocation22 + $0x708] sm:$0xff]
        %v6804 = vld [vmem:[#allocation22 + $0x710] sm:$0xf]
        %v6805 = vld [vmem:[#allocation22 + $0x714] sm:$0xff]
        %v6806 = vld [vmem:[#allocation22 + $0x71c] sm:$0xf]
        %v6807 = vld [vmem:[#allocation22 + $0x720] sm:$0xff]
        %v6808 = vld [vmem:[#allocation22 + $0x728] sm:$0xf]
        %v6809 = vld [vmem:[#allocation22 + $0x72c] sm:$0xff]
        %v6810 = vld [vmem:[#allocation22 + $0x734] sm:$0xf]
        %v6811 = vld [vmem:[#allocation22 + $0x738] sm:$0xff]
        %v6812 = vld [vmem:[#allocation22 + $0x740] sm:$0xf]
        %v6813 = vld [vmem:[#allocation22 + $0x744] sm:$0xff]
        %v6814 = vld [vmem:[#allocation22 + $0x74c] sm:$0xf]
        %v6815 = vld [vmem:[#allocation22 + $0x750] sm:$0xff]
        %v6816 = vld [vmem:[#allocation22 + $0x758] sm:$0xf]
        %v6817 = vld [vmem:[#allocation22 + $0x75c] sm:$0xff]
        %v6818 = vld [vmem:[#allocation22 + $0x764] sm:$0xf]
        %v6819 = vld [vmem:[#allocation22 + $0x768] sm:$0xff]
        %v6820 = vld [vmem:[#allocation22 + $0x770] sm:$0xf]
        %v6821 = vld [vmem:[#allocation22 + $0x774] sm:$0xff]
        %v6822 = vld [vmem:[#allocation22 + $0x77c] sm:$0xf]
        %v6823 = vld [vmem:[#allocation22 + $0x780] sm:$0xff]
        %v6824 = vld [vmem:[#allocation22 + $0x788] sm:$0xf]
        %v6825 = vld [vmem:[#allocation22 + $0x78c] sm:$0xff]
        %v6826 = vld [vmem:[#allocation22 + $0x794] sm:$0xf]
        %v6827 = vld [vmem:[#allocation22 + $0x798] sm:$0xff]
        %v6828 = vld [vmem:[#allocation22 + $0x7a0] sm:$0xf]
        %v6829 = vld [vmem:[#allocation22 + $0x7a4] sm:$0xff]
        %v6830 = vld [vmem:[#allocation22 + $0x7ac] sm:$0xf]
        %v6831 = vld [vmem:[#allocation22 + $0x7b0] sm:$0xff]
        %v6832 = vld [vmem:[#allocation22 + $0x7b8] sm:$0xf]
        %v6833 = vld [vmem:[#allocation22 + $0x7bc] sm:$0xff]
        %v6834 = vld [vmem:[#allocation22 + $0x7c4] sm:$0xf]
        %v6835 = vld [vmem:[#allocation22 + $0x7c8] sm:$0xff]
        %v6836 = vld [vmem:[#allocation22 + $0x7d0] sm:$0xf]
        %v6837 = vld [vmem:[#allocation22 + $0x7d4] sm:$0xff]
        %v6838 = vld [vmem:[#allocation22 + $0x7dc] sm:$0xf]
        %v6839 = vld [vmem:[#allocation22 + $0x7e0] sm:$0xff]
        %v6840 = vld [vmem:[#allocation22 + $0x7e8] sm:$0xf]
        %v6841 = vld [vmem:[#allocation22 + $0x7ec] sm:$0xff]
        %v6842 = vld [vmem:[#allocation22 + $0x7f4] sm:$0xf]
        %v6843 = vld [vmem:[#allocation22 + $0x7f8] sm:$0xff]
        %v6844 = vld [vmem:[#allocation22 + $0x800] sm:$0xf]
        %v6845 = vld [vmem:[#allocation22 + $0x804] sm:$0xff]
        %v6846 = vld [vmem:[#allocation22 + $0x80c] sm:$0xf]
        %v6847 = vld [vmem:[#allocation22 + $0x810] sm:$0xff]
        %v6848 = vld [vmem:[#allocation22 + $0x818] sm:$0xf]
        %v6849 = vld [vmem:[#allocation22 + $0x81c] sm:$0xff]
        %v6850 = vld [vmem:[#allocation22 + $0x824] sm:$0xf]
        %v6851 = vld [vmem:[#allocation22 + $0x828] sm:$0xff]
        %v6852 = vld [vmem:[#allocation22 + $0x830] sm:$0xf]
        %v6853 = vld [vmem:[#allocation22 + $0x834] sm:$0xff]
        %v6854 = vld [vmem:[#allocation22 + $0x83c] sm:$0xf]
        %v6855 = vld [vmem:[#allocation22 + $0x840] sm:$0xff]
        %v6856 = vld [vmem:[#allocation22 + $0x848] sm:$0xf]
        %v6857 = vld [vmem:[#allocation22 + $0x84c] sm:$0xff]
        %v6858 = vld [vmem:[#allocation22 + $0x854] sm:$0xf]
        %v6859 = vld [vmem:[#allocation22 + $0x858] sm:$0xff]
        %v6860 = vld [vmem:[#allocation22 + $0x860] sm:$0xf]
        %v6861 = vld [vmem:[#allocation22 + $0x864] sm:$0xff]
        %v6862 = vld [vmem:[#allocation22 + $0x86c] sm:$0xf]
        %v6863 = vld [vmem:[#allocation22 + $0x870] sm:$0xff]
        %v6864 = vld [vmem:[#allocation22 + $0x878] sm:$0xf]
        %v6865 = vld [vmem:[#allocation22 + $0x87c] sm:$0xff]
        %v6866 = vld [vmem:[#allocation22 + $0x884] sm:$0xf]
        %v6867 = vld [vmem:[#allocation22 + $0x888] sm:$0xff]
        %v6868 = vld [vmem:[#allocation22 + $0x890] sm:$0xf]
        %v6869 = vld [vmem:[#allocation22 + $0x894] sm:$0xff]
        %v6870 = vld [vmem:[#allocation22 + $0x89c] sm:$0xf]
        %v6871 = vld [vmem:[#allocation22 + $0x8a0] sm:$0xff]
        %v6872 = vld [vmem:[#allocation22 + $0x8a8] sm:$0xf]
        %v6873 = vld [vmem:[#allocation22 + $0x8ac] sm:$0xff]
        %v6874 = vld [vmem:[#allocation22 + $0x8b4] sm:$0xf]
        %v6875 = vld [vmem:[#allocation22 + $0x8b8] sm:$0xff]
        %v6876 = vld [vmem:[#allocation22 + $0x8c0] sm:$0xf]
        %v6877 = vld [vmem:[#allocation22 + $0x8c4] sm:$0xff]
        %v6878 = vld [vmem:[#allocation22 + $0x8cc] sm:$0xf]
        %v6879 = vld [vmem:[#allocation22 + $0x8d0] sm:$0xff]
        %v6880 = vld [vmem:[#allocation22 + $0x8d8] sm:$0xf]
        %v6881 = vld [vmem:[#allocation22 + $0x8dc] sm:$0xff]
        %v6882 = vld [vmem:[#allocation22 + $0x8e4] sm:$0xf]
        %v6883 = vld [vmem:[#allocation22 + $0x8e8] sm:$0xff]
        %v6884 = vld [vmem:[#allocation22 + $0x8f0] sm:$0xf]
        %v6885 = vld [vmem:[#allocation22 + $0x8f4] sm:$0xff]
        %v6886 = vld [vmem:[#allocation22 + $0x8fc] sm:$0xf]
        %v6887 = vld [vmem:[#allocation24] sm:$0x7]
        %v6889 = vlaneseq
        %v6890 = vshrl.u32 %v6889, 7
        %v6891 = vsub.s32 0, %v6890
        %v6892 = vrot.slane %v6887, %v6891
        %v6893 = vlaneseq
        %v6894 = vshrl.u32 %v6893, 7
        %v6895 = vsub.s32 1, %v6894
        %v6896 = vrot.slane %v6887, %v6895
        %v6897 = vlaneseq
        %v6898 = vshrl.u32 %v6897, 7
        %v6899 = vsub.s32 2, %v6898
        %v6900 = vrot.slane %v6887, %v6899
        %v7288 = vunpack.c.l.b16 %v6503
        %v7289 = vunpack.c.h.b16 %v6503
        %v7290 = vunpack.c.l.b16 %v6504
        %v7291 = vunpack.c.l.b16 %v6505
        %v7292 = vunpack.c.h.b16 %v6505
        %v7293 = vunpack.c.l.b16 %v6506
        %v7294 = vunpack.c.l.b16 %v6507
        %v7295 = vunpack.c.h.b16 %v6507
        %v7296 = vunpack.c.l.b16 %v6508
        %v7297 = vunpack.c.l.b16 %v6509
        %v7298 = vunpack.c.h.b16 %v6509
        %v7299 = vunpack.c.l.b16 %v6510
        %v7300 = vunpack.c.l.b16 %v6511
        %v7301 = vunpack.c.h.b16 %v6511
        %v7302 = vunpack.c.l.b16 %v6512
        %v7303 = vunpack.c.l.b16 %v6513
        %v7304 = vunpack.c.h.b16 %v6513
        %v7305 = vunpack.c.l.b16 %v6514
        %v7306 = vunpack.c.l.b16 %v6515
        %v7307 = vunpack.c.h.b16 %v6515
        %v7308 = vunpack.c.l.b16 %v6516
        %v7309 = vunpack.c.l.b16 %v6517
        %v7310 = vunpack.c.h.b16 %v6517
        %v7311 = vunpack.c.l.b16 %v6518
        %v7312 = vunpack.c.l.b16 %v6519
        %v7313 = vunpack.c.h.b16 %v6519
        %v7314 = vunpack.c.l.b16 %v6520
        %v7315 = vunpack.c.l.b16 %v6521
        %v7316 = vunpack.c.h.b16 %v6521
        %v7317 = vunpack.c.l.b16 %v6522
        %v7318 = vunpack.c.l.b16 %v6523
        %v7319 = vunpack.c.h.b16 %v6523
        %v7320 = vunpack.c.l.b16 %v6524
        %v7321 = vunpack.c.l.b16 %v6525
        %v7322 = vunpack.c.h.b16 %v6525
        %v7323 = vunpack.c.l.b16 %v6526
        %v7324 = vunpack.c.l.b16 %v6527
        %v7325 = vunpack.c.h.b16 %v6527
        %v7326 = vunpack.c.l.b16 %v6528
        %v7327 = vunpack.c.l.b16 %v6529
        %v7328 = vunpack.c.h.b16 %v6529
        %v7329 = vunpack.c.l.b16 %v6530
        %v7330 = vunpack.c.l.b16 %v6531
        %v7331 = vunpack.c.h.b16 %v6531
        %v7332 = vunpack.c.l.b16 %v6532
        %v7333 = vunpack.c.l.b16 %v6533
        %v7334 = vunpack.c.h.b16 %v6533
        %v7335 = vunpack.c.l.b16 %v6534
        %v7336 = vunpack.c.l.b16 %v6535
        %v7337 = vunpack.c.h.b16 %v6535
        %v7338 = vunpack.c.l.b16 %v6536
        %v7339 = vunpack.c.l.b16 %v6537
        %v7340 = vunpack.c.h.b16 %v6537
        %v7341 = vunpack.c.l.b16 %v6538
        %v7342 = vunpack.c.l.b16 %v6539
        %v7343 = vunpack.c.h.b16 %v6539
        %v7344 = vunpack.c.l.b16 %v6540
        %v7345 = vunpack.c.l.b16 %v6541
        %v7346 = vunpack.c.h.b16 %v6541
        %v7347 = vunpack.c.l.b16 %v6542
        %v7348 = vunpack.c.l.b16 %v6543
        %v7349 = vunpack.c.h.b16 %v6543
        %v7350 = vunpack.c.l.b16 %v6544
        %v7351 = vunpack.c.l.b16 %v6545
        %v7352 = vunpack.c.h.b16 %v6545
        %v7353 = vunpack.c.l.b16 %v6546
        %v7354 = vunpack.c.l.b16 %v6547
        %v7355 = vunpack.c.h.b16 %v6547
        %v7356 = vunpack.c.l.b16 %v6548
        %v7357 = vunpack.c.l.b16 %v6549
        %v7358 = vunpack.c.h.b16 %v6549
        %v7359 = vunpack.c.l.b16 %v6550
        %v7360 = vunpack.c.l.b16 %v6551
        %v7361 = vunpack.c.h.b16 %v6551
        %v7362 = vunpack.c.l.b16 %v6552
        %v7363 = vunpack.c.l.b16 %v6553
        %v7364 = vunpack.c.h.b16 %v6553
        %v7365 = vunpack.c.l.b16 %v6554
        %v7366 = vunpack.c.l.b16 %v6555
        %v7367 = vunpack.c.h.b16 %v6555
        %v7368 = vunpack.c.l.b16 %v6556
        %v7369 = vunpack.c.l.b16 %v6557
        %v7370 = vunpack.c.h.b16 %v6557
        %v7371 = vunpack.c.l.b16 %v6558
        %v7372 = vunpack.c.l.b16 %v6559
        %v7373 = vunpack.c.h.b16 %v6559
        %v7374 = vunpack.c.l.b16 %v6560
        %v7375 = vunpack.c.l.b16 %v6561
        %v7376 = vunpack.c.h.b16 %v6561
        %v7377 = vunpack.c.l.b16 %v6562
        %v7378 = vunpack.c.l.b16 %v6563
        %v7379 = vunpack.c.h.b16 %v6563
        %v7380 = vunpack.c.l.b16 %v6564
        %v7381 = vunpack.c.l.b16 %v6565
        %v7382 = vunpack.c.h.b16 %v6565
        %v7383 = vunpack.c.l.b16 %v6566
        %v7384 = vunpack.c.l.b16 %v6567
        %v7385 = vunpack.c.h.b16 %v6567
        %v7386 = vunpack.c.l.b16 %v6568
        %v7387 = vunpack.c.l.b16 %v6569
        %v7388 = vunpack.c.h.b16 %v6569
        %v7389 = vunpack.c.l.b16 %v6570
        %v7390 = vunpack.c.l.b16 %v6571
        %v7391 = vunpack.c.h.b16 %v6571
        %v7392 = vunpack.c.l.b16 %v6572
        %v7393 = vunpack.c.l.b16 %v6573
        %v7394 = vunpack.c.h.b16 %v6573
        %v7395 = vunpack.c.l.b16 %v6574
        %v7396 = vunpack.c.l.b16 %v6575
        %v7397 = vunpack.c.h.b16 %v6575
        %v7398 = vunpack.c.l.b16 %v6576
        %v7399 = vunpack.c.l.b16 %v6577
        %v7400 = vunpack.c.h.b16 %v6577
        %v7401 = vunpack.c.l.b16 %v6578
        %v7402 = vunpack.c.l.b16 %v6579
        %v7403 = vunpack.c.h.b16 %v6579
        %v7404 = vunpack.c.l.b16 %v6580
        %v7405 = vunpack.c.l.b16 %v6581
        %v7406 = vunpack.c.h.b16 %v6581
        %v7407 = vunpack.c.l.b16 %v6582
        %v7408 = vunpack.c.l.b16 %v6583
        %v7409 = vunpack.c.h.b16 %v6583
        %v7410 = vunpack.c.l.b16 %v6584
        %v7411 = vunpack.c.l.b16 %v6585
        %v7412 = vunpack.c.h.b16 %v6585
        %v7413 = vunpack.c.l.b16 %v6586
        %v7414 = vunpack.c.l.b16 %v6587
        %v7415 = vunpack.c.h.b16 %v6587
        %v7416 = vunpack.c.l.b16 %v6588
        %v7417 = vunpack.c.l.b16 %v6589
        %v7418 = vunpack.c.h.b16 %v6589
        %v7419 = vunpack.c.l.b16 %v6590
        %v7420 = vunpack.c.l.b16 %v6591
        %v7421 = vunpack.c.h.b16 %v6591
        %v7422 = vunpack.c.l.b16 %v6592
        %v7423 = vunpack.c.l.b16 %v6593
        %v7424 = vunpack.c.h.b16 %v6593
        %v7425 = vunpack.c.l.b16 %v6594
        %v7426 = vunpack.c.l.b16 %v6595
        %v7427 = vunpack.c.h.b16 %v6595
        %v7428 = vunpack.c.l.b16 %v6596
        %v7429 = vunpack.c.l.b16 %v6597
        %v7430 = vunpack.c.h.b16 %v6597
        %v7431 = vunpack.c.l.b16 %v6598
        %v7432 = vunpack.c.l.b16 %v6599
        %v7433 = vunpack.c.h.b16 %v6599
        %v7434 = vunpack.c.l.b16 %v6600
        %v7435 = vunpack.c.l.b16 %v6601
        %v7436 = vunpack.c.h.b16 %v6601
        %v7437 = vunpack.c.l.b16 %v6602
        %v7438 = vunpack.c.l.b16 %v6603
        %v7439 = vunpack.c.h.b16 %v6603
        %v7440 = vunpack.c.l.b16 %v6604
        %v7441 = vunpack.c.l.b16 %v6605
        %v7442 = vunpack.c.h.b16 %v6605
        %v7443 = vunpack.c.l.b16 %v6606
        %v7444 = vunpack.c.l.b16 %v6607
        %v7445 = vunpack.c.h.b16 %v6607
        %v7446 = vunpack.c.l.b16 %v6608
        %v7447 = vunpack.c.l.b16 %v6609
        %v7448 = vunpack.c.h.b16 %v6609
        %v7449 = vunpack.c.l.b16 %v6610
        %v7450 = vunpack.c.l.b16 %v6611
        %v7451 = vunpack.c.h.b16 %v6611
        %v7452 = vunpack.c.l.b16 %v6612
        %v7453 = vunpack.c.l.b16 %v6613
        %v7454 = vunpack.c.h.b16 %v6613
        %v7455 = vunpack.c.l.b16 %v6614
        %v7456 = vunpack.c.l.b16 %v6615
        %v7457 = vunpack.c.h.b16 %v6615
        %v7458 = vunpack.c.l.b16 %v6616
        %v7459 = vunpack.c.l.b16 %v6617
        %v7460 = vunpack.c.h.b16 %v6617
        %v7461 = vunpack.c.l.b16 %v6618
        %v7462 = vunpack.c.l.b16 %v6619
        %v7463 = vunpack.c.h.b16 %v6619
        %v7464 = vunpack.c.l.b16 %v6620
        %v7465 = vunpack.c.l.b16 %v6621
        %v7466 = vunpack.c.h.b16 %v6621
        %v7467 = vunpack.c.l.b16 %v6622
        %v7468 = vunpack.c.l.b16 %v6623
        %v7469 = vunpack.c.h.b16 %v6623
        %v7470 = vunpack.c.l.b16 %v6624
        %v7471 = vunpack.c.l.b16 %v6625
        %v7472 = vunpack.c.h.b16 %v6625
        %v7473 = vunpack.c.l.b16 %v6626
        %v7474 = vunpack.c.l.b16 %v6627
        %v7475 = vunpack.c.h.b16 %v6627
        %v7476 = vunpack.c.l.b16 %v6628
        %v7477 = vunpack.c.l.b16 %v6629
        %v7478 = vunpack.c.h.b16 %v6629
        %v7479 = vunpack.c.l.b16 %v6630
        %v7480 = vunpack.c.l.b16 %v6631
        %v7481 = vunpack.c.h.b16 %v6631
        %v7482 = vunpack.c.l.b16 %v6632
        %v7483 = vunpack.c.l.b16 %v6633
        %v7484 = vunpack.c.h.b16 %v6633
        %v7485 = vunpack.c.l.b16 %v6634
        %v7486 = vunpack.c.l.b16 %v6635
        %v7487 = vunpack.c.h.b16 %v6635
        %v7488 = vunpack.c.l.b16 %v6636
        %v7489 = vunpack.c.l.b16 %v6637
        %v7490 = vunpack.c.h.b16 %v6637
        %v7491 = vunpack.c.l.b16 %v6638
        %v7492 = vunpack.c.l.b16 %v6639
        %v7493 = vunpack.c.h.b16 %v6639
        %v7494 = vunpack.c.l.b16 %v6640
        %v7495 = vunpack.c.l.b16 %v6641
        %v7496 = vunpack.c.h.b16 %v6641
        %v7497 = vunpack.c.l.b16 %v6642
        %v7498 = vunpack.c.l.b16 %v6643
        %v7499 = vunpack.c.h.b16 %v6643
        %v7500 = vunpack.c.l.b16 %v6644
        %v7501 = vunpack.c.l.b16 %v6645
        %v7502 = vunpack.c.h.b16 %v6645
        %v7503 = vunpack.c.l.b16 %v6646
        %v7504 = vunpack.c.l.b16 %v6647
        %v7505 = vunpack.c.h.b16 %v6647
        %v7506 = vunpack.c.l.b16 %v6648
        %v7507 = vunpack.c.l.b16 %v6649
        %v7508 = vunpack.c.h.b16 %v6649
        %v7509 = vunpack.c.l.b16 %v6650
        %v7510 = vunpack.c.l.b16 %v6651
        %v7511 = vunpack.c.h.b16 %v6651
        %v7512 = vunpack.c.l.b16 %v6652
        %v7513 = vunpack.c.l.b16 %v6653
        %v7514 = vunpack.c.h.b16 %v6653
        %v7515 = vunpack.c.l.b16 %v6654
        %v7516 = vunpack.c.l.b16 %v6655
        %v7517 = vunpack.c.h.b16 %v6655
        %v7518 = vunpack.c.l.b16 %v6656
        %v7519 = vunpack.c.l.b16 %v6657
        %v7520 = vunpack.c.h.b16 %v6657
        %v7521 = vunpack.c.l.b16 %v6658
        %v7522 = vunpack.c.l.b16 %v6659
        %v7523 = vunpack.c.h.b16 %v6659
        %v7524 = vunpack.c.l.b16 %v6660
        %v7525 = vunpack.c.l.b16 %v6661
        %v7526 = vunpack.c.h.b16 %v6661
        %v7527 = vunpack.c.l.b16 %v6662
        %v7528 = vunpack.c.l.b16 %v6663
        %v7529 = vunpack.c.h.b16 %v6663
        %v7530 = vunpack.c.l.b16 %v6664
        %v7531 = vunpack.c.l.b16 %v6665
        %v7532 = vunpack.c.h.b16 %v6665
        %v7533 = vunpack.c.l.b16 %v6666
        %v7534 = vunpack.c.l.b16 %v6667
        %v7535 = vunpack.c.h.b16 %v6667
        %v7536 = vunpack.c.l.b16 %v6668
        %v7537 = vunpack.c.l.b16 %v6669
        %v7538 = vunpack.c.h.b16 %v6669
        %v7539 = vunpack.c.l.b16 %v6670
        %v7540 = vunpack.c.l.b16 %v6671
        %v7541 = vunpack.c.h.b16 %v6671
        %v7542 = vunpack.c.l.b16 %v6672
        %v7543 = vunpack.c.l.b16 %v6673
        %v7544 = vunpack.c.h.b16 %v6673
        %v7545 = vunpack.c.l.b16 %v6674
        %v7546 = vunpack.c.l.b16 %v6675
        %v7547 = vunpack.c.h.b16 %v6675
        %v7548 = vunpack.c.l.b16 %v6676
        %v7549 = vunpack.c.l.b16 %v6677
        %v7550 = vunpack.c.h.b16 %v6677
        %v7551 = vunpack.c.l.b16 %v6678
        %v7552 = vunpack.c.l.b16 %v6679
        %v7553 = vunpack.c.h.b16 %v6679
        %v7554 = vunpack.c.l.b16 %v6680
        %v7555 = vunpack.c.l.b16 %v6681
        %v7556 = vunpack.c.h.b16 %v6681
        %v7557 = vunpack.c.l.b16 %v6682
        %v7558 = vunpack.c.l.b16 %v6683
        %v7559 = vunpack.c.h.b16 %v6683
        %v7560 = vunpack.c.l.b16 %v6684
        %v7561 = vunpack.c.l.b16 %v6685
        %v7562 = vunpack.c.h.b16 %v6685
        %v7563 = vunpack.c.l.b16 %v6686
        %v7564 = vunpack.c.l.b16 %v6687
        %v7565 = vunpack.c.h.b16 %v6687
        %v7566 = vunpack.c.l.b16 %v6688
        %v7567 = vunpack.c.l.b16 %v6689
        %v7568 = vunpack.c.h.b16 %v6689
        %v7569 = vunpack.c.l.b16 %v6690
        %v7570 = vunpack.c.l.b16 %v6691
        %v7571 = vunpack.c.h.b16 %v6691
        %v7572 = vunpack.c.l.b16 %v6692
        %v7573 = vunpack.c.l.b16 %v6693
        %v7574 = vunpack.c.h.b16 %v6693
        %v7575 = vunpack.c.l.b16 %v6694
        %v7576 = vunpack.c.l.b16 %v6695
        %v7577 = vunpack.c.h.b16 %v6695
        %v7578 = vunpack.c.l.b16 %v6696
        %v7579 = vunpack.c.l.b16 %v6697
        %v7580 = vunpack.c.h.b16 %v6697
        %v7581 = vunpack.c.l.b16 %v6698
        %v7582 = vunpack.c.l.b16 %v6699
        %v7583 = vunpack.c.h.b16 %v6699
        %v7584 = vunpack.c.l.b16 %v6700
        %v7585 = vunpack.c.l.b16 %v6701
        %v7586 = vunpack.c.h.b16 %v6701
        %v7587 = vunpack.c.l.b16 %v6702
        %v7588 = vunpack.c.l.b16 %v6703
        %v7589 = vunpack.c.h.b16 %v6703
        %v7590 = vunpack.c.l.b16 %v6704
        %v7591 = vunpack.c.l.b16 %v6705
        %v7592 = vunpack.c.h.b16 %v6705
        %v7593 = vunpack.c.l.b16 %v6706
        %v7594 = vunpack.c.l.b16 %v6707
        %v7595 = vunpack.c.h.b16 %v6707
        %v7596 = vunpack.c.l.b16 %v6708
        %v7597 = vunpack.c.l.b16 %v6709
        %v7598 = vunpack.c.h.b16 %v6709
        %v7599 = vunpack.c.l.b16 %v6710
        %v7600 = vunpack.c.l.b16 %v6711
        %v7601 = vunpack.c.h.b16 %v6711
        %v7602 = vunpack.c.l.b16 %v6712
        %v7603 = vunpack.c.l.b16 %v6713
        %v7604 = vunpack.c.h.b16 %v6713
        %v7605 = vunpack.c.l.b16 %v6714
        %v7606 = vunpack.c.l.b16 %v6715
        %v7607 = vunpack.c.h.b16 %v6715
        %v7608 = vunpack.c.l.b16 %v6716
        %v7609 = vunpack.c.l.b16 %v6717
        %v7610 = vunpack.c.h.b16 %v6717
        %v7611 = vunpack.c.l.b16 %v6718
        %v7612 = vunpack.c.l.b16 %v6719
        %v7613 = vunpack.c.h.b16 %v6719
        %v7614 = vunpack.c.l.b16 %v6720
        %v7615 = vunpack.c.l.b16 %v6721
        %v7616 = vunpack.c.h.b16 %v6721
        %v7617 = vunpack.c.l.b16 %v6722
        %v7618 = vunpack.c.l.b16 %v6723
        %v7619 = vunpack.c.h.b16 %v6723
        %v7620 = vunpack.c.l.b16 %v6724
        %v7621 = vunpack.c.l.b16 %v6725
        %v7622 = vunpack.c.h.b16 %v6725
        %v7623 = vunpack.c.l.b16 %v6726
        %v7624 = vunpack.c.l.b16 %v6727
        %v7625 = vunpack.c.h.b16 %v6727
        %v7626 = vunpack.c.l.b16 %v6728
        %v7627 = vunpack.c.l.b16 %v6729
        %v7628 = vunpack.c.h.b16 %v6729
        %v7629 = vunpack.c.l.b16 %v6730
        %v7630 = vunpack.c.l.b16 %v6731
        %v7631 = vunpack.c.h.b16 %v6731
        %v7632 = vunpack.c.l.b16 %v6732
        %v7633 = vunpack.c.l.b16 %v6733
        %v7634 = vunpack.c.h.b16 %v6733
        %v7635 = vunpack.c.l.b16 %v6734
        %v7636 = vunpack.c.l.b16 %v6735
        %v7637 = vunpack.c.h.b16 %v6735
        %v7638 = vunpack.c.l.b16 %v6736
        %v7639 = vunpack.c.l.b16 %v6737
        %v7640 = vunpack.c.h.b16 %v6737
        %v7641 = vunpack.c.l.b16 %v6738
        %v7642 = vunpack.c.l.b16 %v6739
        %v7643 = vunpack.c.h.b16 %v6739
        %v7644 = vunpack.c.l.b16 %v6740
        %v7645 = vunpack.c.l.b16 %v6741
        %v7646 = vunpack.c.h.b16 %v6741
        %v7647 = vunpack.c.l.b16 %v6742
        %v7648 = vunpack.c.l.b16 %v6743
        %v7649 = vunpack.c.h.b16 %v6743
        %v7650 = vunpack.c.l.b16 %v6744
        %v7651 = vunpack.c.l.b16 %v6745
        %v7652 = vunpack.c.h.b16 %v6745
        %v7653 = vunpack.c.l.b16 %v6746
        %v7654 = vunpack.c.l.b16 %v6747
        %v7655 = vunpack.c.h.b16 %v6747
        %v7656 = vunpack.c.l.b16 %v6748
        %v7657 = vunpack.c.l.b16 %v6749
        %v7658 = vunpack.c.h.b16 %v6749
        %v7659 = vunpack.c.l.b16 %v6750
        %v7660 = vunpack.c.l.b16 %v6751
        %v7661 = vunpack.c.h.b16 %v6751
        %v7662 = vunpack.c.l.b16 %v6752
        %v7663 = vunpack.c.l.b16 %v6753
        %v7664 = vunpack.c.h.b16 %v6753
        %v7665 = vunpack.c.l.b16 %v6754
        %v7666 = vunpack.c.l.b16 %v6755
        %v7667 = vunpack.c.h.b16 %v6755
        %v7668 = vunpack.c.l.b16 %v6756
        %v7669 = vunpack.c.l.b16 %v6757
        %v7670 = vunpack.c.h.b16 %v6757
        %v7671 = vunpack.c.l.b16 %v6758
        %v7672 = vunpack.c.l.b16 %v6759
        %v7673 = vunpack.c.h.b16 %v6759
        %v7674 = vunpack.c.l.b16 %v6760
        %v7675 = vunpack.c.l.b16 %v6761
        %v7676 = vunpack.c.h.b16 %v6761
        %v7677 = vunpack.c.l.b16 %v6762
        %v7678 = vunpack.c.l.b16 %v6763
        %v7679 = vunpack.c.h.b16 %v6763
        %v7680 = vunpack.c.l.b16 %v6764
        %v7681 = vunpack.c.l.b16 %v6765
        %v7682 = vunpack.c.h.b16 %v6765
        %v7683 = vunpack.c.l.b16 %v6766
        %v7684 = vunpack.c.l.b16 %v6767
        %v7685 = vunpack.c.h.b16 %v6767
        %v7686 = vunpack.c.l.b16 %v6768
        %v7687 = vunpack.c.l.b16 %v6769
        %v7688 = vunpack.c.h.b16 %v6769
        %v7689 = vunpack.c.l.b16 %v6770
        %v7690 = vunpack.c.l.b16 %v6771
        %v7691 = vunpack.c.h.b16 %v6771
        %v7692 = vunpack.c.l.b16 %v6772
        %v7693 = vunpack.c.l.b16 %v6773
        %v7694 = vunpack.c.h.b16 %v6773
        %v7695 = vunpack.c.l.b16 %v6774
        %v7696 = vunpack.c.l.b16 %v6775
        %v7697 = vunpack.c.h.b16 %v6775
        %v7698 = vunpack.c.l.b16 %v6776
        %v7699 = vunpack.c.l.b16 %v6777
        %v7700 = vunpack.c.h.b16 %v6777
        %v7701 = vunpack.c.l.b16 %v6778
        %v7702 = vunpack.c.l.b16 %v6779
        %v7703 = vunpack.c.h.b16 %v6779
        %v7704 = vunpack.c.l.b16 %v6780
        %v7705 = vunpack.c.l.b16 %v6781
        %v7706 = vunpack.c.h.b16 %v6781
        %v7707 = vunpack.c.l.b16 %v6782
        %v7708 = vunpack.c.l.b16 %v6783
        %v7709 = vunpack.c.h.b16 %v6783
        %v7710 = vunpack.c.l.b16 %v6784
        %v7711 = vunpack.c.l.b16 %v6785
        %v7712 = vunpack.c.h.b16 %v6785
        %v7713 = vunpack.c.l.b16 %v6786
        %v7714 = vunpack.c.l.b16 %v6787
        %v7715 = vunpack.c.h.b16 %v6787
        %v7716 = vunpack.c.l.b16 %v6788
        %v7717 = vunpack.c.l.b16 %v6789
        %v7718 = vunpack.c.h.b16 %v6789
        %v7719 = vunpack.c.l.b16 %v6790
        %v7720 = vunpack.c.l.b16 %v6791
        %v7721 = vunpack.c.h.b16 %v6791
        %v7722 = vunpack.c.l.b16 %v6792
        %v7723 = vunpack.c.l.b16 %v6793
        %v7724 = vunpack.c.h.b16 %v6793
        %v7725 = vunpack.c.l.b16 %v6794
        %v7726 = vunpack.c.l.b16 %v6795
        %v7727 = vunpack.c.h.b16 %v6795
        %v7728 = vunpack.c.l.b16 %v6796
        %v7729 = vunpack.c.l.b16 %v6797
        %v7730 = vunpack.c.h.b16 %v6797
        %v7731 = vunpack.c.l.b16 %v6798
        %v7732 = vunpack.c.l.b16 %v6799
        %v7733 = vunpack.c.h.b16 %v6799
        %v7734 = vunpack.c.l.b16 %v6800
        %v7735 = vunpack.c.l.b16 %v6801
        %v7736 = vunpack.c.h.b16 %v6801
        %v7737 = vunpack.c.l.b16 %v6802
        %v7738 = vunpack.c.l.b16 %v6803
        %v7739 = vunpack.c.h.b16 %v6803
        %v7740 = vunpack.c.l.b16 %v6804
        %v7741 = vunpack.c.l.b16 %v6805
        %v7742 = vunpack.c.h.b16 %v6805
        %v7743 = vunpack.c.l.b16 %v6806
        %v7744 = vunpack.c.l.b16 %v6807
        %v7745 = vunpack.c.h.b16 %v6807
        %v7746 = vunpack.c.l.b16 %v6808
        %v7747 = vunpack.c.l.b16 %v6809
        %v7748 = vunpack.c.h.b16 %v6809
        %v7749 = vunpack.c.l.b16 %v6810
        %v7750 = vunpack.c.l.b16 %v6811
        %v7751 = vunpack.c.h.b16 %v6811
        %v7752 = vunpack.c.l.b16 %v6812
        %v7753 = vunpack.c.l.b16 %v6813
        %v7754 = vunpack.c.h.b16 %v6813
        %v7755 = vunpack.c.l.b16 %v6814
        %v7756 = vunpack.c.l.b16 %v6815
        %v7757 = vunpack.c.h.b16 %v6815
        %v7758 = vunpack.c.l.b16 %v6816
        %v7759 = vunpack.c.l.b16 %v6817
        %v7760 = vunpack.c.h.b16 %v6817
        %v7761 = vunpack.c.l.b16 %v6818
        %v7762 = vunpack.c.l.b16 %v6819
        %v7763 = vunpack.c.h.b16 %v6819
        %v7764 = vunpack.c.l.b16 %v6820
        %v7765 = vunpack.c.l.b16 %v6821
        %v7766 = vunpack.c.h.b16 %v6821
        %v7767 = vunpack.c.l.b16 %v6822
        %v7768 = vunpack.c.l.b16 %v6823
        %v7769 = vunpack.c.h.b16 %v6823
        %v7770 = vunpack.c.l.b16 %v6824
        %v7771 = vunpack.c.l.b16 %v6825
        %v7772 = vunpack.c.h.b16 %v6825
        %v7773 = vunpack.c.l.b16 %v6826
        %v7774 = vunpack.c.l.b16 %v6827
        %v7775 = vunpack.c.h.b16 %v6827
        %v7776 = vunpack.c.l.b16 %v6828
        %v7777 = vunpack.c.l.b16 %v6829
        %v7778 = vunpack.c.h.b16 %v6829
        %v7779 = vunpack.c.l.b16 %v6830
        %v7780 = vunpack.c.l.b16 %v6831
        %v7781 = vunpack.c.h.b16 %v6831
        %v7782 = vunpack.c.l.b16 %v6832
        %v7783 = vunpack.c.l.b16 %v6833
        %v7784 = vunpack.c.h.b16 %v6833
        %v7785 = vunpack.c.l.b16 %v6834
        %v7786 = vunpack.c.l.b16 %v6835
        %v7787 = vunpack.c.h.b16 %v6835
        %v7788 = vunpack.c.l.b16 %v6836
        %v7789 = vunpack.c.l.b16 %v6837
        %v7790 = vunpack.c.h.b16 %v6837
        %v7791 = vunpack.c.l.b16 %v6838
        %v7792 = vunpack.c.l.b16 %v6839
        %v7793 = vunpack.c.h.b16 %v6839
        %v7794 = vunpack.c.l.b16 %v6840
        %v7795 = vunpack.c.l.b16 %v6841
        %v7796 = vunpack.c.h.b16 %v6841
        %v7797 = vunpack.c.l.b16 %v6842
        %v7798 = vunpack.c.l.b16 %v6843
        %v7799 = vunpack.c.h.b16 %v6843
        %v7800 = vunpack.c.l.b16 %v6844
        %v7801 = vunpack.c.l.b16 %v6845
        %v7802 = vunpack.c.h.b16 %v6845
        %v7803 = vunpack.c.l.b16 %v6846
        %v7804 = vunpack.c.l.b16 %v6847
        %v7805 = vunpack.c.h.b16 %v6847
        %v7806 = vunpack.c.l.b16 %v6848
        %v7807 = vunpack.c.l.b16 %v6849
        %v7808 = vunpack.c.h.b16 %v6849
        %v7809 = vunpack.c.l.b16 %v6850
        %v7810 = vunpack.c.l.b16 %v6851
        %v7811 = vunpack.c.h.b16 %v6851
        %v7812 = vunpack.c.l.b16 %v6852
        %v7813 = vunpack.c.l.b16 %v6853
        %v7814 = vunpack.c.h.b16 %v6853
        %v7815 = vunpack.c.l.b16 %v6854
        %v7816 = vunpack.c.l.b16 %v6855
        %v7817 = vunpack.c.h.b16 %v6855
        %v7818 = vunpack.c.l.b16 %v6856
        %v7819 = vunpack.c.l.b16 %v6857
        %v7820 = vunpack.c.h.b16 %v6857
        %v7821 = vunpack.c.l.b16 %v6858
        %v7822 = vunpack.c.l.b16 %v6859
        %v7823 = vunpack.c.h.b16 %v6859
        %v7824 = vunpack.c.l.b16 %v6860
        %v7825 = vunpack.c.l.b16 %v6861
        %v7826 = vunpack.c.h.b16 %v6861
        %v7827 = vunpack.c.l.b16 %v6862
        %v7828 = vunpack.c.l.b16 %v6863
        %v7829 = vunpack.c.h.b16 %v6863
        %v7830 = vunpack.c.l.b16 %v6864
        %v7831 = vunpack.c.l.b16 %v6865
        %v7832 = vunpack.c.h.b16 %v6865
        %v7833 = vunpack.c.l.b16 %v6866
        %v7834 = vunpack.c.l.b16 %v6867
        %v7835 = vunpack.c.h.b16 %v6867
        %v7836 = vunpack.c.l.b16 %v6868
        %v7837 = vunpack.c.l.b16 %v6869
        %v7838 = vunpack.c.h.b16 %v6869
        %v7839 = vunpack.c.l.b16 %v6870
        %v7840 = vunpack.c.l.b16 %v6871
        %v7841 = vunpack.c.h.b16 %v6871
        %v7842 = vunpack.c.l.b16 %v6872
        %v7843 = vunpack.c.l.b16 %v6873
        %v7844 = vunpack.c.h.b16 %v6873
        %v7845 = vunpack.c.l.b16 %v6874
        %v7846 = vunpack.c.l.b16 %v6875
        %v7847 = vunpack.c.h.b16 %v6875
        %v7848 = vunpack.c.l.b16 %v6876
        %v7849 = vunpack.c.l.b16 %v6877
        %v7850 = vunpack.c.h.b16 %v6877
        %v7851 = vunpack.c.l.b16 %v6878
        %v7852 = vunpack.c.l.b16 %v6879
        %v7853 = vunpack.c.h.b16 %v6879
        %v7854 = vunpack.c.l.b16 %v6880
        %v7855 = vunpack.c.l.b16 %v6881
        %v7856 = vunpack.c.h.b16 %v6881
        %v7857 = vunpack.c.l.b16 %v6882
        %v7858 = vunpack.c.l.b16 %v6883
        %v7859 = vunpack.c.h.b16 %v6883
        %v7860 = vunpack.c.l.b16 %v6884
        %v7861 = vunpack.c.l.b16 %v6885
        %v7862 = vunpack.c.h.b16 %v6885
        %v7863 = vunpack.c.l.b16 %v6886
        %v7864 = vpack.c.b16 %v7291, %v7288
        %v7865 = vpack.c.b16 %v7292, %v7289
        %v7866 = vpack.c.b16 %v7293, %v7290
        %v7867 = vpack.c.b16 %v7297, %v7294
        %v7868 = vpack.c.b16 %v7298, %v7295
        %v7869 = vpack.c.b16 %v7299, %v7296
        %v7870 = vpack.c.b16 %v7303, %v7300
        %v7871 = vpack.c.b16 %v7304, %v7301
        %v7872 = vpack.c.b16 %v7305, %v7302
        %v7873 = vpack.c.b16 %v7309, %v7306
        %v7874 = vpack.c.b16 %v7310, %v7307
        %v7875 = vpack.c.b16 %v7311, %v7308
        %v7876 = vpack.c.b16 %v7315, %v7312
        %v7877 = vpack.c.b16 %v7316, %v7313
        %v7878 = vpack.c.b16 %v7317, %v7314
        %v7879 = vpack.c.b16 %v7321, %v7318
        %v7880 = vpack.c.b16 %v7322, %v7319
        %v7881 = vpack.c.b16 %v7323, %v7320
        %v7882 = vpack.c.b16 %v7327, %v7324
        %v7883 = vpack.c.b16 %v7328, %v7325
        %v7884 = vpack.c.b16 %v7329, %v7326
        %v7885 = vpack.c.b16 %v7333, %v7330
        %v7886 = vpack.c.b16 %v7334, %v7331
        %v7887 = vpack.c.b16 %v7335, %v7332
        %v7888 = vpack.c.b16 %v7339, %v7336
        %v7889 = vpack.c.b16 %v7340, %v7337
        %v7890 = vpack.c.b16 %v7341, %v7338
        %v7891 = vpack.c.b16 %v7345, %v7342
        %v7892 = vpack.c.b16 %v7346, %v7343
        %v7893 = vpack.c.b16 %v7347, %v7344
        %v7894 = vpack.c.b16 %v7351, %v7348
        %v7895 = vpack.c.b16 %v7352, %v7349
        %v7896 = vpack.c.b16 %v7353, %v7350
        %v7897 = vpack.c.b16 %v7357, %v7354
        %v7898 = vpack.c.b16 %v7358, %v7355
        %v7899 = vpack.c.b16 %v7359, %v7356
        %v7900 = vpack.c.b16 %v7363, %v7360
        %v7901 = vpack.c.b16 %v7364, %v7361
        %v7902 = vpack.c.b16 %v7365, %v7362
        %v7903 = vpack.c.b16 %v7369, %v7366
        %v7904 = vpack.c.b16 %v7370, %v7367
        %v7905 = vpack.c.b16 %v7371, %v7368
        %v7906 = vpack.c.b16 %v7375, %v7372
        %v7907 = vpack.c.b16 %v7376, %v7373
        %v7908 = vpack.c.b16 %v7377, %v7374
        %v7909 = vpack.c.b16 %v7381, %v7378
        %v7910 = vpack.c.b16 %v7382, %v7379
        %v7911 = vpack.c.b16 %v7383, %v7380
        %v7912 = vpack.c.b16 %v7387, %v7384
        %v7913 = vpack.c.b16 %v7388, %v7385
        %v7914 = vpack.c.b16 %v7389, %v7386
        %v7915 = vpack.c.b16 %v7393, %v7390
        %v7916 = vpack.c.b16 %v7394, %v7391
        %v7917 = vpack.c.b16 %v7395, %v7392
        %v7918 = vpack.c.b16 %v7399, %v7396
        %v7919 = vpack.c.b16 %v7400, %v7397
        %v7920 = vpack.c.b16 %v7401, %v7398
        %v7921 = vpack.c.b16 %v7405, %v7402
        %v7922 = vpack.c.b16 %v7406, %v7403
        %v7923 = vpack.c.b16 %v7407, %v7404
        %v7924 = vpack.c.b16 %v7411, %v7408
        %v7925 = vpack.c.b16 %v7412, %v7409
        %v7926 = vpack.c.b16 %v7413, %v7410
        %v7927 = vpack.c.b16 %v7417, %v7414
        %v7928 = vpack.c.b16 %v7418, %v7415
        %v7929 = vpack.c.b16 %v7419, %v7416
        %v7930 = vpack.c.b16 %v7423, %v7420
        %v7931 = vpack.c.b16 %v7424, %v7421
        %v7932 = vpack.c.b16 %v7425, %v7422
        %v7933 = vpack.c.b16 %v7429, %v7426
        %v7934 = vpack.c.b16 %v7430, %v7427
        %v7935 = vpack.c.b16 %v7431, %v7428
        %v7936 = vpack.c.b16 %v7435, %v7432
        %v7937 = vpack.c.b16 %v7436, %v7433
        %v7938 = vpack.c.b16 %v7437, %v7434
        %v7939 = vpack.c.b16 %v7441, %v7438
        %v7940 = vpack.c.b16 %v7442, %v7439
        %v7941 = vpack.c.b16 %v7443, %v7440
        %v7942 = vpack.c.b16 %v7447, %v7444
        %v7943 = vpack.c.b16 %v7448, %v7445
        %v7944 = vpack.c.b16 %v7449, %v7446
        %v7945 = vpack.c.b16 %v7453, %v7450
        %v7946 = vpack.c.b16 %v7454, %v7451
        %v7947 = vpack.c.b16 %v7455, %v7452
        %v7948 = vpack.c.b16 %v7459, %v7456
        %v7949 = vpack.c.b16 %v7460, %v7457
        %v7950 = vpack.c.b16 %v7461, %v7458
        %v7951 = vpack.c.b16 %v7465, %v7462
        %v7952 = vpack.c.b16 %v7466, %v7463
        %v7953 = vpack.c.b16 %v7467, %v7464
        %v7954 = vpack.c.b16 %v7471, %v7468
        %v7955 = vpack.c.b16 %v7472, %v7469
        %v7956 = vpack.c.b16 %v7473, %v7470
        %v7957 = vpack.c.b16 %v7477, %v7474
        %v7958 = vpack.c.b16 %v7478, %v7475
        %v7959 = vpack.c.b16 %v7479, %v7476
        %v7960 = vpack.c.b16 %v7483, %v7480
        %v7961 = vpack.c.b16 %v7484, %v7481
        %v7962 = vpack.c.b16 %v7485, %v7482
        %v7963 = vpack.c.b16 %v7489, %v7486
        %v7964 = vpack.c.b16 %v7490, %v7487
        %v7965 = vpack.c.b16 %v7491, %v7488
        %v7966 = vpack.c.b16 %v7495, %v7492
        %v7967 = vpack.c.b16 %v7496, %v7493
        %v7968 = vpack.c.b16 %v7497, %v7494
        %v7969 = vpack.c.b16 %v7501, %v7498
        %v7970 = vpack.c.b16 %v7502, %v7499
        %v7971 = vpack.c.b16 %v7503, %v7500
        %v7972 = vpack.c.b16 %v7507, %v7504
        %v7973 = vpack.c.b16 %v7508, %v7505
        %v7974 = vpack.c.b16 %v7509, %v7506
        %v7975 = vpack.c.b16 %v7513, %v7510
        %v7976 = vpack.c.b16 %v7514, %v7511
        %v7977 = vpack.c.b16 %v7515, %v7512
        %v7978 = vpack.c.b16 %v7519, %v7516
        %v7979 = vpack.c.b16 %v7520, %v7517
        %v7980 = vpack.c.b16 %v7521, %v7518
        %v7981 = vpack.c.b16 %v7525, %v7522
        %v7982 = vpack.c.b16 %v7526, %v7523
        %v7983 = vpack.c.b16 %v7527, %v7524
        %v7984 = vpack.c.b16 %v7531, %v7528
        %v7985 = vpack.c.b16 %v7532, %v7529
        %v7986 = vpack.c.b16 %v7533, %v7530
        %v7987 = vpack.c.b16 %v7537, %v7534
        %v7988 = vpack.c.b16 %v7538, %v7535
        %v7989 = vpack.c.b16 %v7539, %v7536
        %v7990 = vpack.c.b16 %v7543, %v7540
        %v7991 = vpack.c.b16 %v7544, %v7541
        %v7992 = vpack.c.b16 %v7545, %v7542
        %v7993 = vpack.c.b16 %v7549, %v7546
        %v7994 = vpack.c.b16 %v7550, %v7547
        %v7995 = vpack.c.b16 %v7551, %v7548
        %v7996 = vpack.c.b16 %v7555, %v7552
        %v7997 = vpack.c.b16 %v7556, %v7553
        %v7998 = vpack.c.b16 %v7557, %v7554
        %v7999 = vpack.c.b16 %v7561, %v7558
        %v8000 = vpack.c.b16 %v7562, %v7559
        %v8001 = vpack.c.b16 %v7563, %v7560
        %v8002 = vpack.c.b16 %v7567, %v7564
        %v8003 = vpack.c.b16 %v7568, %v7565
        %v8004 = vpack.c.b16 %v7569, %v7566
        %v8005 = vpack.c.b16 %v7573, %v7570
        %v8006 = vpack.c.b16 %v7574, %v7571
        %v8007 = vpack.c.b16 %v7575, %v7572
        %v8008 = vpack.c.b16 %v7579, %v7576
        %v8009 = vpack.c.b16 %v7580, %v7577
        %v8010 = vpack.c.b16 %v7581, %v7578
        %v8011 = vpack.c.b16 %v7585, %v7582
        %v8012 = vpack.c.b16 %v7586, %v7583
        %v8013 = vpack.c.b16 %v7587, %v7584
        %v8014 = vpack.c.b16 %v7591, %v7588
        %v8015 = vpack.c.b16 %v7592, %v7589
        %v8016 = vpack.c.b16 %v7593, %v7590
        %v8017 = vpack.c.b16 %v7597, %v7594
        %v8018 = vpack.c.b16 %v7598, %v7595
        %v8019 = vpack.c.b16 %v7599, %v7596
        %v8020 = vpack.c.b16 %v7603, %v7600
        %v8021 = vpack.c.b16 %v7604, %v7601
        %v8022 = vpack.c.b16 %v7605, %v7602
        %v8023 = vpack.c.b16 %v7609, %v7606
        %v8024 = vpack.c.b16 %v7610, %v7607
        %v8025 = vpack.c.b16 %v7611, %v7608
        %v8026 = vpack.c.b16 %v7615, %v7612
        %v8027 = vpack.c.b16 %v7616, %v7613
        %v8028 = vpack.c.b16 %v7617, %v7614
        %v8029 = vpack.c.b16 %v7621, %v7618
        %v8030 = vpack.c.b16 %v7622, %v7619
        %v8031 = vpack.c.b16 %v7623, %v7620
        %v8032 = vpack.c.b16 %v7627, %v7624
        %v8033 = vpack.c.b16 %v7628, %v7625
        %v8034 = vpack.c.b16 %v7629, %v7626
        %v8035 = vpack.c.b16 %v7633, %v7630
        %v8036 = vpack.c.b16 %v7634, %v7631
        %v8037 = vpack.c.b16 %v7635, %v7632
        %v8038 = vpack.c.b16 %v7639, %v7636
        %v8039 = vpack.c.b16 %v7640, %v7637
        %v8040 = vpack.c.b16 %v7641, %v7638
        %v8041 = vpack.c.b16 %v7645, %v7642
        %v8042 = vpack.c.b16 %v7646, %v7643
        %v8043 = vpack.c.b16 %v7647, %v7644
        %v8044 = vpack.c.b16 %v7651, %v7648
        %v8045 = vpack.c.b16 %v7652, %v7649
        %v8046 = vpack.c.b16 %v7653, %v7650
        %v8047 = vpack.c.b16 %v7657, %v7654
        %v8048 = vpack.c.b16 %v7658, %v7655
        %v8049 = vpack.c.b16 %v7659, %v7656
        %v8050 = vpack.c.b16 %v7663, %v7660
        %v8051 = vpack.c.b16 %v7664, %v7661
        %v8052 = vpack.c.b16 %v7665, %v7662
        %v8053 = vpack.c.b16 %v7669, %v7666
        %v8054 = vpack.c.b16 %v7670, %v7667
        %v8055 = vpack.c.b16 %v7671, %v7668
        %v8056 = vpack.c.b16 %v7675, %v7672
        %v8057 = vpack.c.b16 %v7676, %v7673
        %v8058 = vpack.c.b16 %v7677, %v7674
        %v8059 = vpack.c.b16 %v7681, %v7678
        %v8060 = vpack.c.b16 %v7682, %v7679
        %v8061 = vpack.c.b16 %v7683, %v7680
        %v8062 = vpack.c.b16 %v7687, %v7684
        %v8063 = vpack.c.b16 %v7688, %v7685
        %v8064 = vpack.c.b16 %v7689, %v7686
        %v8065 = vpack.c.b16 %v7693, %v7690
        %v8066 = vpack.c.b16 %v7694, %v7691
        %v8067 = vpack.c.b16 %v7695, %v7692
        %v8068 = vpack.c.b16 %v7699, %v7696
        %v8069 = vpack.c.b16 %v7700, %v7697
        %v8070 = vpack.c.b16 %v7701, %v7698
        %v8071 = vpack.c.b16 %v7705, %v7702
        %v8072 = vpack.c.b16 %v7706, %v7703
        %v8073 = vpack.c.b16 %v7707, %v7704
        %v8074 = vpack.c.b16 %v7711, %v7708
        %v8075 = vpack.c.b16 %v7712, %v7709
        %v8076 = vpack.c.b16 %v7713, %v7710
        %v8077 = vpack.c.b16 %v7717, %v7714
        %v8078 = vpack.c.b16 %v7718, %v7715
        %v8079 = vpack.c.b16 %v7719, %v7716
        %v8080 = vpack.c.b16 %v7723, %v7720
        %v8081 = vpack.c.b16 %v7724, %v7721
        %v8082 = vpack.c.b16 %v7725, %v7722
        %v8083 = vpack.c.b16 %v7729, %v7726
        %v8084 = vpack.c.b16 %v7730, %v7727
        %v8085 = vpack.c.b16 %v7731, %v7728
        %v8086 = vpack.c.b16 %v7735, %v7732
        %v8087 = vpack.c.b16 %v7736, %v7733
        %v8088 = vpack.c.b16 %v7737, %v7734
        %v8089 = vpack.c.b16 %v7741, %v7738
        %v8090 = vpack.c.b16 %v7742, %v7739
        %v8091 = vpack.c.b16 %v7743, %v7740
        %v8092 = vpack.c.b16 %v7747, %v7744
        %v8093 = vpack.c.b16 %v7748, %v7745
        %v8094 = vpack.c.b16 %v7749, %v7746
        %v8095 = vpack.c.b16 %v7753, %v7750
        %v8096 = vpack.c.b16 %v7754, %v7751
        %v8097 = vpack.c.b16 %v7755, %v7752
        %v8098 = vpack.c.b16 %v7759, %v7756
        %v8099 = vpack.c.b16 %v7760, %v7757
        %v8100 = vpack.c.b16 %v7761, %v7758
        %v8101 = vpack.c.b16 %v7765, %v7762
        %v8102 = vpack.c.b16 %v7766, %v7763
        %v8103 = vpack.c.b16 %v7767, %v7764
        %v8104 = vpack.c.b16 %v7771, %v7768
        %v8105 = vpack.c.b16 %v7772, %v7769
        %v8106 = vpack.c.b16 %v7773, %v7770
        %v8107 = vpack.c.b16 %v7777, %v7774
        %v8108 = vpack.c.b16 %v7778, %v7775
        %v8109 = vpack.c.b16 %v7779, %v7776
        %v8110 = vpack.c.b16 %v7783, %v7780
        %v8111 = vpack.c.b16 %v7784, %v7781
        %v8112 = vpack.c.b16 %v7785, %v7782
        %v8113 = vpack.c.b16 %v7789, %v7786
        %v8114 = vpack.c.b16 %v7790, %v7787
        %v8115 = vpack.c.b16 %v7791, %v7788
        %v8116 = vpack.c.b16 %v7795, %v7792
        %v8117 = vpack.c.b16 %v7796, %v7793
        %v8118 = vpack.c.b16 %v7797, %v7794
        %v8119 = vpack.c.b16 %v7801, %v7798
        %v8120 = vpack.c.b16 %v7802, %v7799
        %v8121 = vpack.c.b16 %v7803, %v7800
        %v8122 = vpack.c.b16 %v7807, %v7804
        %v8123 = vpack.c.b16 %v7808, %v7805
        %v8124 = vpack.c.b16 %v7809, %v7806
        %v8125 = vpack.c.b16 %v7813, %v7810
        %v8126 = vpack.c.b16 %v7814, %v7811
        %v8127 = vpack.c.b16 %v7815, %v7812
        %v8128 = vpack.c.b16 %v7819, %v7816
        %v8129 = vpack.c.b16 %v7820, %v7817
        %v8130 = vpack.c.b16 %v7821, %v7818
        %v8131 = vpack.c.b16 %v7825, %v7822
        %v8132 = vpack.c.b16 %v7826, %v7823
        %v8133 = vpack.c.b16 %v7827, %v7824
        %v8134 = vpack.c.b16 %v7831, %v7828
        %v8135 = vpack.c.b16 %v7832, %v7829
        %v8136 = vpack.c.b16 %v7833, %v7830
        %v8137 = vpack.c.b16 %v7837, %v7834
        %v8138 = vpack.c.b16 %v7838, %v7835
        %v8139 = vpack.c.b16 %v7839, %v7836
        %v8140 = vpack.c.b16 %v7843, %v7840
        %v8141 = vpack.c.b16 %v7844, %v7841
        %v8142 = vpack.c.b16 %v7845, %v7842
        %v8143 = vpack.c.b16 %v7849, %v7846
        %v8144 = vpack.c.b16 %v7850, %v7847
        %v8145 = vpack.c.b16 %v7851, %v7848
        %v8146 = vpack.c.b16 %v7855, %v7852
        %v8147 = vpack.c.b16 %v7856, %v7853
        %v8148 = vpack.c.b16 %v7857, %v7854
        %v8149 = vpack.c.b16 %v7861, %v7858
        %v8150 = vpack.c.b16 %v7862, %v7859
        %v8151 = vpack.c.b16 %v7863, %v7860
        %8440 = vmatprep.subr.bf16.mxu0 %v7886
        %8441 = vmatpush1.bf16.msra.mxu0 %v7885
        %8442 = vmatprep.subr.bf16.mxu0 %v7883
        %8443 = vmatpush1.bf16.msra.mxu0 %v7882
        %8444 = vmatprep.subr.bf16.mxu0 %v7880
        %8445 = vmatpush1.bf16.msra.mxu0 %v7879
        %8446 = vmatprep.subr.bf16.mxu0 %v7877
        %8447 = vmatpush1.bf16.msra.mxu0 %v7876
        %8448 = vmatprep.subr.bf16.mxu0 %v7874
        %8449 = vmatpush1.bf16.msra.mxu0 %v7873
        %8450 = vmatprep.subr.bf16.mxu0 %v7871
        %8451 = vmatpush1.bf16.msra.mxu0 %v7870
        %8452 = vmatprep.subr.bf16.mxu0 %v7868
        %8453 = vmatpush1.bf16.msra.mxu0 %v7867
        %8454 = vmatprep.subr.bf16.mxu0 %v7865
        %8455 = vmatpush1.bf16.msra.mxu0 %v7864
        %8456 = vmatprep.subr.bf16.mxu0 %v7910
        %8457 = vmatpush2.bf16.msra.mxu0 %v7909
        %8458 = vmatprep.subr.bf16.mxu0 %v7907
        %8459 = vmatpush2.bf16.msra.mxu0 %v7906
        %8460 = vmatprep.subr.bf16.mxu0 %v7904
        %8461 = vmatpush2.bf16.msra.mxu0 %v7903
        %8462 = vmatprep.subr.bf16.mxu0 %v7901
        %8463 = vmatpush2.bf16.msra.mxu0 %v7900
        %8464 = vmatprep.subr.bf16.mxu0 %v7898
        %8465 = vmatpush2.bf16.msra.mxu0 %v7897
        %8466 = vmatprep.subr.bf16.mxu0 %v7895
        %8467 = vmatpush2.bf16.msra.mxu0 %v7894
        %8468 = vmatprep.subr.bf16.mxu0 %v7892
        %8469 = vmatpush2.bf16.msra.mxu0 %v7891
        %8470 = vmatprep.subr.bf16.mxu0 %v7889
        %8471 = vmatpush2.bf16.msra.mxu0 %v7888
        %8472 = vmatprep.mubr.bf16.mxu0 %v6492
        %8473 = vmatmul.mubr.bf16.gmra.mxu0 %v6491
        %v8474 = vpop.f32.mrf.mxu0
        %v8475 = vadd.f32 %v6892, %v8474
        %v8476 = vpop.f32.mrf.mxu0
        %v8477 = vadd.f32 %v6896, %v8476
        %v8478 = vpop.f32.mrf.mxu0
        %v8479 = vpop.f32.mrf.mxu0
        %8480 = vdwg.mxu0
        %8481 = vmatprep.subr.bf16.mxu0 %v7934
        %8482 = vmatpush1.bf16.msra.mxu0 %v7933
        %8483 = vmatprep.subr.bf16.mxu0 %v7931
        %8484 = vmatpush1.bf16.msra.mxu0 %v7930
        %8485 = vmatprep.subr.bf16.mxu0 %v7928
        %8486 = vmatpush1.bf16.msra.mxu0 %v7927
        %8487 = vmatprep.subr.bf16.mxu0 %v7925
        %8488 = vmatpush1.bf16.msra.mxu0 %v7924
        %8489 = vmatprep.subr.bf16.mxu0 %v7922
        %8490 = vmatpush1.bf16.msra.mxu0 %v7921
        %8491 = vmatprep.subr.bf16.mxu0 %v7919
        %8492 = vmatpush1.bf16.msra.mxu0 %v7918
        %8493 = vmatprep.subr.bf16.mxu0 %v7916
        %8494 = vmatpush1.bf16.msra.mxu0 %v7915
        %8495 = vmatprep.subr.bf16.mxu0 %v7913
        %8496 = vmatpush1.bf16.msra.mxu0 %v7912
        %8497 = vmatprep.subr.bf16.mxu0 %v7958
        %8498 = vmatpush2.bf16.msra.mxu0 %v7957
        %8499 = vmatprep.subr.bf16.mxu0 %v7955
        %8500 = vmatpush2.bf16.msra.mxu0 %v7954
        %8501 = vmatprep.subr.bf16.mxu0 %v7952
        %8502 = vmatpush2.bf16.msra.mxu0 %v7951
        %8503 = vmatprep.subr.bf16.mxu0 %v7949
        %8504 = vmatpush2.bf16.msra.mxu0 %v7948
        %8505 = vmatprep.subr.bf16.mxu0 %v7946
        %8506 = vmatpush2.bf16.msra.mxu0 %v7945
        %8507 = vmatprep.subr.bf16.mxu0 %v7943
        %8508 = vmatpush2.bf16.msra.mxu0 %v7942
        %8509 = vmatprep.subr.bf16.mxu0 %v7940
        %8510 = vmatpush2.bf16.msra.mxu0 %v7939
        %8511 = vmatprep.subr.bf16.mxu0 %v7937
        %8512 = vmatpush2.bf16.msra.mxu0 %v7936
        %8513 = vmatprep.mubr.bf16.mxu0 %v6494
        %8514 = vmatmul.mubr.bf16.gmra.mxu0 %v6493
        %v8515 = vpop.f32.mrf.mxu0
        %v8516 = vadd.f32 %v8475, %v8515
        %v8517 = vpop.f32.mrf.mxu0
        %v8518 = vadd.f32 %v8477, %v8517
        %v8519 = vpop.f32.mrf.mxu0
        %v8520 = vpop.f32.mrf.mxu0
        %8521 = vdwg.mxu0
        %8522 = vmatprep.subr.bf16.mxu0 %v7982
        %8523 = vmatpush1.bf16.msra.mxu0 %v7981
        %8524 = vmatprep.subr.bf16.mxu0 %v7979
        %8525 = vmatpush1.bf16.msra.mxu0 %v7978
        %8526 = vmatprep.subr.bf16.mxu0 %v7976
        %8527 = vmatpush1.bf16.msra.mxu0 %v7975
        %8528 = vmatprep.subr.bf16.mxu0 %v7973
        %8529 = vmatpush1.bf16.msra.mxu0 %v7972
        %8530 = vmatprep.subr.bf16.mxu0 %v7970
        %8531 = vmatpush1.bf16.msra.mxu0 %v7969
        %8532 = vmatprep.subr.bf16.mxu0 %v7967
        %8533 = vmatpush1.bf16.msra.mxu0 %v7966
        %8534 = vmatprep.subr.bf16.mxu0 %v7964
        %8535 = vmatpush1.bf16.msra.mxu0 %v7963
        %8536 = vmatprep.subr.bf16.mxu0 %v7961
        %8537 = vmatpush1.bf16.msra.mxu0 %v7960
        %8538 = vmatprep.subr.bf16.mxu0 %v8006
        %8539 = vmatpush2.bf16.msra.mxu0 %v8005
        %8540 = vmatprep.subr.bf16.mxu0 %v8003
        %8541 = vmatpush2.bf16.msra.mxu0 %v8002
        %8542 = vmatprep.subr.bf16.mxu0 %v8000
        %8543 = vmatpush2.bf16.msra.mxu0 %v7999
        %8544 = vmatprep.subr.bf16.mxu0 %v7997
        %8545 = vmatpush2.bf16.msra.mxu0 %v7996
        %8546 = vmatprep.subr.bf16.mxu0 %v7994
        %8547 = vmatpush2.bf16.msra.mxu0 %v7993
        %8548 = vmatprep.subr.bf16.mxu0 %v7991
        %8549 = vmatpush2.bf16.msra.mxu0 %v7990
        %8550 = vmatprep.subr.bf16.mxu0 %v7988
        %8551 = vmatpush2.bf16.msra.mxu0 %v7987
        %8552 = vmatprep.subr.bf16.mxu0 %v7985
        %8553 = vmatpush2.bf16.msra.mxu0 %v7984
        %8554 = vmatprep.mubr.bf16.mxu0 %v6496
        %8555 = vmatmul.mubr.bf16.gmra.mxu0 %v6495
        %v8556 = vpop.f32.mrf.mxu0
        %v8557 = vadd.f32 %v8516, %v8556
        %v8558 = vpop.f32.mrf.mxu0
        %v8559 = vadd.f32 %v8518, %v8558
        %v8560 = vpop.f32.mrf.mxu0
        %v8561 = vpop.f32.mrf.mxu0
        %8562 = vdwg.mxu0
        %8563 = vmatprep.subr.bf16.mxu0 %v8030
        %8564 = vmatpush1.bf16.msra.mxu0 %v8029
        %8565 = vmatprep.subr.bf16.mxu0 %v8027
        %8566 = vmatpush1.bf16.msra.mxu0 %v8026
        %8567 = vmatprep.subr.bf16.mxu0 %v8024
        %8568 = vmatpush1.bf16.msra.mxu0 %v8023
        %8569 = vmatprep.subr.bf16.mxu0 %v8021
        %8570 = vmatpush1.bf16.msra.mxu0 %v8020
        %8571 = vmatprep.subr.bf16.mxu0 %v8018
        %8572 = vmatpush1.bf16.msra.mxu0 %v8017
        %8573 = vmatprep.subr.bf16.mxu0 %v8015
        %8574 = vmatpush1.bf16.msra.mxu0 %v8014
        %8575 = vmatprep.subr.bf16.mxu0 %v8012
        %8576 = vmatpush1.bf16.msra.mxu0 %v8011
        %8577 = vmatprep.subr.bf16.mxu0 %v8009
        %8578 = vmatpush1.bf16.msra.mxu0 %v8008
        %8579 = vmatprep.subr.bf16.mxu0 %v8054
        %8580 = vmatpush2.bf16.msra.mxu0 %v8053
        %8581 = vmatprep.subr.bf16.mxu0 %v8051
        %8582 = vmatpush2.bf16.msra.mxu0 %v8050
        %8583 = vmatprep.subr.bf16.mxu0 %v8048
        %8584 = vmatpush2.bf16.msra.mxu0 %v8047
        %8585 = vmatprep.subr.bf16.mxu0 %v8045
        %8586 = vmatpush2.bf16.msra.mxu0 %v8044
        %8587 = vmatprep.subr.bf16.mxu0 %v8042
        %8588 = vmatpush2.bf16.msra.mxu0 %v8041
        %8589 = vmatprep.subr.bf16.mxu0 %v8039
        %8590 = vmatpush2.bf16.msra.mxu0 %v8038
        %8591 = vmatprep.subr.bf16.mxu0 %v8036
        %8592 = vmatpush2.bf16.msra.mxu0 %v8035
        %8593 = vmatprep.subr.bf16.mxu0 %v8033
        %8594 = vmatpush2.bf16.msra.mxu0 %v8032
        %8595 = vmatprep.mubr.bf16.mxu0 %v6498
        %8596 = vmatmul.mubr.bf16.gmra.mxu0 %v6497
        %v8597 = vpop.f32.mrf.mxu0
        %v8598 = vadd.f32 %v8557, %v8597
        %v8599 = vpop.f32.mrf.mxu0
        %v8600 = vadd.f32 %v8559, %v8599
        %v8601 = vpop.f32.mrf.mxu0
        %v8602 = vpop.f32.mrf.mxu0
        %8603 = vdwg.mxu0
        %8604 = vmatprep.subr.bf16.mxu0 %v8078
        %8605 = vmatpush1.bf16.msra.mxu0 %v8077
        %8606 = vmatprep.subr.bf16.mxu0 %v8075
        %8607 = vmatpush1.bf16.msra.mxu0 %v8074
        %8608 = vmatprep.subr.bf16.mxu0 %v8072
        %8609 = vmatpush1.bf16.msra.mxu0 %v8071
        %8610 = vmatprep.subr.bf16.mxu0 %v8069
        %8611 = vmatpush1.bf16.msra.mxu0 %v8068
        %8612 = vmatprep.subr.bf16.mxu0 %v8066
        %8613 = vmatpush1.bf16.msra.mxu0 %v8065
        %8614 = vmatprep.subr.bf16.mxu0 %v8063
        %8615 = vmatpush1.bf16.msra.mxu0 %v8062
        %8616 = vmatprep.subr.bf16.mxu0 %v8060
        %8617 = vmatpush1.bf16.msra.mxu0 %v8059
        %8618 = vmatprep.subr.bf16.mxu0 %v8057
        %8619 = vmatpush1.bf16.msra.mxu0 %v8056
        %8620 = vmatprep.subr.bf16.mxu0 %v8102
        %8621 = vmatpush2.bf16.msra.mxu0 %v8101
        %8622 = vmatprep.subr.bf16.mxu0 %v8099
        %8623 = vmatpush2.bf16.msra.mxu0 %v8098
        %8624 = vmatprep.subr.bf16.mxu0 %v8096
        %8625 = vmatpush2.bf16.msra.mxu0 %v8095
        %8626 = vmatprep.subr.bf16.mxu0 %v8093
        %8627 = vmatpush2.bf16.msra.mxu0 %v8092
        %8628 = vmatprep.subr.bf16.mxu0 %v8090
        %8629 = vmatpush2.bf16.msra.mxu0 %v8089
        %8630 = vmatprep.subr.bf16.mxu0 %v8087
        %8631 = vmatpush2.bf16.msra.mxu0 %v8086
        %8632 = vmatprep.subr.bf16.mxu0 %v8084
        %8633 = vmatpush2.bf16.msra.mxu0 %v8083
        %8634 = vmatprep.subr.bf16.mxu0 %v8081
        %8635 = vmatpush2.bf16.msra.mxu0 %v8080
        %8636 = vmatprep.mubr.bf16.mxu0 %v6500
        %8637 = vmatmul.mubr.bf16.gmra.mxu0 %v6499
        %v8638 = vpop.f32.mrf.mxu0
        %v8639 = vadd.f32 %v8598, %v8638
        %v8640 = vpop.f32.mrf.mxu0
        %v8641 = vadd.f32 %v8600, %v8640
        %v8642 = vpop.f32.mrf.mxu0
        %v8643 = vpop.f32.mrf.mxu0
        %8644 = vdwg.mxu0
        %8645 = vmatprep.subr.bf16.mxu0 %v8126
        %8646 = vmatpush1.bf16.msra.mxu0 %v8125
        %8647 = vmatprep.subr.bf16.mxu0 %v8123
        %8648 = vmatpush1.bf16.msra.mxu0 %v8122
        %8649 = vmatprep.subr.bf16.mxu0 %v8120
        %8650 = vmatpush1.bf16.msra.mxu0 %v8119
        %8651 = vmatprep.subr.bf16.mxu0 %v8117
        %8652 = vmatpush1.bf16.msra.mxu0 %v8116
        %8653 = vmatprep.subr.bf16.mxu0 %v8114
        %8654 = vmatpush1.bf16.msra.mxu0 %v8113
        %8655 = vmatprep.subr.bf16.mxu0 %v8111
        %8656 = vmatpush1.bf16.msra.mxu0 %v8110
        %8657 = vmatprep.subr.bf16.mxu0 %v8108
        %8658 = vmatpush1.bf16.msra.mxu0 %v8107
        %8659 = vmatprep.subr.bf16.mxu0 %v8105
        %8660 = vmatpush1.bf16.msra.mxu0 %v8104
        %8661 = vmatprep.subr.bf16.mxu0 %v8150
        %8662 = vmatpush2.bf16.msra.mxu0 %v8149
        %8663 = vmatprep.subr.bf16.mxu0 %v8147
        %8664 = vmatpush2.bf16.msra.mxu0 %v8146
        %8665 = vmatprep.subr.bf16.mxu0 %v8144
        %8666 = vmatpush2.bf16.msra.mxu0 %v8143
        %8667 = vmatprep.subr.bf16.mxu0 %v8141
        %8668 = vmatpush2.bf16.msra.mxu0 %v8140
        %8669 = vmatprep.subr.bf16.mxu0 %v8138
        %8670 = vmatpush2.bf16.msra.mxu0 %v8137
        %8671 = vmatprep.subr.bf16.mxu0 %v8135
        %8672 = vmatpush2.bf16.msra.mxu0 %v8134
        %8673 = vmatprep.subr.bf16.mxu0 %v8132
        %8674 = vmatpush2.bf16.msra.mxu0 %v8131
        %8675 = vmatprep.subr.bf16.mxu0 %v8129
        %8676 = vmatpush2.bf16.msra.mxu0 %v8128
        %8677 = vmatprep.mubr.bf16.mxu0 %v6502
        %8678 = vmatmul.mubr.bf16.gmra.mxu0 %v6501
        %v8679 = vpop.f32.mrf.mxu0
        %v8680 = vadd.f32 %v8639, %v8679
        %v8681 = vpop.f32.mrf.mxu0
        %v8682 = vadd.f32 %v8641, %v8681
        %v8683 = vpop.f32.mrf.mxu0
        %v8684 = vpop.f32.mrf.mxu0
        %8685 = vdwg.mxu0
        %8686 = vmatprep.subr.bf16.mxu0 0
        %8687 = vmatpush1.bf16.msra.mxu0 %v7887
        %8688 = vmatprep.subr.bf16.mxu0 0
        %8689 = vmatpush1.bf16.msra.mxu0 %v7884
        %8690 = vmatprep.subr.bf16.mxu0 0
        %8691 = vmatpush1.bf16.msra.mxu0 %v7881
        %8692 = vmatprep.subr.bf16.mxu0 0
        %8693 = vmatpush1.bf16.msra.mxu0 %v7878
        %8694 = vmatprep.subr.bf16.mxu0 0
        %8695 = vmatpush1.bf16.msra.mxu0 %v7875
        %8696 = vmatprep.subr.bf16.mxu0 0
        %8697 = vmatpush1.bf16.msra.mxu0 %v7872
        %8698 = vmatprep.subr.bf16.mxu0 0
        %8699 = vmatpush1.bf16.msra.mxu0 %v7869
        %8700 = vmatprep.subr.bf16.mxu0 0
        %8701 = vmatpush1.bf16.msra.mxu0 %v7866
        %8702 = vmatprep.subr.bf16.mxu0 0
        %8703 = vmatpush2.bf16.msra.mxu0 %v7911
        %8704 = vmatprep.subr.bf16.mxu0 0
        %8705 = vmatpush2.bf16.msra.mxu0 %v7908
        %8706 = vmatprep.subr.bf16.mxu0 0
        %8707 = vmatpush2.bf16.msra.mxu0 %v7905
        %8708 = vmatprep.subr.bf16.mxu0 0
        %8709 = vmatpush2.bf16.msra.mxu0 %v7902
        %8710 = vmatprep.subr.bf16.mxu0 0
        %8711 = vmatpush2.bf16.msra.mxu0 %v7899
        %8712 = vmatprep.subr.bf16.mxu0 0
        %8713 = vmatpush2.bf16.msra.mxu0 %v7896
        %8714 = vmatprep.subr.bf16.mxu0 0
        %8715 = vmatpush2.bf16.msra.mxu0 %v7893
        %8716 = vmatprep.subr.bf16.mxu0 0
        %8717 = vmatpush2.bf16.msra.mxu0 %v7890
        %8718 = vmatprep.mubr.bf16.mxu0 %v6492
        %8719 = vmatmul.mubr.bf16.gmra.mxu0 %v6491
        %v8720 = vpop.f32.mrf.mxu0
        %v8721 = vadd.f32 %v6900, %v8720
        %v8722 = vpop.f32.mrf.mxu0
        %v8723 = vpop.f32.mrf.mxu0
        %v8724 = vpop.f32.mrf.mxu0
        %8725 = vdwg.mxu0
        %8726 = vmatprep.subr.bf16.mxu0 0
        %8727 = vmatpush1.bf16.msra.mxu0 %v7935
        %8728 = vmatprep.subr.bf16.mxu0 0
        %8729 = vmatpush1.bf16.msra.mxu0 %v7932
        %8730 = vmatprep.subr.bf16.mxu0 0
        %8731 = vmatpush1.bf16.msra.mxu0 %v7929
        %8732 = vmatprep.subr.bf16.mxu0 0
        %8733 = vmatpush1.bf16.msra.mxu0 %v7926
        %8734 = vmatprep.subr.bf16.mxu0 0
        %8735 = vmatpush1.bf16.msra.mxu0 %v7923
        %8736 = vmatprep.subr.bf16.mxu0 0
        %8737 = vmatpush1.bf16.msra.mxu0 %v7920
        %8738 = vmatprep.subr.bf16.mxu0 0
        %8739 = vmatpush1.bf16.msra.mxu0 %v7917
        %8740 = vmatprep.subr.bf16.mxu0 0
        %8741 = vmatpush1.bf16.msra.mxu0 %v7914
        %8742 = vmatprep.subr.bf16.mxu0 0
        %8743 = vmatpush2.bf16.msra.mxu0 %v7959
        %8744 = vmatprep.subr.bf16.mxu0 0
        %8745 = vmatpush2.bf16.msra.mxu0 %v7956
        %8746 = vmatprep.subr.bf16.mxu0 0
        %8747 = vmatpush2.bf16.msra.mxu0 %v7953
        %8748 = vmatprep.subr.bf16.mxu0 0
        %8749 = vmatpush2.bf16.msra.mxu0 %v7950
        %8750 = vmatprep.subr.bf16.mxu0 0
        %8751 = vmatpush2.bf16.msra.mxu0 %v7947
        %8752 = vmatprep.subr.bf16.mxu0 0
        %8753 = vmatpush2.bf16.msra.mxu0 %v7944
        %8754 = vmatprep.subr.bf16.mxu0 0
        %8755 = vmatpush2.bf16.msra.mxu0 %v7941
        %8756 = vmatprep.subr.bf16.mxu0 0
        %8757 = vmatpush2.bf16.msra.mxu0 %v7938
        %8758 = vmatprep.mubr.bf16.mxu0 %v6494
        %8759 = vmatmul.mubr.bf16.gmra.mxu0 %v6493
        %v8760 = vpop.f32.mrf.mxu0
        %v8761 = vadd.f32 %v8721, %v8760
        %v8762 = vpop.f32.mrf.mxu0
        %v8763 = vpop.f32.mrf.mxu0
        %v8764 = vpop.f32.mrf.mxu0
        %8765 = vdwg.mxu0
        %8766 = vmatprep.subr.bf16.mxu0 0
        %8767 = vmatpush1.bf16.msra.mxu0 %v7983
        %8768 = vmatprep.subr.bf16.mxu0 0
        %8769 = vmatpush1.bf16.msra.mxu0 %v7980
        %8770 = vmatprep.subr.bf16.mxu0 0
        %8771 = vmatpush1.bf16.msra.mxu0 %v7977
        %8772 = vmatprep.subr.bf16.mxu0 0
        %8773 = vmatpush1.bf16.msra.mxu0 %v7974
        %8774 = vmatprep.subr.bf16.mxu0 0
        %8775 = vmatpush1.bf16.msra.mxu0 %v7971
        %8776 = vmatprep.subr.bf16.mxu0 0
        %8777 = vmatpush1.bf16.msra.mxu0 %v7968
        %8778 = vmatprep.subr.bf16.mxu0 0
        %8779 = vmatpush1.bf16.msra.mxu0 %v7965
        %8780 = vmatprep.subr.bf16.mxu0 0
        %8781 = vmatpush1.bf16.msra.mxu0 %v7962
        %8782 = vmatprep.subr.bf16.mxu0 0
        %8783 = vmatpush2.bf16.msra.mxu0 %v8007
        %8784 = vmatprep.subr.bf16.mxu0 0
        %8785 = vmatpush2.bf16.msra.mxu0 %v8004
        %8786 = vmatprep.subr.bf16.mxu0 0
        %8787 = vmatpush2.bf16.msra.mxu0 %v8001
        %8788 = vmatprep.subr.bf16.mxu0 0
        %8789 = vmatpush2.bf16.msra.mxu0 %v7998
        %8790 = vmatprep.subr.bf16.mxu0 0
        %8791 = vmatpush2.bf16.msra.mxu0 %v7995
        %8792 = vmatprep.subr.bf16.mxu0 0
        %8793 = vmatpush2.bf16.msra.mxu0 %v7992
        %8794 = vmatprep.subr.bf16.mxu0 0
        %8795 = vmatpush2.bf16.msra.mxu0 %v7989
        %8796 = vmatprep.subr.bf16.mxu0 0
        %8797 = vmatpush2.bf16.msra.mxu0 %v7986
        %8798 = vmatprep.mubr.bf16.mxu0 %v6496
        %8799 = vmatmul.mubr.bf16.gmra.mxu0 %v6495
        %v8800 = vpop.f32.mrf.mxu0
        %v8801 = vadd.f32 %v8761, %v8800
        %v8802 = vpop.f32.mrf.mxu0
        %v8803 = vpop.f32.mrf.mxu0
        %v8804 = vpop.f32.mrf.mxu0
        %8805 = vdwg.mxu0
        %8806 = vmatprep.subr.bf16.mxu0 0
        %8807 = vmatpush1.bf16.msra.mxu0 %v8031
        %8808 = vmatprep.subr.bf16.mxu0 0
        %8809 = vmatpush1.bf16.msra.mxu0 %v8028
        %8810 = vmatprep.subr.bf16.mxu0 0
        %8811 = vmatpush1.bf16.msra.mxu0 %v8025
        %8812 = vmatprep.subr.bf16.mxu0 0
        %8813 = vmatpush1.bf16.msra.mxu0 %v8022
        %8814 = vmatprep.subr.bf16.mxu0 0
        %8815 = vmatpush1.bf16.msra.mxu0 %v8019
        %8816 = vmatprep.subr.bf16.mxu0 0
        %8817 = vmatpush1.bf16.msra.mxu0 %v8016
        %8818 = vmatprep.subr.bf16.mxu0 0
        %8819 = vmatpush1.bf16.msra.mxu0 %v8013
        %8820 = vmatprep.subr.bf16.mxu0 0
        %8821 = vmatpush1.bf16.msra.mxu0 %v8010
        %8822 = vmatprep.subr.bf16.mxu0 0
        %8823 = vmatpush2.bf16.msra.mxu0 %v8055
        %8824 = vmatprep.subr.bf16.mxu0 0
        %8825 = vmatpush2.bf16.msra.mxu0 %v8052
        %8826 = vmatprep.subr.bf16.mxu0 0
        %8827 = vmatpush2.bf16.msra.mxu0 %v8049
        %8828 = vmatprep.subr.bf16.mxu0 0
        %8829 = vmatpush2.bf16.msra.mxu0 %v8046
        %8830 = vmatprep.subr.bf16.mxu0 0
        %8831 = vmatpush2.bf16.msra.mxu0 %v8043
        %8832 = vmatprep.subr.bf16.mxu0 0
        %8833 = vmatpush2.bf16.msra.mxu0 %v8040
        %8834 = vmatprep.subr.bf16.mxu0 0
        %8835 = vmatpush2.bf16.msra.mxu0 %v8037
        %8836 = vmatprep.subr.bf16.mxu0 0
        %8837 = vmatpush2.bf16.msra.mxu0 %v8034
        %8838 = vmatprep.mubr.bf16.mxu0 %v6498
        %8839 = vmatmul.mubr.bf16.gmra.mxu0 %v6497
        %v8840 = vpop.f32.mrf.mxu0
        %v8841 = vadd.f32 %v8801, %v8840
        %v8842 = vpop.f32.mrf.mxu0
        %v8843 = vpop.f32.mrf.mxu0
        %v8844 = vpop.f32.mrf.mxu0
        %8845 = vdwg.mxu0
        %8846 = vmatprep.subr.bf16.mxu0 0
        %8847 = vmatpush1.bf16.msra.mxu0 %v8079
        %8848 = vmatprep.subr.bf16.mxu0 0
        %8849 = vmatpush1.bf16.msra.mxu0 %v8076
        %8850 = vmatprep.subr.bf16.mxu0 0
        %8851 = vmatpush1.bf16.msra.mxu0 %v8073
        %8852 = vmatprep.subr.bf16.mxu0 0
        %8853 = vmatpush1.bf16.msra.mxu0 %v8070
        %8854 = vmatprep.subr.bf16.mxu0 0
        %8855 = vmatpush1.bf16.msra.mxu0 %v8067
        %8856 = vmatprep.subr.bf16.mxu0 0
        %8857 = vmatpush1.bf16.msra.mxu0 %v8064
        %8858 = vmatprep.subr.bf16.mxu0 0
        %8859 = vmatpush1.bf16.msra.mxu0 %v8061
        %8860 = vmatprep.subr.bf16.mxu0 0
        %8861 = vmatpush1.bf16.msra.mxu0 %v8058
        %8862 = vmatprep.subr.bf16.mxu0 0
        %8863 = vmatpush2.bf16.msra.mxu0 %v8103
        %8864 = vmatprep.subr.bf16.mxu0 0
        %8865 = vmatpush2.bf16.msra.mxu0 %v8100
        %8866 = vmatprep.subr.bf16.mxu0 0
        %8867 = vmatpush2.bf16.msra.mxu0 %v8097
        %8868 = vmatprep.subr.bf16.mxu0 0
        %8869 = vmatpush2.bf16.msra.mxu0 %v8094
        %8870 = vmatprep.subr.bf16.mxu0 0
        %8871 = vmatpush2.bf16.msra.mxu0 %v8091
        %8872 = vmatprep.subr.bf16.mxu0 0
        %8873 = vmatpush2.bf16.msra.mxu0 %v8088
        %8874 = vmatprep.subr.bf16.mxu0 0
        %8875 = vmatpush2.bf16.msra.mxu0 %v8085
        %8876 = vmatprep.subr.bf16.mxu0 0
        %8877 = vmatpush2.bf16.msra.mxu0 %v8082
        %8878 = vmatprep.mubr.bf16.mxu0 %v6500
        %8879 = vmatmul.mubr.bf16.gmra.mxu0 %v6499
        %v8880 = vpop.f32.mrf.mxu0
        %v8881 = vadd.f32 %v8841, %v8880
        %v8882 = vpop.f32.mrf.mxu0
        %v8883 = vpop.f32.mrf.mxu0
        %v8884 = vpop.f32.mrf.mxu0
        %8885 = vdwg.mxu0
        %8886 = vmatprep.subr.bf16.mxu0 0
        %8887 = vmatpush1.bf16.msra.mxu0 %v8127
        %8888 = vmatprep.subr.bf16.mxu0 0
        %8889 = vmatpush1.bf16.msra.mxu0 %v8124
        %8890 = vmatprep.subr.bf16.mxu0 0
        %8891 = vmatpush1.bf16.msra.mxu0 %v8121
        %8892 = vmatprep.subr.bf16.mxu0 0
        %8893 = vmatpush1.bf16.msra.mxu0 %v8118
        %8894 = vmatprep.subr.bf16.mxu0 0
        %8895 = vmatpush1.bf16.msra.mxu0 %v8115
        %8896 = vmatprep.subr.bf16.mxu0 0
        %8897 = vmatpush1.bf16.msra.mxu0 %v8112
        %8898 = vmatprep.subr.bf16.mxu0 0
        %8899 = vmatpush1.bf16.msra.mxu0 %v8109
        %8900 = vmatprep.subr.bf16.mxu0 0
        %8901 = vmatpush1.bf16.msra.mxu0 %v8106
        %8902 = vmatprep.subr.bf16.mxu0 0
        %8903 = vmatpush2.bf16.msra.mxu0 %v8151
        %8904 = vmatprep.subr.bf16.mxu0 0
        %8905 = vmatpush2.bf16.msra.mxu0 %v8148
        %8906 = vmatprep.subr.bf16.mxu0 0
        %8907 = vmatpush2.bf16.msra.mxu0 %v8145
        %8908 = vmatprep.subr.bf16.mxu0 0
        %8909 = vmatpush2.bf16.msra.mxu0 %v8142
        %8910 = vmatprep.subr.bf16.mxu0 0
        %8911 = vmatpush2.bf16.msra.mxu0 %v8139
        %8912 = vmatprep.subr.bf16.mxu0 0
        %8913 = vmatpush2.bf16.msra.mxu0 %v8136
        %8914 = vmatprep.subr.bf16.mxu0 0
        %8915 = vmatpush2.bf16.msra.mxu0 %v8133
        %8916 = vmatprep.subr.bf16.mxu0 0
        %8917 = vmatpush2.bf16.msra.mxu0 %v8130
        %8918 = vmatprep.mubr.bf16.mxu0 %v6502
        %8919 = vmatmul.mubr.bf16.gmra.mxu0 %v6501
        %v8920 = vpop.f32.mrf.mxu0
        %v8921 = vadd.f32 %v8881, %v8920
        %v8922 = vpop.f32.mrf.mxu0
        %v8923 = vpop.f32.mrf.mxu0
        %v8924 = vpop.f32.mrf.mxu0
        %8925 = vdwg.mxu0
        %v8926 = vadd.f32 %v4128, %v8680
        %v8927 = vadd.f32 %v4129, %v8682
        %v8928 = vadd.f32 %v4130, %v8921
        %8929 = vst [vmem:[%s630] sm:$0xff] %v8926
        %8930 = vst [vmem:[%s630 + $0x8] sm:$0xff] %v8927
        %8931 = vst [vmem:[%s630 + $0x10] sm:$0xff] %v8928
        %s8932 = sand.u32 %s336, 1
        %s8933 = scalar_lea.sflag [#allocation6], %s8932
        %s8934 = sand.u32 %s336, 1
        %s8935 = smul.addr %s8934, 24
        %s8936 = scalar_lea.vmem [#allocation25], %s8935
        // Predicated region
        $region171: #{tpu_custom_call.1} parent=71 // pred_check
          %p8937 = pneg %p346
        $region172: #{tpu_custom_call.1} parent=71 // pred_check_branch
          %8939 = sbr.rel (%p8937) target = $region174
        $region173: #{tpu_custom_call.1} parent=71 // pred_region
          %s8941 = ssub.s32 384, 384
          %8942 = vsyncadd %s8933, %s8941
          %s8943 = smul.addr %s41, 3
          %s8944 = smul.addr %s40, 3
          %s8945 = sadd.s32 %s8943, %s8944
          %s8946 = smul.addr %s8945, 128
          %s8947 = scalar_lea.hbm %s13, %s8946
          %s8949 = sshll.u32 %s8936, 4
          %s8950 = int_to_ptr.vmem [resolvable:$true] %s8949
          %8952 = dma.vmem_to_hbm [thread:$0]  %s8950, 384, %s8947, %s8933
        $region174: #{tpu_custom_call.1} parent=71 // pred_fallthru
          _
      $region72: #{tpu_custom_call.1} parent=5 // pred_fallthru
        _
      %p8953 = scmp.le.s32.totalorder 2, %s31
      // Predicated region
      $region175: #{tpu_custom_call.1} parent=5 // pred_check
        %p8954 = pneg %p8953
      $region176: #{tpu_custom_call.1} parent=5 // pred_check_branch
        %8956 = sbr.rel (%p8954) target = $region178
      $region177: #{tpu_custom_call.1} parent=5 // pred_region
        %s8957 = ssub.s32 %s31, 2
        // Predicated region
        $region179: #{tpu_custom_call.1} parent=177 // pred_check
          %p8958 = pneg %p352
        $region180: #{tpu_custom_call.1} parent=177 // pred_check_branch
          %8960 = sbr.rel (%p8958) target = $region182
        $region181: #{tpu_custom_call.1} parent=177 // pred_region
          %s8961 = sand.u32 %s337, 1
          %s8962 = scalar_lea.sflag [#allocation6], %s8961
          %s8963 = sand.u32 %s337, 1
          %s8964 = smul.addr %s8963, 24
          %s8965 = scalar_lea.vmem [#allocation25], %s8964
          %8966 = dma.done %s8962, 384
        $region182: #{tpu_custom_call.1} parent=177 // pred_fallthru
          _
      $region178: #{tpu_custom_call.1} parent=5 // pred_fallthru
        _
    $region6: #{tpu_custom_call.1} parent=1 // loop_footer
      %s35 = sadd.s32 1, %s31
    $region7: #{tpu_custom_call.1} parent=1 // loop_footer_branch
      %30 = sbr.rel target = $region3
    $region8: #{tpu_custom_call.1} parent=1 // loop_exit
      _
    %8967 = vsyncpa [#allocation5], 1
    %s8968 = scalar_lea.sflag [#allocation5], 1
    %8969 = vsyncpa %s8968, 1
    %8970 = vsyncpa [#allocation8], 1
    %8971 = vsyncpa [#allocation11], 1
    %8972 = vsyncpa [#allocation14], 1
    %8973 = vsyncpa [#allocation17], 1
    %8974 = vsyncpa [#allocation20], 1
    %8975 = vsyncpa [#allocation23], 1
    %8976 = vsyncpa [#allocation6], 1
    %s8977 = scalar_lea.sflag [#allocation6], 1
    %8978 = vsyncpa %s8977, 1

</llo_original>
